<compile_context>
chip_gen: v5e
topology: v5e:2x2
jax: 0.10.0
libtpu: 0.0.40
codegen_flags: <defaults>
</compile_context>

<pallas_src>
import numpy as np
import jax
import jax.numpy as jnp
from jax import lax
from jax.experimental import pallas as pl
from jax.experimental.pallas import tpu as pltpu


# ------------------------------ helpers ----------------------------------- #
def _elu(v):
    return jnp.where(v > 0, v, jnp.exp(jnp.minimum(v, 0.0)) - 1.0)


_CP = pltpu.CompilerParams(dimension_semantics=("parallel",),
                           vmem_limit_bytes=32 * 1024 * 1024)


# ------------------------------ Pallas kernels ----------------------------- #
def _fc_kernel(x_ref, w2_ref, b2_ref, w3_ref, b3_ref, o_ref):
    # fc2 + ELU (tiny, recomputed per column block) then fc3 block + ELU.
    h = jnp.dot(x_ref[...], w2_ref[...], preferred_element_type=jnp.float32) + b2_ref[...]
    h = _elu(h)
    y = jnp.dot(h, w3_ref[...], preferred_element_type=jnp.float32) + b3_ref[...]
    o_ref[...] = _elu(y)


def _mm_bias_elu_kernel(x_ref, w_ref, b_ref, o_ref):
    y = jnp.dot(x_ref[...], w_ref[...], preferred_element_type=jnp.float32) + b_ref[...]
    o_ref[...] = _elu(y)


def _deconv23_kernel(xw_ref, w2_ref, b2_ref, w3_ref, b3_ref, o_ref):
    # deconv2 (phase-decomposed, K=288 -> 4 phases x 16ch) + ELU
    y2 = jnp.dot(xw_ref[...], w2_ref[...], preferred_element_type=jnp.float32) + b2_ref[...]
    y2 = _elu(y2)
    # fused deconv3 (block-diagonal over the 4 phases) + sigmoid epilogue
    z = jnp.dot(y2, w3_ref[...], preferred_element_type=jnp.float32) + b3_ref[...]
    o_ref[...] = 1.0 / (1.0 + jnp.exp(-z))


# ------------------------------ kernel wrappers ---------------------------- #
def _fc_fused(xp, pp, nb=1024):
    bp, e_in = xp.shape
    e = pp["fc2_wT"].shape[1]
    n = pp["fc3_wT"].shape[1]                     # 4096
    return pl.pallas_call(
        _fc_kernel,
        out_shape=jax.ShapeDtypeStruct((bp, n), jnp.float32),
        grid=(n // nb,),
        in_specs=[
            pl.BlockSpec((bp, e_in), lambda j: (0, 0)),
            pl.BlockSpec((e_in, e), lambda j: (0, 0)),
            pl.BlockSpec((1, e), lambda j: (0, 0)),
            pl.BlockSpec((e, nb), lambda j: (0, j)),
            pl.BlockSpec((1, nb), lambda j: (0, j)),
        ],
        out_specs=pl.BlockSpec((bp, nb), lambda j: (0, j)),
        compiler_params=_CP,
    )(xp, pp["fc2_wT"], pp["fc2_b"], pp["fc3_wT"], pp["fc3_b"])


def _deconv1(h2d, pp):
    m = h2d.shape[0]                              # b * 64
    tm = 256 if (m % 256 == 0 and m >= 512) else 64
    return pl.pallas_call(
        _mm_bias_elu_kernel,
        out_shape=jax.ShapeDtypeStruct((m, 512), jnp.float32),
        grid=(m // tm,),
        in_specs=[
            pl.BlockSpec((tm, 64), lambda i: (i, 0)),
            pl.BlockSpec((64, 512), lambda i: (0, 0)),
            pl.BlockSpec((1, 512), lambda i: (0, 0)),
        ],
        out_specs=pl.BlockSpec((tm, 512), lambda i: (i, 0)),
        compiler_params=_CP,
    )(h2d, pp["w1m"], pp["b1r"])


def _deconv23(xw2d, pp):
    m = xw2d.shape[0]                             # b * 1024  (one image per grid step)
    return pl.pallas_call(
        _deconv23_kernel,
        out_shape=jax.ShapeDtypeStruct((m, 48), jnp.float32),
        grid=(m // 1024,),
        in_specs=[
            pl.BlockSpec((1024, 288), lambda n: (n, 0)),
            pl.BlockSpec((288, 64), lambda n: (0, 0)),
            pl.BlockSpec((1, 64), lambda n: (0, 0)),
            pl.BlockSpec((64, 48), lambda n: (0, 0)),
            pl.BlockSpec((1, 48), lambda n: (0, 0)),
        ],
        out_specs=pl.BlockSpec((1024, 48), lambda n: (n, 0)),
        compiler_params=_CP,
    )(xw2d, pp["w2m"], pp["b2r"], pp["w3m"], pp["b3r"])


# --------------------------- one-time parameter prep ----------------------- #
def prepare_params(p):
    """Hoisted weight/bias transforms (PyTorch layout -> kernel-ready matrices)."""
    f32 = jnp.float32
    e_in = p["fc2_w"].shape[1]
    e = p["fc2_w"].shape[0]
    out = {}
    # fc2: y = x @ W.T + b
    out["fc2_wT"] = p["fc2_w"].T.astype(f32)                               # (e_in, e)
    out["fc2_b"] = p["fc2_b"].reshape(1, e).astype(f32)
    # fc3: permute output columns from (ci64, pixel) -> (pixel, ci64) so the
    # (b, 4096) result reshapes for free into (b*64 pixels, 64 channels).
    w3t = p["fc3_w"].T                                                     # (e, 4096)
    out["fc3_wT"] = w3t.reshape(e, 64, 64).transpose(0, 2, 1).reshape(e, 4096).astype(f32)
    out["fc3_b"] = p["fc3_b"].reshape(64, 64).T.reshape(1, 4096).astype(f32)
    # deconv1 (k=4, s=4, p=0): per-pixel matmul, columns ordered (di, dj, co)
    out["w1m"] = p["w1"].transpose(0, 2, 3, 1).reshape(64, 512).astype(f32)
    out["b1r"] = jnp.tile(p["b1"], 16).reshape(1, 512).astype(f32)
    # deconv2 (k=4, s=2, p=1): sub-pixel phase decomposition.
    #   rows   : 3x3 padded neighbourhood taps (a, b_) x 32 input channels  -> K = 288
    #   cols   : phase (rh, rw) x 16 output channels                        -> N = 64
    #   tap (a, b_) contributes to phase (rh, rw) with kernel index
    #   (kh, kw) = (3 + rh - 2a, 3 + rw - 2b_) iff a-rh, b_-rw in {0,1}.
    w2 = p["w2"]                                                           # (32, 16, 4, 4)
    z_blk = jnp.zeros((32, 16), f32)
    rows = []
    for a in range(3):
        for bb in range(3):
            cols = []
            for rh in range(2):
                for rw in range(2):
                    dh, dw = a - rh, bb - rw
                    if dh in (0, 1) and dw in (0, 1):
                        cols.append(w2[:, :, 3 - rh - 2 * dh, 3 - rw - 2 * dw])
                    else:
                        cols.append(z_blk)
            rows.append(jnp.concatenate(cols, axis=1))                     # (32, 64)
    out["w2m"] = jnp.concatenate(rows, axis=0).astype(f32)                 # (288, 64)
    out["b2r"] = jnp.tile(p["b2"], 4).reshape(1, 64).astype(f32)
    # deconv3 (k=2, s=2) fused epilogue: block-diagonal over the 4 phases.
    #   rows: (rh, rw, c16) = 64   cols: (rh, rw, c3, dh3, dw3) = 48
    w3f = p["w3"].reshape(16, 12)                                          # (c16, c3*4+dh3*2+dw3)
    z16 = jnp.zeros((16, 12), f32)
    out["w3m"] = jnp.concatenate(
        [jnp.concatenate([w3f if k == ph else z16 for k in range(4)], axis=1)
         for ph in range(4)], axis=0).astype(f32)                          # (64, 48)
    out["b3r"] = jnp.tile(jnp.repeat(p["b3"], 4), 4).reshape(1, 48).astype(f32)
    return out


# ------------------------------ forward pass ------------------------------- #
def image_decoder_forward(x, pp):
    b = x.shape[0]
    bp = ((b + 7) // 8) * 8
    xp = jnp.pad(x, ((0, bp - b), (0, 0))) if bp != b else x

    # K1: fc2 + ELU + fc3 + ELU  (fc3 columns pre-permuted to (pixel, channel))
    h = _fc_fused(xp, pp)[:b]                                   # (b, 4096)

    # K2: ConvTranspose2d(64,32,4,s=4) + ELU  (disjoint 4x4 blocks == per-pixel matmul)
    y1 = _deconv1(h.reshape(b * 64, 64), pp)                    # (b*64, 512) cols (di,dj,co)

    # XLA glue: pixel-shuffle to NHWC 32x32x32, 1-ring zero pad, 3x3 phase im2col (K=288)
    t = y1.reshape(b, 8, 8, 4, 4, 32).transpose(0, 1, 3, 2, 4, 5).reshape(b, 32, 32, 32)
    tpad = jnp.pad(t, ((0, 0), (1, 1), (1, 1), (0, 0)))         # (b, 34, 34, 32)
    wins = [tpad[:, a:a + 32, c:c + 32, :] for a in range(3) for c in range(3)]
    xw = jnp.concatenate(wins, axis=-1).reshape(b * 1024, 288)  # (b*1024, (a,b_,ci))

    # K3: deconv2 (all 4 phases) + ELU + deconv3 + sigmoid, fused
    z = _deconv23(xw, pp)                                       # (b*1024, 48)

    # Assemble NCHW (b, 3, 128, 128); oh3 = 4q+2rh+dh3, ow3 = 4p+2rw+dw3
    out8 = z.reshape(b, 32, 32, 2, 2, 3, 2, 2)                  # (b,q,p,rh,rw,c3,dh3,dw3)
    obs_nchw = jnp.transpose(out8, (0, 5, 1, 3, 6, 2, 4, 7)).reshape(b, 3, 128, 128)
    # PyTorch: NCHW-contiguous tensor .reshape([b, h, w, c])  (raw reinterpretation)
    return obs_nchw.reshape(b, 128, 128, 3)


# --------------------------- pure-JAX reference ---------------------------- #
def _ref_convT(x, w, bias, stride, pad, k):
    w_oihw = jnp.transpose(w, (1, 0, 2, 3))[:, :, ::-1, ::-1]
    y = lax.conv_general_dilated(
        x, w_oihw, window_strides=(1, 1),
        padding=[(k - 1 - pad, k - 1 - pad)] * 2,
        lhs_dilation=(stride, stride),
        dimension_numbers=("NCHW", "OIHW", "NCHW"))
    return y + bias.reshape(1, -1, 1, 1)


def ref_forward(x, p):
    h = jax.nn.elu(x @ p["fc2_w"].T + p["fc2_b"])
    h = jax.nn.elu(h @ p["fc3_w"].T + p["fc3_b"])
    img = h.reshape(-1, 64, 8, 8)
    y = jax.nn.elu(_ref_convT(img, p["w1"], p["b1"], 4, 0, 4))
    y = jax.nn.elu(_ref_convT(y, p["w2"], p["b2"], 2, 1, 4))
    y = jax.nn.sigmoid(_ref_convT(y, p["w3"], p["b3"], 2, 0, 2))
    bb, c, hh, ww = y.shape
    return y.reshape(bb, hh, ww, c)


# ---------------------------------- main ----------------------------------- #
if __name__ == "__main__":
    key = jax.random.PRNGKey(0)
    embedded_obs_dim, embedding_size, batch = 32, 32, 2
    ks = jax.random.split(key, 11)

    def init(k, shape, fan_in):
        return jax.random.normal(k, shape, jnp.float32) / np.sqrt(float(fan_in))

    params = {
        # PyTorch-convention parameter shapes
        "fc2_w": init(ks[0], (embedding_size, embedded_obs_dim), embedded_obs_dim),
        "fc2_b": init(ks[1], (embedding_size,), embedded_obs_dim),
        "fc3_w": init(ks[2], (64 * 8 * 8, embedding_size), embedding_size),
        "fc3_b": init(ks[3], (64 * 8 * 8,), embedding_size),
        "w1": init(ks[4], (64, 32, 4, 4), 64 * 16),   # ConvTranspose2d(64->32, 4, s4)
        "b1": init(ks[5], (32,), 64 * 16),
        "w2": init(ks[6], (32, 16, 4, 4), 32 * 16),   # ConvTranspose2d(32->16, 4, s2, p1)
        "b2": init(ks[7], (16,), 32 * 16),
        "w3": init(ks[8], (16, 3, 2, 2), 16 * 4),     # ConvTranspose2d(16->3, 2, s2)
        "b3": init(ks[9], (3,), 16 * 4),
    }
    x = jax.random.normal(ks[10], (batch, embedded_obs_dim), jnp.float32)

    prepped = prepare_params(params)                  # one-time parameter prep
    fwd = jax.jit(image_decoder_forward)
    out = jax.block_until_ready(fwd(x, prepped))
    ref = jax.block_until_ready(jax.jit(ref_forward)(x, params))

    assert out.shape == (batch, 128, 128, 3), out.shape
    err = float(np.max(np.abs(np.asarray(out) - np.asarray(ref))))
    assert np.allclose(np.asarray(out), np.asarray(ref), atol=1e-3, rtol=1e-3), err
    print("KERNEL_OK")
</pallas_src>

<mosaic_0001>
module attributes {stable_mosaic.version = 11 : i64} {
  func.func @_fc_kernel(%arg0: i32, %arg1: memref<8x32xf32, #tpu.memory_space<vmem>>, %arg2: memref<32x32xf32, #tpu.memory_space<vmem>>, %arg3: memref<1x32xf32, #tpu.memory_space<vmem>>, %arg4: memref<32x1024xf32, #tpu.memory_space<vmem>>, %arg5: memref<1x1024xf32, #tpu.memory_space<vmem>>, %arg6: memref<8x1024xf32, #tpu.memory_space<vmem>>) attributes {dimension_semantics = [#tpu.dimension_semantics<parallel>], iteration_bounds = array<i64: 4>, scalar_prefetch = 0 : i64, scratch_operands = 0 : i64, tpu.core_type = #tpu.core_type<tc>, window_params = [{pipeline_mode = #tpu.pipeline_mode<synchronous>, transform_indices = @transform_0, window_bounds = array<i64: 8, 32>}, {pipeline_mode = #tpu.pipeline_mode<synchronous>, transform_indices = @transform_1, window_bounds = array<i64: 32, 32>}, {pipeline_mode = #tpu.pipeline_mode<synchronous>, transform_indices = @transform_2, window_bounds = array<i64: 1, 32>}, {transform_indices = @transform_3, window_bounds = array<i64: 32, 1024>}, {transform_indices = @transform_4, window_bounds = array<i64: 1, 1024>}, {transform_indices = @transform_5, window_bounds = array<i64: 8, 1024>}]} {
    %c0 = arith.constant 0 : index
    %c0_0 = arith.constant 0 : index
    %0 = vector.load %arg1[%c0, %c0_0] : memref<8x32xf32, #tpu.memory_space<vmem>>, vector<8x32xf32>
    %c0_1 = arith.constant 0 : index
    %c0_2 = arith.constant 0 : index
    %1 = vector.load %arg2[%c0_1, %c0_2] : memref<32x32xf32, #tpu.memory_space<vmem>>, vector<32x32xf32>
    %cst = arith.constant dense<0.000000e+00> : vector<8x32xf32>
    %2 = tpu.matmul %0, %1, %cst {dimension_numbers = #tpu.dot_dimension_numbers<[1], [0], [0], [1], [0, 0, 1, 1], [], []>} : vector<8x32xf32>, vector<32x32xf32>, vector<8x32xf32> -> vector<8x32xf32>
    %c0_3 = arith.constant 0 : index
    %c0_4 = arith.constant 0 : index
    %3 = vector.load %arg3[%c0_3, %c0_4] : memref<1x32xf32, #tpu.memory_space<vmem>>, vector<1x32xf32>
    %4 = vector.broadcast %3 : vector<1x32xf32> to vector<8x32xf32>
    %5 = arith.addf %2, %4 : vector<8x32xf32>
    %cst_5 = arith.constant 0.000000e+00 : f32
    %6 = vector.broadcast %cst_5 : f32 to vector<8x32xf32>
    %7 = arith.cmpf ogt, %5, %6 : vector<8x32xf32>
    %cst_6 = arith.constant 0.000000e+00 : f32
    %8 = vector.broadcast %cst_6 : f32 to vector<8x32xf32>
    %9 = arith.minimumf %5, %8 : vector<8x32xf32>
    %10 = math.exp %9 : vector<8x32xf32>
    %cst_7 = arith.constant 1.000000e+00 : f32
    %11 = vector.broadcast %cst_7 : f32 to vector<8x32xf32>
    %12 = arith.subf %10, %11 : vector<8x32xf32>
    %13 = arith.select %7, %5, %12 : vector<8x32xi1>, vector<8x32xf32>
    %c0_8 = arith.constant 0 : index
    %c0_9 = arith.constant 0 : index
    %14 = vector.load %arg4[%c0_8, %c0_9] : memref<32x1024xf32, #tpu.memory_space<vmem>>, vector<32x1024xf32>
    %cst_10 = arith.constant dense<0.000000e+00> : vector<8x1024xf32>
    %15 = tpu.matmul %13, %14, %cst_10 {dimension_numbers = #tpu.dot_dimension_numbers<[1], [0], [0], [1], [0, 0, 1, 1], [], []>} : vector<8x32xf32>, vector<32x1024xf32>, vector<8x1024xf32> -> vector<8x1024xf32>
    %c0_11 = arith.constant 0 : index
    %c0_12 = arith.constant 0 : index
    %16 = vector.load %arg5[%c0_11, %c0_12] : memref<1x1024xf32, #tpu.memory_space<vmem>>, vector<1x1024xf32>
    %17 = vector.broadcast %16 : vector<1x1024xf32> to vector<8x1024xf32>
    %18 = arith.addf %15, %17 : vector<8x1024xf32>
    %cst_13 = arith.constant 0.000000e+00 : f32
    %19 = vector.broadcast %cst_13 : f32 to vector<8x1024xf32>
    %20 = arith.cmpf ogt, %18, %19 : vector<8x1024xf32>
    %cst_14 = arith.constant 0.000000e+00 : f32
    %21 = vector.broadcast %cst_14 : f32 to vector<8x1024xf32>
    %22 = arith.minimumf %18, %21 : vector<8x1024xf32>
    %23 = math.exp %22 : vector<8x1024xf32>
    %cst_15 = arith.constant 1.000000e+00 : f32
    %24 = vector.broadcast %cst_15 : f32 to vector<8x1024xf32>
    %25 = arith.subf %23, %24 : vector<8x1024xf32>
    %26 = arith.select %20, %18, %25 : vector<8x1024xi1>, vector<8x1024xf32>
    %c0_16 = arith.constant 0 : index
    %c0_17 = arith.constant 0 : index
    %27 = vector.load %arg6[%c0_16, %c0_17] : memref<8x1024xf32, #tpu.memory_space<vmem>>, vector<8x1024xf32>
    tpu.vector_store %arg6[%c0_16, %c0_17], %26 {strides = array<i32>} : memref<8x1024xf32, #tpu.memory_space<vmem>>, vector<8x1024xf32>,
    return
  }
  func.func @transform_0(%arg0: i32) -> (i32, i32) {
    %c0_i32 = arith.constant 0 : i32
    %c0_i32_0 = arith.constant 0 : i32
    %c0_i32_1 = arith.constant 0 : i32
    return %c0_i32, %c0_i32_0 : i32, i32
  }
  func.func @transform_1(%arg0: i32) -> (i32, i32) {
    %c0_i32 = arith.constant 0 : i32
    %c0_i32_0 = arith.constant 0 : i32
    %c0_i32_1 = arith.constant 0 : i32
    return %c0_i32, %c0_i32_0 : i32, i32
  }
  func.func @transform_2(%arg0: i32) -> (i32, i32) {
    %c0_i32 = arith.constant 0 : i32
    %c0_i32_0 = arith.constant 0 : i32
    %c0_i32_1 = arith.constant 0 : i32
    return %c0_i32, %c0_i32_0 : i32, i32
  }
  func.func @transform_3(%arg0: i32) -> (i32, i32) {
    %c0_i32 = arith.constant 0 : i32
    %c0_i32_0 = arith.constant 0 : i32
    return %c0_i32, %arg0 : i32, i32
  }
  func.func @transform_4(%arg0: i32) -> (i32, i32) {
    %c0_i32 = arith.constant 0 : i32
    %c0_i32_0 = arith.constant 0 : i32
    return %c0_i32, %arg0 : i32, i32
  }
  func.func @transform_5(%arg0: i32) -> (i32, i32) {
    %c0_i32 = arith.constant 0 : i32
    %c0_i32_0 = arith.constant 0 : i32
    return %c0_i32, %arg0 : i32, i32
  }
}

module attributes {stable_mosaic.version = 11 : i64} {
  func.func @_mm_bias_elu_kernel(%arg0: i32, %arg1: memref<64x64xf32, #tpu.memory_space<vmem>>, %arg2: memref<64x512xf32, #tpu.memory_space<vmem>>, %arg3: memref<1x512xf32, #tpu.memory_space<vmem>>, %arg4: memref<64x512xf32, #tpu.memory_space<vmem>>) attributes {dimension_semantics = [#tpu.dimension_semantics<parallel>], iteration_bounds = array<i64: 2>, scalar_prefetch = 0 : i64, scratch_operands = 0 : i64, tpu.core_type = #tpu.core_type<tc>, window_params = [{transform_indices = @transform_0, window_bounds = array<i64: 64, 64>}, {pipeline_mode = #tpu.pipeline_mode<synchronous>, transform_indices = @transform_1, window_bounds = array<i64: 64, 512>}, {pipeline_mode = #tpu.pipeline_mode<synchronous>, transform_indices = @transform_2, window_bounds = array<i64: 1, 512>}, {transform_indices = @transform_3, window_bounds = array<i64: 64, 512>}]} {
    %c0 = arith.constant 0 : index
    %c0_0 = arith.constant 0 : index
    %0 = vector.load %arg1[%c0, %c0_0] : memref<64x64xf32, #tpu.memory_space<vmem>>, vector<64x64xf32>
    %c0_1 = arith.constant 0 : index
    %c0_2 = arith.constant 0 : index
    %1 = vector.load %arg2[%c0_1, %c0_2] : memref<64x512xf32, #tpu.memory_space<vmem>>, vector<64x512xf32>
    %cst = arith.constant dense<0.000000e+00> : vector<64x512xf32>
    %2 = tpu.matmul %0, %1, %cst {dimension_numbers = #tpu.dot_dimension_numbers<[1], [0], [0], [1], [0, 0, 1, 1], [], []>} : vector<64x64xf32>, vector<64x512xf32>, vector<64x512xf32> -> vector<64x512xf32>
    %c0_3 = arith.constant 0 : index
    %c0_4 = arith.constant 0 : index
    %3 = vector.load %arg3[%c0_3, %c0_4] : memref<1x512xf32, #tpu.memory_space<vmem>>, vector<1x512xf32>
    %4 = vector.broadcast %3 : vector<1x512xf32> to vector<64x512xf32>
    %5 = arith.addf %2, %4 : vector<64x512xf32>
    %cst_5 = arith.constant 0.000000e+00 : f32
    %6 = vector.broadcast %cst_5 : f32 to vector<64x512xf32>
    %7 = arith.cmpf ogt, %5, %6 : vector<64x512xf32>
    %cst_6 = arith.constant 0.000000e+00 : f32
    %8 = vector.broadcast %cst_6 : f32 to vector<64x512xf32>
    %9 = arith.minimumf %5, %8 : vector<64x512xf32>
    %10 = math.exp %9 : vector<64x512xf32>
    %cst_7 = arith.constant 1.000000e+00 : f32
    %11 = vector.broadcast %cst_7 : f32 to vector<64x512xf32>
    %12 = arith.subf %10, %11 : vector<64x512xf32>
    %13 = arith.select %7, %5, %12 : vector<64x512xi1>, vector<64x512xf32>
    %c0_8 = arith.constant 0 : index
    %c0_9 = arith.constant 0 : index
    %14 = vector.load %arg4[%c0_8, %c0_9] : memref<64x512xf32, #tpu.memory_space<vmem>>, vector<64x512xf32>
    tpu.vector_store %arg4[%c0_8, %c0_9], %13 {strides = array<i32>} : memref<64x512xf32, #tpu.memory_space<vmem>>, vector<64x512xf32>,
    return
  }
  func.func @transform_0(%arg0: i32) -> (i32, i32) {
    %c0_i32 = arith.constant 0 : i32
    %c0_i32_0 = arith.constant 0 : i32
    return %arg0, %c0_i32 : i32, i32
  }
  func.func @transform_1(%arg0: i32) -> (i32, i32) {
    %c0_i32 = arith.constant 0 : i32
    %c0_i32_0 = arith.constant 0 : i32
    %c0_i32_1 = arith.constant 0 : i32
    return %c0_i32, %c0_i32_0 : i32, i32
  }
  func.func @transform_2(%arg0: i32) -> (i32, i32) {
    %c0_i32 = arith.constant 0 : i32
    %c0_i32_0 = arith.constant 0 : i32
    %c0_i32_1 = arith.constant 0 : i32
    return %c0_i32, %c0_i32_0 : i32, i32
  }
  func.func @transform_3(%arg0: i32) -> (i32, i32) {
    %c0_i32 = arith.constant 0 : i32
    %c0_i32_0 = arith.constant 0 : i32
    return %arg0, %c0_i32 : i32, i32
  }
}

module attributes {stable_mosaic.version = 11 : i64} {
  func.func @_deconv23_kernel(%arg0: i32, %arg1: memref<1024x288xf32, #tpu.memory_space<vmem>>, %arg2: memref<288x64xf32, #tpu.memory_space<vmem>>, %arg3: memref<1x64xf32, #tpu.memory_space<vmem>>, %arg4: memref<64x48xf32, #tpu.memory_space<vmem>>, %arg5: memref<1x48xf32, #tpu.memory_space<vmem>>, %arg6: memref<1024x48xf32, #tpu.memory_space<vmem>>) attributes {dimension_semantics = [#tpu.dimension_semantics<parallel>], iteration_bounds = array<i64: 2>, scalar_prefetch = 0 : i64, scratch_operands = 0 : i64, tpu.core_type = #tpu.core_type<tc>, window_params = [{transform_indices = @transform_0, window_bounds = array<i64: 1024, 288>}, {pipeline_mode = #tpu.pipeline_mode<synchronous>, transform_indices = @transform_1, window_bounds = array<i64: 288, 64>}, {pipeline_mode = #tpu.pipeline_mode<synchronous>, transform_indices = @transform_2, window_bounds = array<i64: 1, 64>}, {pipeline_mode = #tpu.pipeline_mode<synchronous>, transform_indices = @transform_3, window_bounds = array<i64: 64, 48>}, {pipeline_mode = #tpu.pipeline_mode<synchronous>, transform_indices = @transform_4, window_bounds = array<i64: 1, 48>}, {transform_indices = @transform_5, window_bounds = array<i64: 1024, 48>}]} {
    %c0 = arith.constant 0 : index
    %c0_0 = arith.constant 0 : index
    %0 = vector.load %arg1[%c0, %c0_0] : memref<1024x288xf32, #tpu.memory_space<vmem>>, vector<1024x288xf32>
    %c0_1 = arith.constant 0 : index
    %c0_2 = arith.constant 0 : index
    %1 = vector.load %arg2[%c0_1, %c0_2] : memref<288x64xf32, #tpu.memory_space<vmem>>, vector<288x64xf32>
    %cst = arith.constant dense<0.000000e+00> : vector<1024x64xf32>
    %2 = tpu.matmul %0, %1, %cst {dimension_numbers = #tpu.dot_dimension_numbers<[1], [0], [0], [1], [0, 0, 1, 1], [], []>} : vector<1024x288xf32>, vector<288x64xf32>, vector<1024x64xf32> -> vector<1024x64xf32>
    %c0_3 = arith.constant 0 : index
    %c0_4 = arith.constant 0 : index
    %3 = vector.load %arg3[%c0_3, %c0_4] : memref<1x64xf32, #tpu.memory_space<vmem>>, vector<1x64xf32>
    %4 = vector.broadcast %3 : vector<1x64xf32> to vector<1024x64xf32>
    %5 = arith.addf %2, %4 : vector<1024x64xf32>
    %cst_5 = arith.constant 0.000000e+00 : f32
    %6 = vector.broadcast %cst_5 : f32 to vector<1024x64xf32>
    %7 = arith.cmpf ogt, %5, %6 : vector<1024x64xf32>
    %cst_6 = arith.constant 0.000000e+00 : f32
    %8 = vector.broadcast %cst_6 : f32 to vector<1024x64xf32>
    %9 = arith.minimumf %5, %8 : vector<1024x64xf32>
    %10 = math.exp %9 : vector<1024x64xf32>
    %cst_7 = arith.constant 1.000000e+00 : f32
    %11 = vector.broadcast %cst_7 : f32 to vector<1024x64xf32>
    %12 = arith.subf %10, %11 : vector<1024x64xf32>
    %13 = arith.select %7, %5, %12 : vector<1024x64xi1>, vector<1024x64xf32>
    %c0_8 = arith.constant 0 : index
    %c0_9 = arith.constant 0 : index
    %14 = vector.load %arg4[%c0_8, %c0_9] : memref<64x48xf32, #tpu.memory_space<vmem>>, vector<64x48xf32>
    %cst_10 = arith.constant dense<0.000000e+00> : vector<1024x48xf32>
    %15 = tpu.matmul %13, %14, %cst_10 {dimension_numbers = #tpu.dot_dimension_numbers<[1], [0], [0], [1], [0, 0, 1, 1], [], []>} : vector<1024x64xf32>, vector<64x48xf32>, vector<1024x48xf32> -> vector<1024x48xf32>
    %c0_11 = arith.constant 0 : index
    %c0_12 = arith.constant 0 : index
    %16 = vector.load %arg5[%c0_11, %c0_12] : memref<1x48xf32, #tpu.memory_space<vmem>>, vector<1x48xf32>
    %17 = vector.broadcast %16 : vector<1x48xf32> to vector<1024x48xf32>
    %18 = arith.addf %15, %17 : vector<1024x48xf32>
    %cst_13 = arith.constant 0.000000e+00 : f32
    %19 = vector.broadcast %cst_13 : f32 to vector<1024x48xf32>
    %20 = arith.subf %19, %18 : vector<1024x48xf32>
    %21 = math.exp %20 : vector<1024x48xf32>
    %cst_14 = arith.constant 1.000000e+00 : f32
    %22 = vector.broadcast %cst_14 : f32 to vector<1024x48xf32>
    %23 = arith.addf %22, %21 : vector<1024x48xf32>
    %cst_15 = arith.constant 1.000000e+00 : f32
    %24 = vector.broadcast %cst_15 : f32 to vector<1024x48xf32>
    %25 = arith.divf %24, %23 : vector<1024x48xf32>
    %c0_16 = arith.constant 0 : index
    %c0_17 = arith.constant 0 : index
    %26 = vector.load %arg6[%c0_16, %c0_17] : memref<1024x48xf32, #tpu.memory_space<vmem>>, vector<1024x48xf32>
    tpu.vector_store %arg6[%c0_16, %c0_17], %25 {strides = array<i32>} : memref<1024x48xf32, #tpu.memory_space<vmem>>, vector<1024x48xf32>,
    return
  }
  func.func @transform_0(%arg0: i32) -> (i32, i32) {
    %c0_i32 = arith.constant 0 : i32
    %c0_i32_0 = arith.constant 0 : i32
    return %arg0, %c0_i32 : i32, i32
  }
  func.func @transform_1(%arg0: i32) -> (i32, i32) {
    %c0_i32 = arith.constant 0 : i32
    %c0_i32_0 = arith.constant 0 : i32
    %c0_i32_1 = arith.constant 0 : i32
    return %c0_i32, %c0_i32_0 : i32, i32
  }
  func.func @transform_2(%arg0: i32) -> (i32, i32) {
    %c0_i32 = arith.constant 0 : i32
    %c0_i32_0 = arith.constant 0 : i32
    %c0_i32_1 = arith.constant 0 : i32
    return %c0_i32, %c0_i32_0 : i32, i32
  }
  func.func @transform_3(%arg0: i32) -> (i32, i32) {
    %c0_i32 = arith.constant 0 : i32
    %c0_i32_0 = arith.constant 0 : i32
    %c0_i32_1 = arith.constant 0 : i32
    return %c0_i32, %c0_i32_0 : i32, i32
  }
  func.func @transform_4(%arg0: i32) -> (i32, i32) {
    %c0_i32 = arith.constant 0 : i32
    %c0_i32_0 = arith.constant 0 : i32
    %c0_i32_1 = arith.constant 0 : i32
    return %c0_i32, %c0_i32_0 : i32, i32
  }
  func.func @transform_5(%arg0: i32) -> (i32, i32) {
    %c0_i32 = arith.constant 0 : i32
    %c0_i32_0 = arith.constant 0 : i32
    return %arg0, %c0_i32 : i32, i32
  }
}

</mosaic_0001>

<llo_original>
// kernel: image_decoder_forward.3
$region0: #{image_decoder_forward.3}
  #allocation0 [shape = 'u32[]', space=smem, size = 0x4, offset = 0x4, fixed_abs, tag = 'smem constant byte address 0x4 - core index']
  #allocation1 [shape = 'u32[72,128]{1,0:T(1,128)}', space=vmem, size = 0x9000, scoped, tag = 'internal scratch']
  %s0 = inlined_call_operand.vmem [shape: f32[8,32], index: 0, kind: input, shape index: {}]
  %s1 = inlined_call_operand.hbm [shape: f32[32,32], index: 1, kind: input, shape index: {}]
  %s2 = inlined_call_operand.hbm [shape: f32[1,32], index: 2, kind: input, shape index: {}]
  %s3 = inlined_call_operand.hbm [shape: f32[32,4096], index: 3, kind: input, shape index: {}]
  %s4 = inlined_call_operand.hbm [shape: f32[1,4096], index: 4, kind: input, shape index: {}]
  %s5 = inlined_call_operand.vmem [shape: f32[8,4096], index: 5, kind: output, shape index: {}]
  %s6 = sld [smem:[#allocation0]]
  $region69: #{image_decoder_forward.3} parent=0
    _
  %s8 = ssub.s32 1, %s6
  %s9 = scalar_select 0, %s8, %s6
  $region1: #{image_decoder_forward.3} parent=0
    #allocation2 [shape = 'u8[16384]{0}', space=vmem, size = 0x4000, scoped, tag = 'input window, operand 1, single buffered']
    #allocation3 [shape = 's32[2]{0}', space=sflag, size = 0x8, scoped, tag = 'scoped memory for image_decoder_forward.3']
    #allocation4 [shape = 'u8[512]{0}', space=vmem, size = 0x400, scoped, tag = 'input window, operand 2, single buffered']
    #allocation5 [shape = 's32[1]{0}', space=sflag, size = 0x4, scoped, tag = 'scoped memory for image_decoder_forward.3']
    #allocation6 [shape = 'u8[262144]{0}', space=vmem, size = 0x40000, scoped, tag = 'input window, operand 3']
    #allocation7 [shape = 'u8[8192]{0}', space=vmem, size = 0x2000, scoped, tag = 'input window, operand 4']
    %10 = vsyncpa [#allocation3], 0
    %11 = vsyncpa [#allocation5], 0
    loop: start=0, step=1, limit=6
    $region2: #{image_decoder_forward.3} parent=1 // loop_pre_header
      _
    $region3: #{image_decoder_forward.3} parent=1 // loop_header
      %s13 = sphi 0, %s17
      %p14 = scmp.ge.s32.totalorder %s13, 6
      %s21 = sphi 0, %s21
      %s23 = sphi 0, %s21
      %s24 = sphi 0, %s23
      %s38 = sphi 0, %s24
      %s42 = sphi 0, %s42
      %s44 = sphi 0, %s42
      %s45 = sphi 0, %s44
      %s59 = sphi 0, %s45
      %s63 = sphi 0, %s63
      %s65 = sphi 0, %s63
      %s66 = sphi 0, %s65
      %s80 = sphi 0, %s66
      %s86 = sphi 0, %s88
      %s89 = sphi 0, %s86
      %s90 = sphi 0, %s89
      %s106 = sphi 0, %s90
      %s112 = sphi 0, %s114
      %s115 = sphi 0, %s112
      %s116 = sphi 0, %s115
      %s132 = sphi 0, %s116
      %s138 = sphi 0, %s140
      %s141 = sphi 0, %s138
      %s142 = sphi 0, %s141
      %s158 = sphi 0, %s142
    $region4: #{image_decoder_forward.3} parent=1 // loop_header_branch
      %16 = sbr.rel (%p14) target = $region8
    $region5: #{image_decoder_forward.3} parent=1 // loop_body
      %s18 = ssub.s32 %s13, 1
      %s19 = ssub.s32 %s13, 2
      %s20 = sadd.s32 %s13, 1
      %s22 = sadd.s32 %s21, 1
      %p25 = scmp.eq.s32.totalorder %s13, 3
      %p26 = scmp.ne.s32.totalorder %s21, %s23
      %p27 = scmp.eq.s32.totalorder %s13, 0
      %p28 = por %p26, %p27
      %p29 = scmp.ne.s32.totalorder %s21, %s23
      %p30 = scmp.eq.s32.totalorder %s18, 3
      %p31 = por %p29, %p30
      %p32 = scmp.ne.s32.totalorder %s23, %s24
      %p33 = scmp.eq.s32.totalorder %s18, 0
      %p34 = por %p32, %p33
      %p35 = scmp.ne.s32.totalorder %s23, %s24
      %p36 = scmp.eq.s32.totalorder %s19, 3
      %p37 = por %p35, %p36
      %p39 = scmp.ne.s32.totalorder %s24, %s38
      %p40 = scmp.eq.s32.totalorder %s19, 0
      %p41 = por %p39, %p40
      %s43 = sadd.s32 %s42, 1
      %p46 = scmp.eq.s32.totalorder %s13, 3
      %p47 = scmp.ne.s32.totalorder %s42, %s44
      %p48 = scmp.eq.s32.totalorder %s13, 0
      %p49 = por %p47, %p48
      %p50 = scmp.ne.s32.totalorder %s42, %s44
      %p51 = scmp.eq.s32.totalorder %s18, 3
      %p52 = por %p50, %p51
      %p53 = scmp.ne.s32.totalorder %s44, %s45
      %p54 = scmp.eq.s32.totalorder %s18, 0
      %p55 = por %p53, %p54
      %p56 = scmp.ne.s32.totalorder %s44, %s45
      %p57 = scmp.eq.s32.totalorder %s19, 3
      %p58 = por %p56, %p57
      %p60 = scmp.ne.s32.totalorder %s45, %s59
      %p61 = scmp.eq.s32.totalorder %s19, 0
      %p62 = por %p60, %p61
      %s64 = sadd.s32 %s63, 1
      %p67 = scmp.eq.s32.totalorder %s13, 3
      %p68 = scmp.ne.s32.totalorder %s63, %s65
      %p69 = scmp.eq.s32.totalorder %s13, 0
      %p70 = por %p68, %p69
      %p71 = scmp.ne.s32.totalorder %s63, %s65
      %p72 = scmp.eq.s32.totalorder %s18, 3
      %p73 = por %p71, %p72
      %p74 = scmp.ne.s32.totalorder %s65, %s66
      %p75 = scmp.eq.s32.totalorder %s18, 0
      %p76 = por %p74, %p75
      %p77 = scmp.ne.s32.totalorder %s65, %s66
      %p78 = scmp.eq.s32.totalorder %s19, 3
      %p79 = por %p77, %p78
      %p81 = scmp.ne.s32.totalorder %s66, %s80
      %p82 = scmp.eq.s32.totalorder %s19, 0
      %p83 = por %p81, %p82
      %s84 = ssub.s32 %s13, %s20
      %p85 = scmp.eq.s32.totalorder %s84, 0
      %s87 = sadd.s32 %s86, 1
      %s88 = scalar_select %p85, %s86, %s87
      %p91 = pneg %p85
      %p92 = scmp.eq.s32.totalorder %s13, 3
      %p93 = por %p91, %p92
      %p94 = scmp.ne.s32.totalorder %s86, %s89
      %p95 = scmp.eq.s32.totalorder %s13, 0
      %p96 = por %p94, %p95
      %p97 = scmp.ne.s32.totalorder %s86, %s89
      %p98 = scmp.eq.s32.totalorder %s18, 3
      %p99 = por %p97, %p98
      %p100 = scmp.ne.s32.totalorder %s89, %s90
      %p101 = scmp.eq.s32.totalorder %s18, 0
      %p102 = por %p100, %p101
      %p103 = scmp.ne.s32.totalorder %s89, %s90
      %p104 = scmp.eq.s32.totalorder %s19, 3
      %p105 = por %p103, %p104
      %p107 = scmp.ne.s32.totalorder %s90, %s106
      %p108 = scmp.eq.s32.totalorder %s19, 0
      %p109 = por %p107, %p108
      %s110 = ssub.s32 %s13, %s20
      %p111 = scmp.eq.s32.totalorder %s110, 0
      %s113 = sadd.s32 %s112, 1
      %s114 = scalar_select %p111, %s112, %s113
      %p117 = pneg %p111
      %p118 = scmp.eq.s32.totalorder %s13, 3
      %p119 = por %p117, %p118
      %p120 = scmp.ne.s32.totalorder %s112, %s115
      %p121 = scmp.eq.s32.totalorder %s13, 0
      %p122 = por %p120, %p121
      %p123 = scmp.ne.s32.totalorder %s112, %s115
      %p124 = scmp.eq.s32.totalorder %s18, 3
      %p125 = por %p123, %p124
      %p126 = scmp.ne.s32.totalorder %s115, %s116
      %p127 = scmp.eq.s32.totalorder %s18, 0
      %p128 = por %p126, %p127
      %p129 = scmp.ne.s32.totalorder %s115, %s116
      %p130 = scmp.eq.s32.totalorder %s19, 3
      %p131 = por %p129, %p130
      %p133 = scmp.ne.s32.totalorder %s116, %s132
      %p134 = scmp.eq.s32.totalorder %s19, 0
      %p135 = por %p133, %p134
      %s136 = ssub.s32 %s13, %s20
      %p137 = scmp.eq.s32.totalorder %s136, 0
      %s139 = sadd.s32 %s138, 1
      %s140 = scalar_select %p137, %s138, %s139
      %p143 = pneg %p137
      %p144 = scmp.eq.s32.totalorder %s13, 3
      %p145 = por %p143, %p144
      %p146 = scmp.ne.s32.totalorder %s138, %s141
      %p147 = scmp.eq.s32.totalorder %s13, 0
      %p148 = por %p146, %p147
      %p149 = scmp.ne.s32.totalorder %s138, %s141
      %p150 = scmp.eq.s32.totalorder %s18, 3
      %p151 = por %p149, %p150
      %p152 = scmp.ne.s32.totalorder %s141, %s142
      %p153 = scmp.eq.s32.totalorder %s18, 0
      %p154 = por %p152, %p153
      %p155 = scmp.ne.s32.totalorder %s141, %s142
      %p156 = scmp.eq.s32.totalorder %s19, 3
      %p157 = por %p155, %p156
      %p159 = scmp.ne.s32.totalorder %s142, %s158
      %p160 = scmp.eq.s32.totalorder %s19, 0
      %p161 = por %p159, %p160
      %p162 = scmp.le.s32.totalorder 1, %s13
      %p163 = scmp.lt.s32.totalorder %s13, 5
      %p164 = pnand %p162, %p163
      %p165 = pneg %p164
      // Predicated region
      $region9: #{image_decoder_forward.3} parent=5 // pred_check
        _
      $region10: #{image_decoder_forward.3} parent=5 // pred_check_branch
        %167 = sbr.rel (%p164) target = $region12
      $region11: #{image_decoder_forward.3} parent=5 // pred_region
        %s168 = ssub.s32 %s13, 1
        // Predicated region
        $region13: #{image_decoder_forward.3} parent=11 // pred_check
          %p169 = pneg %p34
        $region14: #{image_decoder_forward.3} parent=11 // pred_check_branch
          %171 = sbr.rel (%p169) target = $region16
        $region15: #{image_decoder_forward.3} parent=11 // pred_region
          _
        $region16: #{image_decoder_forward.3} parent=11 // pred_fallthru
          _
        // Predicated region
        $region17: #{image_decoder_forward.3} parent=11 // pred_check
          %p172 = pneg %p55
        $region18: #{image_decoder_forward.3} parent=11 // pred_check_branch
          %174 = sbr.rel (%p172) target = $region20
        $region19: #{image_decoder_forward.3} parent=11 // pred_region
          %176 = vsyncadd [#allocation3], 0
          %s177 = sshll.u32 %s1, 4
          %s178 = int_to_ptr.hbm [resolvable:$true] %s177
          %s179 = sshll.u32 [#allocation2], 4
          %s180 = int_to_ptr.vmem [resolvable:$true] %s179
          %185 = dma.hbm_to_vmem [thread:$0]  %s178, 512, %s180, [#allocation3], 128, 128, 8
        $region20: #{image_decoder_forward.3} parent=11 // pred_fallthru
          _
        // Predicated region
        $region21: #{image_decoder_forward.3} parent=11 // pred_check
          %p186 = pneg %p76
        $region22: #{image_decoder_forward.3} parent=11 // pred_check_branch
          %188 = sbr.rel (%p186) target = $region24
        $region23: #{image_decoder_forward.3} parent=11 // pred_region
          %190 = vsyncadd [#allocation5], 0
          %s192 = sshll.u32 %s2, 4
          %s193 = int_to_ptr.hbm [resolvable:$true] %s192
          %s194 = sshll.u32 [#allocation4], 4
          %s195 = int_to_ptr.vmem [resolvable:$true] %s194
          %197 = dma.hbm_to_vmem [thread:$0]  %s193, 16, %s195, [#allocation5]
        $region24: #{image_decoder_forward.3} parent=11 // pred_fallthru
          _
      $region12: #{image_decoder_forward.3} parent=5 // pred_fallthru
        _
      %p198 = scmp.lt.s32.totalorder %s13, 4
      // Predicated region
      $region25: #{image_decoder_forward.3} parent=5 // pred_check
        %p199 = pneg %p198
      $region26: #{image_decoder_forward.3} parent=5 // pred_check_branch
        %201 = sbr.rel (%p199) target = $region28
      $region27: #{image_decoder_forward.3} parent=5 // pred_region
        // Predicated region
        $region29: #{image_decoder_forward.3} parent=27 // pred_check
          %p202 = pneg %p96
        $region30: #{image_decoder_forward.3} parent=27 // pred_check_branch
          %204 = sbr.rel (%p202) target = $region32
        $region31: #{image_decoder_forward.3} parent=27 // pred_region
          %s205 = sand.u32 %s13, 1
          %s206 = scalar_lea.sflag [#allocation3], %s205
          %s207 = sand.u32 %s86, 1
          %s208 = smul.addr %s207, 256
          %s209 = scalar_lea.vmem [#allocation6], %s208
          %s210 = smul.u32 8, %s13
          %212 = vsyncadd %s206, 0
          %s213 = smul.addr %s210, 8
          %s214 = scalar_lea.hbm %s3, %s213
          %s215 = sshll.u32 %s214, 4
          %s216 = int_to_ptr.hbm [resolvable:$true] %s215
          %s217 = sshll.u32 %s209, 4
          %s218 = int_to_ptr.vmem [resolvable:$true] %s217
          %223 = dma.hbm_to_vmem [thread:$0]  %s216, 4096, %s218, %s206, 4096, 1024, 64
        $region32: #{image_decoder_forward.3} parent=27 // pred_fallthru
          _
        // Predicated region
        $region33: #{image_decoder_forward.3} parent=27 // pred_check
          %p224 = pneg %p122
        $region34: #{image_decoder_forward.3} parent=27 // pred_check_branch
          %226 = sbr.rel (%p224) target = $region36
        $region35: #{image_decoder_forward.3} parent=27 // pred_region
          %s227 = sand.u32 %s13, 1
          %s228 = scalar_lea.sflag [#allocation3], %s227
          %s229 = sand.u32 %s112, 1
          %s230 = smul.addr %s229, 8
          %s231 = scalar_lea.vmem [#allocation7], %s230
          %s232 = smul.u32 8, %s13
          %234 = vsyncadd %s228, 0
          %s235 = scalar_lea.hbm %s4, %s232
          %s237 = sshll.u32 %s235, 4
          %s238 = int_to_ptr.hbm [resolvable:$true] %s237
          %s239 = sshll.u32 %s231, 4
          %s240 = int_to_ptr.vmem [resolvable:$true] %s239
          %242 = dma.hbm_to_vmem [thread:$0]  %s238, 128, %s240, %s228
        $region36: #{image_decoder_forward.3} parent=27 // pred_fallthru
          _
      $region28: #{image_decoder_forward.3} parent=5 // pred_fallthru
        _
      %p243 = scmp.le.s32.totalorder 1, %s13
      %p244 = scmp.lt.s32.totalorder %s13, 5
      %p245 = pnand %p243, %p244
      %p246 = pneg %p245
      // Predicated region
      $region37: #{image_decoder_forward.3} parent=5 // pred_check
        _
      $region38: #{image_decoder_forward.3} parent=5 // pred_check_branch
        %248 = sbr.rel (%p245) target = $region40
      $region39: #{image_decoder_forward.3} parent=5 // pred_region
        %s249 = ssub.s32 %s13, 1
        // Predicated region
        $region41: #{image_decoder_forward.3} parent=39 // pred_check
          %p250 = pneg %p55
        $region42: #{image_decoder_forward.3} parent=39 // pred_check_branch
          %252 = sbr.rel (%p250) target = $region44
        $region43: #{image_decoder_forward.3} parent=39 // pred_region
          %254 = dma.done [#allocation3], 512
        $region44: #{image_decoder_forward.3} parent=39 // pred_fallthru
          _
        // Predicated region
        $region45: #{image_decoder_forward.3} parent=39 // pred_check
          %p255 = pneg %p76
        $region46: #{image_decoder_forward.3} parent=39 // pred_check_branch
          %257 = sbr.rel (%p255) target = $region48
        $region47: #{image_decoder_forward.3} parent=39 // pred_region
          %259 = dma.done [#allocation5], 16
        $region48: #{image_decoder_forward.3} parent=39 // pred_fallthru
          _
        %s260 = sand.u32 %s18, 1
        %s261 = scalar_lea.sflag [#allocation3], %s260
        %s262 = sand.u32 %s89, 1
        %s263 = smul.addr %s262, 256
        %s264 = scalar_lea.vmem [#allocation6], %s263
        // Predicated region
        $region49: #{image_decoder_forward.3} parent=39 // pred_check
          %p265 = pneg %p102
        $region50: #{image_decoder_forward.3} parent=39 // pred_check_branch
          %267 = sbr.rel (%p265) target = $region52
        $region51: #{image_decoder_forward.3} parent=39 // pred_region
          %269 = dma.done %s261, 4096
        $region52: #{image_decoder_forward.3} parent=39 // pred_fallthru
          _
        %s270 = sand.u32 %s18, 1
        %s271 = scalar_lea.sflag [#allocation3], %s270
        %s272 = sand.u32 %s115, 1
        %s273 = smul.addr %s272, 8
        %s274 = scalar_lea.vmem [#allocation7], %s273
        // Predicated region
        $region53: #{image_decoder_forward.3} parent=39 // pred_check
          %p275 = pneg %p128
        $region54: #{image_decoder_forward.3} parent=39 // pred_check_branch
          %277 = sbr.rel (%p275) target = $region56
        $region55: #{image_decoder_forward.3} parent=39 // pred_region
          %279 = dma.done %s271, 128
        $region56: #{image_decoder_forward.3} parent=39 // pred_fallthru
          _
        %p280 = pneg %p34
        %p281 = pneg %p31
        %p282 = pneg %p55
        %p283 = pneg %p52
        %p284 = pneg %p76
        %p285 = pneg %p73
        %s286 = sand.u32 %s18, 1
        %s287 = scalar_lea.sflag [#allocation3], %s286
        %s288 = sand.u32 %s89, 1
        %s289 = smul.addr %s288, 256
        %s290 = scalar_lea.vmem [#allocation6], %s289
        %p291 = pneg %p102
        %p292 = pneg %p99
        %s293 = sand.u32 %s18, 1
        %s294 = scalar_lea.sflag [#allocation3], %s293
        %s295 = sand.u32 %s115, 1
        %s296 = smul.addr %s295, 8
        %s297 = scalar_lea.vmem [#allocation7], %s296
        %p298 = pneg %p128
        %p299 = pneg %p125
        %p300 = pneg %p154
        %p301 = pneg %p151
        %s302 = smul.u32 8, %s18
        %p303 = scmp.lt.s32.totalorder %s302, 31
        %s304 = scalar_select %p303, %s302, 31
        %s305 = smul.addr %s304, 8
        %s306 = scalar_lea.vmem %s5, %s305
        %s307 = smul.u32 8, %s18
        %s308 = smul.u32 8, %s18
        %s309 = smul.u32 8, %s18
        %p310 = scmp.lt.s32.totalorder %s309, 31
        %s311 = scalar_select %p310, %s309, 31
        %s312 = smul.addr %s311, 8
        %s313 = scalar_lea.vmem %s5, %s312
        %s314 = smul.u32 8, %s18
        %v315 = vld [vmem:[%s0] sm:$0xff]
        %v316 = vld [vmem:[#allocation2] sm:$0xff]
        %v317 = vld [vmem:[#allocation2 + $0x8] sm:$0xff]
        %v318 = vld [vmem:[#allocation2 + $0x10] sm:$0xff]
        %v319 = vld [vmem:[#allocation2 + $0x18] sm:$0xff]
        %v320 = vld [vmem:[#allocation4] sm:$0x1]
        %v322 = vperm.slane %v320, 0
        %vm324 = vcmask 261120
        %v326 = vsel %vm324, %v315, 0
        %328 = vmatpush.msra.mxu0 0.0
        %329 = vmatpush.msra.mxu0 0.0
        %330 = vmatpush.msra.mxu0 0.0
        %331 = vmatpush.msra.mxu0 0.0
        %332 = vmatpush.msra.mxu0 0.0
        %333 = vmatpush.msra.mxu0 0.0
        %334 = vmatpush.msra.mxu0 0.0
        %335 = vmatpush.msra.mxu0 0.0
        %336 = vmatpush.msra.mxu0 0.0
        %337 = vmatpush.msra.mxu0 0.0
        %338 = vmatpush.msra.mxu0 0.0
        %339 = vmatpush.msra.mxu0 0.0
        %340 = vmatpush.msra.mxu0 %v319
        %341 = vmatpush.msra.mxu0 %v318
        %342 = vmatpush.msra.mxu0 %v317
        %343 = vmatpush.msra.mxu0 %v316
        %344 = vmatmul.f32.gmra.mxu0 %v326
        %v345 = vpop.f32.mrf.mxu0
        %v346 = vadd.f32 %v322, %v345
        %347 = vdwg.mxu0
        %vm348 = vcmp.gt.f32.partialorder %v346, 0.0
        %v349 = vmin.f32 %v346, 0.0
        %v350 = vmul.f32 %v349, 1.442695
        %v351 = vpow.pop %v350
        %v352 = vsub.f32 %v351, 1.0
        %v353 = vsel %vm348, %v346, %v352
        %v354 = vld [vmem:[%s264] sm:$0xff]
        %v355 = vld [vmem:[%s264 + $0x8] sm:$0xff]
        %v356 = vld [vmem:[%s264 + $0x10] sm:$0xff]
        %v357 = vld [vmem:[%s264 + $0x18] sm:$0xff]
        %v358 = vld [vmem:[%s264 + $0x20] sm:$0xff]
        %v359 = vld [vmem:[%s264 + $0x28] sm:$0xff]
        %v360 = vld [vmem:[%s264 + $0x30] sm:$0xff]
        %v361 = vld [vmem:[%s264 + $0x38] sm:$0xff]
        %v362 = vld [vmem:[%s264 + $0x40] sm:$0xff]
        %v363 = vld [vmem:[%s264 + $0x48] sm:$0xff]
        %v364 = vld [vmem:[%s264 + $0x50] sm:$0xff]
        %v365 = vld [vmem:[%s264 + $0x58] sm:$0xff]
        %v366 = vld [vmem:[%s264 + $0x60] sm:$0xff]
        %v367 = vld [vmem:[%s264 + $0x68] sm:$0xff]
        %v368 = vld [vmem:[%s264 + $0x70] sm:$0xff]
        %v369 = vld [vmem:[%s264 + $0x78] sm:$0xff]
        %v370 = vld [vmem:[%s264 + $0x80] sm:$0xff]
        %v371 = vld [vmem:[%s264 + $0x88] sm:$0xff]
        %v372 = vld [vmem:[%s264 + $0x90] sm:$0xff]
        %v373 = vld [vmem:[%s264 + $0x98] sm:$0xff]
        %v374 = vld [vmem:[%s264 + $0xa0] sm:$0xff]
        %v375 = vld [vmem:[%s264 + $0xa8] sm:$0xff]
        %v376 = vld [vmem:[%s264 + $0xb0] sm:$0xff]
        %v377 = vld [vmem:[%s264 + $0xb8] sm:$0xff]
        %v378 = vld [vmem:[%s264 + $0xc0] sm:$0xff]
        %v379 = vld [vmem:[%s264 + $0xc8] sm:$0xff]
        %v380 = vld [vmem:[%s264 + $0xd0] sm:$0xff]
        %v381 = vld [vmem:[%s264 + $0xd8] sm:$0xff]
        %v382 = vld [vmem:[%s264 + $0xe0] sm:$0xff]
        %v383 = vld [vmem:[%s264 + $0xe8] sm:$0xff]
        %v384 = vld [vmem:[%s264 + $0xf0] sm:$0xff]
        %v385 = vld [vmem:[%s264 + $0xf8] sm:$0xff]
        %v386 = vld [vmem:[%s274] sm:$0xff]
        %v388 = vperm.slane %v386, 0
        %v389 = vperm.slane %v386, 1
        %v390 = vperm.slane %v386, 2
        %v391 = vperm.slane %v386, 3
        %v392 = vperm.slane %v386, 4
        %v393 = vperm.slane %v386, 5
        %v394 = vperm.slane %v386, 6
        %v395 = vperm.slane %v386, 7
        %v405 = vsel %vm324, %v353, 0
        %407 = vmatpush.msra.mxu0 0.0
        %408 = vmatpush.msra.mxu0 0.0
        %409 = vmatpush.msra.mxu0 0.0
        %410 = vmatpush.msra.mxu0 0.0
        %411 = vmatpush.msra.mxu0 0.0
        %412 = vmatpush.msra.mxu0 0.0
        %413 = vmatpush.msra.mxu0 0.0
        %414 = vmatpush.msra.mxu0 0.0
        %415 = vmatpush.msra.mxu0 0.0
        %416 = vmatpush.msra.mxu0 0.0
        %417 = vmatpush.msra.mxu0 0.0
        %418 = vmatpush.msra.mxu0 0.0
        %419 = vmatpush.msra.mxu0 %v378
        %420 = vmatpush.msra.mxu0 %v370
        %421 = vmatpush.msra.mxu0 %v362
        %422 = vmatpush.msra.mxu0 %v354
        %423 = vmatmul.f32.gmra.mxu0 %v405
        %v424 = vpop.f32.mrf.mxu0
        %v425 = vadd.f32 %v388, %v424
        %426 = vdwg.mxu0
        %427 = vmatpush.msra.mxu0 0.0
        %428 = vmatpush.msra.mxu0 0.0
        %429 = vmatpush.msra.mxu0 0.0
        %430 = vmatpush.msra.mxu0 0.0
        %431 = vmatpush.msra.mxu0 0.0
        %432 = vmatpush.msra.mxu0 0.0
        %433 = vmatpush.msra.mxu0 0.0
        %434 = vmatpush.msra.mxu0 0.0
        %435 = vmatpush.msra.mxu0 0.0
        %436 = vmatpush.msra.mxu0 0.0
        %437 = vmatpush.msra.mxu0 0.0
        %438 = vmatpush.msra.mxu0 0.0
        %439 = vmatpush.msra.mxu0 %v379
        %440 = vmatpush.msra.mxu0 %v371
        %441 = vmatpush.msra.mxu0 %v363
        %442 = vmatpush.msra.mxu0 %v355
        %443 = vmatmul.f32.gmra.mxu0 %v405
        %v444 = vpop.f32.mrf.mxu0
        %v445 = vadd.f32 %v389, %v444
        %446 = vdwg.mxu0
        %447 = vmatpush.msra.mxu0 0.0
        %448 = vmatpush.msra.mxu0 0.0
        %449 = vmatpush.msra.mxu0 0.0
        %450 = vmatpush.msra.mxu0 0.0
        %451 = vmatpush.msra.mxu0 0.0
        %452 = vmatpush.msra.mxu0 0.0
        %453 = vmatpush.msra.mxu0 0.0
        %454 = vmatpush.msra.mxu0 0.0
        %455 = vmatpush.msra.mxu0 0.0
        %456 = vmatpush.msra.mxu0 0.0
        %457 = vmatpush.msra.mxu0 0.0
        %458 = vmatpush.msra.mxu0 0.0
        %459 = vmatpush.msra.mxu0 %v380
        %460 = vmatpush.msra.mxu0 %v372
        %461 = vmatpush.msra.mxu0 %v364
        %462 = vmatpush.msra.mxu0 %v356
        %463 = vmatmul.f32.gmra.mxu0 %v405
        %v464 = vpop.f32.mrf.mxu0
        %v465 = vadd.f32 %v390, %v464
        %466 = vdwg.mxu0
        %467 = vmatpush.msra.mxu0 0.0
        %468 = vmatpush.msra.mxu0 0.0
        %469 = vmatpush.msra.mxu0 0.0
        %470 = vmatpush.msra.mxu0 0.0
        %471 = vmatpush.msra.mxu0 0.0
        %472 = vmatpush.msra.mxu0 0.0
        %473 = vmatpush.msra.mxu0 0.0
        %474 = vmatpush.msra.mxu0 0.0
        %475 = vmatpush.msra.mxu0 0.0
        %476 = vmatpush.msra.mxu0 0.0
        %477 = vmatpush.msra.mxu0 0.0
        %478 = vmatpush.msra.mxu0 0.0
        %479 = vmatpush.msra.mxu0 %v381
        %480 = vmatpush.msra.mxu0 %v373
        %481 = vmatpush.msra.mxu0 %v365
        %482 = vmatpush.msra.mxu0 %v357
        %483 = vmatmul.f32.gmra.mxu0 %v405
        %v484 = vpop.f32.mrf.mxu0
        %v485 = vadd.f32 %v391, %v484
        %486 = vdwg.mxu0
        %487 = vmatpush.msra.mxu0 0.0
        %488 = vmatpush.msra.mxu0 0.0
        %489 = vmatpush.msra.mxu0 0.0
        %490 = vmatpush.msra.mxu0 0.0
        %491 = vmatpush.msra.mxu0 0.0
        %492 = vmatpush.msra.mxu0 0.0
        %493 = vmatpush.msra.mxu0 0.0
        %494 = vmatpush.msra.mxu0 0.0
        %495 = vmatpush.msra.mxu0 0.0
        %496 = vmatpush.msra.mxu0 0.0
        %497 = vmatpush.msra.mxu0 0.0
        %498 = vmatpush.msra.mxu0 0.0
        %499 = vmatpush.msra.mxu0 %v382
        %500 = vmatpush.msra.mxu0 %v374
        %501 = vmatpush.msra.mxu0 %v366
        %502 = vmatpush.msra.mxu0 %v358
        %503 = vmatmul.f32.gmra.mxu0 %v405
        %v504 = vpop.f32.mrf.mxu0
        %v505 = vadd.f32 %v392, %v504
        %506 = vdwg.mxu0
        %507 = vmatpush.msra.mxu0 0.0
        %508 = vmatpush.msra.mxu0 0.0
        %509 = vmatpush.msra.mxu0 0.0
        %510 = vmatpush.msra.mxu0 0.0
        %511 = vmatpush.msra.mxu0 0.0
        %512 = vmatpush.msra.mxu0 0.0
        %513 = vmatpush.msra.mxu0 0.0
        %514 = vmatpush.msra.mxu0 0.0
        %515 = vmatpush.msra.mxu0 0.0
        %516 = vmatpush.msra.mxu0 0.0
        %517 = vmatpush.msra.mxu0 0.0
        %518 = vmatpush.msra.mxu0 0.0
        %519 = vmatpush.msra.mxu0 %v383
        %520 = vmatpush.msra.mxu0 %v375
        %521 = vmatpush.msra.mxu0 %v367
        %522 = vmatpush.msra.mxu0 %v359
        %523 = vmatmul.f32.gmra.mxu0 %v405
        %v524 = vpop.f32.mrf.mxu0
        %v525 = vadd.f32 %v393, %v524
        %526 = vdwg.mxu0
        %527 = vmatpush.msra.mxu0 0.0
        %528 = vmatpush.msra.mxu0 0.0
        %529 = vmatpush.msra.mxu0 0.0
        %530 = vmatpush.msra.mxu0 0.0
        %531 = vmatpush.msra.mxu0 0.0
        %532 = vmatpush.msra.mxu0 0.0
        %533 = vmatpush.msra.mxu0 0.0
        %534 = vmatpush.msra.mxu0 0.0
        %535 = vmatpush.msra.mxu0 0.0
        %536 = vmatpush.msra.mxu0 0.0
        %537 = vmatpush.msra.mxu0 0.0
        %538 = vmatpush.msra.mxu0 0.0
        %539 = vmatpush.msra.mxu0 %v384
        %540 = vmatpush.msra.mxu0 %v376
        %541 = vmatpush.msra.mxu0 %v368
        %542 = vmatpush.msra.mxu0 %v360
        %543 = vmatmul.f32.gmra.mxu0 %v405
        %v544 = vpop.f32.mrf.mxu0
        %v545 = vadd.f32 %v394, %v544
        %546 = vdwg.mxu0
        %547 = vmatpush.msra.mxu0 0.0
        %548 = vmatpush.msra.mxu0 0.0
        %549 = vmatpush.msra.mxu0 0.0
        %550 = vmatpush.msra.mxu0 0.0
        %551 = vmatpush.msra.mxu0 0.0
        %552 = vmatpush.msra.mxu0 0.0
        %553 = vmatpush.msra.mxu0 0.0
        %554 = vmatpush.msra.mxu0 0.0
        %555 = vmatpush.msra.mxu0 0.0
        %556 = vmatpush.msra.mxu0 0.0
        %557 = vmatpush.msra.mxu0 0.0
        %558 = vmatpush.msra.mxu0 0.0
        %559 = vmatpush.msra.mxu0 %v385
        %560 = vmatpush.msra.mxu0 %v377
        %561 = vmatpush.msra.mxu0 %v369
        %562 = vmatpush.msra.mxu0 %v361
        %563 = vmatmul.f32.gmra.mxu0 %v405
        %v564 = vpop.f32.mrf.mxu0
        %v565 = vadd.f32 %v395, %v564
        %566 = vdwg.mxu0
        %vm567 = vcmp.gt.f32.partialorder %v425, 0.0
        %vm568 = vcmp.gt.f32.partialorder %v445, 0.0
        %vm569 = vcmp.gt.f32.partialorder %v465, 0.0
        %vm570 = vcmp.gt.f32.partialorder %v485, 0.0
        %vm571 = vcmp.gt.f32.partialorder %v505, 0.0
        %vm572 = vcmp.gt.f32.partialorder %v525, 0.0
        %vm573 = vcmp.gt.f32.partialorder %v545, 0.0
        %vm574 = vcmp.gt.f32.partialorder %v565, 0.0
        %v575 = vmin.f32 %v425, 0.0
        %v576 = vmin.f32 %v445, 0.0
        %v577 = vmin.f32 %v465, 0.0
        %v578 = vmin.f32 %v485, 0.0
        %v579 = vmin.f32 %v505, 0.0
        %v580 = vmin.f32 %v525, 0.0
        %v581 = vmin.f32 %v545, 0.0
        %v582 = vmin.f32 %v565, 0.0
        %v583 = vmul.f32 %v575, 1.442695
        %v584 = vpow.pop %v583
        %v585 = vmul.f32 %v576, 1.442695
        %v586 = vpow.pop %v585
        %v587 = vmul.f32 %v577, 1.442695
        %v588 = vpow.pop %v587
        %v589 = vmul.f32 %v578, 1.442695
        %v590 = vpow.pop %v589
        %v591 = vmul.f32 %v579, 1.442695
        %v592 = vpow.pop %v591
        %v593 = vmul.f32 %v580, 1.442695
        %v594 = vpow.pop %v593
        %v595 = vmul.f32 %v581, 1.442695
        %v596 = vpow.pop %v595
        %v597 = vmul.f32 %v582, 1.442695
        %v598 = vpow.pop %v597
        %v599 = vsub.f32 %v584, 1.0
        %v600 = vsub.f32 %v586, 1.0
        %v601 = vsub.f32 %v588, 1.0
        %v602 = vsub.f32 %v590, 1.0
        %v603 = vsub.f32 %v592, 1.0
        %v604 = vsub.f32 %v594, 1.0
        %v605 = vsub.f32 %v596, 1.0
        %v606 = vsub.f32 %v598, 1.0
        %v607 = vsel %vm567, %v425, %v599
        %v608 = vsel %vm568, %v445, %v600
        %v609 = vsel %vm569, %v465, %v601
        %v610 = vsel %vm570, %v485, %v602
        %v611 = vsel %vm571, %v505, %v603
        %v612 = vsel %vm572, %v525, %v604
        %v613 = vsel %vm573, %v545, %v605
        %v614 = vsel %vm574, %v565, %v606
        %615 = vst [vmem:[%s313] sm:$0xff] %v607
        %616 = vst [vmem:[%s313 + $0x8] sm:$0xff] %v608
        %617 = vst [vmem:[%s313 + $0x10] sm:$0xff] %v609
        %618 = vst [vmem:[%s313 + $0x18] sm:$0xff] %v610
        %619 = vst [vmem:[%s313 + $0x20] sm:$0xff] %v611
        %620 = vst [vmem:[%s313 + $0x28] sm:$0xff] %v612
        %621 = vst [vmem:[%s313 + $0x30] sm:$0xff] %v613
        %622 = vst [vmem:[%s313 + $0x38] sm:$0xff] %v614
        %s623 = smul.u32 8, %s18
        %p624 = scmp.lt.s32.totalorder %s623, 31
        %s625 = scalar_select %p624, %s623, 31
        %s626 = smul.addr %s625, 8
        %s627 = scalar_lea.vmem %s5, %s626
        // Predicated region
        $region57: #{image_decoder_forward.3} parent=39 // pred_check
          %p628 = pneg %p151
        $region58: #{image_decoder_forward.3} parent=39 // pred_check_branch
          %630 = sbr.rel (%p628) target = $region60
        $region59: #{image_decoder_forward.3} parent=39 // pred_region
          %s631 = smul.u32 8, %s18
        $region60: #{image_decoder_forward.3} parent=39 // pred_fallthru
          _
      $region40: #{image_decoder_forward.3} parent=5 // pred_fallthru
        _
      %p632 = scmp.le.s32.totalorder 2, %s13
      // Predicated region
      $region61: #{image_decoder_forward.3} parent=5 // pred_check
        %p633 = pneg %p632
      $region62: #{image_decoder_forward.3} parent=5 // pred_check_branch
        %635 = sbr.rel (%p633) target = $region64
      $region63: #{image_decoder_forward.3} parent=5 // pred_region
        %s636 = ssub.s32 %s13, 2
        // Predicated region
        $region65: #{image_decoder_forward.3} parent=63 // pred_check
          %p637 = pneg %p157
        $region66: #{image_decoder_forward.3} parent=63 // pred_check_branch
          %639 = sbr.rel (%p637) target = $region68
        $region67: #{image_decoder_forward.3} parent=63 // pred_region
          %s640 = smul.u32 8, %s19
          %p641 = scmp.lt.s32.totalorder %s640, 31
          %s642 = scalar_select %p641, %s640, 31
          %s643 = smul.addr %s642, 8
          %s644 = scalar_lea.vmem %s5, %s643
        $region68: #{image_decoder_forward.3} parent=63 // pred_fallthru
          _
      $region64: #{image_decoder_forward.3} parent=5 // pred_fallthru
        _
    $region6: #{image_decoder_forward.3} parent=1 // loop_footer
      %s17 = sadd.s32 1, %s13
    $region7: #{image_decoder_forward.3} parent=1 // loop_footer_branch
      %12 = sbr.rel target = $region3
    $region8: #{image_decoder_forward.3} parent=1 // loop_exit
      _
    %645 = vsyncpa [#allocation3], 1
    %s646 = scalar_lea.sflag [#allocation3], 1
    %647 = vsyncpa %s646, 1
    %648 = vsyncpa [#allocation5], 1

// kernel: image_decoder_forward.4
$region0: #{image_decoder_forward.4}
  #allocation0 [shape = 'u32[]', space=smem, size = 0x4, offset = 0x4, fixed_abs, tag = 'smem constant byte address 0x4 - core index']
  #allocation1 [shape = 'u32[72,128]{1,0:T(1,128)}', space=vmem, size = 0x9000, scoped, tag = 'internal scratch']
  %s0 = inlined_call_operand.vmem [shape: f32[128,64], index: 0, kind: input, shape index: {}]
  %s1 = inlined_call_operand.hbm [shape: f32[64,512], index: 1, kind: input, shape index: {}]
  %s2 = inlined_call_operand.hbm [shape: f32[1,512], index: 2, kind: input, shape index: {}]
  %s3 = inlined_call_operand.vmem [shape: f32[128,512], index: 3, kind: output, shape index: {}]
  %s4 = sld [smem:[#allocation0]]
  $region53: #{image_decoder_forward.4} parent=0
    _
  %s6 = ssub.s32 1, %s4
  %s7 = scalar_select 0, %s6, %s4
  $region1: #{image_decoder_forward.4} parent=0
    #allocation2 [shape = 'u8[131072]{0}', space=vmem, size = 0x20000, scoped, tag = 'input window, operand 1, single buffered']
    #allocation3 [shape = 's32[2]{0}', space=sflag, size = 0x8, scoped, tag = 'scoped memory for image_decoder_forward.4']
    #allocation4 [shape = 'u8[2048]{0}', space=vmem, size = 0x800, scoped, tag = 'input window, operand 2, single buffered']
    #allocation5 [shape = 's32[1]{0}', space=sflag, size = 0x4, scoped, tag = 'scoped memory for image_decoder_forward.4']
    %8 = vsyncpa [#allocation3], 0
    %9 = vsyncpa [#allocation5], 0
    loop: start=0, step=1, limit=4
    $region2: #{image_decoder_forward.4} parent=1 // loop_pre_header
      _
    $region3: #{image_decoder_forward.4} parent=1 // loop_header
      %s11 = sphi 0, %s15
      %p12 = scmp.ge.s32.totalorder %s11, 4
      %s21 = sphi 0, %s23
      %s24 = sphi 0, %s21
      %s25 = sphi 0, %s24
      %s41 = sphi 0, %s25
      %s45 = sphi 0, %s45
      %s47 = sphi 0, %s45
      %s48 = sphi 0, %s47
      %s62 = sphi 0, %s48
      %s66 = sphi 0, %s66
      %s68 = sphi 0, %s66
      %s69 = sphi 0, %s68
      %s83 = sphi 0, %s69
      %s89 = sphi 0, %s91
      %s92 = sphi 0, %s89
      %s93 = sphi 0, %s92
      %s109 = sphi 0, %s93
    $region4: #{image_decoder_forward.4} parent=1 // loop_header_branch
      %14 = sbr.rel (%p12) target = $region8
    $region5: #{image_decoder_forward.4} parent=1 // loop_body
      %s16 = ssub.s32 %s11, 1
      %s17 = ssub.s32 %s11, 2
      %s18 = sadd.s32 %s11, 1
      %s19 = ssub.s32 %s11, %s18
      %p20 = scmp.eq.s32.totalorder %s19, 0
      %s22 = sadd.s32 %s21, 1
      %s23 = scalar_select %p20, %s21, %s22
      %p26 = pneg %p20
      %p27 = scmp.eq.s32.totalorder %s11, 1
      %p28 = por %p26, %p27
      %p29 = scmp.ne.s32.totalorder %s21, %s24
      %p30 = scmp.eq.s32.totalorder %s11, 0
      %p31 = por %p29, %p30
      %p32 = scmp.ne.s32.totalorder %s21, %s24
      %p33 = scmp.eq.s32.totalorder %s16, 1
      %p34 = por %p32, %p33
      %p35 = scmp.ne.s32.totalorder %s24, %s25
      %p36 = scmp.eq.s32.totalorder %s16, 0
      %p37 = por %p35, %p36
      %p38 = scmp.ne.s32.totalorder %s24, %s25
      %p39 = scmp.eq.s32.totalorder %s17, 1
      %p40 = por %p38, %p39
      %p42 = scmp.ne.s32.totalorder %s25, %s41
      %p43 = scmp.eq.s32.totalorder %s17, 0
      %p44 = por %p42, %p43
      %s46 = sadd.s32 %s45, 1
      %p49 = scmp.eq.s32.totalorder %s11, 1
      %p50 = scmp.ne.s32.totalorder %s45, %s47
      %p51 = scmp.eq.s32.totalorder %s11, 0
      %p52 = por %p50, %p51
      %p53 = scmp.ne.s32.totalorder %s45, %s47
      %p54 = scmp.eq.s32.totalorder %s16, 1
      %p55 = por %p53, %p54
      %p56 = scmp.ne.s32.totalorder %s47, %s48
      %p57 = scmp.eq.s32.totalorder %s16, 0
      %p58 = por %p56, %p57
      %p59 = scmp.ne.s32.totalorder %s47, %s48
      %p60 = scmp.eq.s32.totalorder %s17, 1
      %p61 = por %p59, %p60
      %p63 = scmp.ne.s32.totalorder %s48, %s62
      %p64 = scmp.eq.s32.totalorder %s17, 0
      %p65 = por %p63, %p64
      %s67 = sadd.s32 %s66, 1
      %p70 = scmp.eq.s32.totalorder %s11, 1
      %p71 = scmp.ne.s32.totalorder %s66, %s68
      %p72 = scmp.eq.s32.totalorder %s11, 0
      %p73 = por %p71, %p72
      %p74 = scmp.ne.s32.totalorder %s66, %s68
      %p75 = scmp.eq.s32.totalorder %s16, 1
      %p76 = por %p74, %p75
      %p77 = scmp.ne.s32.totalorder %s68, %s69
      %p78 = scmp.eq.s32.totalorder %s16, 0
      %p79 = por %p77, %p78
      %p80 = scmp.ne.s32.totalorder %s68, %s69
      %p81 = scmp.eq.s32.totalorder %s17, 1
      %p82 = por %p80, %p81
      %p84 = scmp.ne.s32.totalorder %s69, %s83
      %p85 = scmp.eq.s32.totalorder %s17, 0
      %p86 = por %p84, %p85
      %s87 = ssub.s32 %s11, %s18
      %p88 = scmp.eq.s32.totalorder %s87, 0
      %s90 = sadd.s32 %s89, 1
      %s91 = scalar_select %p88, %s89, %s90
      %p94 = pneg %p88
      %p95 = scmp.eq.s32.totalorder %s11, 1
      %p96 = por %p94, %p95
      %p97 = scmp.ne.s32.totalorder %s89, %s92
      %p98 = scmp.eq.s32.totalorder %s11, 0
      %p99 = por %p97, %p98
      %p100 = scmp.ne.s32.totalorder %s89, %s92
      %p101 = scmp.eq.s32.totalorder %s16, 1
      %p102 = por %p100, %p101
      %p103 = scmp.ne.s32.totalorder %s92, %s93
      %p104 = scmp.eq.s32.totalorder %s16, 0
      %p105 = por %p103, %p104
      %p106 = scmp.ne.s32.totalorder %s92, %s93
      %p107 = scmp.eq.s32.totalorder %s17, 1
      %p108 = por %p106, %p107
      %p110 = scmp.ne.s32.totalorder %s93, %s109
      %p111 = scmp.eq.s32.totalorder %s17, 0
      %p112 = por %p110, %p111
      %p113 = scmp.le.s32.totalorder 1, %s11
      %p114 = scmp.lt.s32.totalorder %s11, 3
      %p115 = pnand %p113, %p114
      %p116 = pneg %p115
      // Predicated region
      $region9: #{image_decoder_forward.4} parent=5 // pred_check
        _
      $region10: #{image_decoder_forward.4} parent=5 // pred_check_branch
        %118 = sbr.rel (%p115) target = $region12
      $region11: #{image_decoder_forward.4} parent=5 // pred_region
        %s119 = ssub.s32 %s11, 1
        // Predicated region
        $region13: #{image_decoder_forward.4} parent=11 // pred_check
          %p120 = pneg %p58
        $region14: #{image_decoder_forward.4} parent=11 // pred_check_branch
          %122 = sbr.rel (%p120) target = $region16
        $region15: #{image_decoder_forward.4} parent=11 // pred_region
          %124 = vsyncadd [#allocation3], 0
          %s125 = sshll.u32 %s1, 4
          %s126 = int_to_ptr.hbm [resolvable:$true] %s125
          %s127 = sshll.u32 [#allocation2], 4
          %s128 = int_to_ptr.vmem [resolvable:$true] %s127
          %133 = dma.hbm_to_vmem [thread:$0]  %s126, 4096, %s128, [#allocation3], 512, 512, 32
        $region16: #{image_decoder_forward.4} parent=11 // pred_fallthru
          _
        // Predicated region
        $region17: #{image_decoder_forward.4} parent=11 // pred_check
          %p134 = pneg %p79
        $region18: #{image_decoder_forward.4} parent=11 // pred_check_branch
          %136 = sbr.rel (%p134) target = $region20
        $region19: #{image_decoder_forward.4} parent=11 // pred_region
          %138 = vsyncadd [#allocation5], 0
          %s140 = sshll.u32 %s2, 4
          %s141 = int_to_ptr.hbm [resolvable:$true] %s140
          %s142 = sshll.u32 [#allocation4], 4
          %s143 = int_to_ptr.vmem [resolvable:$true] %s142
          %145 = dma.hbm_to_vmem [thread:$0]  %s141, 64, %s143, [#allocation5]
        $region20: #{image_decoder_forward.4} parent=11 // pred_fallthru
          _
      $region12: #{image_decoder_forward.4} parent=5 // pred_fallthru
        _
      %p146 = scmp.lt.s32.totalorder %s11, 2
      // Predicated region
      $region21: #{image_decoder_forward.4} parent=5 // pred_check
        %p147 = pneg %p146
      $region22: #{image_decoder_forward.4} parent=5 // pred_check_branch
        %149 = sbr.rel (%p147) target = $region24
      $region23: #{image_decoder_forward.4} parent=5 // pred_region
        // Predicated region
        $region25: #{image_decoder_forward.4} parent=23 // pred_check
          %p150 = pneg %p31
        $region26: #{image_decoder_forward.4} parent=23 // pred_check_branch
          %152 = sbr.rel (%p150) target = $region28
        $region27: #{image_decoder_forward.4} parent=23 // pred_region
          %s153 = smul.u32 8, %s11
          %p154 = scmp.lt.s32.totalorder %s153, 15
          %s155 = scalar_select %p154, %s153, 15
          %s156 = smul.addr %s155, 8
          %s157 = scalar_lea.vmem %s0, %s156
          %s158 = smul.u32 8, %s11
        $region28: #{image_decoder_forward.4} parent=23 // pred_fallthru
          _
      $region24: #{image_decoder_forward.4} parent=5 // pred_fallthru
        _
      %p159 = scmp.le.s32.totalorder 1, %s11
      %p160 = scmp.lt.s32.totalorder %s11, 3
      %p161 = pnand %p159, %p160
      %p162 = pneg %p161
      // Predicated region
      $region29: #{image_decoder_forward.4} parent=5 // pred_check
        _
      $region30: #{image_decoder_forward.4} parent=5 // pred_check_branch
        %164 = sbr.rel (%p161) target = $region32
      $region31: #{image_decoder_forward.4} parent=5 // pred_region
        %s165 = ssub.s32 %s11, 1
        // Predicated region
        $region33: #{image_decoder_forward.4} parent=31 // pred_check
          %p166 = pneg %p58
        $region34: #{image_decoder_forward.4} parent=31 // pred_check_branch
          %168 = sbr.rel (%p166) target = $region36
        $region35: #{image_decoder_forward.4} parent=31 // pred_region
          %170 = dma.done [#allocation3], 4096
        $region36: #{image_decoder_forward.4} parent=31 // pred_fallthru
          _
        // Predicated region
        $region37: #{image_decoder_forward.4} parent=31 // pred_check
          %p171 = pneg %p79
        $region38: #{image_decoder_forward.4} parent=31 // pred_check_branch
          %173 = sbr.rel (%p171) target = $region40
        $region39: #{image_decoder_forward.4} parent=31 // pred_region
          %175 = dma.done [#allocation5], 64
        $region40: #{image_decoder_forward.4} parent=31 // pred_fallthru
          _
        %s176 = smul.u32 8, %s16
        %p177 = scmp.lt.s32.totalorder %s176, 15
        %s178 = scalar_select %p177, %s176, 15
        %s179 = smul.addr %s178, 8
        %s180 = scalar_lea.vmem %s0, %s179
        %p181 = pneg %p37
        %p182 = pneg %p34
        %p183 = pneg %p58
        %p184 = pneg %p55
        %p185 = pneg %p79
        %p186 = pneg %p76
        %p187 = pneg %p105
        %p188 = pneg %p102
        %s189 = smul.u32 8, %s16
        %p190 = scmp.lt.s32.totalorder %s189, 15
        %s191 = scalar_select %p190, %s189, 15
        %s192 = smul.addr %s191, 4
        %s193 = smul.addr %s192, 8
        %s194 = scalar_lea.vmem %s3, %s193
        %s195 = smul.u32 8, %s16
        %p196 = scmp.lt.s32.totalorder %s195, 15
        %s197 = scalar_select %p196, %s195, 15
        %s198 = smul.addr %s197, 8
        %s199 = scalar_lea.vmem %s0, %s198
        %s200 = smul.u32 8, %s16
        %s201 = smul.u32 8, %s16
        %p202 = scmp.lt.s32.totalorder %s201, 15
        %s203 = scalar_select %p202, %s201, 15
        %s204 = smul.addr %s203, 4
        %s205 = smul.addr %s204, 8
        %s206 = scalar_lea.vmem %s3, %s205
        %s207 = smul.u32 8, %s16
        %v208 = vld [vmem:[%s199] sm:$0xff]
        %v209 = vld [vmem:[%s199 + $0x8] sm:$0xff]
        %v210 = vld [vmem:[%s199 + $0x10] sm:$0xff]
        %v211 = vld [vmem:[%s199 + $0x18] sm:$0xff]
        %v212 = vld [vmem:[%s199 + $0x20] sm:$0xff]
        %v213 = vld [vmem:[%s199 + $0x28] sm:$0xff]
        %v214 = vld [vmem:[%s199 + $0x30] sm:$0xff]
        %v215 = vld [vmem:[%s199 + $0x38] sm:$0xff]
        %v216 = vld [vmem:[#allocation2] sm:$0xff]
        %v217 = vld [vmem:[#allocation2 + $0x8] sm:$0xff]
        %v218 = vld [vmem:[#allocation2 + $0x10] sm:$0xff]
        %v219 = vld [vmem:[#allocation2 + $0x18] sm:$0xff]
        %v220 = vld [vmem:[#allocation2 + $0x20] sm:$0xff]
        %v221 = vld [vmem:[#allocation2 + $0x28] sm:$0xff]
        %v222 = vld [vmem:[#allocation2 + $0x30] sm:$0xff]
        %v223 = vld [vmem:[#allocation2 + $0x38] sm:$0xff]
        %v224 = vld [vmem:[#allocation2 + $0x40] sm:$0xff]
        %v225 = vld [vmem:[#allocation2 + $0x48] sm:$0xff]
        %v226 = vld [vmem:[#allocation2 + $0x50] sm:$0xff]
        %v227 = vld [vmem:[#allocation2 + $0x58] sm:$0xff]
        %v228 = vld [vmem:[#allocation2 + $0x60] sm:$0xff]
        %v229 = vld [vmem:[#allocation2 + $0x68] sm:$0xff]
        %v230 = vld [vmem:[#allocation2 + $0x70] sm:$0xff]
        %v231 = vld [vmem:[#allocation2 + $0x78] sm:$0xff]
        %v232 = vld [vmem:[#allocation2 + $0x80] sm:$0xff]
        %v233 = vld [vmem:[#allocation2 + $0x88] sm:$0xff]
        %v234 = vld [vmem:[#allocation2 + $0x90] sm:$0xff]
        %v235 = vld [vmem:[#allocation2 + $0x98] sm:$0xff]
        %v236 = vld [vmem:[#allocation2 + $0xa0] sm:$0xff]
        %v237 = vld [vmem:[#allocation2 + $0xa8] sm:$0xff]
        %v238 = vld [vmem:[#allocation2 + $0xb0] sm:$0xff]
        %v239 = vld [vmem:[#allocation2 + $0xb8] sm:$0xff]
        %v240 = vld [vmem:[#allocation2 + $0xc0] sm:$0xff]
        %v241 = vld [vmem:[#allocation2 + $0xc8] sm:$0xff]
        %v242 = vld [vmem:[#allocation2 + $0xd0] sm:$0xff]
        %v243 = vld [vmem:[#allocation2 + $0xd8] sm:$0xff]
        %v244 = vld [vmem:[#allocation2 + $0xe0] sm:$0xff]
        %v245 = vld [vmem:[#allocation2 + $0xe8] sm:$0xff]
        %v246 = vld [vmem:[#allocation2 + $0xf0] sm:$0xff]
        %v247 = vld [vmem:[#allocation2 + $0xf8] sm:$0xff]
        %v248 = vld [vmem:[#allocation4] sm:$0xf]
        %v250 = vperm.slane %v248, 0
        %v251 = vperm.slane %v248, 1
        %v252 = vperm.slane %v248, 2
        %v253 = vperm.slane %v248, 3
        %vm258 = vcmask 523264
        %v260 = vsel %vm258, %v208, 0
        %v263 = vsel %vm258, %v209, 0
        %v266 = vsel %vm258, %v210, 0
        %v269 = vsel %vm258, %v211, 0
        %v272 = vsel %vm258, %v212, 0
        %v275 = vsel %vm258, %v213, 0
        %v278 = vsel %vm258, %v214, 0
        %v281 = vsel %vm258, %v215, 0
        %283 = vmatpush.msra.mxu0 0.0
        %284 = vmatpush.msra.mxu0 0.0
        %285 = vmatpush.msra.mxu0 0.0
        %286 = vmatpush.msra.mxu0 0.0
        %287 = vmatpush.msra.mxu0 0.0
        %288 = vmatpush.msra.mxu0 0.0
        %289 = vmatpush.msra.mxu0 0.0
        %290 = vmatpush.msra.mxu0 0.0
        %291 = vmatpush.msra.mxu0 %v244
        %292 = vmatpush.msra.mxu0 %v240
        %293 = vmatpush.msra.mxu0 %v236
        %294 = vmatpush.msra.mxu0 %v232
        %295 = vmatpush.msra.mxu0 %v228
        %296 = vmatpush.msra.mxu0 %v224
        %297 = vmatpush.msra.mxu0 %v220
        %298 = vmatpush.msra.mxu0 %v216
        %299 = vmatmul.f32.gmra.mxu0 %v260
        %v300 = vpop.f32.mrf.mxu0
        %v301 = vadd.f32 %v250, %v300
        %302 = vmatmul.f32.gmra.mxu0 %v263
        %v303 = vpop.f32.mrf.mxu0
        %v304 = vadd.f32 %v250, %v303
        %305 = vmatmul.f32.gmra.mxu0 %v266
        %v306 = vpop.f32.mrf.mxu0
        %v307 = vadd.f32 %v250, %v306
        %308 = vmatmul.f32.gmra.mxu0 %v269
        %v309 = vpop.f32.mrf.mxu0
        %v310 = vadd.f32 %v250, %v309
        %311 = vmatmul.f32.gmra.mxu0 %v272
        %v312 = vpop.f32.mrf.mxu0
        %v313 = vadd.f32 %v250, %v312
        %314 = vmatmul.f32.gmra.mxu0 %v275
        %v315 = vpop.f32.mrf.mxu0
        %v316 = vadd.f32 %v250, %v315
        %317 = vmatmul.f32.gmra.mxu0 %v278
        %v318 = vpop.f32.mrf.mxu0
        %v319 = vadd.f32 %v250, %v318
        %320 = vmatmul.f32.gmra.mxu0 %v281
        %v321 = vpop.f32.mrf.mxu0
        %v322 = vadd.f32 %v250, %v321
        %323 = vdwg.mxu0
        %324 = vmatpush.msra.mxu0 0.0
        %325 = vmatpush.msra.mxu0 0.0
        %326 = vmatpush.msra.mxu0 0.0
        %327 = vmatpush.msra.mxu0 0.0
        %328 = vmatpush.msra.mxu0 0.0
        %329 = vmatpush.msra.mxu0 0.0
        %330 = vmatpush.msra.mxu0 0.0
        %331 = vmatpush.msra.mxu0 0.0
        %332 = vmatpush.msra.mxu0 %v245
        %333 = vmatpush.msra.mxu0 %v241
        %334 = vmatpush.msra.mxu0 %v237
        %335 = vmatpush.msra.mxu0 %v233
        %336 = vmatpush.msra.mxu0 %v229
        %337 = vmatpush.msra.mxu0 %v225
        %338 = vmatpush.msra.mxu0 %v221
        %339 = vmatpush.msra.mxu0 %v217
        %340 = vmatmul.f32.gmra.mxu0 %v260
        %v341 = vpop.f32.mrf.mxu0
        %v342 = vadd.f32 %v251, %v341
        %343 = vmatmul.f32.gmra.mxu0 %v263
        %v344 = vpop.f32.mrf.mxu0
        %v345 = vadd.f32 %v251, %v344
        %346 = vmatmul.f32.gmra.mxu0 %v266
        %v347 = vpop.f32.mrf.mxu0
        %v348 = vadd.f32 %v251, %v347
        %349 = vmatmul.f32.gmra.mxu0 %v269
        %v350 = vpop.f32.mrf.mxu0
        %v351 = vadd.f32 %v251, %v350
        %352 = vmatmul.f32.gmra.mxu0 %v272
        %v353 = vpop.f32.mrf.mxu0
        %v354 = vadd.f32 %v251, %v353
        %355 = vmatmul.f32.gmra.mxu0 %v275
        %v356 = vpop.f32.mrf.mxu0
        %v357 = vadd.f32 %v251, %v356
        %358 = vmatmul.f32.gmra.mxu0 %v278
        %v359 = vpop.f32.mrf.mxu0
        %v360 = vadd.f32 %v251, %v359
        %361 = vmatmul.f32.gmra.mxu0 %v281
        %v362 = vpop.f32.mrf.mxu0
        %v363 = vadd.f32 %v251, %v362
        %364 = vdwg.mxu0
        %365 = vmatpush.msra.mxu0 0.0
        %366 = vmatpush.msra.mxu0 0.0
        %367 = vmatpush.msra.mxu0 0.0
        %368 = vmatpush.msra.mxu0 0.0
        %369 = vmatpush.msra.mxu0 0.0
        %370 = vmatpush.msra.mxu0 0.0
        %371 = vmatpush.msra.mxu0 0.0
        %372 = vmatpush.msra.mxu0 0.0
        %373 = vmatpush.msra.mxu0 %v246
        %374 = vmatpush.msra.mxu0 %v242
        %375 = vmatpush.msra.mxu0 %v238
        %376 = vmatpush.msra.mxu0 %v234
        %377 = vmatpush.msra.mxu0 %v230
        %378 = vmatpush.msra.mxu0 %v226
        %379 = vmatpush.msra.mxu0 %v222
        %380 = vmatpush.msra.mxu0 %v218
        %381 = vmatmul.f32.gmra.mxu0 %v260
        %v382 = vpop.f32.mrf.mxu0
        %v383 = vadd.f32 %v252, %v382
        %384 = vmatmul.f32.gmra.mxu0 %v263
        %v385 = vpop.f32.mrf.mxu0
        %v386 = vadd.f32 %v252, %v385
        %387 = vmatmul.f32.gmra.mxu0 %v266
        %v388 = vpop.f32.mrf.mxu0
        %v389 = vadd.f32 %v252, %v388
        %390 = vmatmul.f32.gmra.mxu0 %v269
        %v391 = vpop.f32.mrf.mxu0
        %v392 = vadd.f32 %v252, %v391
        %393 = vmatmul.f32.gmra.mxu0 %v272
        %v394 = vpop.f32.mrf.mxu0
        %v395 = vadd.f32 %v252, %v394
        %396 = vmatmul.f32.gmra.mxu0 %v275
        %v397 = vpop.f32.mrf.mxu0
        %v398 = vadd.f32 %v252, %v397
        %399 = vmatmul.f32.gmra.mxu0 %v278
        %v400 = vpop.f32.mrf.mxu0
        %v401 = vadd.f32 %v252, %v400
        %402 = vmatmul.f32.gmra.mxu0 %v281
        %v403 = vpop.f32.mrf.mxu0
        %v404 = vadd.f32 %v252, %v403
        %405 = vdwg.mxu0
        %406 = vmatpush.msra.mxu0 0.0
        %407 = vmatpush.msra.mxu0 0.0
        %408 = vmatpush.msra.mxu0 0.0
        %409 = vmatpush.msra.mxu0 0.0
        %410 = vmatpush.msra.mxu0 0.0
        %411 = vmatpush.msra.mxu0 0.0
        %412 = vmatpush.msra.mxu0 0.0
        %413 = vmatpush.msra.mxu0 0.0
        %414 = vmatpush.msra.mxu0 %v247
        %415 = vmatpush.msra.mxu0 %v243
        %416 = vmatpush.msra.mxu0 %v239
        %417 = vmatpush.msra.mxu0 %v235
        %418 = vmatpush.msra.mxu0 %v231
        %419 = vmatpush.msra.mxu0 %v227
        %420 = vmatpush.msra.mxu0 %v223
        %421 = vmatpush.msra.mxu0 %v219
        %422 = vmatmul.f32.gmra.mxu0 %v260
        %v423 = vpop.f32.mrf.mxu0
        %v424 = vadd.f32 %v253, %v423
        %425 = vmatmul.f32.gmra.mxu0 %v263
        %v426 = vpop.f32.mrf.mxu0
        %v427 = vadd.f32 %v253, %v426
        %428 = vmatmul.f32.gmra.mxu0 %v266
        %v429 = vpop.f32.mrf.mxu0
        %v430 = vadd.f32 %v253, %v429
        %431 = vmatmul.f32.gmra.mxu0 %v269
        %v432 = vpop.f32.mrf.mxu0
        %v433 = vadd.f32 %v253, %v432
        %434 = vmatmul.f32.gmra.mxu0 %v272
        %v435 = vpop.f32.mrf.mxu0
        %v436 = vadd.f32 %v253, %v435
        %437 = vmatmul.f32.gmra.mxu0 %v275
        %v438 = vpop.f32.mrf.mxu0
        %v439 = vadd.f32 %v253, %v438
        %440 = vmatmul.f32.gmra.mxu0 %v278
        %v441 = vpop.f32.mrf.mxu0
        %v442 = vadd.f32 %v253, %v441
        %443 = vmatmul.f32.gmra.mxu0 %v281
        %v444 = vpop.f32.mrf.mxu0
        %v445 = vadd.f32 %v253, %v444
        %446 = vdwg.mxu0
        %vm447 = vcmp.gt.f32.partialorder %v301, 0.0
        %vm448 = vcmp.gt.f32.partialorder %v342, 0.0
        %vm449 = vcmp.gt.f32.partialorder %v383, 0.0
        %vm450 = vcmp.gt.f32.partialorder %v424, 0.0
        %vm451 = vcmp.gt.f32.partialorder %v304, 0.0
        %vm452 = vcmp.gt.f32.partialorder %v345, 0.0
        %vm453 = vcmp.gt.f32.partialorder %v386, 0.0
        %vm454 = vcmp.gt.f32.partialorder %v427, 0.0
        %vm455 = vcmp.gt.f32.partialorder %v307, 0.0
        %vm456 = vcmp.gt.f32.partialorder %v348, 0.0
        %vm457 = vcmp.gt.f32.partialorder %v389, 0.0
        %vm458 = vcmp.gt.f32.partialorder %v430, 0.0
        %vm459 = vcmp.gt.f32.partialorder %v310, 0.0
        %vm460 = vcmp.gt.f32.partialorder %v351, 0.0
        %vm461 = vcmp.gt.f32.partialorder %v392, 0.0
        %vm462 = vcmp.gt.f32.partialorder %v433, 0.0
        %vm463 = vcmp.gt.f32.partialorder %v313, 0.0
        %vm464 = vcmp.gt.f32.partialorder %v354, 0.0
        %vm465 = vcmp.gt.f32.partialorder %v395, 0.0
        %vm466 = vcmp.gt.f32.partialorder %v436, 0.0
        %vm467 = vcmp.gt.f32.partialorder %v316, 0.0
        %vm468 = vcmp.gt.f32.partialorder %v357, 0.0
        %vm469 = vcmp.gt.f32.partialorder %v398, 0.0
        %vm470 = vcmp.gt.f32.partialorder %v439, 0.0
        %vm471 = vcmp.gt.f32.partialorder %v319, 0.0
        %vm472 = vcmp.gt.f32.partialorder %v360, 0.0
        %vm473 = vcmp.gt.f32.partialorder %v401, 0.0
        %vm474 = vcmp.gt.f32.partialorder %v442, 0.0
        %vm475 = vcmp.gt.f32.partialorder %v322, 0.0
        %vm476 = vcmp.gt.f32.partialorder %v363, 0.0
        %vm477 = vcmp.gt.f32.partialorder %v404, 0.0
        %vm478 = vcmp.gt.f32.partialorder %v445, 0.0
        %v479 = vmin.f32 %v301, 0.0
        %v480 = vmin.f32 %v342, 0.0
        %v481 = vmin.f32 %v383, 0.0
        %v482 = vmin.f32 %v424, 0.0
        %v483 = vmin.f32 %v304, 0.0
        %v484 = vmin.f32 %v345, 0.0
        %v485 = vmin.f32 %v386, 0.0
        %v486 = vmin.f32 %v427, 0.0
        %v487 = vmin.f32 %v307, 0.0
        %v488 = vmin.f32 %v348, 0.0
        %v489 = vmin.f32 %v389, 0.0
        %v490 = vmin.f32 %v430, 0.0
        %v491 = vmin.f32 %v310, 0.0
        %v492 = vmin.f32 %v351, 0.0
        %v493 = vmin.f32 %v392, 0.0
        %v494 = vmin.f32 %v433, 0.0
        %v495 = vmin.f32 %v313, 0.0
        %v496 = vmin.f32 %v354, 0.0
        %v497 = vmin.f32 %v395, 0.0
        %v498 = vmin.f32 %v436, 0.0
        %v499 = vmin.f32 %v316, 0.0
        %v500 = vmin.f32 %v357, 0.0
        %v501 = vmin.f32 %v398, 0.0
        %v502 = vmin.f32 %v439, 0.0
        %v503 = vmin.f32 %v319, 0.0
        %v504 = vmin.f32 %v360, 0.0
        %v505 = vmin.f32 %v401, 0.0
        %v506 = vmin.f32 %v442, 0.0
        %v507 = vmin.f32 %v322, 0.0
        %v508 = vmin.f32 %v363, 0.0
        %v509 = vmin.f32 %v404, 0.0
        %v510 = vmin.f32 %v445, 0.0
        %v511 = vmul.f32 %v479, 1.442695
        %v512 = vpow.pop %v511
        %v513 = vmul.f32 %v480, 1.442695
        %v514 = vpow.pop %v513
        %v515 = vmul.f32 %v481, 1.442695
        %v516 = vpow.pop %v515
        %v517 = vmul.f32 %v482, 1.442695
        %v518 = vpow.pop %v517
        %v519 = vmul.f32 %v483, 1.442695
        %v520 = vpow.pop %v519
        %v521 = vmul.f32 %v484, 1.442695
        %v522 = vpow.pop %v521
        %v523 = vmul.f32 %v485, 1.442695
        %v524 = vpow.pop %v523
        %v525 = vmul.f32 %v486, 1.442695
        %v526 = vpow.pop %v525
        %v527 = vmul.f32 %v487, 1.442695
        %v528 = vpow.pop %v527
        %v529 = vmul.f32 %v488, 1.442695
        %v530 = vpow.pop %v529
        %v531 = vmul.f32 %v489, 1.442695
        %v532 = vpow.pop %v531
        %v533 = vmul.f32 %v490, 1.442695
        %v534 = vpow.pop %v533
        %v535 = vmul.f32 %v491, 1.442695
        %v536 = vpow.pop %v535
        %v537 = vmul.f32 %v492, 1.442695
        %v538 = vpow.pop %v537
        %v539 = vmul.f32 %v493, 1.442695
        %v540 = vpow.pop %v539
        %v541 = vmul.f32 %v494, 1.442695
        %v542 = vpow.pop %v541
        %v543 = vmul.f32 %v495, 1.442695
        %v544 = vpow.pop %v543
        %v545 = vmul.f32 %v496, 1.442695
        %v546 = vpow.pop %v545
        %v547 = vmul.f32 %v497, 1.442695
        %v548 = vpow.pop %v547
        %v549 = vmul.f32 %v498, 1.442695
        %v550 = vpow.pop %v549
        %v551 = vmul.f32 %v499, 1.442695
        %v552 = vpow.pop %v551
        %v553 = vmul.f32 %v500, 1.442695
        %v554 = vpow.pop %v553
        %v555 = vmul.f32 %v501, 1.442695
        %v556 = vpow.pop %v555
        %v557 = vmul.f32 %v502, 1.442695
        %v558 = vpow.pop %v557
        %v559 = vmul.f32 %v503, 1.442695
        %v560 = vpow.pop %v559
        %v561 = vmul.f32 %v504, 1.442695
        %v562 = vpow.pop %v561
        %v563 = vmul.f32 %v505, 1.442695
        %v564 = vpow.pop %v563
        %v565 = vmul.f32 %v506, 1.442695
        %v566 = vpow.pop %v565
        %v567 = vmul.f32 %v507, 1.442695
        %v568 = vpow.pop %v567
        %v569 = vmul.f32 %v508, 1.442695
        %v570 = vpow.pop %v569
        %v571 = vmul.f32 %v509, 1.442695
        %v572 = vpow.pop %v571
        %v573 = vmul.f32 %v510, 1.442695
        %v574 = vpow.pop %v573
        %v575 = vsub.f32 %v512, 1.0
        %v576 = vsub.f32 %v514, 1.0
        %v577 = vsub.f32 %v516, 1.0
        %v578 = vsub.f32 %v518, 1.0
        %v579 = vsub.f32 %v520, 1.0
        %v580 = vsub.f32 %v522, 1.0
        %v581 = vsub.f32 %v524, 1.0
        %v582 = vsub.f32 %v526, 1.0
        %v583 = vsub.f32 %v528, 1.0
        %v584 = vsub.f32 %v530, 1.0
        %v585 = vsub.f32 %v532, 1.0
        %v586 = vsub.f32 %v534, 1.0
        %v587 = vsub.f32 %v536, 1.0
        %v588 = vsub.f32 %v538, 1.0
        %v589 = vsub.f32 %v540, 1.0
        %v590 = vsub.f32 %v542, 1.0
        %v591 = vsub.f32 %v544, 1.0
        %v592 = vsub.f32 %v546, 1.0
        %v593 = vsub.f32 %v548, 1.0
        %v594 = vsub.f32 %v550, 1.0
        %v595 = vsub.f32 %v552, 1.0
        %v596 = vsub.f32 %v554, 1.0
        %v597 = vsub.f32 %v556, 1.0
        %v598 = vsub.f32 %v558, 1.0
        %v599 = vsub.f32 %v560, 1.0
        %v600 = vsub.f32 %v562, 1.0
        %v601 = vsub.f32 %v564, 1.0
        %v602 = vsub.f32 %v566, 1.0
        %v603 = vsub.f32 %v568, 1.0
        %v604 = vsub.f32 %v570, 1.0
        %v605 = vsub.f32 %v572, 1.0
        %v606 = vsub.f32 %v574, 1.0
        %v607 = vsel %vm447, %v301, %v575
        %v608 = vsel %vm448, %v342, %v576
        %v609 = vsel %vm449, %v383, %v577
        %v610 = vsel %vm450, %v424, %v578
        %v611 = vsel %vm451, %v304, %v579
        %v612 = vsel %vm452, %v345, %v580
        %v613 = vsel %vm453, %v386, %v581
        %v614 = vsel %vm454, %v427, %v582
        %v615 = vsel %vm455, %v307, %v583
        %v616 = vsel %vm456, %v348, %v584
        %v617 = vsel %vm457, %v389, %v585
        %v618 = vsel %vm458, %v430, %v586
        %v619 = vsel %vm459, %v310, %v587
        %v620 = vsel %vm460, %v351, %v588
        %v621 = vsel %vm461, %v392, %v589
        %v622 = vsel %vm462, %v433, %v590
        %v623 = vsel %vm463, %v313, %v591
        %v624 = vsel %vm464, %v354, %v592
        %v625 = vsel %vm465, %v395, %v593
        %v626 = vsel %vm466, %v436, %v594
        %v627 = vsel %vm467, %v316, %v595
        %v628 = vsel %vm468, %v357, %v596
        %v629 = vsel %vm469, %v398, %v597
        %v630 = vsel %vm470, %v439, %v598
        %v631 = vsel %vm471, %v319, %v599
        %v632 = vsel %vm472, %v360, %v600
        %v633 = vsel %vm473, %v401, %v601
        %v634 = vsel %vm474, %v442, %v602
        %v635 = vsel %vm475, %v322, %v603
        %v636 = vsel %vm476, %v363, %v604
        %v637 = vsel %vm477, %v404, %v605
        %v638 = vsel %vm478, %v445, %v606
        %639 = vst [vmem:[%s206] sm:$0xff] %v607
        %640 = vst [vmem:[%s206 + $0x8] sm:$0xff] %v608
        %641 = vst [vmem:[%s206 + $0x10] sm:$0xff] %v609
        %642 = vst [vmem:[%s206 + $0x18] sm:$0xff] %v610
        %643 = vst [vmem:[%s206 + $0x20] sm:$0xff] %v611
        %644 = vst [vmem:[%s206 + $0x28] sm:$0xff] %v612
        %645 = vst [vmem:[%s206 + $0x30] sm:$0xff] %v613
        %646 = vst [vmem:[%s206 + $0x38] sm:$0xff] %v614
        %647 = vst [vmem:[%s206 + $0x40] sm:$0xff] %v615
        %648 = vst [vmem:[%s206 + $0x48] sm:$0xff] %v616
        %649 = vst [vmem:[%s206 + $0x50] sm:$0xff] %v617
        %650 = vst [vmem:[%s206 + $0x58] sm:$0xff] %v618
        %651 = vst [vmem:[%s206 + $0x60] sm:$0xff] %v619
        %652 = vst [vmem:[%s206 + $0x68] sm:$0xff] %v620
        %653 = vst [vmem:[%s206 + $0x70] sm:$0xff] %v621
        %654 = vst [vmem:[%s206 + $0x78] sm:$0xff] %v622
        %655 = vst [vmem:[%s206 + $0x80] sm:$0xff] %v623
        %656 = vst [vmem:[%s206 + $0x88] sm:$0xff] %v624
        %657 = vst [vmem:[%s206 + $0x90] sm:$0xff] %v625
        %658 = vst [vmem:[%s206 + $0x98] sm:$0xff] %v626
        %659 = vst [vmem:[%s206 + $0xa0] sm:$0xff] %v627
        %660 = vst [vmem:[%s206 + $0xa8] sm:$0xff] %v628
        %661 = vst [vmem:[%s206 + $0xb0] sm:$0xff] %v629
        %662 = vst [vmem:[%s206 + $0xb8] sm:$0xff] %v630
        %663 = vst [vmem:[%s206 + $0xc0] sm:$0xff] %v631
        %664 = vst [vmem:[%s206 + $0xc8] sm:$0xff] %v632
        %665 = vst [vmem:[%s206 + $0xd0] sm:$0xff] %v633
        %666 = vst [vmem:[%s206 + $0xd8] sm:$0xff] %v634
        %667 = vst [vmem:[%s206 + $0xe0] sm:$0xff] %v635
        %668 = vst [vmem:[%s206 + $0xe8] sm:$0xff] %v636
        %669 = vst [vmem:[%s206 + $0xf0] sm:$0xff] %v637
        %670 = vst [vmem:[%s206 + $0xf8] sm:$0xff] %v638
        %s671 = smul.u32 8, %s16
        %p672 = scmp.lt.s32.totalorder %s671, 15
        %s673 = scalar_select %p672, %s671, 15
        %s674 = smul.addr %s673, 4
        %s675 = smul.addr %s674, 8
        %s676 = scalar_lea.vmem %s3, %s675
        // Predicated region
        $region41: #{image_decoder_forward.4} parent=31 // pred_check
          %p677 = pneg %p102
        $region42: #{image_decoder_forward.4} parent=31 // pred_check_branch
          %679 = sbr.rel (%p677) target = $region44
        $region43: #{image_decoder_forward.4} parent=31 // pred_region
          %s680 = smul.u32 8, %s16
        $region44: #{image_decoder_forward.4} parent=31 // pred_fallthru
          _
      $region32: #{image_decoder_forward.4} parent=5 // pred_fallthru
        _
      %p681 = scmp.le.s32.totalorder 2, %s11
      // Predicated region
      $region45: #{image_decoder_forward.4} parent=5 // pred_check
        %p682 = pneg %p681
      $region46: #{image_decoder_forward.4} parent=5 // pred_check_branch
        %684 = sbr.rel (%p682) target = $region48
      $region47: #{image_decoder_forward.4} parent=5 // pred_region
        %s685 = ssub.s32 %s11, 2
        // Predicated region
        $region49: #{image_decoder_forward.4} parent=47 // pred_check
          %p686 = pneg %p108
        $region50: #{image_decoder_forward.4} parent=47 // pred_check_branch
          %688 = sbr.rel (%p686) target = $region52
        $region51: #{image_decoder_forward.4} parent=47 // pred_region
          %s689 = smul.u32 8, %s17
          %p690 = scmp.lt.s32.totalorder %s689, 15
          %s691 = scalar_select %p690, %s689, 15
          %s692 = smul.addr %s691, 4
          %s693 = smul.addr %s692, 8
          %s694 = scalar_lea.vmem %s3, %s693
        $region52: #{image_decoder_forward.4} parent=47 // pred_fallthru
          _
      $region48: #{image_decoder_forward.4} parent=5 // pred_fallthru
        _
    $region6: #{image_decoder_forward.4} parent=1 // loop_footer
      %s15 = sadd.s32 1, %s11
    $region7: #{image_decoder_forward.4} parent=1 // loop_footer_branch
      %10 = sbr.rel target = $region3
    $region8: #{image_decoder_forward.4} parent=1 // loop_exit
      _
    %695 = vsyncpa [#allocation3], 1
    %s696 = scalar_lea.sflag [#allocation3], 1
    %697 = vsyncpa %s696, 1
    %698 = vsyncpa [#allocation5], 1

// kernel: image_decoder_forward.5
$region0: #{image_decoder_forward.5}
  #allocation0 [shape = 'u32[]', space=smem, size = 0x4, offset = 0x4, fixed_abs, tag = 'smem constant byte address 0x4 - core index']
  #allocation1 [shape = 'u32[72,128]{1,0:T(1,128)}', space=vmem, size = 0x9000, scoped, tag = 'internal scratch']
  %s0 = inlined_call_operand.vmem [shape: f32[2048,288], index: 0, kind: input, shape index: {}]
  %s1 = inlined_call_operand.vmem [shape: f32[288,64], index: 1, kind: input, shape index: {}]
  %s2 = inlined_call_operand.vmem [shape: f32[1,64], index: 2, kind: input, shape index: {}]
  %s3 = inlined_call_operand.vmem [shape: f32[64,48], index: 3, kind: input, shape index: {}]
  %s4 = inlined_call_operand.vmem [shape: f32[1,48], index: 4, kind: input, shape index: {}]
  %s5 = inlined_call_operand.vmem [shape: f32[2048,48], index: 5, kind: output, shape index: {}]
  %s6 = sld [smem:[#allocation0]]
  $region53: #{image_decoder_forward.5} parent=0
    _
  %s8 = ssub.s32 1, %s6
  %s9 = scalar_select 0, %s8, %s6
  loop: start=0, step=1, limit=4
  $region2: #{image_decoder_forward.5} parent=0 // loop_pre_header
    _
  $region3: #{image_decoder_forward.5} parent=0 // loop_header
    %s11 = sphi 0, %s15
    %p12 = scmp.ge.s32.totalorder %s11, 4
    %s21 = sphi 0, %s23
    %s24 = sphi 0, %s21
    %s25 = sphi 0, %s24
    %s41 = sphi 0, %s25
    %s45 = sphi 0, %s45
    %s47 = sphi 0, %s45
    %s48 = sphi 0, %s47
    %s62 = sphi 0, %s48
    %s66 = sphi 0, %s66
    %s68 = sphi 0, %s66
    %s69 = sphi 0, %s68
    %s83 = sphi 0, %s69
    %s87 = sphi 0, %s87
    %s89 = sphi 0, %s87
    %s90 = sphi 0, %s89
    %s104 = sphi 0, %s90
    %s108 = sphi 0, %s108
    %s110 = sphi 0, %s108
    %s111 = sphi 0, %s110
    %s125 = sphi 0, %s111
    %s131 = sphi 0, %s133
    %s134 = sphi 0, %s131
    %s135 = sphi 0, %s134
    %s151 = sphi 0, %s135
  $region4: #{image_decoder_forward.5} parent=0 // loop_header_branch
    %14 = sbr.rel (%p12) target = $region8
  $region5: #{image_decoder_forward.5} parent=0 // loop_body
    %s16 = ssub.s32 %s11, 1
    %s17 = ssub.s32 %s11, 2
    %s18 = sadd.s32 %s11, 1
    %s19 = ssub.s32 %s11, %s18
    %p20 = scmp.eq.s32.totalorder %s19, 0
    %s22 = sadd.s32 %s21, 1
    %s23 = scalar_select %p20, %s21, %s22
    %p26 = pneg %p20
    %p27 = scmp.eq.s32.totalorder %s11, 1
    %p28 = por %p26, %p27
    %p29 = scmp.ne.s32.totalorder %s21, %s24
    %p30 = scmp.eq.s32.totalorder %s11, 0
    %p31 = por %p29, %p30
    %p32 = scmp.ne.s32.totalorder %s21, %s24
    %p33 = scmp.eq.s32.totalorder %s16, 1
    %p34 = por %p32, %p33
    %p35 = scmp.ne.s32.totalorder %s24, %s25
    %p36 = scmp.eq.s32.totalorder %s16, 0
    %p37 = por %p35, %p36
    %p38 = scmp.ne.s32.totalorder %s24, %s25
    %p39 = scmp.eq.s32.totalorder %s17, 1
    %p40 = por %p38, %p39
    %p42 = scmp.ne.s32.totalorder %s25, %s41
    %p43 = scmp.eq.s32.totalorder %s17, 0
    %p44 = por %p42, %p43
    %s46 = sadd.s32 %s45, 1
    %p49 = scmp.eq.s32.totalorder %s11, 1
    %p50 = scmp.ne.s32.totalorder %s45, %s47
    %p51 = scmp.eq.s32.totalorder %s11, 0
    %p52 = por %p50, %p51
    %p53 = scmp.ne.s32.totalorder %s45, %s47
    %p54 = scmp.eq.s32.totalorder %s16, 1
    %p55 = por %p53, %p54
    %p56 = scmp.ne.s32.totalorder %s47, %s48
    %p57 = scmp.eq.s32.totalorder %s16, 0
    %p58 = por %p56, %p57
    %p59 = scmp.ne.s32.totalorder %s47, %s48
    %p60 = scmp.eq.s32.totalorder %s17, 1
    %p61 = por %p59, %p60
    %p63 = scmp.ne.s32.totalorder %s48, %s62
    %p64 = scmp.eq.s32.totalorder %s17, 0
    %p65 = por %p63, %p64
    %s67 = sadd.s32 %s66, 1
    %p70 = scmp.eq.s32.totalorder %s11, 1
    %p71 = scmp.ne.s32.totalorder %s66, %s68
    %p72 = scmp.eq.s32.totalorder %s11, 0
    %p73 = por %p71, %p72
    %p74 = scmp.ne.s32.totalorder %s66, %s68
    %p75 = scmp.eq.s32.totalorder %s16, 1
    %p76 = por %p74, %p75
    %p77 = scmp.ne.s32.totalorder %s68, %s69
    %p78 = scmp.eq.s32.totalorder %s16, 0
    %p79 = por %p77, %p78
    %p80 = scmp.ne.s32.totalorder %s68, %s69
    %p81 = scmp.eq.s32.totalorder %s17, 1
    %p82 = por %p80, %p81
    %p84 = scmp.ne.s32.totalorder %s69, %s83
    %p85 = scmp.eq.s32.totalorder %s17, 0
    %p86 = por %p84, %p85
    %s88 = sadd.s32 %s87, 1
    %p91 = scmp.eq.s32.totalorder %s11, 1
    %p92 = scmp.ne.s32.totalorder %s87, %s89
    %p93 = scmp.eq.s32.totalorder %s11, 0
    %p94 = por %p92, %p93
    %p95 = scmp.ne.s32.totalorder %s87, %s89
    %p96 = scmp.eq.s32.totalorder %s16, 1
    %p97 = por %p95, %p96
    %p98 = scmp.ne.s32.totalorder %s89, %s90
    %p99 = scmp.eq.s32.totalorder %s16, 0
    %p100 = por %p98, %p99
    %p101 = scmp.ne.s32.totalorder %s89, %s90
    %p102 = scmp.eq.s32.totalorder %s17, 1
    %p103 = por %p101, %p102
    %p105 = scmp.ne.s32.totalorder %s90, %s104
    %p106 = scmp.eq.s32.totalorder %s17, 0
    %p107 = por %p105, %p106
    %s109 = sadd.s32 %s108, 1
    %p112 = scmp.eq.s32.totalorder %s11, 1
    %p113 = scmp.ne.s32.totalorder %s108, %s110
    %p114 = scmp.eq.s32.totalorder %s11, 0
    %p115 = por %p113, %p114
    %p116 = scmp.ne.s32.totalorder %s108, %s110
    %p117 = scmp.eq.s32.totalorder %s16, 1
    %p118 = por %p116, %p117
    %p119 = scmp.ne.s32.totalorder %s110, %s111
    %p120 = scmp.eq.s32.totalorder %s16, 0
    %p121 = por %p119, %p120
    %p122 = scmp.ne.s32.totalorder %s110, %s111
    %p123 = scmp.eq.s32.totalorder %s17, 1
    %p124 = por %p122, %p123
    %p126 = scmp.ne.s32.totalorder %s111, %s125
    %p127 = scmp.eq.s32.totalorder %s17, 0
    %p128 = por %p126, %p127
    %s129 = ssub.s32 %s11, %s18
    %p130 = scmp.eq.s32.totalorder %s129, 0
    %s132 = sadd.s32 %s131, 1
    %s133 = scalar_select %p130, %s131, %s132
    %p136 = pneg %p130
    %p137 = scmp.eq.s32.totalorder %s11, 1
    %p138 = por %p136, %p137
    %p139 = scmp.ne.s32.totalorder %s131, %s134
    %p140 = scmp.eq.s32.totalorder %s11, 0
    %p141 = por %p139, %p140
    %p142 = scmp.ne.s32.totalorder %s131, %s134
    %p143 = scmp.eq.s32.totalorder %s16, 1
    %p144 = por %p142, %p143
    %p145 = scmp.ne.s32.totalorder %s134, %s135
    %p146 = scmp.eq.s32.totalorder %s16, 0
    %p147 = por %p145, %p146
    %p148 = scmp.ne.s32.totalorder %s134, %s135
    %p149 = scmp.eq.s32.totalorder %s17, 1
    %p150 = por %p148, %p149
    %p152 = scmp.ne.s32.totalorder %s135, %s151
    %p153 = scmp.eq.s32.totalorder %s17, 0
    %p154 = por %p152, %p153
    %p155 = scmp.le.s32.totalorder 1, %s11
    %p156 = scmp.lt.s32.totalorder %s11, 3
    %p157 = pnand %p155, %p156
    %p158 = pneg %p157
    // Predicated region
    $region9: #{image_decoder_forward.5} parent=5 // pred_check
      _
    $region10: #{image_decoder_forward.5} parent=5 // pred_check_branch
      %160 = sbr.rel (%p157) target = $region12
    $region11: #{image_decoder_forward.5} parent=5 // pred_region
      %s161 = ssub.s32 %s11, 1
      // Predicated region
      $region13: #{image_decoder_forward.5} parent=11 // pred_check
        %p162 = pneg %p58
      $region14: #{image_decoder_forward.5} parent=11 // pred_check_branch
        %164 = sbr.rel (%p162) target = $region16
      $region15: #{image_decoder_forward.5} parent=11 // pred_region
        _
      $region16: #{image_decoder_forward.5} parent=11 // pred_fallthru
        _
      // Predicated region
      $region17: #{image_decoder_forward.5} parent=11 // pred_check
        %p165 = pneg %p79
      $region18: #{image_decoder_forward.5} parent=11 // pred_check_branch
        %167 = sbr.rel (%p165) target = $region20
      $region19: #{image_decoder_forward.5} parent=11 // pred_region
        _
      $region20: #{image_decoder_forward.5} parent=11 // pred_fallthru
        _
      // Predicated region
      $region21: #{image_decoder_forward.5} parent=11 // pred_check
        %p168 = pneg %p100
      $region22: #{image_decoder_forward.5} parent=11 // pred_check_branch
        %170 = sbr.rel (%p168) target = $region24
      $region23: #{image_decoder_forward.5} parent=11 // pred_region
        _
      $region24: #{image_decoder_forward.5} parent=11 // pred_fallthru
        _
      // Predicated region
      $region25: #{image_decoder_forward.5} parent=11 // pred_check
        %p171 = pneg %p121
      $region26: #{image_decoder_forward.5} parent=11 // pred_check_branch
        %173 = sbr.rel (%p171) target = $region28
      $region27: #{image_decoder_forward.5} parent=11 // pred_region
        _
      $region28: #{image_decoder_forward.5} parent=11 // pred_fallthru
        _
    $region12: #{image_decoder_forward.5} parent=5 // pred_fallthru
      _
    %p174 = scmp.lt.s32.totalorder %s11, 2
    // Predicated region
    $region29: #{image_decoder_forward.5} parent=5 // pred_check
      %p175 = pneg %p174
    $region30: #{image_decoder_forward.5} parent=5 // pred_check_branch
      %177 = sbr.rel (%p175) target = $region32
    $region31: #{image_decoder_forward.5} parent=5 // pred_region
      // Predicated region
      $region33: #{image_decoder_forward.5} parent=31 // pred_check
        %p178 = pneg %p31
      $region34: #{image_decoder_forward.5} parent=31 // pred_check_branch
        %180 = sbr.rel (%p178) target = $region36
      $region35: #{image_decoder_forward.5} parent=31 // pred_region
        %s181 = smul.u32 128, %s11
        %p182 = scmp.lt.s32.totalorder %s181, 255
        %s183 = scalar_select %p182, %s181, 255
        %s184 = smul.addr %s183, 3
        %s185 = smul.addr %s184, 8
        %s186 = scalar_lea.vmem %s0, %s185
        %s187 = smul.u32 128, %s11
      $region36: #{image_decoder_forward.5} parent=31 // pred_fallthru
        _
    $region32: #{image_decoder_forward.5} parent=5 // pred_fallthru
      _
    %p188 = scmp.le.s32.totalorder 1, %s11
    %p189 = scmp.lt.s32.totalorder %s11, 3
    %p190 = pnand %p188, %p189
    %p191 = pneg %p190
    // Predicated region
    $region37: #{image_decoder_forward.5} parent=5 // pred_check
      _
    $region38: #{image_decoder_forward.5} parent=5 // pred_check_branch
      %193 = sbr.rel (%p190) target = $region40
    $region39: #{image_decoder_forward.5} parent=5 // pred_region
      %s194 = ssub.s32 %s11, 1
      %s195 = smul.u32 128, %s16
      %p196 = scmp.lt.s32.totalorder %s195, 255
      %s197 = scalar_select %p196, %s195, 255
      %s198 = smul.addr %s197, 3
      %s199 = smul.addr %s198, 8
      %s200 = scalar_lea.vmem %s0, %s199
      %p201 = pneg %p37
      %p202 = pneg %p34
      %p203 = pneg %p58
      %p204 = pneg %p55
      %p205 = pneg %p79
      %p206 = pneg %p76
      %p207 = pneg %p100
      %p208 = pneg %p97
      %p209 = pneg %p121
      %p210 = pneg %p118
      %p211 = pneg %p147
      %p212 = pneg %p144
      %s213 = smul.u32 128, %s16
      %p214 = scmp.lt.s32.totalorder %s213, 255
      %s215 = scalar_select %p214, %s213, 255
      %s216 = smul.addr %s215, 8
      %s217 = scalar_lea.vmem %s5, %s216
      %s218 = smul.u32 128, %s16
      %p219 = scmp.lt.s32.totalorder %s218, 255
      %s220 = scalar_select %p219, %s218, 255
      %s221 = smul.addr %s220, 3
      %s222 = smul.addr %s221, 8
      %s223 = scalar_lea.vmem %s0, %s222
      %s224 = smul.u32 128, %s16
      %s225 = smul.u32 128, %s16
      %p226 = scmp.lt.s32.totalorder %s225, 255
      %s227 = scalar_select %p226, %s225, 255
      %s228 = smul.addr %s227, 8
      %s229 = scalar_lea.vmem %s5, %s228
      %s230 = smul.u32 128, %s16
      %v231 = vld [vmem:[%s223] sm:$0xff]
      %v232 = vld [vmem:[%s223 + $0x8] sm:$0xff]
      %v233 = vld [vmem:[%s223 + $0x10] sm:$0xff]
      %v234 = vld [vmem:[%s223 + $0x18] sm:$0xff]
      %v235 = vld [vmem:[%s223 + $0x20] sm:$0xff]
      %v236 = vld [vmem:[%s223 + $0x28] sm:$0xff]
      %v237 = vld [vmem:[%s223 + $0x30] sm:$0xff]
      %v238 = vld [vmem:[%s223 + $0x38] sm:$0xff]
      %v239 = vld [vmem:[%s223 + $0x40] sm:$0xff]
      %v240 = vld [vmem:[%s223 + $0x48] sm:$0xff]
      %v241 = vld [vmem:[%s223 + $0x50] sm:$0xff]
      %v242 = vld [vmem:[%s223 + $0x58] sm:$0xff]
      %v243 = vld [vmem:[%s223 + $0x60] sm:$0xff]
      %v244 = vld [vmem:[%s223 + $0x68] sm:$0xff]
      %v245 = vld [vmem:[%s223 + $0x70] sm:$0xff]
      %v246 = vld [vmem:[%s223 + $0x78] sm:$0xff]
      %v247 = vld [vmem:[%s223 + $0x80] sm:$0xff]
      %v248 = vld [vmem:[%s223 + $0x88] sm:$0xff]
      %v249 = vld [vmem:[%s223 + $0x90] sm:$0xff]
      %v250 = vld [vmem:[%s223 + $0x98] sm:$0xff]
      %v251 = vld [vmem:[%s223 + $0xa0] sm:$0xff]
      %v252 = vld [vmem:[%s223 + $0xa8] sm:$0xff]
      %v253 = vld [vmem:[%s223 + $0xb0] sm:$0xff]
      %v254 = vld [vmem:[%s223 + $0xb8] sm:$0xff]
      %v255 = vld [vmem:[%s223 + $0xc0] sm:$0xff]
      %v256 = vld [vmem:[%s223 + $0xc8] sm:$0xff]
      %v257 = vld [vmem:[%s223 + $0xd0] sm:$0xff]
      %v258 = vld [vmem:[%s223 + $0xd8] sm:$0xff]
      %v259 = vld [vmem:[%s223 + $0xe0] sm:$0xff]
      %v260 = vld [vmem:[%s223 + $0xe8] sm:$0xff]
      %v261 = vld [vmem:[%s223 + $0xf0] sm:$0xff]
      %v262 = vld [vmem:[%s223 + $0xf8] sm:$0xff]
      %v263 = vld [vmem:[%s223 + $0x100] sm:$0xff]
      %v264 = vld [vmem:[%s223 + $0x108] sm:$0xff]
      %v265 = vld [vmem:[%s223 + $0x110] sm:$0xff]
      %v266 = vld [vmem:[%s223 + $0x118] sm:$0xff]
      %v267 = vld [vmem:[%s223 + $0x120] sm:$0xff]
      %v268 = vld [vmem:[%s223 + $0x128] sm:$0xff]
      %v269 = vld [vmem:[%s223 + $0x130] sm:$0xff]
      %v270 = vld [vmem:[%s223 + $0x138] sm:$0xff]
      %v271 = vld [vmem:[%s223 + $0x140] sm:$0xff]
      %v272 = vld [vmem:[%s223 + $0x148] sm:$0xff]
      %v273 = vld [vmem:[%s223 + $0x150] sm:$0xff]
      %v274 = vld [vmem:[%s223 + $0x158] sm:$0xff]
      %v275 = vld [vmem:[%s223 + $0x160] sm:$0xff]
      %v276 = vld [vmem:[%s223 + $0x168] sm:$0xff]
      %v277 = vld [vmem:[%s223 + $0x170] sm:$0xff]
      %v278 = vld [vmem:[%s223 + $0x178] sm:$0xff]
      %v279 = vld [vmem:[%s223 + $0x180] sm:$0xff]
      %v280 = vld [vmem:[%s223 + $0x188] sm:$0xff]
      %v281 = vld [vmem:[%s223 + $0x190] sm:$0xff]
      %v282 = vld [vmem:[%s223 + $0x198] sm:$0xff]
      %v283 = vld [vmem:[%s223 + $0x1a0] sm:$0xff]
      %v284 = vld [vmem:[%s223 + $0x1a8] sm:$0xff]
      %v285 = vld [vmem:[%s223 + $0x1b0] sm:$0xff]
      %v286 = vld [vmem:[%s223 + $0x1b8] sm:$0xff]
      %v287 = vld [vmem:[%s223 + $0x1c0] sm:$0xff]
      %v288 = vld [vmem:[%s223 + $0x1c8] sm:$0xff]
      %v289 = vld [vmem:[%s223 + $0x1d0] sm:$0xff]
      %v290 = vld [vmem:[%s223 + $0x1d8] sm:$0xff]
      %v291 = vld [vmem:[%s223 + $0x1e0] sm:$0xff]
      %v292 = vld [vmem:[%s223 + $0x1e8] sm:$0xff]
      %v293 = vld [vmem:[%s223 + $0x1f0] sm:$0xff]
      %v294 = vld [vmem:[%s223 + $0x1f8] sm:$0xff]
      %v295 = vld [vmem:[%s223 + $0x200] sm:$0xff]
      %v296 = vld [vmem:[%s223 + $0x208] sm:$0xff]
      %v297 = vld [vmem:[%s223 + $0x210] sm:$0xff]
      %v298 = vld [vmem:[%s223 + $0x218] sm:$0xff]
      %v299 = vld [vmem:[%s223 + $0x220] sm:$0xff]
      %v300 = vld [vmem:[%s223 + $0x228] sm:$0xff]
      %v301 = vld [vmem:[%s223 + $0x230] sm:$0xff]
      %v302 = vld [vmem:[%s223 + $0x238] sm:$0xff]
      %v303 = vld [vmem:[%s223 + $0x240] sm:$0xff]
      %v304 = vld [vmem:[%s223 + $0x248] sm:$0xff]
      %v305 = vld [vmem:[%s223 + $0x250] sm:$0xff]
      %v306 = vld [vmem:[%s223 + $0x258] sm:$0xff]
      %v307 = vld [vmem:[%s223 + $0x260] sm:$0xff]
      %v308 = vld [vmem:[%s223 + $0x268] sm:$0xff]
      %v309 = vld [vmem:[%s223 + $0x270] sm:$0xff]
      %v310 = vld [vmem:[%s223 + $0x278] sm:$0xff]
      %v311 = vld [vmem:[%s223 + $0x280] sm:$0xff]
      %v312 = vld [vmem:[%s223 + $0x288] sm:$0xff]
      %v313 = vld [vmem:[%s223 + $0x290] sm:$0xff]
      %v314 = vld [vmem:[%s223 + $0x298] sm:$0xff]
      %v315 = vld [vmem:[%s223 + $0x2a0] sm:$0xff]
      %v316 = vld [vmem:[%s223 + $0x2a8] sm:$0xff]
      %v317 = vld [vmem:[%s223 + $0x2b0] sm:$0xff]
      %v318 = vld [vmem:[%s223 + $0x2b8] sm:$0xff]
      %v319 = vld [vmem:[%s223 + $0x2c0] sm:$0xff]
      %v320 = vld [vmem:[%s223 + $0x2c8] sm:$0xff]
      %v321 = vld [vmem:[%s223 + $0x2d0] sm:$0xff]
      %v322 = vld [vmem:[%s223 + $0x2d8] sm:$0xff]
      %v323 = vld [vmem:[%s223 + $0x2e0] sm:$0xff]
      %v324 = vld [vmem:[%s223 + $0x2e8] sm:$0xff]
      %v325 = vld [vmem:[%s223 + $0x2f0] sm:$0xff]
      %v326 = vld [vmem:[%s223 + $0x2f8] sm:$0xff]
      %v327 = vld [vmem:[%s223 + $0x300] sm:$0xff]
      %v328 = vld [vmem:[%s223 + $0x308] sm:$0xff]
      %v329 = vld [vmem:[%s223 + $0x310] sm:$0xff]
      %v330 = vld [vmem:[%s223 + $0x318] sm:$0xff]
      %v331 = vld [vmem:[%s223 + $0x320] sm:$0xff]
      %v332 = vld [vmem:[%s223 + $0x328] sm:$0xff]
      %v333 = vld [vmem:[%s223 + $0x330] sm:$0xff]
      %v334 = vld [vmem:[%s223 + $0x338] sm:$0xff]
      %v335 = vld [vmem:[%s223 + $0x340] sm:$0xff]
      %v336 = vld [vmem:[%s223 + $0x348] sm:$0xff]
      %v337 = vld [vmem:[%s223 + $0x350] sm:$0xff]
      %v338 = vld [vmem:[%s223 + $0x358] sm:$0xff]
      %v339 = vld [vmem:[%s223 + $0x360] sm:$0xff]
      %v340 = vld [vmem:[%s223 + $0x368] sm:$0xff]
      %v341 = vld [vmem:[%s223 + $0x370] sm:$0xff]
      %v342 = vld [vmem:[%s223 + $0x378] sm:$0xff]
      %v343 = vld [vmem:[%s223 + $0x380] sm:$0xff]
      %v344 = vld [vmem:[%s223 + $0x388] sm:$0xff]
      %v345 = vld [vmem:[%s223 + $0x390] sm:$0xff]
      %v346 = vld [vmem:[%s223 + $0x398] sm:$0xff]
      %v347 = vld [vmem:[%s223 + $0x3a0] sm:$0xff]
      %v348 = vld [vmem:[%s223 + $0x3a8] sm:$0xff]
      %v349 = vld [vmem:[%s223 + $0x3b0] sm:$0xff]
      %v350 = vld [vmem:[%s223 + $0x3b8] sm:$0xff]
      %v351 = vld [vmem:[%s223 + $0x3c0] sm:$0xff]
      %v352 = vld [vmem:[%s223 + $0x3c8] sm:$0xff]
      %v353 = vld [vmem:[%s223 + $0x3d0] sm:$0xff]
      %v354 = vld [vmem:[%s223 + $0x3d8] sm:$0xff]
      %v355 = vld [vmem:[%s223 + $0x3e0] sm:$0xff]
      %v356 = vld [vmem:[%s223 + $0x3e8] sm:$0xff]
      %v357 = vld [vmem:[%s223 + $0x3f0] sm:$0xff]
      %v358 = vld [vmem:[%s223 + $0x3f8] sm:$0xff]
      %v359 = vld [vmem:[%s223 + $0x400] sm:$0xff]
      %v360 = vld [vmem:[%s223 + $0x408] sm:$0xff]
      %v361 = vld [vmem:[%s223 + $0x410] sm:$0xff]
      %v362 = vld [vmem:[%s223 + $0x418] sm:$0xff]
      %v363 = vld [vmem:[%s223 + $0x420] sm:$0xff]
      %v364 = vld [vmem:[%s223 + $0x428] sm:$0xff]
      %v365 = vld [vmem:[%s223 + $0x430] sm:$0xff]
      %v366 = vld [vmem:[%s223 + $0x438] sm:$0xff]
      %v367 = vld [vmem:[%s223 + $0x440] sm:$0xff]
      %v368 = vld [vmem:[%s223 + $0x448] sm:$0xff]
      %v369 = vld [vmem:[%s223 + $0x450] sm:$0xff]
      %v370 = vld [vmem:[%s223 + $0x458] sm:$0xff]
      %v371 = vld [vmem:[%s223 + $0x460] sm:$0xff]
      %v372 = vld [vmem:[%s223 + $0x468] sm:$0xff]
      %v373 = vld [vmem:[%s223 + $0x470] sm:$0xff]
      %v374 = vld [vmem:[%s223 + $0x478] sm:$0xff]
      %v375 = vld [vmem:[%s223 + $0x480] sm:$0xff]
      %v376 = vld [vmem:[%s223 + $0x488] sm:$0xff]
      %v377 = vld [vmem:[%s223 + $0x490] sm:$0xff]
      %v378 = vld [vmem:[%s223 + $0x498] sm:$0xff]
      %v379 = vld [vmem:[%s223 + $0x4a0] sm:$0xff]
      %v380 = vld [vmem:[%s223 + $0x4a8] sm:$0xff]
      %v381 = vld [vmem:[%s223 + $0x4b0] sm:$0xff]
      %v382 = vld [vmem:[%s223 + $0x4b8] sm:$0xff]
      %v383 = vld [vmem:[%s223 + $0x4c0] sm:$0xff]
      %v384 = vld [vmem:[%s223 + $0x4c8] sm:$0xff]
      %v385 = vld [vmem:[%s223 + $0x4d0] sm:$0xff]
      %v386 = vld [vmem:[%s223 + $0x4d8] sm:$0xff]
      %v387 = vld [vmem:[%s223 + $0x4e0] sm:$0xff]
      %v388 = vld [vmem:[%s223 + $0x4e8] sm:$0xff]
      %v389 = vld [vmem:[%s223 + $0x4f0] sm:$0xff]
      %v390 = vld [vmem:[%s223 + $0x4f8] sm:$0xff]
      %v391 = vld [vmem:[%s223 + $0x500] sm:$0xff]
      %v392 = vld [vmem:[%s223 + $0x508] sm:$0xff]
      %v393 = vld [vmem:[%s223 + $0x510] sm:$0xff]
      %v394 = vld [vmem:[%s223 + $0x518] sm:$0xff]
      %v395 = vld [vmem:[%s223 + $0x520] sm:$0xff]
      %v396 = vld [vmem:[%s223 + $0x528] sm:$0xff]
      %v397 = vld [vmem:[%s223 + $0x530] sm:$0xff]
      %v398 = vld [vmem:[%s223 + $0x538] sm:$0xff]
      %v399 = vld [vmem:[%s223 + $0x540] sm:$0xff]
      %v400 = vld [vmem:[%s223 + $0x548] sm:$0xff]
      %v401 = vld [vmem:[%s223 + $0x550] sm:$0xff]
      %v402 = vld [vmem:[%s223 + $0x558] sm:$0xff]
      %v403 = vld [vmem:[%s223 + $0x560] sm:$0xff]
      %v404 = vld [vmem:[%s223 + $0x568] sm:$0xff]
      %v405 = vld [vmem:[%s223 + $0x570] sm:$0xff]
      %v406 = vld [vmem:[%s223 + $0x578] sm:$0xff]
      %v407 = vld [vmem:[%s223 + $0x580] sm:$0xff]
      %v408 = vld [vmem:[%s223 + $0x588] sm:$0xff]
      %v409 = vld [vmem:[%s223 + $0x590] sm:$0xff]
      %v410 = vld [vmem:[%s223 + $0x598] sm:$0xff]
      %v411 = vld [vmem:[%s223 + $0x5a0] sm:$0xff]
      %v412 = vld [vmem:[%s223 + $0x5a8] sm:$0xff]
      %v413 = vld [vmem:[%s223 + $0x5b0] sm:$0xff]
      %v414 = vld [vmem:[%s223 + $0x5b8] sm:$0xff]
      %v415 = vld [vmem:[%s223 + $0x5c0] sm:$0xff]
      %v416 = vld [vmem:[%s223 + $0x5c8] sm:$0xff]
      %v417 = vld [vmem:[%s223 + $0x5d0] sm:$0xff]
      %v418 = vld [vmem:[%s223 + $0x5d8] sm:$0xff]
      %v419 = vld [vmem:[%s223 + $0x5e0] sm:$0xff]
      %v420 = vld [vmem:[%s223 + $0x5e8] sm:$0xff]
      %v421 = vld [vmem:[%s223 + $0x5f0] sm:$0xff]
      %v422 = vld [vmem:[%s223 + $0x5f8] sm:$0xff]
      %v423 = vld [vmem:[%s223 + $0x600] sm:$0xff]
      %v424 = vld [vmem:[%s223 + $0x608] sm:$0xff]
      %v425 = vld [vmem:[%s223 + $0x610] sm:$0xff]
      %v426 = vld [vmem:[%s223 + $0x618] sm:$0xff]
      %v427 = vld [vmem:[%s223 + $0x620] sm:$0xff]
      %v428 = vld [vmem:[%s223 + $0x628] sm:$0xff]
      %v429 = vld [vmem:[%s223 + $0x630] sm:$0xff]
      %v430 = vld [vmem:[%s223 + $0x638] sm:$0xff]
      %v431 = vld [vmem:[%s223 + $0x640] sm:$0xff]
      %v432 = vld [vmem:[%s223 + $0x648] sm:$0xff]
      %v433 = vld [vmem:[%s223 + $0x650] sm:$0xff]
      %v434 = vld [vmem:[%s223 + $0x658] sm:$0xff]
      %v435 = vld [vmem:[%s223 + $0x660] sm:$0xff]
      %v436 = vld [vmem:[%s223 + $0x668] sm:$0xff]
      %v437 = vld [vmem:[%s223 + $0x670] sm:$0xff]
      %v438 = vld [vmem:[%s223 + $0x678] sm:$0xff]
      %v439 = vld [vmem:[%s223 + $0x680] sm:$0xff]
      %v440 = vld [vmem:[%s223 + $0x688] sm:$0xff]
      %v441 = vld [vmem:[%s223 + $0x690] sm:$0xff]
      %v442 = vld [vmem:[%s223 + $0x698] sm:$0xff]
      %v443 = vld [vmem:[%s223 + $0x6a0] sm:$0xff]
      %v444 = vld [vmem:[%s223 + $0x6a8] sm:$0xff]
      %v445 = vld [vmem:[%s223 + $0x6b0] sm:$0xff]
      %v446 = vld [vmem:[%s223 + $0x6b8] sm:$0xff]
      %v447 = vld [vmem:[%s223 + $0x6c0] sm:$0xff]
      %v448 = vld [vmem:[%s223 + $0x6c8] sm:$0xff]
      %v449 = vld [vmem:[%s223 + $0x6d0] sm:$0xff]
      %v450 = vld [vmem:[%s223 + $0x6d8] sm:$0xff]
      %v451 = vld [vmem:[%s223 + $0x6e0] sm:$0xff]
      %v452 = vld [vmem:[%s223 + $0x6e8] sm:$0xff]
      %v453 = vld [vmem:[%s223 + $0x6f0] sm:$0xff]
      %v454 = vld [vmem:[%s223 + $0x6f8] sm:$0xff]
      %v455 = vld [vmem:[%s223 + $0x700] sm:$0xff]
      %v456 = vld [vmem:[%s223 + $0x708] sm:$0xff]
      %v457 = vld [vmem:[%s223 + $0x710] sm:$0xff]
      %v458 = vld [vmem:[%s223 + $0x718] sm:$0xff]
      %v459 = vld [vmem:[%s223 + $0x720] sm:$0xff]
      %v460 = vld [vmem:[%s223 + $0x728] sm:$0xff]
      %v461 = vld [vmem:[%s223 + $0x730] sm:$0xff]
      %v462 = vld [vmem:[%s223 + $0x738] sm:$0xff]
      %v463 = vld [vmem:[%s223 + $0x740] sm:$0xff]
      %v464 = vld [vmem:[%s223 + $0x748] sm:$0xff]
      %v465 = vld [vmem:[%s223 + $0x750] sm:$0xff]
      %v466 = vld [vmem:[%s223 + $0x758] sm:$0xff]
      %v467 = vld [vmem:[%s223 + $0x760] sm:$0xff]
      %v468 = vld [vmem:[%s223 + $0x768] sm:$0xff]
      %v469 = vld [vmem:[%s223 + $0x770] sm:$0xff]
      %v470 = vld [vmem:[%s223 + $0x778] sm:$0xff]
      %v471 = vld [vmem:[%s223 + $0x780] sm:$0xff]
      %v472 = vld [vmem:[%s223 + $0x788] sm:$0xff]
      %v473 = vld [vmem:[%s223 + $0x790] sm:$0xff]
      %v474 = vld [vmem:[%s223 + $0x798] sm:$0xff]
      %v475 = vld [vmem:[%s223 + $0x7a0] sm:$0xff]
      %v476 = vld [vmem:[%s223 + $0x7a8] sm:$0xff]
      %v477 = vld [vmem:[%s223 + $0x7b0] sm:$0xff]
      %v478 = vld [vmem:[%s223 + $0x7b8] sm:$0xff]
      %v479 = vld [vmem:[%s223 + $0x7c0] sm:$0xff]
      %v480 = vld [vmem:[%s223 + $0x7c8] sm:$0xff]
      %v481 = vld [vmem:[%s223 + $0x7d0] sm:$0xff]
      %v482 = vld [vmem:[%s223 + $0x7d8] sm:$0xff]
      %v483 = vld [vmem:[%s223 + $0x7e0] sm:$0xff]
      %v484 = vld [vmem:[%s223 + $0x7e8] sm:$0xff]
      %v485 = vld [vmem:[%s223 + $0x7f0] sm:$0xff]
      %v486 = vld [vmem:[%s223 + $0x7f8] sm:$0xff]
      %v487 = vld [vmem:[%s223 + $0x800] sm:$0xff]
      %v488 = vld [vmem:[%s223 + $0x808] sm:$0xff]
      %v489 = vld [vmem:[%s223 + $0x810] sm:$0xff]
      %v490 = vld [vmem:[%s223 + $0x818] sm:$0xff]
      %v491 = vld [vmem:[%s223 + $0x820] sm:$0xff]
      %v492 = vld [vmem:[%s223 + $0x828] sm:$0xff]
      %v493 = vld [vmem:[%s223 + $0x830] sm:$0xff]
      %v494 = vld [vmem:[%s223 + $0x838] sm:$0xff]
      %v495 = vld [vmem:[%s223 + $0x840] sm:$0xff]
      %v496 = vld [vmem:[%s223 + $0x848] sm:$0xff]
      %v497 = vld [vmem:[%s223 + $0x850] sm:$0xff]
      %v498 = vld [vmem:[%s223 + $0x858] sm:$0xff]
      %v499 = vld [vmem:[%s223 + $0x860] sm:$0xff]
      %v500 = vld [vmem:[%s223 + $0x868] sm:$0xff]
      %v501 = vld [vmem:[%s223 + $0x870] sm:$0xff]
      %v502 = vld [vmem:[%s223 + $0x878] sm:$0xff]
      %v503 = vld [vmem:[%s223 + $0x880] sm:$0xff]
      %v504 = vld [vmem:[%s223 + $0x888] sm:$0xff]
      %v505 = vld [vmem:[%s223 + $0x890] sm:$0xff]
      %v506 = vld [vmem:[%s223 + $0x898] sm:$0xff]
      %v507 = vld [vmem:[%s223 + $0x8a0] sm:$0xff]
      %v508 = vld [vmem:[%s223 + $0x8a8] sm:$0xff]
      %v509 = vld [vmem:[%s223 + $0x8b0] sm:$0xff]
      %v510 = vld [vmem:[%s223 + $0x8b8] sm:$0xff]
      %v511 = vld [vmem:[%s223 + $0x8c0] sm:$0xff]
      %v512 = vld [vmem:[%s223 + $0x8c8] sm:$0xff]
      %v513 = vld [vmem:[%s223 + $0x8d0] sm:$0xff]
      %v514 = vld [vmem:[%s223 + $0x8d8] sm:$0xff]
      %v515 = vld [vmem:[%s223 + $0x8e0] sm:$0xff]
      %v516 = vld [vmem:[%s223 + $0x8e8] sm:$0xff]
      %v517 = vld [vmem:[%s223 + $0x8f0] sm:$0xff]
      %v518 = vld [vmem:[%s223 + $0x8f8] sm:$0xff]
      %v519 = vld [vmem:[%s223 + $0x900] sm:$0xff]
      %v520 = vld [vmem:[%s223 + $0x908] sm:$0xff]
      %v521 = vld [vmem:[%s223 + $0x910] sm:$0xff]
      %v522 = vld [vmem:[%s223 + $0x918] sm:$0xff]
      %v523 = vld [vmem:[%s223 + $0x920] sm:$0xff]
      %v524 = vld [vmem:[%s223 + $0x928] sm:$0xff]
      %v525 = vld [vmem:[%s223 + $0x930] sm:$0xff]
      %v526 = vld [vmem:[%s223 + $0x938] sm:$0xff]
      %v527 = vld [vmem:[%s223 + $0x940] sm:$0xff]
      %v528 = vld [vmem:[%s223 + $0x948] sm:$0xff]
      %v529 = vld [vmem:[%s223 + $0x950] sm:$0xff]
      %v530 = vld [vmem:[%s223 + $0x958] sm:$0xff]
      %v531 = vld [vmem:[%s223 + $0x960] sm:$0xff]
      %v532 = vld [vmem:[%s223 + $0x968] sm:$0xff]
      %v533 = vld [vmem:[%s223 + $0x970] sm:$0xff]
      %v534 = vld [vmem:[%s223 + $0x978] sm:$0xff]
      %v535 = vld [vmem:[%s223 + $0x980] sm:$0xff]
      %v536 = vld [vmem:[%s223 + $0x988] sm:$0xff]
      %v537 = vld [vmem:[%s223 + $0x990] sm:$0xff]
      %v538 = vld [vmem:[%s223 + $0x998] sm:$0xff]
      %v539 = vld [vmem:[%s223 + $0x9a0] sm:$0xff]
      %v540 = vld [vmem:[%s223 + $0x9a8] sm:$0xff]
      %v541 = vld [vmem:[%s223 + $0x9b0] sm:$0xff]
      %v542 = vld [vmem:[%s223 + $0x9b8] sm:$0xff]
      %v543 = vld [vmem:[%s223 + $0x9c0] sm:$0xff]
      %v544 = vld [vmem:[%s223 + $0x9c8] sm:$0xff]
      %v545 = vld [vmem:[%s223 + $0x9d0] sm:$0xff]
      %v546 = vld [vmem:[%s223 + $0x9d8] sm:$0xff]
      %v547 = vld [vmem:[%s223 + $0x9e0] sm:$0xff]
      %v548 = vld [vmem:[%s223 + $0x9e8] sm:$0xff]
      %v549 = vld [vmem:[%s223 + $0x9f0] sm:$0xff]
      %v550 = vld [vmem:[%s223 + $0x9f8] sm:$0xff]
      %v551 = vld [vmem:[%s223 + $0xa00] sm:$0xff]
      %v552 = vld [vmem:[%s223 + $0xa08] sm:$0xff]
      %v553 = vld [vmem:[%s223 + $0xa10] sm:$0xff]
      %v554 = vld [vmem:[%s223 + $0xa18] sm:$0xff]
      %v555 = vld [vmem:[%s223 + $0xa20] sm:$0xff]
      %v556 = vld [vmem:[%s223 + $0xa28] sm:$0xff]
      %v557 = vld [vmem:[%s223 + $0xa30] sm:$0xff]
      %v558 = vld [vmem:[%s223 + $0xa38] sm:$0xff]
      %v559 = vld [vmem:[%s223 + $0xa40] sm:$0xff]
      %v560 = vld [vmem:[%s223 + $0xa48] sm:$0xff]
      %v561 = vld [vmem:[%s223 + $0xa50] sm:$0xff]
      %v562 = vld [vmem:[%s223 + $0xa58] sm:$0xff]
      %v563 = vld [vmem:[%s223 + $0xa60] sm:$0xff]
      %v564 = vld [vmem:[%s223 + $0xa68] sm:$0xff]
      %v565 = vld [vmem:[%s223 + $0xa70] sm:$0xff]
      %v566 = vld [vmem:[%s223 + $0xa78] sm:$0xff]
      %v567 = vld [vmem:[%s223 + $0xa80] sm:$0xff]
      %v568 = vld [vmem:[%s223 + $0xa88] sm:$0xff]
      %v569 = vld [vmem:[%s223 + $0xa90] sm:$0xff]
      %v570 = vld [vmem:[%s223 + $0xa98] sm:$0xff]
      %v571 = vld [vmem:[%s223 + $0xaa0] sm:$0xff]
      %v572 = vld [vmem:[%s223 + $0xaa8] sm:$0xff]
      %v573 = vld [vmem:[%s223 + $0xab0] sm:$0xff]
      %v574 = vld [vmem:[%s223 + $0xab8] sm:$0xff]
      %v575 = vld [vmem:[%s223 + $0xac0] sm:$0xff]
      %v576 = vld [vmem:[%s223 + $0xac8] sm:$0xff]
      %v577 = vld [vmem:[%s223 + $0xad0] sm:$0xff]
      %v578 = vld [vmem:[%s223 + $0xad8] sm:$0xff]
      %v579 = vld [vmem:[%s223 + $0xae0] sm:$0xff]
      %v580 = vld [vmem:[%s223 + $0xae8] sm:$0xff]
      %v581 = vld [vmem:[%s223 + $0xaf0] sm:$0xff]
      %v582 = vld [vmem:[%s223 + $0xaf8] sm:$0xff]
      %v583 = vld [vmem:[%s223 + $0xb00] sm:$0xff]
      %v584 = vld [vmem:[%s223 + $0xb08] sm:$0xff]
      %v585 = vld [vmem:[%s223 + $0xb10] sm:$0xff]
      %v586 = vld [vmem:[%s223 + $0xb18] sm:$0xff]
      %v587 = vld [vmem:[%s223 + $0xb20] sm:$0xff]
      %v588 = vld [vmem:[%s223 + $0xb28] sm:$0xff]
      %v589 = vld [vmem:[%s223 + $0xb30] sm:$0xff]
      %v590 = vld [vmem:[%s223 + $0xb38] sm:$0xff]
      %v591 = vld [vmem:[%s223 + $0xb40] sm:$0xff]
      %v592 = vld [vmem:[%s223 + $0xb48] sm:$0xff]
      %v593 = vld [vmem:[%s223 + $0xb50] sm:$0xff]
      %v594 = vld [vmem:[%s223 + $0xb58] sm:$0xff]
      %v595 = vld [vmem:[%s223 + $0xb60] sm:$0xff]
      %v596 = vld [vmem:[%s223 + $0xb68] sm:$0xff]
      %v597 = vld [vmem:[%s223 + $0xb70] sm:$0xff]
      %v598 = vld [vmem:[%s223 + $0xb78] sm:$0xff]
      %v599 = vld [vmem:[%s223 + $0xb80] sm:$0xff]
      %v600 = vld [vmem:[%s223 + $0xb88] sm:$0xff]
      %v601 = vld [vmem:[%s223 + $0xb90] sm:$0xff]
      %v602 = vld [vmem:[%s223 + $0xb98] sm:$0xff]
      %v603 = vld [vmem:[%s223 + $0xba0] sm:$0xff]
      %v604 = vld [vmem:[%s223 + $0xba8] sm:$0xff]
      %v605 = vld [vmem:[%s223 + $0xbb0] sm:$0xff]
      %v606 = vld [vmem:[%s223 + $0xbb8] sm:$0xff]
      %v607 = vld [vmem:[%s223 + $0xbc0] sm:$0xff]
      %v608 = vld [vmem:[%s223 + $0xbc8] sm:$0xff]
      %v609 = vld [vmem:[%s223 + $0xbd0] sm:$0xff]
      %v610 = vld [vmem:[%s223 + $0xbd8] sm:$0xff]
      %v611 = vld [vmem:[%s223 + $0xbe0] sm:$0xff]
      %v612 = vld [vmem:[%s223 + $0xbe8] sm:$0xff]
      %v613 = vld [vmem:[%s223 + $0xbf0] sm:$0xff]
      %v614 = vld [vmem:[%s223 + $0xbf8] sm:$0xff]
      %v615 = vld [vmem:[%s1] sm:$0xff]
      %v616 = vld [vmem:[%s1 + $0x8] sm:$0xff]
      %v617 = vld [vmem:[%s1 + $0x10] sm:$0xff]
      %v618 = vld [vmem:[%s1 + $0x18] sm:$0xff]
      %v619 = vld [vmem:[%s1 + $0x20] sm:$0xff]
      %v620 = vld [vmem:[%s1 + $0x28] sm:$0xff]
      %v621 = vld [vmem:[%s1 + $0x30] sm:$0xff]
      %v622 = vld [vmem:[%s1 + $0x38] sm:$0xff]
      %v623 = vld [vmem:[%s1 + $0x40] sm:$0xff]
      %v624 = vld [vmem:[%s1 + $0x48] sm:$0xff]
      %v625 = vld [vmem:[%s1 + $0x50] sm:$0xff]
      %v626 = vld [vmem:[%s1 + $0x58] sm:$0xff]
      %v627 = vld [vmem:[%s1 + $0x60] sm:$0xff]
      %v628 = vld [vmem:[%s1 + $0x68] sm:$0xff]
      %v629 = vld [vmem:[%s1 + $0x70] sm:$0xff]
      %v630 = vld [vmem:[%s1 + $0x78] sm:$0xff]
      %v631 = vld [vmem:[%s1 + $0x80] sm:$0xff]
      %v632 = vld [vmem:[%s1 + $0x88] sm:$0xff]
      %v633 = vld [vmem:[%s1 + $0x90] sm:$0xff]
      %v634 = vld [vmem:[%s1 + $0x98] sm:$0xff]
      %v635 = vld [vmem:[%s1 + $0xa0] sm:$0xff]
      %v636 = vld [vmem:[%s1 + $0xa8] sm:$0xff]
      %v637 = vld [vmem:[%s1 + $0xb0] sm:$0xff]
      %v638 = vld [vmem:[%s1 + $0xb8] sm:$0xff]
      %v639 = vld [vmem:[%s1 + $0xc0] sm:$0xff]
      %v640 = vld [vmem:[%s1 + $0xc8] sm:$0xff]
      %v641 = vld [vmem:[%s1 + $0xd0] sm:$0xff]
      %v642 = vld [vmem:[%s1 + $0xd8] sm:$0xff]
      %v643 = vld [vmem:[%s1 + $0xe0] sm:$0xff]
      %v644 = vld [vmem:[%s1 + $0xe8] sm:$0xff]
      %v645 = vld [vmem:[%s1 + $0xf0] sm:$0xff]
      %v646 = vld [vmem:[%s1 + $0xf8] sm:$0xff]
      %v647 = vld [vmem:[%s1 + $0x100] sm:$0xff]
      %v648 = vld [vmem:[%s1 + $0x108] sm:$0xff]
      %v649 = vld [vmem:[%s1 + $0x110] sm:$0xff]
      %v650 = vld [vmem:[%s1 + $0x118] sm:$0xff]
      %v651 = vld [vmem:[%s2] sm:$0x1]
      %v653 = vperm.slane %v651, 0
      %vm655 = vcmask 261120
      %v657 = vsel %vm655, %v233, 0
      %v660 = vsel %vm655, %v236, 0
      %v663 = vsel %vm655, %v239, 0
      %v666 = vsel %vm655, %v242, 0
      %v669 = vsel %vm655, %v245, 0
      %v672 = vsel %vm655, %v248, 0
      %v675 = vsel %vm655, %v251, 0
      %v678 = vsel %vm655, %v254, 0
      %v681 = vsel %vm655, %v257, 0
      %v684 = vsel %vm655, %v260, 0
      %v687 = vsel %vm655, %v263, 0
      %v690 = vsel %vm655, %v266, 0
      %v693 = vsel %vm655, %v269, 0
      %v696 = vsel %vm655, %v272, 0
      %v699 = vsel %vm655, %v275, 0
      %v702 = vsel %vm655, %v278, 0
      %v705 = vsel %vm655, %v281, 0
      %v708 = vsel %vm655, %v284, 0
      %v711 = vsel %vm655, %v287, 0
      %v714 = vsel %vm655, %v290, 0
      %v717 = vsel %vm655, %v293, 0
      %v720 = vsel %vm655, %v296, 0
      %v723 = vsel %vm655, %v299, 0
      %v726 = vsel %vm655, %v302, 0
      %v729 = vsel %vm655, %v305, 0
      %v732 = vsel %vm655, %v308, 0
      %v735 = vsel %vm655, %v311, 0
      %v738 = vsel %vm655, %v314, 0
      %v741 = vsel %vm655, %v317, 0
      %v744 = vsel %vm655, %v320, 0
      %v747 = vsel %vm655, %v323, 0
      %v750 = vsel %vm655, %v326, 0
      %v753 = vsel %vm655, %v329, 0
      %v756 = vsel %vm655, %v332, 0
      %v759 = vsel %vm655, %v335, 0
      %v762 = vsel %vm655, %v338, 0
      %v765 = vsel %vm655, %v341, 0
      %v768 = vsel %vm655, %v344, 0
      %v771 = vsel %vm655, %v347, 0
      %v774 = vsel %vm655, %v350, 0
      %v777 = vsel %vm655, %v353, 0
      %v780 = vsel %vm655, %v356, 0
      %v783 = vsel %vm655, %v359, 0
      %v786 = vsel %vm655, %v362, 0
      %v789 = vsel %vm655, %v365, 0
      %v792 = vsel %vm655, %v368, 0
      %v795 = vsel %vm655, %v371, 0
      %v798 = vsel %vm655, %v374, 0
      %v801 = vsel %vm655, %v377, 0
      %v804 = vsel %vm655, %v380, 0
      %v807 = vsel %vm655, %v383, 0
      %v810 = vsel %vm655, %v386, 0
      %v813 = vsel %vm655, %v389, 0
      %v816 = vsel %vm655, %v392, 0
      %v819 = vsel %vm655, %v395, 0
      %v822 = vsel %vm655, %v398, 0
      %v825 = vsel %vm655, %v401, 0
      %v828 = vsel %vm655, %v404, 0
      %v831 = vsel %vm655, %v407, 0
      %v834 = vsel %vm655, %v410, 0
      %v837 = vsel %vm655, %v413, 0
      %v840 = vsel %vm655, %v416, 0
      %v843 = vsel %vm655, %v419, 0
      %v846 = vsel %vm655, %v422, 0
      %v849 = vsel %vm655, %v425, 0
      %v852 = vsel %vm655, %v428, 0
      %v855 = vsel %vm655, %v431, 0
      %v858 = vsel %vm655, %v434, 0
      %v861 = vsel %vm655, %v437, 0
      %v864 = vsel %vm655, %v440, 0
      %v867 = vsel %vm655, %v443, 0
      %v870 = vsel %vm655, %v446, 0
      %v873 = vsel %vm655, %v449, 0
      %v876 = vsel %vm655, %v452, 0
      %v879 = vsel %vm655, %v455, 0
      %v882 = vsel %vm655, %v458, 0
      %v885 = vsel %vm655, %v461, 0
      %v888 = vsel %vm655, %v464, 0
      %v891 = vsel %vm655, %v467, 0
      %v894 = vsel %vm655, %v470, 0
      %v897 = vsel %vm655, %v473, 0
      %v900 = vsel %vm655, %v476, 0
      %v903 = vsel %vm655, %v479, 0
      %v906 = vsel %vm655, %v482, 0
      %v909 = vsel %vm655, %v485, 0
      %v912 = vsel %vm655, %v488, 0
      %v915 = vsel %vm655, %v491, 0
      %v918 = vsel %vm655, %v494, 0
      %v921 = vsel %vm655, %v497, 0
      %v924 = vsel %vm655, %v500, 0
      %v927 = vsel %vm655, %v503, 0
      %v930 = vsel %vm655, %v506, 0
      %v933 = vsel %vm655, %v509, 0
      %v936 = vsel %vm655, %v512, 0
      %v939 = vsel %vm655, %v515, 0
      %v942 = vsel %vm655, %v518, 0
      %v945 = vsel %vm655, %v521, 0
      %v948 = vsel %vm655, %v524, 0
      %v951 = vsel %vm655, %v527, 0
      %v954 = vsel %vm655, %v530, 0
      %v957 = vsel %vm655, %v533, 0
      %v960 = vsel %vm655, %v536, 0
      %v963 = vsel %vm655, %v539, 0
      %v966 = vsel %vm655, %v542, 0
      %v969 = vsel %vm655, %v545, 0
      %v972 = vsel %vm655, %v548, 0
      %v975 = vsel %vm655, %v551, 0
      %v978 = vsel %vm655, %v554, 0
      %v981 = vsel %vm655, %v557, 0
      %v984 = vsel %vm655, %v560, 0
      %v987 = vsel %vm655, %v563, 0
      %v990 = vsel %vm655, %v566, 0
      %v993 = vsel %vm655, %v569, 0
      %v996 = vsel %vm655, %v572, 0
      %v999 = vsel %vm655, %v575, 0
      %v1002 = vsel %vm655, %v578, 0
      %v1005 = vsel %vm655, %v581, 0
      %v1008 = vsel %vm655, %v584, 0
      %v1011 = vsel %vm655, %v587, 0
      %v1014 = vsel %vm655, %v590, 0
      %v1017 = vsel %vm655, %v593, 0
      %v1020 = vsel %vm655, %v596, 0
      %v1023 = vsel %vm655, %v599, 0
      %v1026 = vsel %vm655, %v602, 0
      %v1029 = vsel %vm655, %v605, 0
      %v1032 = vsel %vm655, %v608, 0
      %v1035 = vsel %vm655, %v611, 0
      %v1038 = vsel %vm655, %v614, 0
      %1040 = vmatpush.msra.mxu0 %v630
      %1041 = vmatpush.msra.mxu0 %v629
      %1042 = vmatpush.msra.mxu0 %v628
      %1043 = vmatpush.msra.mxu0 %v627
      %1044 = vmatpush.msra.mxu0 %v626
      %1045 = vmatpush.msra.mxu0 %v625
      %1046 = vmatpush.msra.mxu0 %v624
      %1047 = vmatpush.msra.mxu0 %v623
      %1048 = vmatpush.msra.mxu0 %v622
      %1049 = vmatpush.msra.mxu0 %v621
      %1050 = vmatpush.msra.mxu0 %v620
      %1051 = vmatpush.msra.mxu0 %v619
      %1052 = vmatpush.msra.mxu0 %v618
      %1053 = vmatpush.msra.mxu0 %v617
      %1054 = vmatpush.msra.mxu0 %v616
      %1055 = vmatpush.msra.mxu0 %v615
      %1056 = vmatmul.f32.gmra.mxu0 %v231
      %v1057 = vpop.f32.mrf.mxu0
      %v1058 = vadd.f32 %v653, %v1057
      %1059 = vmatmul.f32.gmra.mxu0 %v234
      %v1060 = vpop.f32.mrf.mxu0
      %v1061 = vadd.f32 %v653, %v1060
      %1062 = vmatmul.f32.gmra.mxu0 %v237
      %v1063 = vpop.f32.mrf.mxu0
      %v1064 = vadd.f32 %v653, %v1063
      %1065 = vmatmul.f32.gmra.mxu0 %v240
      %v1066 = vpop.f32.mrf.mxu0
      %v1067 = vadd.f32 %v653, %v1066
      %1068 = vmatmul.f32.gmra.mxu0 %v243
      %v1069 = vpop.f32.mrf.mxu0
      %v1070 = vadd.f32 %v653, %v1069
      %1071 = vmatmul.f32.gmra.mxu0 %v246
      %v1072 = vpop.f32.mrf.mxu0
      %v1073 = vadd.f32 %v653, %v1072
      %1074 = vmatmul.f32.gmra.mxu0 %v249
      %v1075 = vpop.f32.mrf.mxu0
      %v1076 = vadd.f32 %v653, %v1075
      %1077 = vmatmul.f32.gmra.mxu0 %v252
      %v1078 = vpop.f32.mrf.mxu0
      %v1079 = vadd.f32 %v653, %v1078
      %1080 = vmatmul.f32.gmra.mxu0 %v255
      %v1081 = vpop.f32.mrf.mxu0
      %v1082 = vadd.f32 %v653, %v1081
      %1083 = vmatmul.f32.gmra.mxu0 %v258
      %v1084 = vpop.f32.mrf.mxu0
      %v1085 = vadd.f32 %v653, %v1084
      %1086 = vmatmul.f32.gmra.mxu0 %v261
      %v1087 = vpop.f32.mrf.mxu0
      %v1088 = vadd.f32 %v653, %v1087
      %1089 = vmatmul.f32.gmra.mxu0 %v264
      %v1090 = vpop.f32.mrf.mxu0
      %v1091 = vadd.f32 %v653, %v1090
      %1092 = vmatmul.f32.gmra.mxu0 %v267
      %v1093 = vpop.f32.mrf.mxu0
      %v1094 = vadd.f32 %v653, %v1093
      %1095 = vmatmul.f32.gmra.mxu0 %v270
      %v1096 = vpop.f32.mrf.mxu0
      %v1097 = vadd.f32 %v653, %v1096
      %1098 = vmatmul.f32.gmra.mxu0 %v273
      %v1099 = vpop.f32.mrf.mxu0
      %v1100 = vadd.f32 %v653, %v1099
      %1101 = vmatmul.f32.gmra.mxu0 %v276
      %v1102 = vpop.f32.mrf.mxu0
      %v1103 = vadd.f32 %v653, %v1102
      %1104 = vmatmul.f32.gmra.mxu0 %v279
      %v1105 = vpop.f32.mrf.mxu0
      %v1106 = vadd.f32 %v653, %v1105
      %1107 = vmatmul.f32.gmra.mxu0 %v282
      %v1108 = vpop.f32.mrf.mxu0
      %v1109 = vadd.f32 %v653, %v1108
      %1110 = vmatmul.f32.gmra.mxu0 %v285
      %v1111 = vpop.f32.mrf.mxu0
      %v1112 = vadd.f32 %v653, %v1111
      %1113 = vmatmul.f32.gmra.mxu0 %v288
      %v1114 = vpop.f32.mrf.mxu0
      %v1115 = vadd.f32 %v653, %v1114
      %1116 = vmatmul.f32.gmra.mxu0 %v291
      %v1117 = vpop.f32.mrf.mxu0
      %v1118 = vadd.f32 %v653, %v1117
      %1119 = vmatmul.f32.gmra.mxu0 %v294
      %v1120 = vpop.f32.mrf.mxu0
      %v1121 = vadd.f32 %v653, %v1120
      %1122 = vmatmul.f32.gmra.mxu0 %v297
      %v1123 = vpop.f32.mrf.mxu0
      %v1124 = vadd.f32 %v653, %v1123
      %1125 = vmatmul.f32.gmra.mxu0 %v300
      %v1126 = vpop.f32.mrf.mxu0
      %v1127 = vadd.f32 %v653, %v1126
      %1128 = vmatmul.f32.gmra.mxu0 %v303
      %v1129 = vpop.f32.mrf.mxu0
      %v1130 = vadd.f32 %v653, %v1129
      %1131 = vmatmul.f32.gmra.mxu0 %v306
      %v1132 = vpop.f32.mrf.mxu0
      %v1133 = vadd.f32 %v653, %v1132
      %1134 = vmatmul.f32.gmra.mxu0 %v309
      %v1135 = vpop.f32.mrf.mxu0
      %v1136 = vadd.f32 %v653, %v1135
      %1137 = vmatmul.f32.gmra.mxu0 %v312
      %v1138 = vpop.f32.mrf.mxu0
      %v1139 = vadd.f32 %v653, %v1138
      %1140 = vmatmul.f32.gmra.mxu0 %v315
      %v1141 = vpop.f32.mrf.mxu0
      %v1142 = vadd.f32 %v653, %v1141
      %1143 = vmatmul.f32.gmra.mxu0 %v318
      %v1144 = vpop.f32.mrf.mxu0
      %v1145 = vadd.f32 %v653, %v1144
      %1146 = vmatmul.f32.gmra.mxu0 %v321
      %v1147 = vpop.f32.mrf.mxu0
      %v1148 = vadd.f32 %v653, %v1147
      %1149 = vmatmul.f32.gmra.mxu0 %v324
      %v1150 = vpop.f32.mrf.mxu0
      %v1151 = vadd.f32 %v653, %v1150
      %1152 = vmatmul.f32.gmra.mxu0 %v327
      %v1153 = vpop.f32.mrf.mxu0
      %v1154 = vadd.f32 %v653, %v1153
      %1155 = vmatmul.f32.gmra.mxu0 %v330
      %v1156 = vpop.f32.mrf.mxu0
      %v1157 = vadd.f32 %v653, %v1156
      %1158 = vmatmul.f32.gmra.mxu0 %v333
      %v1159 = vpop.f32.mrf.mxu0
      %v1160 = vadd.f32 %v653, %v1159
      %1161 = vmatmul.f32.gmra.mxu0 %v336
      %v1162 = vpop.f32.mrf.mxu0
      %v1163 = vadd.f32 %v653, %v1162
      %1164 = vmatmul.f32.gmra.mxu0 %v339
      %v1165 = vpop.f32.mrf.mxu0
      %v1166 = vadd.f32 %v653, %v1165
      %1167 = vmatmul.f32.gmra.mxu0 %v342
      %v1168 = vpop.f32.mrf.mxu0
      %v1169 = vadd.f32 %v653, %v1168
      %1170 = vmatmul.f32.gmra.mxu0 %v345
      %v1171 = vpop.f32.mrf.mxu0
      %v1172 = vadd.f32 %v653, %v1171
      %1173 = vmatmul.f32.gmra.mxu0 %v348
      %v1174 = vpop.f32.mrf.mxu0
      %v1175 = vadd.f32 %v653, %v1174
      %1176 = vmatmul.f32.gmra.mxu0 %v351
      %v1177 = vpop.f32.mrf.mxu0
      %v1178 = vadd.f32 %v653, %v1177
      %1179 = vmatmul.f32.gmra.mxu0 %v354
      %v1180 = vpop.f32.mrf.mxu0
      %v1181 = vadd.f32 %v653, %v1180
      %1182 = vmatmul.f32.gmra.mxu0 %v357
      %v1183 = vpop.f32.mrf.mxu0
      %v1184 = vadd.f32 %v653, %v1183
      %1185 = vmatmul.f32.gmra.mxu0 %v360
      %v1186 = vpop.f32.mrf.mxu0
      %v1187 = vadd.f32 %v653, %v1186
      %1188 = vmatmul.f32.gmra.mxu0 %v363
      %v1189 = vpop.f32.mrf.mxu0
      %v1190 = vadd.f32 %v653, %v1189
      %1191 = vmatmul.f32.gmra.mxu0 %v366
      %v1192 = vpop.f32.mrf.mxu0
      %v1193 = vadd.f32 %v653, %v1192
      %1194 = vmatmul.f32.gmra.mxu0 %v369
      %v1195 = vpop.f32.mrf.mxu0
      %v1196 = vadd.f32 %v653, %v1195
      %1197 = vmatmul.f32.gmra.mxu0 %v372
      %v1198 = vpop.f32.mrf.mxu0
      %v1199 = vadd.f32 %v653, %v1198
      %1200 = vmatmul.f32.gmra.mxu0 %v375
      %v1201 = vpop.f32.mrf.mxu0
      %v1202 = vadd.f32 %v653, %v1201
      %1203 = vmatmul.f32.gmra.mxu0 %v378
      %v1204 = vpop.f32.mrf.mxu0
      %v1205 = vadd.f32 %v653, %v1204
      %1206 = vmatmul.f32.gmra.mxu0 %v381
      %v1207 = vpop.f32.mrf.mxu0
      %v1208 = vadd.f32 %v653, %v1207
      %1209 = vmatmul.f32.gmra.mxu0 %v384
      %v1210 = vpop.f32.mrf.mxu0
      %v1211 = vadd.f32 %v653, %v1210
      %1212 = vmatmul.f32.gmra.mxu0 %v387
      %v1213 = vpop.f32.mrf.mxu0
      %v1214 = vadd.f32 %v653, %v1213
      %1215 = vmatmul.f32.gmra.mxu0 %v390
      %v1216 = vpop.f32.mrf.mxu0
      %v1217 = vadd.f32 %v653, %v1216
      %1218 = vmatmul.f32.gmra.mxu0 %v393
      %v1219 = vpop.f32.mrf.mxu0
      %v1220 = vadd.f32 %v653, %v1219
      %1221 = vmatmul.f32.gmra.mxu0 %v396
      %v1222 = vpop.f32.mrf.mxu0
      %v1223 = vadd.f32 %v653, %v1222
      %1224 = vmatmul.f32.gmra.mxu0 %v399
      %v1225 = vpop.f32.mrf.mxu0
      %v1226 = vadd.f32 %v653, %v1225
      %1227 = vmatmul.f32.gmra.mxu0 %v402
      %v1228 = vpop.f32.mrf.mxu0
      %v1229 = vadd.f32 %v653, %v1228
      %1230 = vmatmul.f32.gmra.mxu0 %v405
      %v1231 = vpop.f32.mrf.mxu0
      %v1232 = vadd.f32 %v653, %v1231
      %1233 = vmatmul.f32.gmra.mxu0 %v408
      %v1234 = vpop.f32.mrf.mxu0
      %v1235 = vadd.f32 %v653, %v1234
      %1236 = vmatmul.f32.gmra.mxu0 %v411
      %v1237 = vpop.f32.mrf.mxu0
      %v1238 = vadd.f32 %v653, %v1237
      %1239 = vmatmul.f32.gmra.mxu0 %v414
      %v1240 = vpop.f32.mrf.mxu0
      %v1241 = vadd.f32 %v653, %v1240
      %1242 = vmatmul.f32.gmra.mxu0 %v417
      %v1243 = vpop.f32.mrf.mxu0
      %v1244 = vadd.f32 %v653, %v1243
      %1245 = vmatmul.f32.gmra.mxu0 %v420
      %v1246 = vpop.f32.mrf.mxu0
      %v1247 = vadd.f32 %v653, %v1246
      %1248 = vmatmul.f32.gmra.mxu0 %v423
      %v1249 = vpop.f32.mrf.mxu0
      %v1250 = vadd.f32 %v653, %v1249
      %1251 = vmatmul.f32.gmra.mxu0 %v426
      %v1252 = vpop.f32.mrf.mxu0
      %v1253 = vadd.f32 %v653, %v1252
      %1254 = vmatmul.f32.gmra.mxu0 %v429
      %v1255 = vpop.f32.mrf.mxu0
      %v1256 = vadd.f32 %v653, %v1255
      %1257 = vmatmul.f32.gmra.mxu0 %v432
      %v1258 = vpop.f32.mrf.mxu0
      %v1259 = vadd.f32 %v653, %v1258
      %1260 = vmatmul.f32.gmra.mxu0 %v435
      %v1261 = vpop.f32.mrf.mxu0
      %v1262 = vadd.f32 %v653, %v1261
      %1263 = vmatmul.f32.gmra.mxu0 %v438
      %v1264 = vpop.f32.mrf.mxu0
      %v1265 = vadd.f32 %v653, %v1264
      %1266 = vmatmul.f32.gmra.mxu0 %v441
      %v1267 = vpop.f32.mrf.mxu0
      %v1268 = vadd.f32 %v653, %v1267
      %1269 = vmatmul.f32.gmra.mxu0 %v444
      %v1270 = vpop.f32.mrf.mxu0
      %v1271 = vadd.f32 %v653, %v1270
      %1272 = vmatmul.f32.gmra.mxu0 %v447
      %v1273 = vpop.f32.mrf.mxu0
      %v1274 = vadd.f32 %v653, %v1273
      %1275 = vmatmul.f32.gmra.mxu0 %v450
      %v1276 = vpop.f32.mrf.mxu0
      %v1277 = vadd.f32 %v653, %v1276
      %1278 = vmatmul.f32.gmra.mxu0 %v453
      %v1279 = vpop.f32.mrf.mxu0
      %v1280 = vadd.f32 %v653, %v1279
      %1281 = vmatmul.f32.gmra.mxu0 %v456
      %v1282 = vpop.f32.mrf.mxu0
      %v1283 = vadd.f32 %v653, %v1282
      %1284 = vmatmul.f32.gmra.mxu0 %v459
      %v1285 = vpop.f32.mrf.mxu0
      %v1286 = vadd.f32 %v653, %v1285
      %1287 = vmatmul.f32.gmra.mxu0 %v462
      %v1288 = vpop.f32.mrf.mxu0
      %v1289 = vadd.f32 %v653, %v1288
      %1290 = vmatmul.f32.gmra.mxu0 %v465
      %v1291 = vpop.f32.mrf.mxu0
      %v1292 = vadd.f32 %v653, %v1291
      %1293 = vmatmul.f32.gmra.mxu0 %v468
      %v1294 = vpop.f32.mrf.mxu0
      %v1295 = vadd.f32 %v653, %v1294
      %1296 = vmatmul.f32.gmra.mxu0 %v471
      %v1297 = vpop.f32.mrf.mxu0
      %v1298 = vadd.f32 %v653, %v1297
      %1299 = vmatmul.f32.gmra.mxu0 %v474
      %v1300 = vpop.f32.mrf.mxu0
      %v1301 = vadd.f32 %v653, %v1300
      %1302 = vmatmul.f32.gmra.mxu0 %v477
      %v1303 = vpop.f32.mrf.mxu0
      %v1304 = vadd.f32 %v653, %v1303
      %1305 = vmatmul.f32.gmra.mxu0 %v480
      %v1306 = vpop.f32.mrf.mxu0
      %v1307 = vadd.f32 %v653, %v1306
      %1308 = vmatmul.f32.gmra.mxu0 %v483
      %v1309 = vpop.f32.mrf.mxu0
      %v1310 = vadd.f32 %v653, %v1309
      %1311 = vmatmul.f32.gmra.mxu0 %v486
      %v1312 = vpop.f32.mrf.mxu0
      %v1313 = vadd.f32 %v653, %v1312
      %1314 = vmatmul.f32.gmra.mxu0 %v489
      %v1315 = vpop.f32.mrf.mxu0
      %v1316 = vadd.f32 %v653, %v1315
      %1317 = vmatmul.f32.gmra.mxu0 %v492
      %v1318 = vpop.f32.mrf.mxu0
      %v1319 = vadd.f32 %v653, %v1318
      %1320 = vmatmul.f32.gmra.mxu0 %v495
      %v1321 = vpop.f32.mrf.mxu0
      %v1322 = vadd.f32 %v653, %v1321
      %1323 = vmatmul.f32.gmra.mxu0 %v498
      %v1324 = vpop.f32.mrf.mxu0
      %v1325 = vadd.f32 %v653, %v1324
      %1326 = vmatmul.f32.gmra.mxu0 %v501
      %v1327 = vpop.f32.mrf.mxu0
      %v1328 = vadd.f32 %v653, %v1327
      %1329 = vmatmul.f32.gmra.mxu0 %v504
      %v1330 = vpop.f32.mrf.mxu0
      %v1331 = vadd.f32 %v653, %v1330
      %1332 = vmatmul.f32.gmra.mxu0 %v507
      %v1333 = vpop.f32.mrf.mxu0
      %v1334 = vadd.f32 %v653, %v1333
      %1335 = vmatmul.f32.gmra.mxu0 %v510
      %v1336 = vpop.f32.mrf.mxu0
      %v1337 = vadd.f32 %v653, %v1336
      %1338 = vmatmul.f32.gmra.mxu0 %v513
      %v1339 = vpop.f32.mrf.mxu0
      %v1340 = vadd.f32 %v653, %v1339
      %1341 = vmatmul.f32.gmra.mxu0 %v516
      %v1342 = vpop.f32.mrf.mxu0
      %v1343 = vadd.f32 %v653, %v1342
      %1344 = vmatmul.f32.gmra.mxu0 %v519
      %v1345 = vpop.f32.mrf.mxu0
      %v1346 = vadd.f32 %v653, %v1345
      %1347 = vmatmul.f32.gmra.mxu0 %v522
      %v1348 = vpop.f32.mrf.mxu0
      %v1349 = vadd.f32 %v653, %v1348
      %1350 = vmatmul.f32.gmra.mxu0 %v525
      %v1351 = vpop.f32.mrf.mxu0
      %v1352 = vadd.f32 %v653, %v1351
      %1353 = vmatmul.f32.gmra.mxu0 %v528
      %v1354 = vpop.f32.mrf.mxu0
      %v1355 = vadd.f32 %v653, %v1354
      %1356 = vmatmul.f32.gmra.mxu0 %v531
      %v1357 = vpop.f32.mrf.mxu0
      %v1358 = vadd.f32 %v653, %v1357
      %1359 = vmatmul.f32.gmra.mxu0 %v534
      %v1360 = vpop.f32.mrf.mxu0
      %v1361 = vadd.f32 %v653, %v1360
      %1362 = vmatmul.f32.gmra.mxu0 %v537
      %v1363 = vpop.f32.mrf.mxu0
      %v1364 = vadd.f32 %v653, %v1363
      %1365 = vmatmul.f32.gmra.mxu0 %v540
      %v1366 = vpop.f32.mrf.mxu0
      %v1367 = vadd.f32 %v653, %v1366
      %1368 = vmatmul.f32.gmra.mxu0 %v543
      %v1369 = vpop.f32.mrf.mxu0
      %v1370 = vadd.f32 %v653, %v1369
      %1371 = vmatmul.f32.gmra.mxu0 %v546
      %v1372 = vpop.f32.mrf.mxu0
      %v1373 = vadd.f32 %v653, %v1372
      %1374 = vmatmul.f32.gmra.mxu0 %v549
      %v1375 = vpop.f32.mrf.mxu0
      %v1376 = vadd.f32 %v653, %v1375
      %1377 = vmatmul.f32.gmra.mxu0 %v552
      %v1378 = vpop.f32.mrf.mxu0
      %v1379 = vadd.f32 %v653, %v1378
      %1380 = vmatmul.f32.gmra.mxu0 %v555
      %v1381 = vpop.f32.mrf.mxu0
      %v1382 = vadd.f32 %v653, %v1381
      %1383 = vmatmul.f32.gmra.mxu0 %v558
      %v1384 = vpop.f32.mrf.mxu0
      %v1385 = vadd.f32 %v653, %v1384
      %1386 = vmatmul.f32.gmra.mxu0 %v561
      %v1387 = vpop.f32.mrf.mxu0
      %v1388 = vadd.f32 %v653, %v1387
      %1389 = vmatmul.f32.gmra.mxu0 %v564
      %v1390 = vpop.f32.mrf.mxu0
      %v1391 = vadd.f32 %v653, %v1390
      %1392 = vmatmul.f32.gmra.mxu0 %v567
      %v1393 = vpop.f32.mrf.mxu0
      %v1394 = vadd.f32 %v653, %v1393
      %1395 = vmatmul.f32.gmra.mxu0 %v570
      %v1396 = vpop.f32.mrf.mxu0
      %v1397 = vadd.f32 %v653, %v1396
      %1398 = vmatmul.f32.gmra.mxu0 %v573
      %v1399 = vpop.f32.mrf.mxu0
      %v1400 = vadd.f32 %v653, %v1399
      %1401 = vmatmul.f32.gmra.mxu0 %v576
      %v1402 = vpop.f32.mrf.mxu0
      %v1403 = vadd.f32 %v653, %v1402
      %1404 = vmatmul.f32.gmra.mxu0 %v579
      %v1405 = vpop.f32.mrf.mxu0
      %v1406 = vadd.f32 %v653, %v1405
      %1407 = vmatmul.f32.gmra.mxu0 %v582
      %v1408 = vpop.f32.mrf.mxu0
      %v1409 = vadd.f32 %v653, %v1408
      %1410 = vmatmul.f32.gmra.mxu0 %v585
      %v1411 = vpop.f32.mrf.mxu0
      %v1412 = vadd.f32 %v653, %v1411
      %1413 = vmatmul.f32.gmra.mxu0 %v588
      %v1414 = vpop.f32.mrf.mxu0
      %v1415 = vadd.f32 %v653, %v1414
      %1416 = vmatmul.f32.gmra.mxu0 %v591
      %v1417 = vpop.f32.mrf.mxu0
      %v1418 = vadd.f32 %v653, %v1417
      %1419 = vmatmul.f32.gmra.mxu0 %v594
      %v1420 = vpop.f32.mrf.mxu0
      %v1421 = vadd.f32 %v653, %v1420
      %1422 = vmatmul.f32.gmra.mxu0 %v597
      %v1423 = vpop.f32.mrf.mxu0
      %v1424 = vadd.f32 %v653, %v1423
      %1425 = vmatmul.f32.gmra.mxu0 %v600
      %v1426 = vpop.f32.mrf.mxu0
      %v1427 = vadd.f32 %v653, %v1426
      %1428 = vmatmul.f32.gmra.mxu0 %v603
      %v1429 = vpop.f32.mrf.mxu0
      %v1430 = vadd.f32 %v653, %v1429
      %1431 = vmatmul.f32.gmra.mxu0 %v606
      %v1432 = vpop.f32.mrf.mxu0
      %v1433 = vadd.f32 %v653, %v1432
      %1434 = vmatmul.f32.gmra.mxu0 %v609
      %v1435 = vpop.f32.mrf.mxu0
      %v1436 = vadd.f32 %v653, %v1435
      %1437 = vmatmul.f32.gmra.mxu0 %v612
      %v1438 = vpop.f32.mrf.mxu0
      %v1439 = vadd.f32 %v653, %v1438
      %1440 = vdwg.mxu0
      %1441 = vmatpush.msra.mxu0 %v646
      %1442 = vmatpush.msra.mxu0 %v645
      %1443 = vmatpush.msra.mxu0 %v644
      %1444 = vmatpush.msra.mxu0 %v643
      %1445 = vmatpush.msra.mxu0 %v642
      %1446 = vmatpush.msra.mxu0 %v641
      %1447 = vmatpush.msra.mxu0 %v640
      %1448 = vmatpush.msra.mxu0 %v639
      %1449 = vmatpush.msra.mxu0 %v638
      %1450 = vmatpush.msra.mxu0 %v637
      %1451 = vmatpush.msra.mxu0 %v636
      %1452 = vmatpush.msra.mxu0 %v635
      %1453 = vmatpush.msra.mxu0 %v634
      %1454 = vmatpush.msra.mxu0 %v633
      %1455 = vmatpush.msra.mxu0 %v632
      %1456 = vmatpush.msra.mxu0 %v631
      %1457 = vmatmul.f32.gmra.mxu0 %v232
      %v1458 = vpop.f32.mrf.mxu0
      %v1459 = vadd.f32 %v1058, %v1458
      %1460 = vmatmul.f32.gmra.mxu0 %v235
      %v1461 = vpop.f32.mrf.mxu0
      %v1462 = vadd.f32 %v1061, %v1461
      %1463 = vmatmul.f32.gmra.mxu0 %v238
      %v1464 = vpop.f32.mrf.mxu0
      %v1465 = vadd.f32 %v1064, %v1464
      %1466 = vmatmul.f32.gmra.mxu0 %v241
      %v1467 = vpop.f32.mrf.mxu0
      %v1468 = vadd.f32 %v1067, %v1467
      %1469 = vmatmul.f32.gmra.mxu0 %v244
      %v1470 = vpop.f32.mrf.mxu0
      %v1471 = vadd.f32 %v1070, %v1470
      %1472 = vmatmul.f32.gmra.mxu0 %v247
      %v1473 = vpop.f32.mrf.mxu0
      %v1474 = vadd.f32 %v1073, %v1473
      %1475 = vmatmul.f32.gmra.mxu0 %v250
      %v1476 = vpop.f32.mrf.mxu0
      %v1477 = vadd.f32 %v1076, %v1476
      %1478 = vmatmul.f32.gmra.mxu0 %v253
      %v1479 = vpop.f32.mrf.mxu0
      %v1480 = vadd.f32 %v1079, %v1479
      %1481 = vmatmul.f32.gmra.mxu0 %v256
      %v1482 = vpop.f32.mrf.mxu0
      %v1483 = vadd.f32 %v1082, %v1482
      %1484 = vmatmul.f32.gmra.mxu0 %v259
      %v1485 = vpop.f32.mrf.mxu0
      %v1486 = vadd.f32 %v1085, %v1485
      %1487 = vmatmul.f32.gmra.mxu0 %v262
      %v1488 = vpop.f32.mrf.mxu0
      %v1489 = vadd.f32 %v1088, %v1488
      %1490 = vmatmul.f32.gmra.mxu0 %v265
      %v1491 = vpop.f32.mrf.mxu0
      %v1492 = vadd.f32 %v1091, %v1491
      %1493 = vmatmul.f32.gmra.mxu0 %v268
      %v1494 = vpop.f32.mrf.mxu0
      %v1495 = vadd.f32 %v1094, %v1494
      %1496 = vmatmul.f32.gmra.mxu0 %v271
      %v1497 = vpop.f32.mrf.mxu0
      %v1498 = vadd.f32 %v1097, %v1497
      %1499 = vmatmul.f32.gmra.mxu0 %v274
      %v1500 = vpop.f32.mrf.mxu0
      %v1501 = vadd.f32 %v1100, %v1500
      %1502 = vmatmul.f32.gmra.mxu0 %v277
      %v1503 = vpop.f32.mrf.mxu0
      %v1504 = vadd.f32 %v1103, %v1503
      %1505 = vmatmul.f32.gmra.mxu0 %v280
      %v1506 = vpop.f32.mrf.mxu0
      %v1507 = vadd.f32 %v1106, %v1506
      %1508 = vmatmul.f32.gmra.mxu0 %v283
      %v1509 = vpop.f32.mrf.mxu0
      %v1510 = vadd.f32 %v1109, %v1509
      %1511 = vmatmul.f32.gmra.mxu0 %v286
      %v1512 = vpop.f32.mrf.mxu0
      %v1513 = vadd.f32 %v1112, %v1512
      %1514 = vmatmul.f32.gmra.mxu0 %v289
      %v1515 = vpop.f32.mrf.mxu0
      %v1516 = vadd.f32 %v1115, %v1515
      %1517 = vmatmul.f32.gmra.mxu0 %v292
      %v1518 = vpop.f32.mrf.mxu0
      %v1519 = vadd.f32 %v1118, %v1518
      %1520 = vmatmul.f32.gmra.mxu0 %v295
      %v1521 = vpop.f32.mrf.mxu0
      %v1522 = vadd.f32 %v1121, %v1521
      %1523 = vmatmul.f32.gmra.mxu0 %v298
      %v1524 = vpop.f32.mrf.mxu0
      %v1525 = vadd.f32 %v1124, %v1524
      %1526 = vmatmul.f32.gmra.mxu0 %v301
      %v1527 = vpop.f32.mrf.mxu0
      %v1528 = vadd.f32 %v1127, %v1527
      %1529 = vmatmul.f32.gmra.mxu0 %v304
      %v1530 = vpop.f32.mrf.mxu0
      %v1531 = vadd.f32 %v1130, %v1530
      %1532 = vmatmul.f32.gmra.mxu0 %v307
      %v1533 = vpop.f32.mrf.mxu0
      %v1534 = vadd.f32 %v1133, %v1533
      %1535 = vmatmul.f32.gmra.mxu0 %v310
      %v1536 = vpop.f32.mrf.mxu0
      %v1537 = vadd.f32 %v1136, %v1536
      %1538 = vmatmul.f32.gmra.mxu0 %v313
      %v1539 = vpop.f32.mrf.mxu0
      %v1540 = vadd.f32 %v1139, %v1539
      %1541 = vmatmul.f32.gmra.mxu0 %v316
      %v1542 = vpop.f32.mrf.mxu0
      %v1543 = vadd.f32 %v1142, %v1542
      %1544 = vmatmul.f32.gmra.mxu0 %v319
      %v1545 = vpop.f32.mrf.mxu0
      %v1546 = vadd.f32 %v1145, %v1545
      %1547 = vmatmul.f32.gmra.mxu0 %v322
      %v1548 = vpop.f32.mrf.mxu0
      %v1549 = vadd.f32 %v1148, %v1548
      %1550 = vmatmul.f32.gmra.mxu0 %v325
      %v1551 = vpop.f32.mrf.mxu0
      %v1552 = vadd.f32 %v1151, %v1551
      %1553 = vmatmul.f32.gmra.mxu0 %v328
      %v1554 = vpop.f32.mrf.mxu0
      %v1555 = vadd.f32 %v1154, %v1554
      %1556 = vmatmul.f32.gmra.mxu0 %v331
      %v1557 = vpop.f32.mrf.mxu0
      %v1558 = vadd.f32 %v1157, %v1557
      %1559 = vmatmul.f32.gmra.mxu0 %v334
      %v1560 = vpop.f32.mrf.mxu0
      %v1561 = vadd.f32 %v1160, %v1560
      %1562 = vmatmul.f32.gmra.mxu0 %v337
      %v1563 = vpop.f32.mrf.mxu0
      %v1564 = vadd.f32 %v1163, %v1563
      %1565 = vmatmul.f32.gmra.mxu0 %v340
      %v1566 = vpop.f32.mrf.mxu0
      %v1567 = vadd.f32 %v1166, %v1566
      %1568 = vmatmul.f32.gmra.mxu0 %v343
      %v1569 = vpop.f32.mrf.mxu0
      %v1570 = vadd.f32 %v1169, %v1569
      %1571 = vmatmul.f32.gmra.mxu0 %v346
      %v1572 = vpop.f32.mrf.mxu0
      %v1573 = vadd.f32 %v1172, %v1572
      %1574 = vmatmul.f32.gmra.mxu0 %v349
      %v1575 = vpop.f32.mrf.mxu0
      %v1576 = vadd.f32 %v1175, %v1575
      %1577 = vmatmul.f32.gmra.mxu0 %v352
      %v1578 = vpop.f32.mrf.mxu0
      %v1579 = vadd.f32 %v1178, %v1578
      %1580 = vmatmul.f32.gmra.mxu0 %v355
      %v1581 = vpop.f32.mrf.mxu0
      %v1582 = vadd.f32 %v1181, %v1581
      %1583 = vmatmul.f32.gmra.mxu0 %v358
      %v1584 = vpop.f32.mrf.mxu0
      %v1585 = vadd.f32 %v1184, %v1584
      %1586 = vmatmul.f32.gmra.mxu0 %v361
      %v1587 = vpop.f32.mrf.mxu0
      %v1588 = vadd.f32 %v1187, %v1587
      %1589 = vmatmul.f32.gmra.mxu0 %v364
      %v1590 = vpop.f32.mrf.mxu0
      %v1591 = vadd.f32 %v1190, %v1590
      %1592 = vmatmul.f32.gmra.mxu0 %v367
      %v1593 = vpop.f32.mrf.mxu0
      %v1594 = vadd.f32 %v1193, %v1593
      %1595 = vmatmul.f32.gmra.mxu0 %v370
      %v1596 = vpop.f32.mrf.mxu0
      %v1597 = vadd.f32 %v1196, %v1596
      %1598 = vmatmul.f32.gmra.mxu0 %v373
      %v1599 = vpop.f32.mrf.mxu0
      %v1600 = vadd.f32 %v1199, %v1599
      %1601 = vmatmul.f32.gmra.mxu0 %v376
      %v1602 = vpop.f32.mrf.mxu0
      %v1603 = vadd.f32 %v1202, %v1602
      %1604 = vmatmul.f32.gmra.mxu0 %v379
      %v1605 = vpop.f32.mrf.mxu0
      %v1606 = vadd.f32 %v1205, %v1605
      %1607 = vmatmul.f32.gmra.mxu0 %v382
      %v1608 = vpop.f32.mrf.mxu0
      %v1609 = vadd.f32 %v1208, %v1608
      %1610 = vmatmul.f32.gmra.mxu0 %v385
      %v1611 = vpop.f32.mrf.mxu0
      %v1612 = vadd.f32 %v1211, %v1611
      %1613 = vmatmul.f32.gmra.mxu0 %v388
      %v1614 = vpop.f32.mrf.mxu0
      %v1615 = vadd.f32 %v1214, %v1614
      %1616 = vmatmul.f32.gmra.mxu0 %v391
      %v1617 = vpop.f32.mrf.mxu0
      %v1618 = vadd.f32 %v1217, %v1617
      %1619 = vmatmul.f32.gmra.mxu0 %v394
      %v1620 = vpop.f32.mrf.mxu0
      %v1621 = vadd.f32 %v1220, %v1620
      %1622 = vmatmul.f32.gmra.mxu0 %v397
      %v1623 = vpop.f32.mrf.mxu0
      %v1624 = vadd.f32 %v1223, %v1623
      %1625 = vmatmul.f32.gmra.mxu0 %v400
      %v1626 = vpop.f32.mrf.mxu0
      %v1627 = vadd.f32 %v1226, %v1626
      %1628 = vmatmul.f32.gmra.mxu0 %v403
      %v1629 = vpop.f32.mrf.mxu0
      %v1630 = vadd.f32 %v1229, %v1629
      %1631 = vmatmul.f32.gmra.mxu0 %v406
      %v1632 = vpop.f32.mrf.mxu0
      %v1633 = vadd.f32 %v1232, %v1632
      %1634 = vmatmul.f32.gmra.mxu0 %v409
      %v1635 = vpop.f32.mrf.mxu0
      %v1636 = vadd.f32 %v1235, %v1635
      %1637 = vmatmul.f32.gmra.mxu0 %v412
      %v1638 = vpop.f32.mrf.mxu0
      %v1639 = vadd.f32 %v1238, %v1638
      %1640 = vmatmul.f32.gmra.mxu0 %v415
      %v1641 = vpop.f32.mrf.mxu0
      %v1642 = vadd.f32 %v1241, %v1641
      %1643 = vmatmul.f32.gmra.mxu0 %v418
      %v1644 = vpop.f32.mrf.mxu0
      %v1645 = vadd.f32 %v1244, %v1644
      %1646 = vmatmul.f32.gmra.mxu0 %v421
      %v1647 = vpop.f32.mrf.mxu0
      %v1648 = vadd.f32 %v1247, %v1647
      %1649 = vmatmul.f32.gmra.mxu0 %v424
      %v1650 = vpop.f32.mrf.mxu0
      %v1651 = vadd.f32 %v1250, %v1650
      %1652 = vmatmul.f32.gmra.mxu0 %v427
      %v1653 = vpop.f32.mrf.mxu0
      %v1654 = vadd.f32 %v1253, %v1653
      %1655 = vmatmul.f32.gmra.mxu0 %v430
      %v1656 = vpop.f32.mrf.mxu0
      %v1657 = vadd.f32 %v1256, %v1656
      %1658 = vmatmul.f32.gmra.mxu0 %v433
      %v1659 = vpop.f32.mrf.mxu0
      %v1660 = vadd.f32 %v1259, %v1659
      %1661 = vmatmul.f32.gmra.mxu0 %v436
      %v1662 = vpop.f32.mrf.mxu0
      %v1663 = vadd.f32 %v1262, %v1662
      %1664 = vmatmul.f32.gmra.mxu0 %v439
      %v1665 = vpop.f32.mrf.mxu0
      %v1666 = vadd.f32 %v1265, %v1665
      %1667 = vmatmul.f32.gmra.mxu0 %v442
      %v1668 = vpop.f32.mrf.mxu0
      %v1669 = vadd.f32 %v1268, %v1668
      %1670 = vmatmul.f32.gmra.mxu0 %v445
      %v1671 = vpop.f32.mrf.mxu0
      %v1672 = vadd.f32 %v1271, %v1671
      %1673 = vmatmul.f32.gmra.mxu0 %v448
      %v1674 = vpop.f32.mrf.mxu0
      %v1675 = vadd.f32 %v1274, %v1674
      %1676 = vmatmul.f32.gmra.mxu0 %v451
      %v1677 = vpop.f32.mrf.mxu0
      %v1678 = vadd.f32 %v1277, %v1677
      %1679 = vmatmul.f32.gmra.mxu0 %v454
      %v1680 = vpop.f32.mrf.mxu0
      %v1681 = vadd.f32 %v1280, %v1680
      %1682 = vmatmul.f32.gmra.mxu0 %v457
      %v1683 = vpop.f32.mrf.mxu0
      %v1684 = vadd.f32 %v1283, %v1683
      %1685 = vmatmul.f32.gmra.mxu0 %v460
      %v1686 = vpop.f32.mrf.mxu0
      %v1687 = vadd.f32 %v1286, %v1686
      %1688 = vmatmul.f32.gmra.mxu0 %v463
      %v1689 = vpop.f32.mrf.mxu0
      %v1690 = vadd.f32 %v1289, %v1689
      %1691 = vmatmul.f32.gmra.mxu0 %v466
      %v1692 = vpop.f32.mrf.mxu0
      %v1693 = vadd.f32 %v1292, %v1692
      %1694 = vmatmul.f32.gmra.mxu0 %v469
      %v1695 = vpop.f32.mrf.mxu0
      %v1696 = vadd.f32 %v1295, %v1695
      %1697 = vmatmul.f32.gmra.mxu0 %v472
      %v1698 = vpop.f32.mrf.mxu0
      %v1699 = vadd.f32 %v1298, %v1698
      %1700 = vmatmul.f32.gmra.mxu0 %v475
      %v1701 = vpop.f32.mrf.mxu0
      %v1702 = vadd.f32 %v1301, %v1701
      %1703 = vmatmul.f32.gmra.mxu0 %v478
      %v1704 = vpop.f32.mrf.mxu0
      %v1705 = vadd.f32 %v1304, %v1704
      %1706 = vmatmul.f32.gmra.mxu0 %v481
      %v1707 = vpop.f32.mrf.mxu0
      %v1708 = vadd.f32 %v1307, %v1707
      %1709 = vmatmul.f32.gmra.mxu0 %v484
      %v1710 = vpop.f32.mrf.mxu0
      %v1711 = vadd.f32 %v1310, %v1710
      %1712 = vmatmul.f32.gmra.mxu0 %v487
      %v1713 = vpop.f32.mrf.mxu0
      %v1714 = vadd.f32 %v1313, %v1713
      %1715 = vmatmul.f32.gmra.mxu0 %v490
      %v1716 = vpop.f32.mrf.mxu0
      %v1717 = vadd.f32 %v1316, %v1716
      %1718 = vmatmul.f32.gmra.mxu0 %v493
      %v1719 = vpop.f32.mrf.mxu0
      %v1720 = vadd.f32 %v1319, %v1719
      %1721 = vmatmul.f32.gmra.mxu0 %v496
      %v1722 = vpop.f32.mrf.mxu0
      %v1723 = vadd.f32 %v1322, %v1722
      %1724 = vmatmul.f32.gmra.mxu0 %v499
      %v1725 = vpop.f32.mrf.mxu0
      %v1726 = vadd.f32 %v1325, %v1725
      %1727 = vmatmul.f32.gmra.mxu0 %v502
      %v1728 = vpop.f32.mrf.mxu0
      %v1729 = vadd.f32 %v1328, %v1728
      %1730 = vmatmul.f32.gmra.mxu0 %v505
      %v1731 = vpop.f32.mrf.mxu0
      %v1732 = vadd.f32 %v1331, %v1731
      %1733 = vmatmul.f32.gmra.mxu0 %v508
      %v1734 = vpop.f32.mrf.mxu0
      %v1735 = vadd.f32 %v1334, %v1734
      %1736 = vmatmul.f32.gmra.mxu0 %v511
      %v1737 = vpop.f32.mrf.mxu0
      %v1738 = vadd.f32 %v1337, %v1737
      %1739 = vmatmul.f32.gmra.mxu0 %v514
      %v1740 = vpop.f32.mrf.mxu0
      %v1741 = vadd.f32 %v1340, %v1740
      %1742 = vmatmul.f32.gmra.mxu0 %v517
      %v1743 = vpop.f32.mrf.mxu0
      %v1744 = vadd.f32 %v1343, %v1743
      %1745 = vmatmul.f32.gmra.mxu0 %v520
      %v1746 = vpop.f32.mrf.mxu0
      %v1747 = vadd.f32 %v1346, %v1746
      %1748 = vmatmul.f32.gmra.mxu0 %v523
      %v1749 = vpop.f32.mrf.mxu0
      %v1750 = vadd.f32 %v1349, %v1749
      %1751 = vmatmul.f32.gmra.mxu0 %v526
      %v1752 = vpop.f32.mrf.mxu0
      %v1753 = vadd.f32 %v1352, %v1752
      %1754 = vmatmul.f32.gmra.mxu0 %v529
      %v1755 = vpop.f32.mrf.mxu0
      %v1756 = vadd.f32 %v1355, %v1755
      %1757 = vmatmul.f32.gmra.mxu0 %v532
      %v1758 = vpop.f32.mrf.mxu0
      %v1759 = vadd.f32 %v1358, %v1758
      %1760 = vmatmul.f32.gmra.mxu0 %v535
      %v1761 = vpop.f32.mrf.mxu0
      %v1762 = vadd.f32 %v1361, %v1761
      %1763 = vmatmul.f32.gmra.mxu0 %v538
      %v1764 = vpop.f32.mrf.mxu0
      %v1765 = vadd.f32 %v1364, %v1764
      %1766 = vmatmul.f32.gmra.mxu0 %v541
      %v1767 = vpop.f32.mrf.mxu0
      %v1768 = vadd.f32 %v1367, %v1767
      %1769 = vmatmul.f32.gmra.mxu0 %v544
      %v1770 = vpop.f32.mrf.mxu0
      %v1771 = vadd.f32 %v1370, %v1770
      %1772 = vmatmul.f32.gmra.mxu0 %v547
      %v1773 = vpop.f32.mrf.mxu0
      %v1774 = vadd.f32 %v1373, %v1773
      %1775 = vmatmul.f32.gmra.mxu0 %v550
      %v1776 = vpop.f32.mrf.mxu0
      %v1777 = vadd.f32 %v1376, %v1776
      %1778 = vmatmul.f32.gmra.mxu0 %v553
      %v1779 = vpop.f32.mrf.mxu0
      %v1780 = vadd.f32 %v1379, %v1779
      %1781 = vmatmul.f32.gmra.mxu0 %v556
      %v1782 = vpop.f32.mrf.mxu0
      %v1783 = vadd.f32 %v1382, %v1782
      %1784 = vmatmul.f32.gmra.mxu0 %v559
      %v1785 = vpop.f32.mrf.mxu0
      %v1786 = vadd.f32 %v1385, %v1785
      %1787 = vmatmul.f32.gmra.mxu0 %v562
      %v1788 = vpop.f32.mrf.mxu0
      %v1789 = vadd.f32 %v1388, %v1788
      %1790 = vmatmul.f32.gmra.mxu0 %v565
      %v1791 = vpop.f32.mrf.mxu0
      %v1792 = vadd.f32 %v1391, %v1791
      %1793 = vmatmul.f32.gmra.mxu0 %v568
      %v1794 = vpop.f32.mrf.mxu0
      %v1795 = vadd.f32 %v1394, %v1794
      %1796 = vmatmul.f32.gmra.mxu0 %v571
      %v1797 = vpop.f32.mrf.mxu0
      %v1798 = vadd.f32 %v1397, %v1797
      %1799 = vmatmul.f32.gmra.mxu0 %v574
      %v1800 = vpop.f32.mrf.mxu0
      %v1801 = vadd.f32 %v1400, %v1800
      %1802 = vmatmul.f32.gmra.mxu0 %v577
      %v1803 = vpop.f32.mrf.mxu0
      %v1804 = vadd.f32 %v1403, %v1803
      %1805 = vmatmul.f32.gmra.mxu0 %v580
      %v1806 = vpop.f32.mrf.mxu0
      %v1807 = vadd.f32 %v1406, %v1806
      %1808 = vmatmul.f32.gmra.mxu0 %v583
      %v1809 = vpop.f32.mrf.mxu0
      %v1810 = vadd.f32 %v1409, %v1809
      %1811 = vmatmul.f32.gmra.mxu0 %v586
      %v1812 = vpop.f32.mrf.mxu0
      %v1813 = vadd.f32 %v1412, %v1812
      %1814 = vmatmul.f32.gmra.mxu0 %v589
      %v1815 = vpop.f32.mrf.mxu0
      %v1816 = vadd.f32 %v1415, %v1815
      %1817 = vmatmul.f32.gmra.mxu0 %v592
      %v1818 = vpop.f32.mrf.mxu0
      %v1819 = vadd.f32 %v1418, %v1818
      %1820 = vmatmul.f32.gmra.mxu0 %v595
      %v1821 = vpop.f32.mrf.mxu0
      %v1822 = vadd.f32 %v1421, %v1821
      %1823 = vmatmul.f32.gmra.mxu0 %v598
      %v1824 = vpop.f32.mrf.mxu0
      %v1825 = vadd.f32 %v1424, %v1824
      %1826 = vmatmul.f32.gmra.mxu0 %v601
      %v1827 = vpop.f32.mrf.mxu0
      %v1828 = vadd.f32 %v1427, %v1827
      %1829 = vmatmul.f32.gmra.mxu0 %v604
      %v1830 = vpop.f32.mrf.mxu0
      %v1831 = vadd.f32 %v1430, %v1830
      %1832 = vmatmul.f32.gmra.mxu0 %v607
      %v1833 = vpop.f32.mrf.mxu0
      %v1834 = vadd.f32 %v1433, %v1833
      %1835 = vmatmul.f32.gmra.mxu0 %v610
      %v1836 = vpop.f32.mrf.mxu0
      %v1837 = vadd.f32 %v1436, %v1836
      %1838 = vmatmul.f32.gmra.mxu0 %v613
      %v1839 = vpop.f32.mrf.mxu0
      %v1840 = vadd.f32 %v1439, %v1839
      %1841 = vdwg.mxu0
      %1842 = vmatpush.msra.mxu0 0.0
      %1843 = vmatpush.msra.mxu0 0.0
      %1844 = vmatpush.msra.mxu0 0.0
      %1845 = vmatpush.msra.mxu0 0.0
      %1846 = vmatpush.msra.mxu0 0.0
      %1847 = vmatpush.msra.mxu0 0.0
      %1848 = vmatpush.msra.mxu0 0.0
      %1849 = vmatpush.msra.mxu0 0.0
      %1850 = vmatpush.msra.mxu0 0.0
      %1851 = vmatpush.msra.mxu0 0.0
      %1852 = vmatpush.msra.mxu0 0.0
      %1853 = vmatpush.msra.mxu0 0.0
      %1854 = vmatpush.msra.mxu0 %v650
      %1855 = vmatpush.msra.mxu0 %v649
      %1856 = vmatpush.msra.mxu0 %v648
      %1857 = vmatpush.msra.mxu0 %v647
      %1858 = vmatmul.f32.gmra.mxu0 %v657
      %v1859 = vpop.f32.mrf.mxu0
      %v1860 = vadd.f32 %v1459, %v1859
      %1861 = vmatmul.f32.gmra.mxu0 %v660
      %v1862 = vpop.f32.mrf.mxu0
      %v1863 = vadd.f32 %v1462, %v1862
      %1864 = vmatmul.f32.gmra.mxu0 %v663
      %v1865 = vpop.f32.mrf.mxu0
      %v1866 = vadd.f32 %v1465, %v1865
      %1867 = vmatmul.f32.gmra.mxu0 %v666
      %v1868 = vpop.f32.mrf.mxu0
      %v1869 = vadd.f32 %v1468, %v1868
      %1870 = vmatmul.f32.gmra.mxu0 %v669
      %v1871 = vpop.f32.mrf.mxu0
      %v1872 = vadd.f32 %v1471, %v1871
      %1873 = vmatmul.f32.gmra.mxu0 %v672
      %v1874 = vpop.f32.mrf.mxu0
      %v1875 = vadd.f32 %v1474, %v1874
      %1876 = vmatmul.f32.gmra.mxu0 %v675
      %v1877 = vpop.f32.mrf.mxu0
      %v1878 = vadd.f32 %v1477, %v1877
      %1879 = vmatmul.f32.gmra.mxu0 %v678
      %v1880 = vpop.f32.mrf.mxu0
      %v1881 = vadd.f32 %v1480, %v1880
      %1882 = vmatmul.f32.gmra.mxu0 %v681
      %v1883 = vpop.f32.mrf.mxu0
      %v1884 = vadd.f32 %v1483, %v1883
      %1885 = vmatmul.f32.gmra.mxu0 %v684
      %v1886 = vpop.f32.mrf.mxu0
      %v1887 = vadd.f32 %v1486, %v1886
      %1888 = vmatmul.f32.gmra.mxu0 %v687
      %v1889 = vpop.f32.mrf.mxu0
      %v1890 = vadd.f32 %v1489, %v1889
      %1891 = vmatmul.f32.gmra.mxu0 %v690
      %v1892 = vpop.f32.mrf.mxu0
      %v1893 = vadd.f32 %v1492, %v1892
      %1894 = vmatmul.f32.gmra.mxu0 %v693
      %v1895 = vpop.f32.mrf.mxu0
      %v1896 = vadd.f32 %v1495, %v1895
      %1897 = vmatmul.f32.gmra.mxu0 %v696
      %v1898 = vpop.f32.mrf.mxu0
      %v1899 = vadd.f32 %v1498, %v1898
      %1900 = vmatmul.f32.gmra.mxu0 %v699
      %v1901 = vpop.f32.mrf.mxu0
      %v1902 = vadd.f32 %v1501, %v1901
      %1903 = vmatmul.f32.gmra.mxu0 %v702
      %v1904 = vpop.f32.mrf.mxu0
      %v1905 = vadd.f32 %v1504, %v1904
      %1906 = vmatmul.f32.gmra.mxu0 %v705
      %v1907 = vpop.f32.mrf.mxu0
      %v1908 = vadd.f32 %v1507, %v1907
      %1909 = vmatmul.f32.gmra.mxu0 %v708
      %v1910 = vpop.f32.mrf.mxu0
      %v1911 = vadd.f32 %v1510, %v1910
      %1912 = vmatmul.f32.gmra.mxu0 %v711
      %v1913 = vpop.f32.mrf.mxu0
      %v1914 = vadd.f32 %v1513, %v1913
      %1915 = vmatmul.f32.gmra.mxu0 %v714
      %v1916 = vpop.f32.mrf.mxu0
      %v1917 = vadd.f32 %v1516, %v1916
      %1918 = vmatmul.f32.gmra.mxu0 %v717
      %v1919 = vpop.f32.mrf.mxu0
      %v1920 = vadd.f32 %v1519, %v1919
      %1921 = vmatmul.f32.gmra.mxu0 %v720
      %v1922 = vpop.f32.mrf.mxu0
      %v1923 = vadd.f32 %v1522, %v1922
      %1924 = vmatmul.f32.gmra.mxu0 %v723
      %v1925 = vpop.f32.mrf.mxu0
      %v1926 = vadd.f32 %v1525, %v1925
      %1927 = vmatmul.f32.gmra.mxu0 %v726
      %v1928 = vpop.f32.mrf.mxu0
      %v1929 = vadd.f32 %v1528, %v1928
      %1930 = vmatmul.f32.gmra.mxu0 %v729
      %v1931 = vpop.f32.mrf.mxu0
      %v1932 = vadd.f32 %v1531, %v1931
      %1933 = vmatmul.f32.gmra.mxu0 %v732
      %v1934 = vpop.f32.mrf.mxu0
      %v1935 = vadd.f32 %v1534, %v1934
      %1936 = vmatmul.f32.gmra.mxu0 %v735
      %v1937 = vpop.f32.mrf.mxu0
      %v1938 = vadd.f32 %v1537, %v1937
      %1939 = vmatmul.f32.gmra.mxu0 %v738
      %v1940 = vpop.f32.mrf.mxu0
      %v1941 = vadd.f32 %v1540, %v1940
      %1942 = vmatmul.f32.gmra.mxu0 %v741
      %v1943 = vpop.f32.mrf.mxu0
      %v1944 = vadd.f32 %v1543, %v1943
      %1945 = vmatmul.f32.gmra.mxu0 %v744
      %v1946 = vpop.f32.mrf.mxu0
      %v1947 = vadd.f32 %v1546, %v1946
      %1948 = vmatmul.f32.gmra.mxu0 %v747
      %v1949 = vpop.f32.mrf.mxu0
      %v1950 = vadd.f32 %v1549, %v1949
      %1951 = vmatmul.f32.gmra.mxu0 %v750
      %v1952 = vpop.f32.mrf.mxu0
      %v1953 = vadd.f32 %v1552, %v1952
      %1954 = vmatmul.f32.gmra.mxu0 %v753
      %v1955 = vpop.f32.mrf.mxu0
      %v1956 = vadd.f32 %v1555, %v1955
      %1957 = vmatmul.f32.gmra.mxu0 %v756
      %v1958 = vpop.f32.mrf.mxu0
      %v1959 = vadd.f32 %v1558, %v1958
      %1960 = vmatmul.f32.gmra.mxu0 %v759
      %v1961 = vpop.f32.mrf.mxu0
      %v1962 = vadd.f32 %v1561, %v1961
      %1963 = vmatmul.f32.gmra.mxu0 %v762
      %v1964 = vpop.f32.mrf.mxu0
      %v1965 = vadd.f32 %v1564, %v1964
      %1966 = vmatmul.f32.gmra.mxu0 %v765
      %v1967 = vpop.f32.mrf.mxu0
      %v1968 = vadd.f32 %v1567, %v1967
      %1969 = vmatmul.f32.gmra.mxu0 %v768
      %v1970 = vpop.f32.mrf.mxu0
      %v1971 = vadd.f32 %v1570, %v1970
      %1972 = vmatmul.f32.gmra.mxu0 %v771
      %v1973 = vpop.f32.mrf.mxu0
      %v1974 = vadd.f32 %v1573, %v1973
      %1975 = vmatmul.f32.gmra.mxu0 %v774
      %v1976 = vpop.f32.mrf.mxu0
      %v1977 = vadd.f32 %v1576, %v1976
      %1978 = vmatmul.f32.gmra.mxu0 %v777
      %v1979 = vpop.f32.mrf.mxu0
      %v1980 = vadd.f32 %v1579, %v1979
      %1981 = vmatmul.f32.gmra.mxu0 %v780
      %v1982 = vpop.f32.mrf.mxu0
      %v1983 = vadd.f32 %v1582, %v1982
      %1984 = vmatmul.f32.gmra.mxu0 %v783
      %v1985 = vpop.f32.mrf.mxu0
      %v1986 = vadd.f32 %v1585, %v1985
      %1987 = vmatmul.f32.gmra.mxu0 %v786
      %v1988 = vpop.f32.mrf.mxu0
      %v1989 = vadd.f32 %v1588, %v1988
      %1990 = vmatmul.f32.gmra.mxu0 %v789
      %v1991 = vpop.f32.mrf.mxu0
      %v1992 = vadd.f32 %v1591, %v1991
      %1993 = vmatmul.f32.gmra.mxu0 %v792
      %v1994 = vpop.f32.mrf.mxu0
      %v1995 = vadd.f32 %v1594, %v1994
      %1996 = vmatmul.f32.gmra.mxu0 %v795
      %v1997 = vpop.f32.mrf.mxu0
      %v1998 = vadd.f32 %v1597, %v1997
      %1999 = vmatmul.f32.gmra.mxu0 %v798
      %v2000 = vpop.f32.mrf.mxu0
      %v2001 = vadd.f32 %v1600, %v2000
      %2002 = vmatmul.f32.gmra.mxu0 %v801
      %v2003 = vpop.f32.mrf.mxu0
      %v2004 = vadd.f32 %v1603, %v2003
      %2005 = vmatmul.f32.gmra.mxu0 %v804
      %v2006 = vpop.f32.mrf.mxu0
      %v2007 = vadd.f32 %v1606, %v2006
      %2008 = vmatmul.f32.gmra.mxu0 %v807
      %v2009 = vpop.f32.mrf.mxu0
      %v2010 = vadd.f32 %v1609, %v2009
      %2011 = vmatmul.f32.gmra.mxu0 %v810
      %v2012 = vpop.f32.mrf.mxu0
      %v2013 = vadd.f32 %v1612, %v2012
      %2014 = vmatmul.f32.gmra.mxu0 %v813
      %v2015 = vpop.f32.mrf.mxu0
      %v2016 = vadd.f32 %v1615, %v2015
      %2017 = vmatmul.f32.gmra.mxu0 %v816
      %v2018 = vpop.f32.mrf.mxu0
      %v2019 = vadd.f32 %v1618, %v2018
      %2020 = vmatmul.f32.gmra.mxu0 %v819
      %v2021 = vpop.f32.mrf.mxu0
      %v2022 = vadd.f32 %v1621, %v2021
      %2023 = vmatmul.f32.gmra.mxu0 %v822
      %v2024 = vpop.f32.mrf.mxu0
      %v2025 = vadd.f32 %v1624, %v2024
      %2026 = vmatmul.f32.gmra.mxu0 %v825
      %v2027 = vpop.f32.mrf.mxu0
      %v2028 = vadd.f32 %v1627, %v2027
      %2029 = vmatmul.f32.gmra.mxu0 %v828
      %v2030 = vpop.f32.mrf.mxu0
      %v2031 = vadd.f32 %v1630, %v2030
      %2032 = vmatmul.f32.gmra.mxu0 %v831
      %v2033 = vpop.f32.mrf.mxu0
      %v2034 = vadd.f32 %v1633, %v2033
      %2035 = vmatmul.f32.gmra.mxu0 %v834
      %v2036 = vpop.f32.mrf.mxu0
      %v2037 = vadd.f32 %v1636, %v2036
      %2038 = vmatmul.f32.gmra.mxu0 %v837
      %v2039 = vpop.f32.mrf.mxu0
      %v2040 = vadd.f32 %v1639, %v2039
      %2041 = vmatmul.f32.gmra.mxu0 %v840
      %v2042 = vpop.f32.mrf.mxu0
      %v2043 = vadd.f32 %v1642, %v2042
      %2044 = vmatmul.f32.gmra.mxu0 %v843
      %v2045 = vpop.f32.mrf.mxu0
      %v2046 = vadd.f32 %v1645, %v2045
      %2047 = vmatmul.f32.gmra.mxu0 %v846
      %v2048 = vpop.f32.mrf.mxu0
      %v2049 = vadd.f32 %v1648, %v2048
      %2050 = vmatmul.f32.gmra.mxu0 %v849
      %v2051 = vpop.f32.mrf.mxu0
      %v2052 = vadd.f32 %v1651, %v2051
      %2053 = vmatmul.f32.gmra.mxu0 %v852
      %v2054 = vpop.f32.mrf.mxu0
      %v2055 = vadd.f32 %v1654, %v2054
      %2056 = vmatmul.f32.gmra.mxu0 %v855
      %v2057 = vpop.f32.mrf.mxu0
      %v2058 = vadd.f32 %v1657, %v2057
      %2059 = vmatmul.f32.gmra.mxu0 %v858
      %v2060 = vpop.f32.mrf.mxu0
      %v2061 = vadd.f32 %v1660, %v2060
      %2062 = vmatmul.f32.gmra.mxu0 %v861
      %v2063 = vpop.f32.mrf.mxu0
      %v2064 = vadd.f32 %v1663, %v2063
      %2065 = vmatmul.f32.gmra.mxu0 %v864
      %v2066 = vpop.f32.mrf.mxu0
      %v2067 = vadd.f32 %v1666, %v2066
      %2068 = vmatmul.f32.gmra.mxu0 %v867
      %v2069 = vpop.f32.mrf.mxu0
      %v2070 = vadd.f32 %v1669, %v2069
      %2071 = vmatmul.f32.gmra.mxu0 %v870
      %v2072 = vpop.f32.mrf.mxu0
      %v2073 = vadd.f32 %v1672, %v2072
      %2074 = vmatmul.f32.gmra.mxu0 %v873
      %v2075 = vpop.f32.mrf.mxu0
      %v2076 = vadd.f32 %v1675, %v2075
      %2077 = vmatmul.f32.gmra.mxu0 %v876
      %v2078 = vpop.f32.mrf.mxu0
      %v2079 = vadd.f32 %v1678, %v2078
      %2080 = vmatmul.f32.gmra.mxu0 %v879
      %v2081 = vpop.f32.mrf.mxu0
      %v2082 = vadd.f32 %v1681, %v2081
      %2083 = vmatmul.f32.gmra.mxu0 %v882
      %v2084 = vpop.f32.mrf.mxu0
      %v2085 = vadd.f32 %v1684, %v2084
      %2086 = vmatmul.f32.gmra.mxu0 %v885
      %v2087 = vpop.f32.mrf.mxu0
      %v2088 = vadd.f32 %v1687, %v2087
      %2089 = vmatmul.f32.gmra.mxu0 %v888
      %v2090 = vpop.f32.mrf.mxu0
      %v2091 = vadd.f32 %v1690, %v2090
      %2092 = vmatmul.f32.gmra.mxu0 %v891
      %v2093 = vpop.f32.mrf.mxu0
      %v2094 = vadd.f32 %v1693, %v2093
      %2095 = vmatmul.f32.gmra.mxu0 %v894
      %v2096 = vpop.f32.mrf.mxu0
      %v2097 = vadd.f32 %v1696, %v2096
      %2098 = vmatmul.f32.gmra.mxu0 %v897
      %v2099 = vpop.f32.mrf.mxu0
      %v2100 = vadd.f32 %v1699, %v2099
      %2101 = vmatmul.f32.gmra.mxu0 %v900
      %v2102 = vpop.f32.mrf.mxu0
      %v2103 = vadd.f32 %v1702, %v2102
      %2104 = vmatmul.f32.gmra.mxu0 %v903
      %v2105 = vpop.f32.mrf.mxu0
      %v2106 = vadd.f32 %v1705, %v2105
      %2107 = vmatmul.f32.gmra.mxu0 %v906
      %v2108 = vpop.f32.mrf.mxu0
      %v2109 = vadd.f32 %v1708, %v2108
      %2110 = vmatmul.f32.gmra.mxu0 %v909
      %v2111 = vpop.f32.mrf.mxu0
      %v2112 = vadd.f32 %v1711, %v2111
      %2113 = vmatmul.f32.gmra.mxu0 %v912
      %v2114 = vpop.f32.mrf.mxu0
      %v2115 = vadd.f32 %v1714, %v2114
      %2116 = vmatmul.f32.gmra.mxu0 %v915
      %v2117 = vpop.f32.mrf.mxu0
      %v2118 = vadd.f32 %v1717, %v2117
      %2119 = vmatmul.f32.gmra.mxu0 %v918
      %v2120 = vpop.f32.mrf.mxu0
      %v2121 = vadd.f32 %v1720, %v2120
      %2122 = vmatmul.f32.gmra.mxu0 %v921
      %v2123 = vpop.f32.mrf.mxu0
      %v2124 = vadd.f32 %v1723, %v2123
      %2125 = vmatmul.f32.gmra.mxu0 %v924
      %v2126 = vpop.f32.mrf.mxu0
      %v2127 = vadd.f32 %v1726, %v2126
      %2128 = vmatmul.f32.gmra.mxu0 %v927
      %v2129 = vpop.f32.mrf.mxu0
      %v2130 = vadd.f32 %v1729, %v2129
      %2131 = vmatmul.f32.gmra.mxu0 %v930
      %v2132 = vpop.f32.mrf.mxu0
      %v2133 = vadd.f32 %v1732, %v2132
      %2134 = vmatmul.f32.gmra.mxu0 %v933
      %v2135 = vpop.f32.mrf.mxu0
      %v2136 = vadd.f32 %v1735, %v2135
      %2137 = vmatmul.f32.gmra.mxu0 %v936
      %v2138 = vpop.f32.mrf.mxu0
      %v2139 = vadd.f32 %v1738, %v2138
      %2140 = vmatmul.f32.gmra.mxu0 %v939
      %v2141 = vpop.f32.mrf.mxu0
      %v2142 = vadd.f32 %v1741, %v2141
      %2143 = vmatmul.f32.gmra.mxu0 %v942
      %v2144 = vpop.f32.mrf.mxu0
      %v2145 = vadd.f32 %v1744, %v2144
      %2146 = vmatmul.f32.gmra.mxu0 %v945
      %v2147 = vpop.f32.mrf.mxu0
      %v2148 = vadd.f32 %v1747, %v2147
      %2149 = vmatmul.f32.gmra.mxu0 %v948
      %v2150 = vpop.f32.mrf.mxu0
      %v2151 = vadd.f32 %v1750, %v2150
      %2152 = vmatmul.f32.gmra.mxu0 %v951
      %v2153 = vpop.f32.mrf.mxu0
      %v2154 = vadd.f32 %v1753, %v2153
      %2155 = vmatmul.f32.gmra.mxu0 %v954
      %v2156 = vpop.f32.mrf.mxu0
      %v2157 = vadd.f32 %v1756, %v2156
      %2158 = vmatmul.f32.gmra.mxu0 %v957
      %v2159 = vpop.f32.mrf.mxu0
      %v2160 = vadd.f32 %v1759, %v2159
      %2161 = vmatmul.f32.gmra.mxu0 %v960
      %v2162 = vpop.f32.mrf.mxu0
      %v2163 = vadd.f32 %v1762, %v2162
      %2164 = vmatmul.f32.gmra.mxu0 %v963
      %v2165 = vpop.f32.mrf.mxu0
      %v2166 = vadd.f32 %v1765, %v2165
      %2167 = vmatmul.f32.gmra.mxu0 %v966
      %v2168 = vpop.f32.mrf.mxu0
      %v2169 = vadd.f32 %v1768, %v2168
      %2170 = vmatmul.f32.gmra.mxu0 %v969
      %v2171 = vpop.f32.mrf.mxu0
      %v2172 = vadd.f32 %v1771, %v2171
      %2173 = vmatmul.f32.gmra.mxu0 %v972
      %v2174 = vpop.f32.mrf.mxu0
      %v2175 = vadd.f32 %v1774, %v2174
      %2176 = vmatmul.f32.gmra.mxu0 %v975
      %v2177 = vpop.f32.mrf.mxu0
      %v2178 = vadd.f32 %v1777, %v2177
      %2179 = vmatmul.f32.gmra.mxu0 %v978
      %v2180 = vpop.f32.mrf.mxu0
      %v2181 = vadd.f32 %v1780, %v2180
      %2182 = vmatmul.f32.gmra.mxu0 %v981
      %v2183 = vpop.f32.mrf.mxu0
      %v2184 = vadd.f32 %v1783, %v2183
      %2185 = vmatmul.f32.gmra.mxu0 %v984
      %v2186 = vpop.f32.mrf.mxu0
      %v2187 = vadd.f32 %v1786, %v2186
      %2188 = vmatmul.f32.gmra.mxu0 %v987
      %v2189 = vpop.f32.mrf.mxu0
      %v2190 = vadd.f32 %v1789, %v2189
      %2191 = vmatmul.f32.gmra.mxu0 %v990
      %v2192 = vpop.f32.mrf.mxu0
      %v2193 = vadd.f32 %v1792, %v2192
      %2194 = vmatmul.f32.gmra.mxu0 %v993
      %v2195 = vpop.f32.mrf.mxu0
      %v2196 = vadd.f32 %v1795, %v2195
      %2197 = vmatmul.f32.gmra.mxu0 %v996
      %v2198 = vpop.f32.mrf.mxu0
      %v2199 = vadd.f32 %v1798, %v2198
      %2200 = vmatmul.f32.gmra.mxu0 %v999
      %v2201 = vpop.f32.mrf.mxu0
      %v2202 = vadd.f32 %v1801, %v2201
      %2203 = vmatmul.f32.gmra.mxu0 %v1002
      %v2204 = vpop.f32.mrf.mxu0
      %v2205 = vadd.f32 %v1804, %v2204
      %2206 = vmatmul.f32.gmra.mxu0 %v1005
      %v2207 = vpop.f32.mrf.mxu0
      %v2208 = vadd.f32 %v1807, %v2207
      %2209 = vmatmul.f32.gmra.mxu0 %v1008
      %v2210 = vpop.f32.mrf.mxu0
      %v2211 = vadd.f32 %v1810, %v2210
      %2212 = vmatmul.f32.gmra.mxu0 %v1011
      %v2213 = vpop.f32.mrf.mxu0
      %v2214 = vadd.f32 %v1813, %v2213
      %2215 = vmatmul.f32.gmra.mxu0 %v1014
      %v2216 = vpop.f32.mrf.mxu0
      %v2217 = vadd.f32 %v1816, %v2216
      %2218 = vmatmul.f32.gmra.mxu0 %v1017
      %v2219 = vpop.f32.mrf.mxu0
      %v2220 = vadd.f32 %v1819, %v2219
      %2221 = vmatmul.f32.gmra.mxu0 %v1020
      %v2222 = vpop.f32.mrf.mxu0
      %v2223 = vadd.f32 %v1822, %v2222
      %2224 = vmatmul.f32.gmra.mxu0 %v1023
      %v2225 = vpop.f32.mrf.mxu0
      %v2226 = vadd.f32 %v1825, %v2225
      %2227 = vmatmul.f32.gmra.mxu0 %v1026
      %v2228 = vpop.f32.mrf.mxu0
      %v2229 = vadd.f32 %v1828, %v2228
      %2230 = vmatmul.f32.gmra.mxu0 %v1029
      %v2231 = vpop.f32.mrf.mxu0
      %v2232 = vadd.f32 %v1831, %v2231
      %2233 = vmatmul.f32.gmra.mxu0 %v1032
      %v2234 = vpop.f32.mrf.mxu0
      %v2235 = vadd.f32 %v1834, %v2234
      %2236 = vmatmul.f32.gmra.mxu0 %v1035
      %v2237 = vpop.f32.mrf.mxu0
      %v2238 = vadd.f32 %v1837, %v2237
      %2239 = vmatmul.f32.gmra.mxu0 %v1038
      %v2240 = vpop.f32.mrf.mxu0
      %v2241 = vadd.f32 %v1840, %v2240
      %2242 = vdwg.mxu0
      %vm2243 = vcmp.gt.f32.partialorder %v1860, 0.0
      %vm2244 = vcmp.gt.f32.partialorder %v1863, 0.0
      %vm2245 = vcmp.gt.f32.partialorder %v1866, 0.0
      %vm2246 = vcmp.gt.f32.partialorder %v1869, 0.0
      %vm2247 = vcmp.gt.f32.partialorder %v1872, 0.0
      %vm2248 = vcmp.gt.f32.partialorder %v1875, 0.0
      %vm2249 = vcmp.gt.f32.partialorder %v1878, 0.0
      %vm2250 = vcmp.gt.f32.partialorder %v1881, 0.0
      %vm2251 = vcmp.gt.f32.partialorder %v1884, 0.0
      %vm2252 = vcmp.gt.f32.partialorder %v1887, 0.0
      %vm2253 = vcmp.gt.f32.partialorder %v1890, 0.0
      %vm2254 = vcmp.gt.f32.partialorder %v1893, 0.0
      %vm2255 = vcmp.gt.f32.partialorder %v1896, 0.0
      %vm2256 = vcmp.gt.f32.partialorder %v1899, 0.0
      %vm2257 = vcmp.gt.f32.partialorder %v1902, 0.0
      %vm2258 = vcmp.gt.f32.partialorder %v1905, 0.0
      %vm2259 = vcmp.gt.f32.partialorder %v1908, 0.0
      %vm2260 = vcmp.gt.f32.partialorder %v1911, 0.0
      %vm2261 = vcmp.gt.f32.partialorder %v1914, 0.0
      %vm2262 = vcmp.gt.f32.partialorder %v1917, 0.0
      %vm2263 = vcmp.gt.f32.partialorder %v1920, 0.0
      %vm2264 = vcmp.gt.f32.partialorder %v1923, 0.0
      %vm2265 = vcmp.gt.f32.partialorder %v1926, 0.0
      %vm2266 = vcmp.gt.f32.partialorder %v1929, 0.0
      %vm2267 = vcmp.gt.f32.partialorder %v1932, 0.0
      %vm2268 = vcmp.gt.f32.partialorder %v1935, 0.0
      %vm2269 = vcmp.gt.f32.partialorder %v1938, 0.0
      %vm2270 = vcmp.gt.f32.partialorder %v1941, 0.0
      %vm2271 = vcmp.gt.f32.partialorder %v1944, 0.0
      %vm2272 = vcmp.gt.f32.partialorder %v1947, 0.0
      %vm2273 = vcmp.gt.f32.partialorder %v1950, 0.0
      %vm2274 = vcmp.gt.f32.partialorder %v1953, 0.0
      %vm2275 = vcmp.gt.f32.partialorder %v1956, 0.0
      %vm2276 = vcmp.gt.f32.partialorder %v1959, 0.0
      %vm2277 = vcmp.gt.f32.partialorder %v1962, 0.0
      %vm2278 = vcmp.gt.f32.partialorder %v1965, 0.0
      %vm2279 = vcmp.gt.f32.partialorder %v1968, 0.0
      %vm2280 = vcmp.gt.f32.partialorder %v1971, 0.0
      %vm2281 = vcmp.gt.f32.partialorder %v1974, 0.0
      %vm2282 = vcmp.gt.f32.partialorder %v1977, 0.0
      %vm2283 = vcmp.gt.f32.partialorder %v1980, 0.0
      %vm2284 = vcmp.gt.f32.partialorder %v1983, 0.0
      %vm2285 = vcmp.gt.f32.partialorder %v1986, 0.0
      %vm2286 = vcmp.gt.f32.partialorder %v1989, 0.0
      %vm2287 = vcmp.gt.f32.partialorder %v1992, 0.0
      %vm2288 = vcmp.gt.f32.partialorder %v1995, 0.0
      %vm2289 = vcmp.gt.f32.partialorder %v1998, 0.0
      %vm2290 = vcmp.gt.f32.partialorder %v2001, 0.0
      %vm2291 = vcmp.gt.f32.partialorder %v2004, 0.0
      %vm2292 = vcmp.gt.f32.partialorder %v2007, 0.0
      %vm2293 = vcmp.gt.f32.partialorder %v2010, 0.0
      %vm2294 = vcmp.gt.f32.partialorder %v2013, 0.0
      %vm2295 = vcmp.gt.f32.partialorder %v2016, 0.0
      %vm2296 = vcmp.gt.f32.partialorder %v2019, 0.0
      %vm2297 = vcmp.gt.f32.partialorder %v2022, 0.0
      %vm2298 = vcmp.gt.f32.partialorder %v2025, 0.0
      %vm2299 = vcmp.gt.f32.partialorder %v2028, 0.0
      %vm2300 = vcmp.gt.f32.partialorder %v2031, 0.0
      %vm2301 = vcmp.gt.f32.partialorder %v2034, 0.0
      %vm2302 = vcmp.gt.f32.partialorder %v2037, 0.0
      %vm2303 = vcmp.gt.f32.partialorder %v2040, 0.0
      %vm2304 = vcmp.gt.f32.partialorder %v2043, 0.0
      %vm2305 = vcmp.gt.f32.partialorder %v2046, 0.0
      %vm2306 = vcmp.gt.f32.partialorder %v2049, 0.0
      %vm2307 = vcmp.gt.f32.partialorder %v2052, 0.0
      %vm2308 = vcmp.gt.f32.partialorder %v2055, 0.0
      %vm2309 = vcmp.gt.f32.partialorder %v2058, 0.0
      %vm2310 = vcmp.gt.f32.partialorder %v2061, 0.0
      %vm2311 = vcmp.gt.f32.partialorder %v2064, 0.0
      %vm2312 = vcmp.gt.f32.partialorder %v2067, 0.0
      %vm2313 = vcmp.gt.f32.partialorder %v2070, 0.0
      %vm2314 = vcmp.gt.f32.partialorder %v2073, 0.0
      %vm2315 = vcmp.gt.f32.partialorder %v2076, 0.0
      %vm2316 = vcmp.gt.f32.partialorder %v2079, 0.0
      %vm2317 = vcmp.gt.f32.partialorder %v2082, 0.0
      %vm2318 = vcmp.gt.f32.partialorder %v2085, 0.0
      %vm2319 = vcmp.gt.f32.partialorder %v2088, 0.0
      %vm2320 = vcmp.gt.f32.partialorder %v2091, 0.0
      %vm2321 = vcmp.gt.f32.partialorder %v2094, 0.0
      %vm2322 = vcmp.gt.f32.partialorder %v2097, 0.0
      %vm2323 = vcmp.gt.f32.partialorder %v2100, 0.0
      %vm2324 = vcmp.gt.f32.partialorder %v2103, 0.0
      %vm2325 = vcmp.gt.f32.partialorder %v2106, 0.0
      %vm2326 = vcmp.gt.f32.partialorder %v2109, 0.0
      %vm2327 = vcmp.gt.f32.partialorder %v2112, 0.0
      %vm2328 = vcmp.gt.f32.partialorder %v2115, 0.0
      %vm2329 = vcmp.gt.f32.partialorder %v2118, 0.0
      %vm2330 = vcmp.gt.f32.partialorder %v2121, 0.0
      %vm2331 = vcmp.gt.f32.partialorder %v2124, 0.0
      %vm2332 = vcmp.gt.f32.partialorder %v2127, 0.0
      %vm2333 = vcmp.gt.f32.partialorder %v2130, 0.0
      %vm2334 = vcmp.gt.f32.partialorder %v2133, 0.0
      %vm2335 = vcmp.gt.f32.partialorder %v2136, 0.0
      %vm2336 = vcmp.gt.f32.partialorder %v2139, 0.0
      %vm2337 = vcmp.gt.f32.partialorder %v2142, 0.0
      %vm2338 = vcmp.gt.f32.partialorder %v2145, 0.0
      %vm2339 = vcmp.gt.f32.partialorder %v2148, 0.0
      %vm2340 = vcmp.gt.f32.partialorder %v2151, 0.0
      %vm2341 = vcmp.gt.f32.partialorder %v2154, 0.0
      %vm2342 = vcmp.gt.f32.partialorder %v2157, 0.0
      %vm2343 = vcmp.gt.f32.partialorder %v2160, 0.0
      %vm2344 = vcmp.gt.f32.partialorder %v2163, 0.0
      %vm2345 = vcmp.gt.f32.partialorder %v2166, 0.0
      %vm2346 = vcmp.gt.f32.partialorder %v2169, 0.0
      %vm2347 = vcmp.gt.f32.partialorder %v2172, 0.0
      %vm2348 = vcmp.gt.f32.partialorder %v2175, 0.0
      %vm2349 = vcmp.gt.f32.partialorder %v2178, 0.0
      %vm2350 = vcmp.gt.f32.partialorder %v2181, 0.0
      %vm2351 = vcmp.gt.f32.partialorder %v2184, 0.0
      %vm2352 = vcmp.gt.f32.partialorder %v2187, 0.0
      %vm2353 = vcmp.gt.f32.partialorder %v2190, 0.0
      %vm2354 = vcmp.gt.f32.partialorder %v2193, 0.0
      %vm2355 = vcmp.gt.f32.partialorder %v2196, 0.0
      %vm2356 = vcmp.gt.f32.partialorder %v2199, 0.0
      %vm2357 = vcmp.gt.f32.partialorder %v2202, 0.0
      %vm2358 = vcmp.gt.f32.partialorder %v2205, 0.0
      %vm2359 = vcmp.gt.f32.partialorder %v2208, 0.0
      %vm2360 = vcmp.gt.f32.partialorder %v2211, 0.0
      %vm2361 = vcmp.gt.f32.partialorder %v2214, 0.0
      %vm2362 = vcmp.gt.f32.partialorder %v2217, 0.0
      %vm2363 = vcmp.gt.f32.partialorder %v2220, 0.0
      %vm2364 = vcmp.gt.f32.partialorder %v2223, 0.0
      %vm2365 = vcmp.gt.f32.partialorder %v2226, 0.0
      %vm2366 = vcmp.gt.f32.partialorder %v2229, 0.0
      %vm2367 = vcmp.gt.f32.partialorder %v2232, 0.0
      %vm2368 = vcmp.gt.f32.partialorder %v2235, 0.0
      %vm2369 = vcmp.gt.f32.partialorder %v2238, 0.0
      %vm2370 = vcmp.gt.f32.partialorder %v2241, 0.0
      %v2371 = vmin.f32 %v1860, 0.0
      %v2372 = vmin.f32 %v1863, 0.0
      %v2373 = vmin.f32 %v1866, 0.0
      %v2374 = vmin.f32 %v1869, 0.0
      %v2375 = vmin.f32 %v1872, 0.0
      %v2376 = vmin.f32 %v1875, 0.0
      %v2377 = vmin.f32 %v1878, 0.0
      %v2378 = vmin.f32 %v1881, 0.0
      %v2379 = vmin.f32 %v1884, 0.0
      %v2380 = vmin.f32 %v1887, 0.0
      %v2381 = vmin.f32 %v1890, 0.0
      %v2382 = vmin.f32 %v1893, 0.0
      %v2383 = vmin.f32 %v1896, 0.0
      %v2384 = vmin.f32 %v1899, 0.0
      %v2385 = vmin.f32 %v1902, 0.0
      %v2386 = vmin.f32 %v1905, 0.0
      %v2387 = vmin.f32 %v1908, 0.0
      %v2388 = vmin.f32 %v1911, 0.0
      %v2389 = vmin.f32 %v1914, 0.0
      %v2390 = vmin.f32 %v1917, 0.0
      %v2391 = vmin.f32 %v1920, 0.0
      %v2392 = vmin.f32 %v1923, 0.0
      %v2393 = vmin.f32 %v1926, 0.0
      %v2394 = vmin.f32 %v1929, 0.0
      %v2395 = vmin.f32 %v1932, 0.0
      %v2396 = vmin.f32 %v1935, 0.0
      %v2397 = vmin.f32 %v1938, 0.0
      %v2398 = vmin.f32 %v1941, 0.0
      %v2399 = vmin.f32 %v1944, 0.0
      %v2400 = vmin.f32 %v1947, 0.0
      %v2401 = vmin.f32 %v1950, 0.0
      %v2402 = vmin.f32 %v1953, 0.0
      %v2403 = vmin.f32 %v1956, 0.0
      %v2404 = vmin.f32 %v1959, 0.0
      %v2405 = vmin.f32 %v1962, 0.0
      %v2406 = vmin.f32 %v1965, 0.0
      %v2407 = vmin.f32 %v1968, 0.0
      %v2408 = vmin.f32 %v1971, 0.0
      %v2409 = vmin.f32 %v1974, 0.0
      %v2410 = vmin.f32 %v1977, 0.0
      %v2411 = vmin.f32 %v1980, 0.0
      %v2412 = vmin.f32 %v1983, 0.0
      %v2413 = vmin.f32 %v1986, 0.0
      %v2414 = vmin.f32 %v1989, 0.0
      %v2415 = vmin.f32 %v1992, 0.0
      %v2416 = vmin.f32 %v1995, 0.0
      %v2417 = vmin.f32 %v1998, 0.0
      %v2418 = vmin.f32 %v2001, 0.0
      %v2419 = vmin.f32 %v2004, 0.0
      %v2420 = vmin.f32 %v2007, 0.0
      %v2421 = vmin.f32 %v2010, 0.0
      %v2422 = vmin.f32 %v2013, 0.0
      %v2423 = vmin.f32 %v2016, 0.0
      %v2424 = vmin.f32 %v2019, 0.0
      %v2425 = vmin.f32 %v2022, 0.0
      %v2426 = vmin.f32 %v2025, 0.0
      %v2427 = vmin.f32 %v2028, 0.0
      %v2428 = vmin.f32 %v2031, 0.0
      %v2429 = vmin.f32 %v2034, 0.0
      %v2430 = vmin.f32 %v2037, 0.0
      %v2431 = vmin.f32 %v2040, 0.0
      %v2432 = vmin.f32 %v2043, 0.0
      %v2433 = vmin.f32 %v2046, 0.0
      %v2434 = vmin.f32 %v2049, 0.0
      %v2435 = vmin.f32 %v2052, 0.0
      %v2436 = vmin.f32 %v2055, 0.0
      %v2437 = vmin.f32 %v2058, 0.0
      %v2438 = vmin.f32 %v2061, 0.0
      %v2439 = vmin.f32 %v2064, 0.0
      %v2440 = vmin.f32 %v2067, 0.0
      %v2441 = vmin.f32 %v2070, 0.0
      %v2442 = vmin.f32 %v2073, 0.0
      %v2443 = vmin.f32 %v2076, 0.0
      %v2444 = vmin.f32 %v2079, 0.0
      %v2445 = vmin.f32 %v2082, 0.0
      %v2446 = vmin.f32 %v2085, 0.0
      %v2447 = vmin.f32 %v2088, 0.0
      %v2448 = vmin.f32 %v2091, 0.0
      %v2449 = vmin.f32 %v2094, 0.0
      %v2450 = vmin.f32 %v2097, 0.0
      %v2451 = vmin.f32 %v2100, 0.0
      %v2452 = vmin.f32 %v2103, 0.0
      %v2453 = vmin.f32 %v2106, 0.0
      %v2454 = vmin.f32 %v2109, 0.0
      %v2455 = vmin.f32 %v2112, 0.0
      %v2456 = vmin.f32 %v2115, 0.0
      %v2457 = vmin.f32 %v2118, 0.0
      %v2458 = vmin.f32 %v2121, 0.0
      %v2459 = vmin.f32 %v2124, 0.0
      %v2460 = vmin.f32 %v2127, 0.0
      %v2461 = vmin.f32 %v2130, 0.0
      %v2462 = vmin.f32 %v2133, 0.0
      %v2463 = vmin.f32 %v2136, 0.0
      %v2464 = vmin.f32 %v2139, 0.0
      %v2465 = vmin.f32 %v2142, 0.0
      %v2466 = vmin.f32 %v2145, 0.0
      %v2467 = vmin.f32 %v2148, 0.0
      %v2468 = vmin.f32 %v2151, 0.0
      %v2469 = vmin.f32 %v2154, 0.0
      %v2470 = vmin.f32 %v2157, 0.0
      %v2471 = vmin.f32 %v2160, 0.0
      %v2472 = vmin.f32 %v2163, 0.0
      %v2473 = vmin.f32 %v2166, 0.0
      %v2474 = vmin.f32 %v2169, 0.0
      %v2475 = vmin.f32 %v2172, 0.0
      %v2476 = vmin.f32 %v2175, 0.0
      %v2477 = vmin.f32 %v2178, 0.0
      %v2478 = vmin.f32 %v2181, 0.0
      %v2479 = vmin.f32 %v2184, 0.0
      %v2480 = vmin.f32 %v2187, 0.0
      %v2481 = vmin.f32 %v2190, 0.0
      %v2482 = vmin.f32 %v2193, 0.0
      %v2483 = vmin.f32 %v2196, 0.0
      %v2484 = vmin.f32 %v2199, 0.0
      %v2485 = vmin.f32 %v2202, 0.0
      %v2486 = vmin.f32 %v2205, 0.0
      %v2487 = vmin.f32 %v2208, 0.0
      %v2488 = vmin.f32 %v2211, 0.0
      %v2489 = vmin.f32 %v2214, 0.0
      %v2490 = vmin.f32 %v2217, 0.0
      %v2491 = vmin.f32 %v2220, 0.0
      %v2492 = vmin.f32 %v2223, 0.0
      %v2493 = vmin.f32 %v2226, 0.0
      %v2494 = vmin.f32 %v2229, 0.0
      %v2495 = vmin.f32 %v2232, 0.0
      %v2496 = vmin.f32 %v2235, 0.0
      %v2497 = vmin.f32 %v2238, 0.0
      %v2498 = vmin.f32 %v2241, 0.0
      %v2499 = vmul.f32 %v2371, 1.442695
      %v2500 = vpow.pop %v2499
      %v2501 = vmul.f32 %v2372, 1.442695
      %v2502 = vpow.pop %v2501
      %v2503 = vmul.f32 %v2373, 1.442695
      %v2504 = vpow.pop %v2503
      %v2505 = vmul.f32 %v2374, 1.442695
      %v2506 = vpow.pop %v2505
      %v2507 = vmul.f32 %v2375, 1.442695
      %v2508 = vpow.pop %v2507
      %v2509 = vmul.f32 %v2376, 1.442695
      %v2510 = vpow.pop %v2509
      %v2511 = vmul.f32 %v2377, 1.442695
      %v2512 = vpow.pop %v2511
      %v2513 = vmul.f32 %v2378, 1.442695
      %v2514 = vpow.pop %v2513
      %v2515 = vmul.f32 %v2379, 1.442695
      %v2516 = vpow.pop %v2515
      %v2517 = vmul.f32 %v2380, 1.442695
      %v2518 = vpow.pop %v2517
      %v2519 = vmul.f32 %v2381, 1.442695
      %v2520 = vpow.pop %v2519
      %v2521 = vmul.f32 %v2382, 1.442695
      %v2522 = vpow.pop %v2521
      %v2523 = vmul.f32 %v2383, 1.442695
      %v2524 = vpow.pop %v2523
      %v2525 = vmul.f32 %v2384, 1.442695
      %v2526 = vpow.pop %v2525
      %v2527 = vmul.f32 %v2385, 1.442695
      %v2528 = vpow.pop %v2527
      %v2529 = vmul.f32 %v2386, 1.442695
      %v2530 = vpow.pop %v2529
      %v2531 = vmul.f32 %v2387, 1.442695
      %v2532 = vpow.pop %v2531
      %v2533 = vmul.f32 %v2388, 1.442695
      %v2534 = vpow.pop %v2533
      %v2535 = vmul.f32 %v2389, 1.442695
      %v2536 = vpow.pop %v2535
      %v2537 = vmul.f32 %v2390, 1.442695
      %v2538 = vpow.pop %v2537
      %v2539 = vmul.f32 %v2391, 1.442695
      %v2540 = vpow.pop %v2539
      %v2541 = vmul.f32 %v2392, 1.442695
      %v2542 = vpow.pop %v2541
      %v2543 = vmul.f32 %v2393, 1.442695
      %v2544 = vpow.pop %v2543
      %v2545 = vmul.f32 %v2394, 1.442695
      %v2546 = vpow.pop %v2545
      %v2547 = vmul.f32 %v2395, 1.442695
      %v2548 = vpow.pop %v2547
      %v2549 = vmul.f32 %v2396, 1.442695
      %v2550 = vpow.pop %v2549
      %v2551 = vmul.f32 %v2397, 1.442695
      %v2552 = vpow.pop %v2551
      %v2553 = vmul.f32 %v2398, 1.442695
      %v2554 = vpow.pop %v2553
      %v2555 = vmul.f32 %v2399, 1.442695
      %v2556 = vpow.pop %v2555
      %v2557 = vmul.f32 %v2400, 1.442695
      %v2558 = vpow.pop %v2557
      %v2559 = vmul.f32 %v2401, 1.442695
      %v2560 = vpow.pop %v2559
      %v2561 = vmul.f32 %v2402, 1.442695
      %v2562 = vpow.pop %v2561
      %v2563 = vmul.f32 %v2403, 1.442695
      %v2564 = vpow.pop %v2563
      %v2565 = vmul.f32 %v2404, 1.442695
      %v2566 = vpow.pop %v2565
      %v2567 = vmul.f32 %v2405, 1.442695
      %v2568 = vpow.pop %v2567
      %v2569 = vmul.f32 %v2406, 1.442695
      %v2570 = vpow.pop %v2569
      %v2571 = vmul.f32 %v2407, 1.442695
      %v2572 = vpow.pop %v2571
      %v2573 = vmul.f32 %v2408, 1.442695
      %v2574 = vpow.pop %v2573
      %v2575 = vmul.f32 %v2409, 1.442695
      %v2576 = vpow.pop %v2575
      %v2577 = vmul.f32 %v2410, 1.442695
      %v2578 = vpow.pop %v2577
      %v2579 = vmul.f32 %v2411, 1.442695
      %v2580 = vpow.pop %v2579
      %v2581 = vmul.f32 %v2412, 1.442695
      %v2582 = vpow.pop %v2581
      %v2583 = vmul.f32 %v2413, 1.442695
      %v2584 = vpow.pop %v2583
      %v2585 = vmul.f32 %v2414, 1.442695
      %v2586 = vpow.pop %v2585
      %v2587 = vmul.f32 %v2415, 1.442695
      %v2588 = vpow.pop %v2587
      %v2589 = vmul.f32 %v2416, 1.442695
      %v2590 = vpow.pop %v2589
      %v2591 = vmul.f32 %v2417, 1.442695
      %v2592 = vpow.pop %v2591
      %v2593 = vmul.f32 %v2418, 1.442695
      %v2594 = vpow.pop %v2593
      %v2595 = vmul.f32 %v2419, 1.442695
      %v2596 = vpow.pop %v2595
      %v2597 = vmul.f32 %v2420, 1.442695
      %v2598 = vpow.pop %v2597
      %v2599 = vmul.f32 %v2421, 1.442695
      %v2600 = vpow.pop %v2599
      %v2601 = vmul.f32 %v2422, 1.442695
      %v2602 = vpow.pop %v2601
      %v2603 = vmul.f32 %v2423, 1.442695
      %v2604 = vpow.pop %v2603
      %v2605 = vmul.f32 %v2424, 1.442695
      %v2606 = vpow.pop %v2605
      %v2607 = vmul.f32 %v2425, 1.442695
      %v2608 = vpow.pop %v2607
      %v2609 = vmul.f32 %v2426, 1.442695
      %v2610 = vpow.pop %v2609
      %v2611 = vmul.f32 %v2427, 1.442695
      %v2612 = vpow.pop %v2611
      %v2613 = vmul.f32 %v2428, 1.442695
      %v2614 = vpow.pop %v2613
      %v2615 = vmul.f32 %v2429, 1.442695
      %v2616 = vpow.pop %v2615
      %v2617 = vmul.f32 %v2430, 1.442695
      %v2618 = vpow.pop %v2617
      %v2619 = vmul.f32 %v2431, 1.442695
      %v2620 = vpow.pop %v2619
      %v2621 = vmul.f32 %v2432, 1.442695
      %v2622 = vpow.pop %v2621
      %v2623 = vmul.f32 %v2433, 1.442695
      %v2624 = vpow.pop %v2623
      %v2625 = vmul.f32 %v2434, 1.442695
      %v2626 = vpow.pop %v2625
      %v2627 = vmul.f32 %v2435, 1.442695
      %v2628 = vpow.pop %v2627
      %v2629 = vmul.f32 %v2436, 1.442695
      %v2630 = vpow.pop %v2629
      %v2631 = vmul.f32 %v2437, 1.442695
      %v2632 = vpow.pop %v2631
      %v2633 = vmul.f32 %v2438, 1.442695
      %v2634 = vpow.pop %v2633
      %v2635 = vmul.f32 %v2439, 1.442695
      %v2636 = vpow.pop %v2635
      %v2637 = vmul.f32 %v2440, 1.442695
      %v2638 = vpow.pop %v2637
      %v2639 = vmul.f32 %v2441, 1.442695
      %v2640 = vpow.pop %v2639
      %v2641 = vmul.f32 %v2442, 1.442695
      %v2642 = vpow.pop %v2641
      %v2643 = vmul.f32 %v2443, 1.442695
      %v2644 = vpow.pop %v2643
      %v2645 = vmul.f32 %v2444, 1.442695
      %v2646 = vpow.pop %v2645
      %v2647 = vmul.f32 %v2445, 1.442695
      %v2648 = vpow.pop %v2647
      %v2649 = vmul.f32 %v2446, 1.442695
      %v2650 = vpow.pop %v2649
      %v2651 = vmul.f32 %v2447, 1.442695
      %v2652 = vpow.pop %v2651
      %v2653 = vmul.f32 %v2448, 1.442695
      %v2654 = vpow.pop %v2653
      %v2655 = vmul.f32 %v2449, 1.442695
      %v2656 = vpow.pop %v2655
      %v2657 = vmul.f32 %v2450, 1.442695
      %v2658 = vpow.pop %v2657
      %v2659 = vmul.f32 %v2451, 1.442695
      %v2660 = vpow.pop %v2659
      %v2661 = vmul.f32 %v2452, 1.442695
      %v2662 = vpow.pop %v2661
      %v2663 = vmul.f32 %v2453, 1.442695
      %v2664 = vpow.pop %v2663
      %v2665 = vmul.f32 %v2454, 1.442695
      %v2666 = vpow.pop %v2665
      %v2667 = vmul.f32 %v2455, 1.442695
      %v2668 = vpow.pop %v2667
      %v2669 = vmul.f32 %v2456, 1.442695
      %v2670 = vpow.pop %v2669
      %v2671 = vmul.f32 %v2457, 1.442695
      %v2672 = vpow.pop %v2671
      %v2673 = vmul.f32 %v2458, 1.442695
      %v2674 = vpow.pop %v2673
      %v2675 = vmul.f32 %v2459, 1.442695
      %v2676 = vpow.pop %v2675
      %v2677 = vmul.f32 %v2460, 1.442695
      %v2678 = vpow.pop %v2677
      %v2679 = vmul.f32 %v2461, 1.442695
      %v2680 = vpow.pop %v2679
      %v2681 = vmul.f32 %v2462, 1.442695
      %v2682 = vpow.pop %v2681
      %v2683 = vmul.f32 %v2463, 1.442695
      %v2684 = vpow.pop %v2683
      %v2685 = vmul.f32 %v2464, 1.442695
      %v2686 = vpow.pop %v2685
      %v2687 = vmul.f32 %v2465, 1.442695
      %v2688 = vpow.pop %v2687
      %v2689 = vmul.f32 %v2466, 1.442695
      %v2690 = vpow.pop %v2689
      %v2691 = vmul.f32 %v2467, 1.442695
      %v2692 = vpow.pop %v2691
      %v2693 = vmul.f32 %v2468, 1.442695
      %v2694 = vpow.pop %v2693
      %v2695 = vmul.f32 %v2469, 1.442695
      %v2696 = vpow.pop %v2695
      %v2697 = vmul.f32 %v2470, 1.442695
      %v2698 = vpow.pop %v2697
      %v2699 = vmul.f32 %v2471, 1.442695
      %v2700 = vpow.pop %v2699
      %v2701 = vmul.f32 %v2472, 1.442695
      %v2702 = vpow.pop %v2701
      %v2703 = vmul.f32 %v2473, 1.442695
      %v2704 = vpow.pop %v2703
      %v2705 = vmul.f32 %v2474, 1.442695
      %v2706 = vpow.pop %v2705
      %v2707 = vmul.f32 %v2475, 1.442695
      %v2708 = vpow.pop %v2707
      %v2709 = vmul.f32 %v2476, 1.442695
      %v2710 = vpow.pop %v2709
      %v2711 = vmul.f32 %v2477, 1.442695
      %v2712 = vpow.pop %v2711
      %v2713 = vmul.f32 %v2478, 1.442695
      %v2714 = vpow.pop %v2713
      %v2715 = vmul.f32 %v2479, 1.442695
      %v2716 = vpow.pop %v2715
      %v2717 = vmul.f32 %v2480, 1.442695
      %v2718 = vpow.pop %v2717
      %v2719 = vmul.f32 %v2481, 1.442695
      %v2720 = vpow.pop %v2719
      %v2721 = vmul.f32 %v2482, 1.442695
      %v2722 = vpow.pop %v2721
      %v2723 = vmul.f32 %v2483, 1.442695
      %v2724 = vpow.pop %v2723
      %v2725 = vmul.f32 %v2484, 1.442695
      %v2726 = vpow.pop %v2725
      %v2727 = vmul.f32 %v2485, 1.442695
      %v2728 = vpow.pop %v2727
      %v2729 = vmul.f32 %v2486, 1.442695
      %v2730 = vpow.pop %v2729
      %v2731 = vmul.f32 %v2487, 1.442695
      %v2732 = vpow.pop %v2731
      %v2733 = vmul.f32 %v2488, 1.442695
      %v2734 = vpow.pop %v2733
      %v2735 = vmul.f32 %v2489, 1.442695
      %v2736 = vpow.pop %v2735
      %v2737 = vmul.f32 %v2490, 1.442695
      %v2738 = vpow.pop %v2737
      %v2739 = vmul.f32 %v2491, 1.442695
      %v2740 = vpow.pop %v2739
      %v2741 = vmul.f32 %v2492, 1.442695
      %v2742 = vpow.pop %v2741
      %v2743 = vmul.f32 %v2493, 1.442695
      %v2744 = vpow.pop %v2743
      %v2745 = vmul.f32 %v2494, 1.442695
      %v2746 = vpow.pop %v2745
      %v2747 = vmul.f32 %v2495, 1.442695
      %v2748 = vpow.pop %v2747
      %v2749 = vmul.f32 %v2496, 1.442695
      %v2750 = vpow.pop %v2749
      %v2751 = vmul.f32 %v2497, 1.442695
      %v2752 = vpow.pop %v2751
      %v2753 = vmul.f32 %v2498, 1.442695
      %v2754 = vpow.pop %v2753
      %v2755 = vsub.f32 %v2500, 1.0
      %v2756 = vsub.f32 %v2502, 1.0
      %v2757 = vsub.f32 %v2504, 1.0
      %v2758 = vsub.f32 %v2506, 1.0
      %v2759 = vsub.f32 %v2508, 1.0
      %v2760 = vsub.f32 %v2510, 1.0
      %v2761 = vsub.f32 %v2512, 1.0
      %v2762 = vsub.f32 %v2514, 1.0
      %v2763 = vsub.f32 %v2516, 1.0
      %v2764 = vsub.f32 %v2518, 1.0
      %v2765 = vsub.f32 %v2520, 1.0
      %v2766 = vsub.f32 %v2522, 1.0
      %v2767 = vsub.f32 %v2524, 1.0
      %v2768 = vsub.f32 %v2526, 1.0
      %v2769 = vsub.f32 %v2528, 1.0
      %v2770 = vsub.f32 %v2530, 1.0
      %v2771 = vsub.f32 %v2532, 1.0
      %v2772 = vsub.f32 %v2534, 1.0
      %v2773 = vsub.f32 %v2536, 1.0
      %v2774 = vsub.f32 %v2538, 1.0
      %v2775 = vsub.f32 %v2540, 1.0
      %v2776 = vsub.f32 %v2542, 1.0
      %v2777 = vsub.f32 %v2544, 1.0
      %v2778 = vsub.f32 %v2546, 1.0
      %v2779 = vsub.f32 %v2548, 1.0
      %v2780 = vsub.f32 %v2550, 1.0
      %v2781 = vsub.f32 %v2552, 1.0
      %v2782 = vsub.f32 %v2554, 1.0
      %v2783 = vsub.f32 %v2556, 1.0
      %v2784 = vsub.f32 %v2558, 1.0
      %v2785 = vsub.f32 %v2560, 1.0
      %v2786 = vsub.f32 %v2562, 1.0
      %v2787 = vsub.f32 %v2564, 1.0
      %v2788 = vsub.f32 %v2566, 1.0
      %v2789 = vsub.f32 %v2568, 1.0
      %v2790 = vsub.f32 %v2570, 1.0
      %v2791 = vsub.f32 %v2572, 1.0
      %v2792 = vsub.f32 %v2574, 1.0
      %v2793 = vsub.f32 %v2576, 1.0
      %v2794 = vsub.f32 %v2578, 1.0
      %v2795 = vsub.f32 %v2580, 1.0
      %v2796 = vsub.f32 %v2582, 1.0
      %v2797 = vsub.f32 %v2584, 1.0
      %v2798 = vsub.f32 %v2586, 1.0
      %v2799 = vsub.f32 %v2588, 1.0
      %v2800 = vsub.f32 %v2590, 1.0
      %v2801 = vsub.f32 %v2592, 1.0
      %v2802 = vsub.f32 %v2594, 1.0
      %v2803 = vsub.f32 %v2596, 1.0
      %v2804 = vsub.f32 %v2598, 1.0
      %v2805 = vsub.f32 %v2600, 1.0
      %v2806 = vsub.f32 %v2602, 1.0
      %v2807 = vsub.f32 %v2604, 1.0
      %v2808 = vsub.f32 %v2606, 1.0
      %v2809 = vsub.f32 %v2608, 1.0
      %v2810 = vsub.f32 %v2610, 1.0
      %v2811 = vsub.f32 %v2612, 1.0
      %v2812 = vsub.f32 %v2614, 1.0
      %v2813 = vsub.f32 %v2616, 1.0
      %v2814 = vsub.f32 %v2618, 1.0
      %v2815 = vsub.f32 %v2620, 1.0
      %v2816 = vsub.f32 %v2622, 1.0
      %v2817 = vsub.f32 %v2624, 1.0
      %v2818 = vsub.f32 %v2626, 1.0
      %v2819 = vsub.f32 %v2628, 1.0
      %v2820 = vsub.f32 %v2630, 1.0
      %v2821 = vsub.f32 %v2632, 1.0
      %v2822 = vsub.f32 %v2634, 1.0
      %v2823 = vsub.f32 %v2636, 1.0
      %v2824 = vsub.f32 %v2638, 1.0
      %v2825 = vsub.f32 %v2640, 1.0
      %v2826 = vsub.f32 %v2642, 1.0
      %v2827 = vsub.f32 %v2644, 1.0
      %v2828 = vsub.f32 %v2646, 1.0
      %v2829 = vsub.f32 %v2648, 1.0
      %v2830 = vsub.f32 %v2650, 1.0
      %v2831 = vsub.f32 %v2652, 1.0
      %v2832 = vsub.f32 %v2654, 1.0
      %v2833 = vsub.f32 %v2656, 1.0
      %v2834 = vsub.f32 %v2658, 1.0
      %v2835 = vsub.f32 %v2660, 1.0
      %v2836 = vsub.f32 %v2662, 1.0
      %v2837 = vsub.f32 %v2664, 1.0
      %v2838 = vsub.f32 %v2666, 1.0
      %v2839 = vsub.f32 %v2668, 1.0
      %v2840 = vsub.f32 %v2670, 1.0
      %v2841 = vsub.f32 %v2672, 1.0
      %v2842 = vsub.f32 %v2674, 1.0
      %v2843 = vsub.f32 %v2676, 1.0
      %v2844 = vsub.f32 %v2678, 1.0
      %v2845 = vsub.f32 %v2680, 1.0
      %v2846 = vsub.f32 %v2682, 1.0
      %v2847 = vsub.f32 %v2684, 1.0
      %v2848 = vsub.f32 %v2686, 1.0
      %v2849 = vsub.f32 %v2688, 1.0
      %v2850 = vsub.f32 %v2690, 1.0
      %v2851 = vsub.f32 %v2692, 1.0
      %v2852 = vsub.f32 %v2694, 1.0
      %v2853 = vsub.f32 %v2696, 1.0
      %v2854 = vsub.f32 %v2698, 1.0
      %v2855 = vsub.f32 %v2700, 1.0
      %v2856 = vsub.f32 %v2702, 1.0
      %v2857 = vsub.f32 %v2704, 1.0
      %v2858 = vsub.f32 %v2706, 1.0
      %v2859 = vsub.f32 %v2708, 1.0
      %v2860 = vsub.f32 %v2710, 1.0
      %v2861 = vsub.f32 %v2712, 1.0
      %v2862 = vsub.f32 %v2714, 1.0
      %v2863 = vsub.f32 %v2716, 1.0
      %v2864 = vsub.f32 %v2718, 1.0
      %v2865 = vsub.f32 %v2720, 1.0
      %v2866 = vsub.f32 %v2722, 1.0
      %v2867 = vsub.f32 %v2724, 1.0
      %v2868 = vsub.f32 %v2726, 1.0
      %v2869 = vsub.f32 %v2728, 1.0
      %v2870 = vsub.f32 %v2730, 1.0
      %v2871 = vsub.f32 %v2732, 1.0
      %v2872 = vsub.f32 %v2734, 1.0
      %v2873 = vsub.f32 %v2736, 1.0
      %v2874 = vsub.f32 %v2738, 1.0
      %v2875 = vsub.f32 %v2740, 1.0
      %v2876 = vsub.f32 %v2742, 1.0
      %v2877 = vsub.f32 %v2744, 1.0
      %v2878 = vsub.f32 %v2746, 1.0
      %v2879 = vsub.f32 %v2748, 1.0
      %v2880 = vsub.f32 %v2750, 1.0
      %v2881 = vsub.f32 %v2752, 1.0
      %v2882 = vsub.f32 %v2754, 1.0
      %v2883 = vsel %vm2243, %v1860, %v2755
      %v2884 = vsel %vm2244, %v1863, %v2756
      %v2885 = vsel %vm2245, %v1866, %v2757
      %v2886 = vsel %vm2246, %v1869, %v2758
      %v2887 = vsel %vm2247, %v1872, %v2759
      %v2888 = vsel %vm2248, %v1875, %v2760
      %v2889 = vsel %vm2249, %v1878, %v2761
      %v2890 = vsel %vm2250, %v1881, %v2762
      %v2891 = vsel %vm2251, %v1884, %v2763
      %v2892 = vsel %vm2252, %v1887, %v2764
      %v2893 = vsel %vm2253, %v1890, %v2765
      %v2894 = vsel %vm2254, %v1893, %v2766
      %v2895 = vsel %vm2255, %v1896, %v2767
      %v2896 = vsel %vm2256, %v1899, %v2768
      %v2897 = vsel %vm2257, %v1902, %v2769
      %v2898 = vsel %vm2258, %v1905, %v2770
      %v2899 = vsel %vm2259, %v1908, %v2771
      %v2900 = vsel %vm2260, %v1911, %v2772
      %v2901 = vsel %vm2261, %v1914, %v2773
      %v2902 = vsel %vm2262, %v1917, %v2774
      %v2903 = vsel %vm2263, %v1920, %v2775
      %v2904 = vsel %vm2264, %v1923, %v2776
      %v2905 = vsel %vm2265, %v1926, %v2777
      %v2906 = vsel %vm2266, %v1929, %v2778
      %v2907 = vsel %vm2267, %v1932, %v2779
      %v2908 = vsel %vm2268, %v1935, %v2780
      %v2909 = vsel %vm2269, %v1938, %v2781
      %v2910 = vsel %vm2270, %v1941, %v2782
      %v2911 = vsel %vm2271, %v1944, %v2783
      %v2912 = vsel %vm2272, %v1947, %v2784
      %v2913 = vsel %vm2273, %v1950, %v2785
      %v2914 = vsel %vm2274, %v1953, %v2786
      %v2915 = vsel %vm2275, %v1956, %v2787
      %v2916 = vsel %vm2276, %v1959, %v2788
      %v2917 = vsel %vm2277, %v1962, %v2789
      %v2918 = vsel %vm2278, %v1965, %v2790
      %v2919 = vsel %vm2279, %v1968, %v2791
      %v2920 = vsel %vm2280, %v1971, %v2792
      %v2921 = vsel %vm2281, %v1974, %v2793
      %v2922 = vsel %vm2282, %v1977, %v2794
      %v2923 = vsel %vm2283, %v1980, %v2795
      %v2924 = vsel %vm2284, %v1983, %v2796
      %v2925 = vsel %vm2285, %v1986, %v2797
      %v2926 = vsel %vm2286, %v1989, %v2798
      %v2927 = vsel %vm2287, %v1992, %v2799
      %v2928 = vsel %vm2288, %v1995, %v2800
      %v2929 = vsel %vm2289, %v1998, %v2801
      %v2930 = vsel %vm2290, %v2001, %v2802
      %v2931 = vsel %vm2291, %v2004, %v2803
      %v2932 = vsel %vm2292, %v2007, %v2804
      %v2933 = vsel %vm2293, %v2010, %v2805
      %v2934 = vsel %vm2294, %v2013, %v2806
      %v2935 = vsel %vm2295, %v2016, %v2807
      %v2936 = vsel %vm2296, %v2019, %v2808
      %v2937 = vsel %vm2297, %v2022, %v2809
      %v2938 = vsel %vm2298, %v2025, %v2810
      %v2939 = vsel %vm2299, %v2028, %v2811
      %v2940 = vsel %vm2300, %v2031, %v2812
      %v2941 = vsel %vm2301, %v2034, %v2813
      %v2942 = vsel %vm2302, %v2037, %v2814
      %v2943 = vsel %vm2303, %v2040, %v2815
      %v2944 = vsel %vm2304, %v2043, %v2816
      %v2945 = vsel %vm2305, %v2046, %v2817
      %v2946 = vsel %vm2306, %v2049, %v2818
      %v2947 = vsel %vm2307, %v2052, %v2819
      %v2948 = vsel %vm2308, %v2055, %v2820
      %v2949 = vsel %vm2309, %v2058, %v2821
      %v2950 = vsel %vm2310, %v2061, %v2822
      %v2951 = vsel %vm2311, %v2064, %v2823
      %v2952 = vsel %vm2312, %v2067, %v2824
      %v2953 = vsel %vm2313, %v2070, %v2825
      %v2954 = vsel %vm2314, %v2073, %v2826
      %v2955 = vsel %vm2315, %v2076, %v2827
      %v2956 = vsel %vm2316, %v2079, %v2828
      %v2957 = vsel %vm2317, %v2082, %v2829
      %v2958 = vsel %vm2318, %v2085, %v2830
      %v2959 = vsel %vm2319, %v2088, %v2831
      %v2960 = vsel %vm2320, %v2091, %v2832
      %v2961 = vsel %vm2321, %v2094, %v2833
      %v2962 = vsel %vm2322, %v2097, %v2834
      %v2963 = vsel %vm2323, %v2100, %v2835
      %v2964 = vsel %vm2324, %v2103, %v2836
      %v2965 = vsel %vm2325, %v2106, %v2837
      %v2966 = vsel %vm2326, %v2109, %v2838
      %v2967 = vsel %vm2327, %v2112, %v2839
      %v2968 = vsel %vm2328, %v2115, %v2840
      %v2969 = vsel %vm2329, %v2118, %v2841
      %v2970 = vsel %vm2330, %v2121, %v2842
      %v2971 = vsel %vm2331, %v2124, %v2843
      %v2972 = vsel %vm2332, %v2127, %v2844
      %v2973 = vsel %vm2333, %v2130, %v2845
      %v2974 = vsel %vm2334, %v2133, %v2846
      %v2975 = vsel %vm2335, %v2136, %v2847
      %v2976 = vsel %vm2336, %v2139, %v2848
      %v2977 = vsel %vm2337, %v2142, %v2849
      %v2978 = vsel %vm2338, %v2145, %v2850
      %v2979 = vsel %vm2339, %v2148, %v2851
      %v2980 = vsel %vm2340, %v2151, %v2852
      %v2981 = vsel %vm2341, %v2154, %v2853
      %v2982 = vsel %vm2342, %v2157, %v2854
      %v2983 = vsel %vm2343, %v2160, %v2855
      %v2984 = vsel %vm2344, %v2163, %v2856
      %v2985 = vsel %vm2345, %v2166, %v2857
      %v2986 = vsel %vm2346, %v2169, %v2858
      %v2987 = vsel %vm2347, %v2172, %v2859
      %v2988 = vsel %vm2348, %v2175, %v2860
      %v2989 = vsel %vm2349, %v2178, %v2861
      %v2990 = vsel %vm2350, %v2181, %v2862
      %v2991 = vsel %vm2351, %v2184, %v2863
      %v2992 = vsel %vm2352, %v2187, %v2864
      %v2993 = vsel %vm2353, %v2190, %v2865
      %v2994 = vsel %vm2354, %v2193, %v2866
      %v2995 = vsel %vm2355, %v2196, %v2867
      %v2996 = vsel %vm2356, %v2199, %v2868
      %v2997 = vsel %vm2357, %v2202, %v2869
      %v2998 = vsel %vm2358, %v2205, %v2870
      %v2999 = vsel %vm2359, %v2208, %v2871
      %v3000 = vsel %vm2360, %v2211, %v2872
      %v3001 = vsel %vm2361, %v2214, %v2873
      %v3002 = vsel %vm2362, %v2217, %v2874
      %v3003 = vsel %vm2363, %v2220, %v2875
      %v3004 = vsel %vm2364, %v2223, %v2876
      %v3005 = vsel %vm2365, %v2226, %v2877
      %v3006 = vsel %vm2366, %v2229, %v2878
      %v3007 = vsel %vm2367, %v2232, %v2879
      %v3008 = vsel %vm2368, %v2235, %v2880
      %v3009 = vsel %vm2369, %v2238, %v2881
      %v3010 = vsel %vm2370, %v2241, %v2882
      %v3011 = vld [vmem:[%s3] sm:$0xff]
      %v3012 = vld [vmem:[%s3 + $0x8] sm:$0xff]
      %v3013 = vld [vmem:[%s3 + $0x10] sm:$0xff]
      %v3014 = vld [vmem:[%s3 + $0x18] sm:$0xff]
      %v3015 = vld [vmem:[%s3 + $0x20] sm:$0xff]
      %v3016 = vld [vmem:[%s3 + $0x28] sm:$0xff]
      %v3017 = vld [vmem:[%s3 + $0x30] sm:$0xff]
      %v3018 = vld [vmem:[%s3 + $0x38] sm:$0xff]
      %v3019 = vld [vmem:[%s4] sm:$0x1]
      %v3021 = vperm.slane %v3019, 0
      %vm3023 = vcmask 523264
      %v3025 = vsel %vm3023, %v2883, 0
      %v3028 = vsel %vm3023, %v2884, 0
      %v3031 = vsel %vm3023, %v2885, 0
      %v3034 = vsel %vm3023, %v2886, 0
      %v3037 = vsel %vm3023, %v2887, 0
      %v3040 = vsel %vm3023, %v2888, 0
      %v3043 = vsel %vm3023, %v2889, 0
      %v3046 = vsel %vm3023, %v2890, 0
      %v3049 = vsel %vm3023, %v2891, 0
      %v3052 = vsel %vm3023, %v2892, 0
      %v3055 = vsel %vm3023, %v2893, 0
      %v3058 = vsel %vm3023, %v2894, 0
      %v3061 = vsel %vm3023, %v2895, 0
      %v3064 = vsel %vm3023, %v2896, 0
      %v3067 = vsel %vm3023, %v2897, 0
      %v3070 = vsel %vm3023, %v2898, 0
      %v3073 = vsel %vm3023, %v2899, 0
      %v3076 = vsel %vm3023, %v2900, 0
      %v3079 = vsel %vm3023, %v2901, 0
      %v3082 = vsel %vm3023, %v2902, 0
      %v3085 = vsel %vm3023, %v2903, 0
      %v3088 = vsel %vm3023, %v2904, 0
      %v3091 = vsel %vm3023, %v2905, 0
      %v3094 = vsel %vm3023, %v2906, 0
      %v3097 = vsel %vm3023, %v2907, 0
      %v3100 = vsel %vm3023, %v2908, 0
      %v3103 = vsel %vm3023, %v2909, 0
      %v3106 = vsel %vm3023, %v2910, 0
      %v3109 = vsel %vm3023, %v2911, 0
      %v3112 = vsel %vm3023, %v2912, 0
      %v3115 = vsel %vm3023, %v2913, 0
      %v3118 = vsel %vm3023, %v2914, 0
      %v3121 = vsel %vm3023, %v2915, 0
      %v3124 = vsel %vm3023, %v2916, 0
      %v3127 = vsel %vm3023, %v2917, 0
      %v3130 = vsel %vm3023, %v2918, 0
      %v3133 = vsel %vm3023, %v2919, 0
      %v3136 = vsel %vm3023, %v2920, 0
      %v3139 = vsel %vm3023, %v2921, 0
      %v3142 = vsel %vm3023, %v2922, 0
      %v3145 = vsel %vm3023, %v2923, 0
      %v3148 = vsel %vm3023, %v2924, 0
      %v3151 = vsel %vm3023, %v2925, 0
      %v3154 = vsel %vm3023, %v2926, 0
      %v3157 = vsel %vm3023, %v2927, 0
      %v3160 = vsel %vm3023, %v2928, 0
      %v3163 = vsel %vm3023, %v2929, 0
      %v3166 = vsel %vm3023, %v2930, 0
      %v3169 = vsel %vm3023, %v2931, 0
      %v3172 = vsel %vm3023, %v2932, 0
      %v3175 = vsel %vm3023, %v2933, 0
      %v3178 = vsel %vm3023, %v2934, 0
      %v3181 = vsel %vm3023, %v2935, 0
      %v3184 = vsel %vm3023, %v2936, 0
      %v3187 = vsel %vm3023, %v2937, 0
      %v3190 = vsel %vm3023, %v2938, 0
      %v3193 = vsel %vm3023, %v2939, 0
      %v3196 = vsel %vm3023, %v2940, 0
      %v3199 = vsel %vm3023, %v2941, 0
      %v3202 = vsel %vm3023, %v2942, 0
      %v3205 = vsel %vm3023, %v2943, 0
      %v3208 = vsel %vm3023, %v2944, 0
      %v3211 = vsel %vm3023, %v2945, 0
      %v3214 = vsel %vm3023, %v2946, 0
      %v3217 = vsel %vm3023, %v2947, 0
      %v3220 = vsel %vm3023, %v2948, 0
      %v3223 = vsel %vm3023, %v2949, 0
      %v3226 = vsel %vm3023, %v2950, 0
      %v3229 = vsel %vm3023, %v2951, 0
      %v3232 = vsel %vm3023, %v2952, 0
      %v3235 = vsel %vm3023, %v2953, 0
      %v3238 = vsel %vm3023, %v2954, 0
      %v3241 = vsel %vm3023, %v2955, 0
      %v3244 = vsel %vm3023, %v2956, 0
      %v3247 = vsel %vm3023, %v2957, 0
      %v3250 = vsel %vm3023, %v2958, 0
      %v3253 = vsel %vm3023, %v2959, 0
      %v3256 = vsel %vm3023, %v2960, 0
      %v3259 = vsel %vm3023, %v2961, 0
      %v3262 = vsel %vm3023, %v2962, 0
      %v3265 = vsel %vm3023, %v2963, 0
      %v3268 = vsel %vm3023, %v2964, 0
      %v3271 = vsel %vm3023, %v2965, 0
      %v3274 = vsel %vm3023, %v2966, 0
      %v3277 = vsel %vm3023, %v2967, 0
      %v3280 = vsel %vm3023, %v2968, 0
      %v3283 = vsel %vm3023, %v2969, 0
      %v3286 = vsel %vm3023, %v2970, 0
      %v3289 = vsel %vm3023, %v2971, 0
      %v3292 = vsel %vm3023, %v2972, 0
      %v3295 = vsel %vm3023, %v2973, 0
      %v3298 = vsel %vm3023, %v2974, 0
      %v3301 = vsel %vm3023, %v2975, 0
      %v3304 = vsel %vm3023, %v2976, 0
      %v3307 = vsel %vm3023, %v2977, 0
      %v3310 = vsel %vm3023, %v2978, 0
      %v3313 = vsel %vm3023, %v2979, 0
      %v3316 = vsel %vm3023, %v2980, 0
      %v3319 = vsel %vm3023, %v2981, 0
      %v3322 = vsel %vm3023, %v2982, 0
      %v3325 = vsel %vm3023, %v2983, 0
      %v3328 = vsel %vm3023, %v2984, 0
      %v3331 = vsel %vm3023, %v2985, 0
      %v3334 = vsel %vm3023, %v2986, 0
      %v3337 = vsel %vm3023, %v2987, 0
      %v3340 = vsel %vm3023, %v2988, 0
      %v3343 = vsel %vm3023, %v2989, 0
      %v3346 = vsel %vm3023, %v2990, 0
      %v3349 = vsel %vm3023, %v2991, 0
      %v3352 = vsel %vm3023, %v2992, 0
      %v3355 = vsel %vm3023, %v2993, 0
      %v3358 = vsel %vm3023, %v2994, 0
      %v3361 = vsel %vm3023, %v2995, 0
      %v3364 = vsel %vm3023, %v2996, 0
      %v3367 = vsel %vm3023, %v2997, 0
      %v3370 = vsel %vm3023, %v2998, 0
      %v3373 = vsel %vm3023, %v2999, 0
      %v3376 = vsel %vm3023, %v3000, 0
      %v3379 = vsel %vm3023, %v3001, 0
      %v3382 = vsel %vm3023, %v3002, 0
      %v3385 = vsel %vm3023, %v3003, 0
      %v3388 = vsel %vm3023, %v3004, 0
      %v3391 = vsel %vm3023, %v3005, 0
      %v3394 = vsel %vm3023, %v3006, 0
      %v3397 = vsel %vm3023, %v3007, 0
      %v3400 = vsel %vm3023, %v3008, 0
      %v3403 = vsel %vm3023, %v3009, 0
      %v3406 = vsel %vm3023, %v3010, 0
      %3408 = vmatpush.msra.mxu0 0.0
      %3409 = vmatpush.msra.mxu0 0.0
      %3410 = vmatpush.msra.mxu0 0.0
      %3411 = vmatpush.msra.mxu0 0.0
      %3412 = vmatpush.msra.mxu0 0.0
      %3413 = vmatpush.msra.mxu0 0.0
      %3414 = vmatpush.msra.mxu0 0.0
      %3415 = vmatpush.msra.mxu0 0.0
      %3416 = vmatpush.msra.mxu0 %v3018
      %3417 = vmatpush.msra.mxu0 %v3017
      %3418 = vmatpush.msra.mxu0 %v3016
      %3419 = vmatpush.msra.mxu0 %v3015
      %3420 = vmatpush.msra.mxu0 %v3014
      %3421 = vmatpush.msra.mxu0 %v3013
      %3422 = vmatpush.msra.mxu0 %v3012
      %3423 = vmatpush.msra.mxu0 %v3011
      %3424 = vmatmul.f32.gmra.mxu0 %v3025
      %v3425 = vpop.f32.mrf.mxu0
      %v3426 = vadd.f32 %v3021, %v3425
      %3427 = vmatmul.f32.gmra.mxu0 %v3028
      %v3428 = vpop.f32.mrf.mxu0
      %v3429 = vadd.f32 %v3021, %v3428
      %3430 = vmatmul.f32.gmra.mxu0 %v3031
      %v3431 = vpop.f32.mrf.mxu0
      %v3432 = vadd.f32 %v3021, %v3431
      %3433 = vmatmul.f32.gmra.mxu0 %v3034
      %v3434 = vpop.f32.mrf.mxu0
      %v3435 = vadd.f32 %v3021, %v3434
      %3436 = vmatmul.f32.gmra.mxu0 %v3037
      %v3437 = vpop.f32.mrf.mxu0
      %v3438 = vadd.f32 %v3021, %v3437
      %3439 = vmatmul.f32.gmra.mxu0 %v3040
      %v3440 = vpop.f32.mrf.mxu0
      %v3441 = vadd.f32 %v3021, %v3440
      %3442 = vmatmul.f32.gmra.mxu0 %v3043
      %v3443 = vpop.f32.mrf.mxu0
      %v3444 = vadd.f32 %v3021, %v3443
      %3445 = vmatmul.f32.gmra.mxu0 %v3046
      %v3446 = vpop.f32.mrf.mxu0
      %v3447 = vadd.f32 %v3021, %v3446
      %3448 = vmatmul.f32.gmra.mxu0 %v3049
      %v3449 = vpop.f32.mrf.mxu0
      %v3450 = vadd.f32 %v3021, %v3449
      %3451 = vmatmul.f32.gmra.mxu0 %v3052
      %v3452 = vpop.f32.mrf.mxu0
      %v3453 = vadd.f32 %v3021, %v3452
      %3454 = vmatmul.f32.gmra.mxu0 %v3055
      %v3455 = vpop.f32.mrf.mxu0
      %v3456 = vadd.f32 %v3021, %v3455
      %3457 = vmatmul.f32.gmra.mxu0 %v3058
      %v3458 = vpop.f32.mrf.mxu0
      %v3459 = vadd.f32 %v3021, %v3458
      %3460 = vmatmul.f32.gmra.mxu0 %v3061
      %v3461 = vpop.f32.mrf.mxu0
      %v3462 = vadd.f32 %v3021, %v3461
      %3463 = vmatmul.f32.gmra.mxu0 %v3064
      %v3464 = vpop.f32.mrf.mxu0
      %v3465 = vadd.f32 %v3021, %v3464
      %3466 = vmatmul.f32.gmra.mxu0 %v3067
      %v3467 = vpop.f32.mrf.mxu0
      %v3468 = vadd.f32 %v3021, %v3467
      %3469 = vmatmul.f32.gmra.mxu0 %v3070
      %v3470 = vpop.f32.mrf.mxu0
      %v3471 = vadd.f32 %v3021, %v3470
      %3472 = vmatmul.f32.gmra.mxu0 %v3073
      %v3473 = vpop.f32.mrf.mxu0
      %v3474 = vadd.f32 %v3021, %v3473
      %3475 = vmatmul.f32.gmra.mxu0 %v3076
      %v3476 = vpop.f32.mrf.mxu0
      %v3477 = vadd.f32 %v3021, %v3476
      %3478 = vmatmul.f32.gmra.mxu0 %v3079
      %v3479 = vpop.f32.mrf.mxu0
      %v3480 = vadd.f32 %v3021, %v3479
      %3481 = vmatmul.f32.gmra.mxu0 %v3082
      %v3482 = vpop.f32.mrf.mxu0
      %v3483 = vadd.f32 %v3021, %v3482
      %3484 = vmatmul.f32.gmra.mxu0 %v3085
      %v3485 = vpop.f32.mrf.mxu0
      %v3486 = vadd.f32 %v3021, %v3485
      %3487 = vmatmul.f32.gmra.mxu0 %v3088
      %v3488 = vpop.f32.mrf.mxu0
      %v3489 = vadd.f32 %v3021, %v3488
      %3490 = vmatmul.f32.gmra.mxu0 %v3091
      %v3491 = vpop.f32.mrf.mxu0
      %v3492 = vadd.f32 %v3021, %v3491
      %3493 = vmatmul.f32.gmra.mxu0 %v3094
      %v3494 = vpop.f32.mrf.mxu0
      %v3495 = vadd.f32 %v3021, %v3494
      %3496 = vmatmul.f32.gmra.mxu0 %v3097
      %v3497 = vpop.f32.mrf.mxu0
      %v3498 = vadd.f32 %v3021, %v3497
      %3499 = vmatmul.f32.gmra.mxu0 %v3100
      %v3500 = vpop.f32.mrf.mxu0
      %v3501 = vadd.f32 %v3021, %v3500
      %3502 = vmatmul.f32.gmra.mxu0 %v3103
      %v3503 = vpop.f32.mrf.mxu0
      %v3504 = vadd.f32 %v3021, %v3503
      %3505 = vmatmul.f32.gmra.mxu0 %v3106
      %v3506 = vpop.f32.mrf.mxu0
      %v3507 = vadd.f32 %v3021, %v3506
      %3508 = vmatmul.f32.gmra.mxu0 %v3109
      %v3509 = vpop.f32.mrf.mxu0
      %v3510 = vadd.f32 %v3021, %v3509
      %3511 = vmatmul.f32.gmra.mxu0 %v3112
      %v3512 = vpop.f32.mrf.mxu0
      %v3513 = vadd.f32 %v3021, %v3512
      %3514 = vmatmul.f32.gmra.mxu0 %v3115
      %v3515 = vpop.f32.mrf.mxu0
      %v3516 = vadd.f32 %v3021, %v3515
      %3517 = vmatmul.f32.gmra.mxu0 %v3118
      %v3518 = vpop.f32.mrf.mxu0
      %v3519 = vadd.f32 %v3021, %v3518
      %3520 = vmatmul.f32.gmra.mxu0 %v3121
      %v3521 = vpop.f32.mrf.mxu0
      %v3522 = vadd.f32 %v3021, %v3521
      %3523 = vmatmul.f32.gmra.mxu0 %v3124
      %v3524 = vpop.f32.mrf.mxu0
      %v3525 = vadd.f32 %v3021, %v3524
      %3526 = vmatmul.f32.gmra.mxu0 %v3127
      %v3527 = vpop.f32.mrf.mxu0
      %v3528 = vadd.f32 %v3021, %v3527
      %3529 = vmatmul.f32.gmra.mxu0 %v3130
      %v3530 = vpop.f32.mrf.mxu0
      %v3531 = vadd.f32 %v3021, %v3530
      %3532 = vmatmul.f32.gmra.mxu0 %v3133
      %v3533 = vpop.f32.mrf.mxu0
      %v3534 = vadd.f32 %v3021, %v3533
      %3535 = vmatmul.f32.gmra.mxu0 %v3136
      %v3536 = vpop.f32.mrf.mxu0
      %v3537 = vadd.f32 %v3021, %v3536
      %3538 = vmatmul.f32.gmra.mxu0 %v3139
      %v3539 = vpop.f32.mrf.mxu0
      %v3540 = vadd.f32 %v3021, %v3539
      %3541 = vmatmul.f32.gmra.mxu0 %v3142
      %v3542 = vpop.f32.mrf.mxu0
      %v3543 = vadd.f32 %v3021, %v3542
      %3544 = vmatmul.f32.gmra.mxu0 %v3145
      %v3545 = vpop.f32.mrf.mxu0
      %v3546 = vadd.f32 %v3021, %v3545
      %3547 = vmatmul.f32.gmra.mxu0 %v3148
      %v3548 = vpop.f32.mrf.mxu0
      %v3549 = vadd.f32 %v3021, %v3548
      %3550 = vmatmul.f32.gmra.mxu0 %v3151
      %v3551 = vpop.f32.mrf.mxu0
      %v3552 = vadd.f32 %v3021, %v3551
      %3553 = vmatmul.f32.gmra.mxu0 %v3154
      %v3554 = vpop.f32.mrf.mxu0
      %v3555 = vadd.f32 %v3021, %v3554
      %3556 = vmatmul.f32.gmra.mxu0 %v3157
      %v3557 = vpop.f32.mrf.mxu0
      %v3558 = vadd.f32 %v3021, %v3557
      %3559 = vmatmul.f32.gmra.mxu0 %v3160
      %v3560 = vpop.f32.mrf.mxu0
      %v3561 = vadd.f32 %v3021, %v3560
      %3562 = vmatmul.f32.gmra.mxu0 %v3163
      %v3563 = vpop.f32.mrf.mxu0
      %v3564 = vadd.f32 %v3021, %v3563
      %3565 = vmatmul.f32.gmra.mxu0 %v3166
      %v3566 = vpop.f32.mrf.mxu0
      %v3567 = vadd.f32 %v3021, %v3566
      %3568 = vmatmul.f32.gmra.mxu0 %v3169
      %v3569 = vpop.f32.mrf.mxu0
      %v3570 = vadd.f32 %v3021, %v3569
      %3571 = vmatmul.f32.gmra.mxu0 %v3172
      %v3572 = vpop.f32.mrf.mxu0
      %v3573 = vadd.f32 %v3021, %v3572
      %3574 = vmatmul.f32.gmra.mxu0 %v3175
      %v3575 = vpop.f32.mrf.mxu0
      %v3576 = vadd.f32 %v3021, %v3575
      %3577 = vmatmul.f32.gmra.mxu0 %v3178
      %v3578 = vpop.f32.mrf.mxu0
      %v3579 = vadd.f32 %v3021, %v3578
      %3580 = vmatmul.f32.gmra.mxu0 %v3181
      %v3581 = vpop.f32.mrf.mxu0
      %v3582 = vadd.f32 %v3021, %v3581
      %3583 = vmatmul.f32.gmra.mxu0 %v3184
      %v3584 = vpop.f32.mrf.mxu0
      %v3585 = vadd.f32 %v3021, %v3584
      %3586 = vmatmul.f32.gmra.mxu0 %v3187
      %v3587 = vpop.f32.mrf.mxu0
      %v3588 = vadd.f32 %v3021, %v3587
      %3589 = vmatmul.f32.gmra.mxu0 %v3190
      %v3590 = vpop.f32.mrf.mxu0
      %v3591 = vadd.f32 %v3021, %v3590
      %3592 = vmatmul.f32.gmra.mxu0 %v3193
      %v3593 = vpop.f32.mrf.mxu0
      %v3594 = vadd.f32 %v3021, %v3593
      %3595 = vmatmul.f32.gmra.mxu0 %v3196
      %v3596 = vpop.f32.mrf.mxu0
      %v3597 = vadd.f32 %v3021, %v3596
      %3598 = vmatmul.f32.gmra.mxu0 %v3199
      %v3599 = vpop.f32.mrf.mxu0
      %v3600 = vadd.f32 %v3021, %v3599
      %3601 = vmatmul.f32.gmra.mxu0 %v3202
      %v3602 = vpop.f32.mrf.mxu0
      %v3603 = vadd.f32 %v3021, %v3602
      %3604 = vmatmul.f32.gmra.mxu0 %v3205
      %v3605 = vpop.f32.mrf.mxu0
      %v3606 = vadd.f32 %v3021, %v3605
      %3607 = vmatmul.f32.gmra.mxu0 %v3208
      %v3608 = vpop.f32.mrf.mxu0
      %v3609 = vadd.f32 %v3021, %v3608
      %3610 = vmatmul.f32.gmra.mxu0 %v3211
      %v3611 = vpop.f32.mrf.mxu0
      %v3612 = vadd.f32 %v3021, %v3611
      %3613 = vmatmul.f32.gmra.mxu0 %v3214
      %v3614 = vpop.f32.mrf.mxu0
      %v3615 = vadd.f32 %v3021, %v3614
      %3616 = vmatmul.f32.gmra.mxu0 %v3217
      %v3617 = vpop.f32.mrf.mxu0
      %v3618 = vadd.f32 %v3021, %v3617
      %3619 = vmatmul.f32.gmra.mxu0 %v3220
      %v3620 = vpop.f32.mrf.mxu0
      %v3621 = vadd.f32 %v3021, %v3620
      %3622 = vmatmul.f32.gmra.mxu0 %v3223
      %v3623 = vpop.f32.mrf.mxu0
      %v3624 = vadd.f32 %v3021, %v3623
      %3625 = vmatmul.f32.gmra.mxu0 %v3226
      %v3626 = vpop.f32.mrf.mxu0
      %v3627 = vadd.f32 %v3021, %v3626
      %3628 = vmatmul.f32.gmra.mxu0 %v3229
      %v3629 = vpop.f32.mrf.mxu0
      %v3630 = vadd.f32 %v3021, %v3629
      %3631 = vmatmul.f32.gmra.mxu0 %v3232
      %v3632 = vpop.f32.mrf.mxu0
      %v3633 = vadd.f32 %v3021, %v3632
      %3634 = vmatmul.f32.gmra.mxu0 %v3235
      %v3635 = vpop.f32.mrf.mxu0
      %v3636 = vadd.f32 %v3021, %v3635
      %3637 = vmatmul.f32.gmra.mxu0 %v3238
      %v3638 = vpop.f32.mrf.mxu0
      %v3639 = vadd.f32 %v3021, %v3638
      %3640 = vmatmul.f32.gmra.mxu0 %v3241
      %v3641 = vpop.f32.mrf.mxu0
      %v3642 = vadd.f32 %v3021, %v3641
      %3643 = vmatmul.f32.gmra.mxu0 %v3244
      %v3644 = vpop.f32.mrf.mxu0
      %v3645 = vadd.f32 %v3021, %v3644
      %3646 = vmatmul.f32.gmra.mxu0 %v3247
      %v3647 = vpop.f32.mrf.mxu0
      %v3648 = vadd.f32 %v3021, %v3647
      %3649 = vmatmul.f32.gmra.mxu0 %v3250
      %v3650 = vpop.f32.mrf.mxu0
      %v3651 = vadd.f32 %v3021, %v3650
      %3652 = vmatmul.f32.gmra.mxu0 %v3253
      %v3653 = vpop.f32.mrf.mxu0
      %v3654 = vadd.f32 %v3021, %v3653
      %3655 = vmatmul.f32.gmra.mxu0 %v3256
      %v3656 = vpop.f32.mrf.mxu0
      %v3657 = vadd.f32 %v3021, %v3656
      %3658 = vmatmul.f32.gmra.mxu0 %v3259
      %v3659 = vpop.f32.mrf.mxu0
      %v3660 = vadd.f32 %v3021, %v3659
      %3661 = vmatmul.f32.gmra.mxu0 %v3262
      %v3662 = vpop.f32.mrf.mxu0
      %v3663 = vadd.f32 %v3021, %v3662
      %3664 = vmatmul.f32.gmra.mxu0 %v3265
      %v3665 = vpop.f32.mrf.mxu0
      %v3666 = vadd.f32 %v3021, %v3665
      %3667 = vmatmul.f32.gmra.mxu0 %v3268
      %v3668 = vpop.f32.mrf.mxu0
      %v3669 = vadd.f32 %v3021, %v3668
      %3670 = vmatmul.f32.gmra.mxu0 %v3271
      %v3671 = vpop.f32.mrf.mxu0
      %v3672 = vadd.f32 %v3021, %v3671
      %3673 = vmatmul.f32.gmra.mxu0 %v3274
      %v3674 = vpop.f32.mrf.mxu0
      %v3675 = vadd.f32 %v3021, %v3674
      %3676 = vmatmul.f32.gmra.mxu0 %v3277
      %v3677 = vpop.f32.mrf.mxu0
      %v3678 = vadd.f32 %v3021, %v3677
      %3679 = vmatmul.f32.gmra.mxu0 %v3280
      %v3680 = vpop.f32.mrf.mxu0
      %v3681 = vadd.f32 %v3021, %v3680
      %3682 = vmatmul.f32.gmra.mxu0 %v3283
      %v3683 = vpop.f32.mrf.mxu0
      %v3684 = vadd.f32 %v3021, %v3683
      %3685 = vmatmul.f32.gmra.mxu0 %v3286
      %v3686 = vpop.f32.mrf.mxu0
      %v3687 = vadd.f32 %v3021, %v3686
      %3688 = vmatmul.f32.gmra.mxu0 %v3289
      %v3689 = vpop.f32.mrf.mxu0
      %v3690 = vadd.f32 %v3021, %v3689
      %3691 = vmatmul.f32.gmra.mxu0 %v3292
      %v3692 = vpop.f32.mrf.mxu0
      %v3693 = vadd.f32 %v3021, %v3692
      %3694 = vmatmul.f32.gmra.mxu0 %v3295
      %v3695 = vpop.f32.mrf.mxu0
      %v3696 = vadd.f32 %v3021, %v3695
      %3697 = vmatmul.f32.gmra.mxu0 %v3298
      %v3698 = vpop.f32.mrf.mxu0
      %v3699 = vadd.f32 %v3021, %v3698
      %3700 = vmatmul.f32.gmra.mxu0 %v3301
      %v3701 = vpop.f32.mrf.mxu0
      %v3702 = vadd.f32 %v3021, %v3701
      %3703 = vmatmul.f32.gmra.mxu0 %v3304
      %v3704 = vpop.f32.mrf.mxu0
      %v3705 = vadd.f32 %v3021, %v3704
      %3706 = vmatmul.f32.gmra.mxu0 %v3307
      %v3707 = vpop.f32.mrf.mxu0
      %v3708 = vadd.f32 %v3021, %v3707
      %3709 = vmatmul.f32.gmra.mxu0 %v3310
      %v3710 = vpop.f32.mrf.mxu0
      %v3711 = vadd.f32 %v3021, %v3710
      %3712 = vmatmul.f32.gmra.mxu0 %v3313
      %v3713 = vpop.f32.mrf.mxu0
      %v3714 = vadd.f32 %v3021, %v3713
      %3715 = vmatmul.f32.gmra.mxu0 %v3316
      %v3716 = vpop.f32.mrf.mxu0
      %v3717 = vadd.f32 %v3021, %v3716
      %3718 = vmatmul.f32.gmra.mxu0 %v3319
      %v3719 = vpop.f32.mrf.mxu0
      %v3720 = vadd.f32 %v3021, %v3719
      %3721 = vmatmul.f32.gmra.mxu0 %v3322
      %v3722 = vpop.f32.mrf.mxu0
      %v3723 = vadd.f32 %v3021, %v3722
      %3724 = vmatmul.f32.gmra.mxu0 %v3325
      %v3725 = vpop.f32.mrf.mxu0
      %v3726 = vadd.f32 %v3021, %v3725
      %3727 = vmatmul.f32.gmra.mxu0 %v3328
      %v3728 = vpop.f32.mrf.mxu0
      %v3729 = vadd.f32 %v3021, %v3728
      %3730 = vmatmul.f32.gmra.mxu0 %v3331
      %v3731 = vpop.f32.mrf.mxu0
      %v3732 = vadd.f32 %v3021, %v3731
      %3733 = vmatmul.f32.gmra.mxu0 %v3334
      %v3734 = vpop.f32.mrf.mxu0
      %v3735 = vadd.f32 %v3021, %v3734
      %3736 = vmatmul.f32.gmra.mxu0 %v3337
      %v3737 = vpop.f32.mrf.mxu0
      %v3738 = vadd.f32 %v3021, %v3737
      %3739 = vmatmul.f32.gmra.mxu0 %v3340
      %v3740 = vpop.f32.mrf.mxu0
      %v3741 = vadd.f32 %v3021, %v3740
      %3742 = vmatmul.f32.gmra.mxu0 %v3343
      %v3743 = vpop.f32.mrf.mxu0
      %v3744 = vadd.f32 %v3021, %v3743
      %3745 = vmatmul.f32.gmra.mxu0 %v3346
      %v3746 = vpop.f32.mrf.mxu0
      %v3747 = vadd.f32 %v3021, %v3746
      %3748 = vmatmul.f32.gmra.mxu0 %v3349
      %v3749 = vpop.f32.mrf.mxu0
      %v3750 = vadd.f32 %v3021, %v3749
      %3751 = vmatmul.f32.gmra.mxu0 %v3352
      %v3752 = vpop.f32.mrf.mxu0
      %v3753 = vadd.f32 %v3021, %v3752
      %3754 = vmatmul.f32.gmra.mxu0 %v3355
      %v3755 = vpop.f32.mrf.mxu0
      %v3756 = vadd.f32 %v3021, %v3755
      %3757 = vmatmul.f32.gmra.mxu0 %v3358
      %v3758 = vpop.f32.mrf.mxu0
      %v3759 = vadd.f32 %v3021, %v3758
      %3760 = vmatmul.f32.gmra.mxu0 %v3361
      %v3761 = vpop.f32.mrf.mxu0
      %v3762 = vadd.f32 %v3021, %v3761
      %3763 = vmatmul.f32.gmra.mxu0 %v3364
      %v3764 = vpop.f32.mrf.mxu0
      %v3765 = vadd.f32 %v3021, %v3764
      %3766 = vmatmul.f32.gmra.mxu0 %v3367
      %v3767 = vpop.f32.mrf.mxu0
      %v3768 = vadd.f32 %v3021, %v3767
      %3769 = vmatmul.f32.gmra.mxu0 %v3370
      %v3770 = vpop.f32.mrf.mxu0
      %v3771 = vadd.f32 %v3021, %v3770
      %3772 = vmatmul.f32.gmra.mxu0 %v3373
      %v3773 = vpop.f32.mrf.mxu0
      %v3774 = vadd.f32 %v3021, %v3773
      %3775 = vmatmul.f32.gmra.mxu0 %v3376
      %v3776 = vpop.f32.mrf.mxu0
      %v3777 = vadd.f32 %v3021, %v3776
      %3778 = vmatmul.f32.gmra.mxu0 %v3379
      %v3779 = vpop.f32.mrf.mxu0
      %v3780 = vadd.f32 %v3021, %v3779
      %3781 = vmatmul.f32.gmra.mxu0 %v3382
      %v3782 = vpop.f32.mrf.mxu0
      %v3783 = vadd.f32 %v3021, %v3782
      %3784 = vmatmul.f32.gmra.mxu0 %v3385
      %v3785 = vpop.f32.mrf.mxu0
      %v3786 = vadd.f32 %v3021, %v3785
      %3787 = vmatmul.f32.gmra.mxu0 %v3388
      %v3788 = vpop.f32.mrf.mxu0
      %v3789 = vadd.f32 %v3021, %v3788
      %3790 = vmatmul.f32.gmra.mxu0 %v3391
      %v3791 = vpop.f32.mrf.mxu0
      %v3792 = vadd.f32 %v3021, %v3791
      %3793 = vmatmul.f32.gmra.mxu0 %v3394
      %v3794 = vpop.f32.mrf.mxu0
      %v3795 = vadd.f32 %v3021, %v3794
      %3796 = vmatmul.f32.gmra.mxu0 %v3397
      %v3797 = vpop.f32.mrf.mxu0
      %v3798 = vadd.f32 %v3021, %v3797
      %3799 = vmatmul.f32.gmra.mxu0 %v3400
      %v3800 = vpop.f32.mrf.mxu0
      %v3801 = vadd.f32 %v3021, %v3800
      %3802 = vmatmul.f32.gmra.mxu0 %v3403
      %v3803 = vpop.f32.mrf.mxu0
      %v3804 = vadd.f32 %v3021, %v3803
      %3805 = vmatmul.f32.gmra.mxu0 %v3406
      %v3806 = vpop.f32.mrf.mxu0
      %v3807 = vadd.f32 %v3021, %v3806
      %3808 = vdwg.mxu0
      %v3809 = vsub.f32 0.0, %v3426
      %v3810 = vsub.f32 0.0, %v3429
      %v3811 = vsub.f32 0.0, %v3432
      %v3812 = vsub.f32 0.0, %v3435
      %v3813 = vsub.f32 0.0, %v3438
      %v3814 = vsub.f32 0.0, %v3441
      %v3815 = vsub.f32 0.0, %v3444
      %v3816 = vsub.f32 0.0, %v3447
      %v3817 = vsub.f32 0.0, %v3450
      %v3818 = vsub.f32 0.0, %v3453
      %v3819 = vsub.f32 0.0, %v3456
      %v3820 = vsub.f32 0.0, %v3459
      %v3821 = vsub.f32 0.0, %v3462
      %v3822 = vsub.f32 0.0, %v3465
      %v3823 = vsub.f32 0.0, %v3468
      %v3824 = vsub.f32 0.0, %v3471
      %v3825 = vsub.f32 0.0, %v3474
      %v3826 = vsub.f32 0.0, %v3477
      %v3827 = vsub.f32 0.0, %v3480
      %v3828 = vsub.f32 0.0, %v3483
      %v3829 = vsub.f32 0.0, %v3486
      %v3830 = vsub.f32 0.0, %v3489
      %v3831 = vsub.f32 0.0, %v3492
      %v3832 = vsub.f32 0.0, %v3495
      %v3833 = vsub.f32 0.0, %v3498
      %v3834 = vsub.f32 0.0, %v3501
      %v3835 = vsub.f32 0.0, %v3504
      %v3836 = vsub.f32 0.0, %v3507
      %v3837 = vsub.f32 0.0, %v3510
      %v3838 = vsub.f32 0.0, %v3513
      %v3839 = vsub.f32 0.0, %v3516
      %v3840 = vsub.f32 0.0, %v3519
      %v3841 = vsub.f32 0.0, %v3522
      %v3842 = vsub.f32 0.0, %v3525
      %v3843 = vsub.f32 0.0, %v3528
      %v3844 = vsub.f32 0.0, %v3531
      %v3845 = vsub.f32 0.0, %v3534
      %v3846 = vsub.f32 0.0, %v3537
      %v3847 = vsub.f32 0.0, %v3540
      %v3848 = vsub.f32 0.0, %v3543
      %v3849 = vsub.f32 0.0, %v3546
      %v3850 = vsub.f32 0.0, %v3549
      %v3851 = vsub.f32 0.0, %v3552
      %v3852 = vsub.f32 0.0, %v3555
      %v3853 = vsub.f32 0.0, %v3558
      %v3854 = vsub.f32 0.0, %v3561
      %v3855 = vsub.f32 0.0, %v3564
      %v3856 = vsub.f32 0.0, %v3567
      %v3857 = vsub.f32 0.0, %v3570
      %v3858 = vsub.f32 0.0, %v3573
      %v3859 = vsub.f32 0.0, %v3576
      %v3860 = vsub.f32 0.0, %v3579
      %v3861 = vsub.f32 0.0, %v3582
      %v3862 = vsub.f32 0.0, %v3585
      %v3863 = vsub.f32 0.0, %v3588
      %v3864 = vsub.f32 0.0, %v3591
      %v3865 = vsub.f32 0.0, %v3594
      %v3866 = vsub.f32 0.0, %v3597
      %v3867 = vsub.f32 0.0, %v3600
      %v3868 = vsub.f32 0.0, %v3603
      %v3869 = vsub.f32 0.0, %v3606
      %v3870 = vsub.f32 0.0, %v3609
      %v3871 = vsub.f32 0.0, %v3612
      %v3872 = vsub.f32 0.0, %v3615
      %v3873 = vsub.f32 0.0, %v3618
      %v3874 = vsub.f32 0.0, %v3621
      %v3875 = vsub.f32 0.0, %v3624
      %v3876 = vsub.f32 0.0, %v3627
      %v3877 = vsub.f32 0.0, %v3630
      %v3878 = vsub.f32 0.0, %v3633
      %v3879 = vsub.f32 0.0, %v3636
      %v3880 = vsub.f32 0.0, %v3639
      %v3881 = vsub.f32 0.0, %v3642
      %v3882 = vsub.f32 0.0, %v3645
      %v3883 = vsub.f32 0.0, %v3648
      %v3884 = vsub.f32 0.0, %v3651
      %v3885 = vsub.f32 0.0, %v3654
      %v3886 = vsub.f32 0.0, %v3657
      %v3887 = vsub.f32 0.0, %v3660
      %v3888 = vsub.f32 0.0, %v3663
      %v3889 = vsub.f32 0.0, %v3666
      %v3890 = vsub.f32 0.0, %v3669
      %v3891 = vsub.f32 0.0, %v3672
      %v3892 = vsub.f32 0.0, %v3675
      %v3893 = vsub.f32 0.0, %v3678
      %v3894 = vsub.f32 0.0, %v3681
      %v3895 = vsub.f32 0.0, %v3684
      %v3896 = vsub.f32 0.0, %v3687
      %v3897 = vsub.f32 0.0, %v3690
      %v3898 = vsub.f32 0.0, %v3693
      %v3899 = vsub.f32 0.0, %v3696
      %v3900 = vsub.f32 0.0, %v3699
      %v3901 = vsub.f32 0.0, %v3702
      %v3902 = vsub.f32 0.0, %v3705
      %v3903 = vsub.f32 0.0, %v3708
      %v3904 = vsub.f32 0.0, %v3711
      %v3905 = vsub.f32 0.0, %v3714
      %v3906 = vsub.f32 0.0, %v3717
      %v3907 = vsub.f32 0.0, %v3720
      %v3908 = vsub.f32 0.0, %v3723
      %v3909 = vsub.f32 0.0, %v3726
      %v3910 = vsub.f32 0.0, %v3729
      %v3911 = vsub.f32 0.0, %v3732
      %v3912 = vsub.f32 0.0, %v3735
      %v3913 = vsub.f32 0.0, %v3738
      %v3914 = vsub.f32 0.0, %v3741
      %v3915 = vsub.f32 0.0, %v3744
      %v3916 = vsub.f32 0.0, %v3747
      %v3917 = vsub.f32 0.0, %v3750
      %v3918 = vsub.f32 0.0, %v3753
      %v3919 = vsub.f32 0.0, %v3756
      %v3920 = vsub.f32 0.0, %v3759
      %v3921 = vsub.f32 0.0, %v3762
      %v3922 = vsub.f32 0.0, %v3765
      %v3923 = vsub.f32 0.0, %v3768
      %v3924 = vsub.f32 0.0, %v3771
      %v3925 = vsub.f32 0.0, %v3774
      %v3926 = vsub.f32 0.0, %v3777
      %v3927 = vsub.f32 0.0, %v3780
      %v3928 = vsub.f32 0.0, %v3783
      %v3929 = vsub.f32 0.0, %v3786
      %v3930 = vsub.f32 0.0, %v3789
      %v3931 = vsub.f32 0.0, %v3792
      %v3932 = vsub.f32 0.0, %v3795
      %v3933 = vsub.f32 0.0, %v3798
      %v3934 = vsub.f32 0.0, %v3801
      %v3935 = vsub.f32 0.0, %v3804
      %v3936 = vsub.f32 0.0, %v3807
      %v3937 = vmul.f32 %v3809, 1.442695
      %v3938 = vpow.pop %v3937
      %v3939 = vmul.f32 %v3810, 1.442695
      %v3940 = vpow.pop %v3939
      %v3941 = vmul.f32 %v3811, 1.442695
      %v3942 = vpow.pop %v3941
      %v3943 = vmul.f32 %v3812, 1.442695
      %v3944 = vpow.pop %v3943
      %v3945 = vmul.f32 %v3813, 1.442695
      %v3946 = vpow.pop %v3945
      %v3947 = vmul.f32 %v3814, 1.442695
      %v3948 = vpow.pop %v3947
      %v3949 = vmul.f32 %v3815, 1.442695
      %v3950 = vpow.pop %v3949
      %v3951 = vmul.f32 %v3816, 1.442695
      %v3952 = vpow.pop %v3951
      %v3953 = vmul.f32 %v3817, 1.442695
      %v3954 = vpow.pop %v3953
      %v3955 = vmul.f32 %v3818, 1.442695
      %v3956 = vpow.pop %v3955
      %v3957 = vmul.f32 %v3819, 1.442695
      %v3958 = vpow.pop %v3957
      %v3959 = vmul.f32 %v3820, 1.442695
      %v3960 = vpow.pop %v3959
      %v3961 = vmul.f32 %v3821, 1.442695
      %v3962 = vpow.pop %v3961
      %v3963 = vmul.f32 %v3822, 1.442695
      %v3964 = vpow.pop %v3963
      %v3965 = vmul.f32 %v3823, 1.442695
      %v3966 = vpow.pop %v3965
      %v3967 = vmul.f32 %v3824, 1.442695
      %v3968 = vpow.pop %v3967
      %v3969 = vmul.f32 %v3825, 1.442695
      %v3970 = vpow.pop %v3969
      %v3971 = vmul.f32 %v3826, 1.442695
      %v3972 = vpow.pop %v3971
      %v3973 = vmul.f32 %v3827, 1.442695
      %v3974 = vpow.pop %v3973
      %v3975 = vmul.f32 %v3828, 1.442695
      %v3976 = vpow.pop %v3975
      %v3977 = vmul.f32 %v3829, 1.442695
      %v3978 = vpow.pop %v3977
      %v3979 = vmul.f32 %v3830, 1.442695
      %v3980 = vpow.pop %v3979
      %v3981 = vmul.f32 %v3831, 1.442695
      %v3982 = vpow.pop %v3981
      %v3983 = vmul.f32 %v3832, 1.442695
      %v3984 = vpow.pop %v3983
      %v3985 = vmul.f32 %v3833, 1.442695
      %v3986 = vpow.pop %v3985
      %v3987 = vmul.f32 %v3834, 1.442695
      %v3988 = vpow.pop %v3987
      %v3989 = vmul.f32 %v3835, 1.442695
      %v3990 = vpow.pop %v3989
      %v3991 = vmul.f32 %v3836, 1.442695
      %v3992 = vpow.pop %v3991
      %v3993 = vmul.f32 %v3837, 1.442695
      %v3994 = vpow.pop %v3993
      %v3995 = vmul.f32 %v3838, 1.442695
      %v3996 = vpow.pop %v3995
      %v3997 = vmul.f32 %v3839, 1.442695
      %v3998 = vpow.pop %v3997
      %v3999 = vmul.f32 %v3840, 1.442695
      %v4000 = vpow.pop %v3999
      %v4001 = vmul.f32 %v3841, 1.442695
      %v4002 = vpow.pop %v4001
      %v4003 = vmul.f32 %v3842, 1.442695
      %v4004 = vpow.pop %v4003
      %v4005 = vmul.f32 %v3843, 1.442695
      %v4006 = vpow.pop %v4005
      %v4007 = vmul.f32 %v3844, 1.442695
      %v4008 = vpow.pop %v4007
      %v4009 = vmul.f32 %v3845, 1.442695
      %v4010 = vpow.pop %v4009
      %v4011 = vmul.f32 %v3846, 1.442695
      %v4012 = vpow.pop %v4011
      %v4013 = vmul.f32 %v3847, 1.442695
      %v4014 = vpow.pop %v4013
      %v4015 = vmul.f32 %v3848, 1.442695
      %v4016 = vpow.pop %v4015
      %v4017 = vmul.f32 %v3849, 1.442695
      %v4018 = vpow.pop %v4017
      %v4019 = vmul.f32 %v3850, 1.442695
      %v4020 = vpow.pop %v4019
      %v4021 = vmul.f32 %v3851, 1.442695
      %v4022 = vpow.pop %v4021
      %v4023 = vmul.f32 %v3852, 1.442695
      %v4024 = vpow.pop %v4023
      %v4025 = vmul.f32 %v3853, 1.442695
      %v4026 = vpow.pop %v4025
      %v4027 = vmul.f32 %v3854, 1.442695
      %v4028 = vpow.pop %v4027
      %v4029 = vmul.f32 %v3855, 1.442695
      %v4030 = vpow.pop %v4029
      %v4031 = vmul.f32 %v3856, 1.442695
      %v4032 = vpow.pop %v4031
      %v4033 = vmul.f32 %v3857, 1.442695
      %v4034 = vpow.pop %v4033
      %v4035 = vmul.f32 %v3858, 1.442695
      %v4036 = vpow.pop %v4035
      %v4037 = vmul.f32 %v3859, 1.442695
      %v4038 = vpow.pop %v4037
      %v4039 = vmul.f32 %v3860, 1.442695
      %v4040 = vpow.pop %v4039
      %v4041 = vmul.f32 %v3861, 1.442695
      %v4042 = vpow.pop %v4041
      %v4043 = vmul.f32 %v3862, 1.442695
      %v4044 = vpow.pop %v4043
      %v4045 = vmul.f32 %v3863, 1.442695
      %v4046 = vpow.pop %v4045
      %v4047 = vmul.f32 %v3864, 1.442695
      %v4048 = vpow.pop %v4047
      %v4049 = vmul.f32 %v3865, 1.442695
      %v4050 = vpow.pop %v4049
      %v4051 = vmul.f32 %v3866, 1.442695
      %v4052 = vpow.pop %v4051
      %v4053 = vmul.f32 %v3867, 1.442695
      %v4054 = vpow.pop %v4053
      %v4055 = vmul.f32 %v3868, 1.442695
      %v4056 = vpow.pop %v4055
      %v4057 = vmul.f32 %v3869, 1.442695
      %v4058 = vpow.pop %v4057
      %v4059 = vmul.f32 %v3870, 1.442695
      %v4060 = vpow.pop %v4059
      %v4061 = vmul.f32 %v3871, 1.442695
      %v4062 = vpow.pop %v4061
      %v4063 = vmul.f32 %v3872, 1.442695
      %v4064 = vpow.pop %v4063
      %v4065 = vmul.f32 %v3873, 1.442695
      %v4066 = vpow.pop %v4065
      %v4067 = vmul.f32 %v3874, 1.442695
      %v4068 = vpow.pop %v4067
      %v4069 = vmul.f32 %v3875, 1.442695
      %v4070 = vpow.pop %v4069
      %v4071 = vmul.f32 %v3876, 1.442695
      %v4072 = vpow.pop %v4071
      %v4073 = vmul.f32 %v3877, 1.442695
      %v4074 = vpow.pop %v4073
      %v4075 = vmul.f32 %v3878, 1.442695
      %v4076 = vpow.pop %v4075
      %v4077 = vmul.f32 %v3879, 1.442695
      %v4078 = vpow.pop %v4077
      %v4079 = vmul.f32 %v3880, 1.442695
      %v4080 = vpow.pop %v4079
      %v4081 = vmul.f32 %v3881, 1.442695
      %v4082 = vpow.pop %v4081
      %v4083 = vmul.f32 %v3882, 1.442695
      %v4084 = vpow.pop %v4083
      %v4085 = vmul.f32 %v3883, 1.442695
      %v4086 = vpow.pop %v4085
      %v4087 = vmul.f32 %v3884, 1.442695
      %v4088 = vpow.pop %v4087
      %v4089 = vmul.f32 %v3885, 1.442695
      %v4090 = vpow.pop %v4089
      %v4091 = vmul.f32 %v3886, 1.442695
      %v4092 = vpow.pop %v4091
      %v4093 = vmul.f32 %v3887, 1.442695
      %v4094 = vpow.pop %v4093
      %v4095 = vmul.f32 %v3888, 1.442695
      %v4096 = vpow.pop %v4095
      %v4097 = vmul.f32 %v3889, 1.442695
      %v4098 = vpow.pop %v4097
      %v4099 = vmul.f32 %v3890, 1.442695
      %v4100 = vpow.pop %v4099
      %v4101 = vmul.f32 %v3891, 1.442695
      %v4102 = vpow.pop %v4101
      %v4103 = vmul.f32 %v3892, 1.442695
      %v4104 = vpow.pop %v4103
      %v4105 = vmul.f32 %v3893, 1.442695
      %v4106 = vpow.pop %v4105
      %v4107 = vmul.f32 %v3894, 1.442695
      %v4108 = vpow.pop %v4107
      %v4109 = vmul.f32 %v3895, 1.442695
      %v4110 = vpow.pop %v4109
      %v4111 = vmul.f32 %v3896, 1.442695
      %v4112 = vpow.pop %v4111
      %v4113 = vmul.f32 %v3897, 1.442695
      %v4114 = vpow.pop %v4113
      %v4115 = vmul.f32 %v3898, 1.442695
      %v4116 = vpow.pop %v4115
      %v4117 = vmul.f32 %v3899, 1.442695
      %v4118 = vpow.pop %v4117
      %v4119 = vmul.f32 %v3900, 1.442695
      %v4120 = vpow.pop %v4119
      %v4121 = vmul.f32 %v3901, 1.442695
      %v4122 = vpow.pop %v4121
      %v4123 = vmul.f32 %v3902, 1.442695
      %v4124 = vpow.pop %v4123
      %v4125 = vmul.f32 %v3903, 1.442695
      %v4126 = vpow.pop %v4125
      %v4127 = vmul.f32 %v3904, 1.442695
      %v4128 = vpow.pop %v4127
      %v4129 = vmul.f32 %v3905, 1.442695
      %v4130 = vpow.pop %v4129
      %v4131 = vmul.f32 %v3906, 1.442695
      %v4132 = vpow.pop %v4131
      %v4133 = vmul.f32 %v3907, 1.442695
      %v4134 = vpow.pop %v4133
      %v4135 = vmul.f32 %v3908, 1.442695
      %v4136 = vpow.pop %v4135
      %v4137 = vmul.f32 %v3909, 1.442695
      %v4138 = vpow.pop %v4137
      %v4139 = vmul.f32 %v3910, 1.442695
      %v4140 = vpow.pop %v4139
      %v4141 = vmul.f32 %v3911, 1.442695
      %v4142 = vpow.pop %v4141
      %v4143 = vmul.f32 %v3912, 1.442695
      %v4144 = vpow.pop %v4143
      %v4145 = vmul.f32 %v3913, 1.442695
      %v4146 = vpow.pop %v4145
      %v4147 = vmul.f32 %v3914, 1.442695
      %v4148 = vpow.pop %v4147
      %v4149 = vmul.f32 %v3915, 1.442695
      %v4150 = vpow.pop %v4149
      %v4151 = vmul.f32 %v3916, 1.442695
      %v4152 = vpow.pop %v4151
      %v4153 = vmul.f32 %v3917, 1.442695
      %v4154 = vpow.pop %v4153
      %v4155 = vmul.f32 %v3918, 1.442695
      %v4156 = vpow.pop %v4155
      %v4157 = vmul.f32 %v3919, 1.442695
      %v4158 = vpow.pop %v4157
      %v4159 = vmul.f32 %v3920, 1.442695
      %v4160 = vpow.pop %v4159
      %v4161 = vmul.f32 %v3921, 1.442695
      %v4162 = vpow.pop %v4161
      %v4163 = vmul.f32 %v3922, 1.442695
      %v4164 = vpow.pop %v4163
      %v4165 = vmul.f32 %v3923, 1.442695
      %v4166 = vpow.pop %v4165
      %v4167 = vmul.f32 %v3924, 1.442695
      %v4168 = vpow.pop %v4167
      %v4169 = vmul.f32 %v3925, 1.442695
      %v4170 = vpow.pop %v4169
      %v4171 = vmul.f32 %v3926, 1.442695
      %v4172 = vpow.pop %v4171
      %v4173 = vmul.f32 %v3927, 1.442695
      %v4174 = vpow.pop %v4173
      %v4175 = vmul.f32 %v3928, 1.442695
      %v4176 = vpow.pop %v4175
      %v4177 = vmul.f32 %v3929, 1.442695
      %v4178 = vpow.pop %v4177
      %v4179 = vmul.f32 %v3930, 1.442695
      %v4180 = vpow.pop %v4179
      %v4181 = vmul.f32 %v3931, 1.442695
      %v4182 = vpow.pop %v4181
      %v4183 = vmul.f32 %v3932, 1.442695
      %v4184 = vpow.pop %v4183
      %v4185 = vmul.f32 %v3933, 1.442695
      %v4186 = vpow.pop %v4185
      %v4187 = vmul.f32 %v3934, 1.442695
      %v4188 = vpow.pop %v4187
      %v4189 = vmul.f32 %v3935, 1.442695
      %v4190 = vpow.pop %v4189
      %v4191 = vmul.f32 %v3936, 1.442695
      %v4192 = vpow.pop %v4191
      %v4193 = vadd.f32 %v3938, 1.0
      %v4194 = vadd.f32 %v3940, 1.0
      %v4195 = vadd.f32 %v3942, 1.0
      %v4196 = vadd.f32 %v3944, 1.0
      %v4197 = vadd.f32 %v3946, 1.0
      %v4198 = vadd.f32 %v3948, 1.0
      %v4199 = vadd.f32 %v3950, 1.0
      %v4200 = vadd.f32 %v3952, 1.0
      %v4201 = vadd.f32 %v3954, 1.0
      %v4202 = vadd.f32 %v3956, 1.0
      %v4203 = vadd.f32 %v3958, 1.0
      %v4204 = vadd.f32 %v3960, 1.0
      %v4205 = vadd.f32 %v3962, 1.0
      %v4206 = vadd.f32 %v3964, 1.0
      %v4207 = vadd.f32 %v3966, 1.0
      %v4208 = vadd.f32 %v3968, 1.0
      %v4209 = vadd.f32 %v3970, 1.0
      %v4210 = vadd.f32 %v3972, 1.0
      %v4211 = vadd.f32 %v3974, 1.0
      %v4212 = vadd.f32 %v3976, 1.0
      %v4213 = vadd.f32 %v3978, 1.0
      %v4214 = vadd.f32 %v3980, 1.0
      %v4215 = vadd.f32 %v3982, 1.0
      %v4216 = vadd.f32 %v3984, 1.0
      %v4217 = vadd.f32 %v3986, 1.0
      %v4218 = vadd.f32 %v3988, 1.0
      %v4219 = vadd.f32 %v3990, 1.0
      %v4220 = vadd.f32 %v3992, 1.0
      %v4221 = vadd.f32 %v3994, 1.0
      %v4222 = vadd.f32 %v3996, 1.0
      %v4223 = vadd.f32 %v3998, 1.0
      %v4224 = vadd.f32 %v4000, 1.0
      %v4225 = vadd.f32 %v4002, 1.0
      %v4226 = vadd.f32 %v4004, 1.0
      %v4227 = vadd.f32 %v4006, 1.0
      %v4228 = vadd.f32 %v4008, 1.0
      %v4229 = vadd.f32 %v4010, 1.0
      %v4230 = vadd.f32 %v4012, 1.0
      %v4231 = vadd.f32 %v4014, 1.0
      %v4232 = vadd.f32 %v4016, 1.0
      %v4233 = vadd.f32 %v4018, 1.0
      %v4234 = vadd.f32 %v4020, 1.0
      %v4235 = vadd.f32 %v4022, 1.0
      %v4236 = vadd.f32 %v4024, 1.0
      %v4237 = vadd.f32 %v4026, 1.0
      %v4238 = vadd.f32 %v4028, 1.0
      %v4239 = vadd.f32 %v4030, 1.0
      %v4240 = vadd.f32 %v4032, 1.0
      %v4241 = vadd.f32 %v4034, 1.0
      %v4242 = vadd.f32 %v4036, 1.0
      %v4243 = vadd.f32 %v4038, 1.0
      %v4244 = vadd.f32 %v4040, 1.0
      %v4245 = vadd.f32 %v4042, 1.0
      %v4246 = vadd.f32 %v4044, 1.0
      %v4247 = vadd.f32 %v4046, 1.0
      %v4248 = vadd.f32 %v4048, 1.0
      %v4249 = vadd.f32 %v4050, 1.0
      %v4250 = vadd.f32 %v4052, 1.0
      %v4251 = vadd.f32 %v4054, 1.0
      %v4252 = vadd.f32 %v4056, 1.0
      %v4253 = vadd.f32 %v4058, 1.0
      %v4254 = vadd.f32 %v4060, 1.0
      %v4255 = vadd.f32 %v4062, 1.0
      %v4256 = vadd.f32 %v4064, 1.0
      %v4257 = vadd.f32 %v4066, 1.0
      %v4258 = vadd.f32 %v4068, 1.0
      %v4259 = vadd.f32 %v4070, 1.0
      %v4260 = vadd.f32 %v4072, 1.0
      %v4261 = vadd.f32 %v4074, 1.0
      %v4262 = vadd.f32 %v4076, 1.0
      %v4263 = vadd.f32 %v4078, 1.0
      %v4264 = vadd.f32 %v4080, 1.0
      %v4265 = vadd.f32 %v4082, 1.0
      %v4266 = vadd.f32 %v4084, 1.0
      %v4267 = vadd.f32 %v4086, 1.0
      %v4268 = vadd.f32 %v4088, 1.0
      %v4269 = vadd.f32 %v4090, 1.0
      %v4270 = vadd.f32 %v4092, 1.0
      %v4271 = vadd.f32 %v4094, 1.0
      %v4272 = vadd.f32 %v4096, 1.0
      %v4273 = vadd.f32 %v4098, 1.0
      %v4274 = vadd.f32 %v4100, 1.0
      %v4275 = vadd.f32 %v4102, 1.0
      %v4276 = vadd.f32 %v4104, 1.0
      %v4277 = vadd.f32 %v4106, 1.0
      %v4278 = vadd.f32 %v4108, 1.0
      %v4279 = vadd.f32 %v4110, 1.0
      %v4280 = vadd.f32 %v4112, 1.0
      %v4281 = vadd.f32 %v4114, 1.0
      %v4282 = vadd.f32 %v4116, 1.0
      %v4283 = vadd.f32 %v4118, 1.0
      %v4284 = vadd.f32 %v4120, 1.0
      %v4285 = vadd.f32 %v4122, 1.0
      %v4286 = vadd.f32 %v4124, 1.0
      %v4287 = vadd.f32 %v4126, 1.0
      %v4288 = vadd.f32 %v4128, 1.0
      %v4289 = vadd.f32 %v4130, 1.0
      %v4290 = vadd.f32 %v4132, 1.0
      %v4291 = vadd.f32 %v4134, 1.0
      %v4292 = vadd.f32 %v4136, 1.0
      %v4293 = vadd.f32 %v4138, 1.0
      %v4294 = vadd.f32 %v4140, 1.0
      %v4295 = vadd.f32 %v4142, 1.0
      %v4296 = vadd.f32 %v4144, 1.0
      %v4297 = vadd.f32 %v4146, 1.0
      %v4298 = vadd.f32 %v4148, 1.0
      %v4299 = vadd.f32 %v4150, 1.0
      %v4300 = vadd.f32 %v4152, 1.0
      %v4301 = vadd.f32 %v4154, 1.0
      %v4302 = vadd.f32 %v4156, 1.0
      %v4303 = vadd.f32 %v4158, 1.0
      %v4304 = vadd.f32 %v4160, 1.0
      %v4305 = vadd.f32 %v4162, 1.0
      %v4306 = vadd.f32 %v4164, 1.0
      %v4307 = vadd.f32 %v4166, 1.0
      %v4308 = vadd.f32 %v4168, 1.0
      %v4309 = vadd.f32 %v4170, 1.0
      %v4310 = vadd.f32 %v4172, 1.0
      %v4311 = vadd.f32 %v4174, 1.0
      %v4312 = vadd.f32 %v4176, 1.0
      %v4313 = vadd.f32 %v4178, 1.0
      %v4314 = vadd.f32 %v4180, 1.0
      %v4315 = vadd.f32 %v4182, 1.0
      %v4316 = vadd.f32 %v4184, 1.0
      %v4317 = vadd.f32 %v4186, 1.0
      %v4318 = vadd.f32 %v4188, 1.0
      %v4319 = vadd.f32 %v4190, 1.0
      %v4320 = vadd.f32 %v4192, 1.0
      %v4321 = vrcp.pop %v4193
      %v4322 = vmul.f32 %v4193, %v4321
      %v4323 = vsub.f32 1.0, %v4322
      %v4324 = vmul.f32 %v4321, %v4323
      %v4325 = vadd.f32 %v4321, %v4324
      %vm4326 = vweird.f32 %v4193
      %vm4327 = vweird.f32 %v4321
      %vm4328 = vmor %vm4326, %vm4327
      %v4329 = vsel %vm4328, %v4321, %v4325
      %v4330 = vand.u32 2147483647, %v4193
      %vm4331 = vcmp.eq.f32.partialorder %v4330, 8.507059e+37
      %v4332 = vand.u32 %v4193, 2147483648
      %v4333 = vor.u32 1.1754944e-38, %v4332
      %v4334 = vsel %vm4331, %v4333, %v4329
      %v4335 = vmul.f32 1.0, %v4334
      %v4336 = vrcp.pop %v4194
      %v4337 = vmul.f32 %v4194, %v4336
      %v4338 = vsub.f32 1.0, %v4337
      %v4339 = vmul.f32 %v4336, %v4338
      %v4340 = vadd.f32 %v4336, %v4339
      %vm4341 = vweird.f32 %v4194
      %vm4342 = vweird.f32 %v4336
      %vm4343 = vmor %vm4341, %vm4342
      %v4344 = vsel %vm4343, %v4336, %v4340
      %v4345 = vand.u32 2147483647, %v4194
      %vm4346 = vcmp.eq.f32.partialorder %v4345, 8.507059e+37
      %v4347 = vand.u32 %v4194, 2147483648
      %v4348 = vor.u32 1.1754944e-38, %v4347
      %v4349 = vsel %vm4346, %v4348, %v4344
      %v4350 = vmul.f32 1.0, %v4349
      %v4351 = vrcp.pop %v4195
      %v4352 = vmul.f32 %v4195, %v4351
      %v4353 = vsub.f32 1.0, %v4352
      %v4354 = vmul.f32 %v4351, %v4353
      %v4355 = vadd.f32 %v4351, %v4354
      %vm4356 = vweird.f32 %v4195
      %vm4357 = vweird.f32 %v4351
      %vm4358 = vmor %vm4356, %vm4357
      %v4359 = vsel %vm4358, %v4351, %v4355
      %v4360 = vand.u32 2147483647, %v4195
      %vm4361 = vcmp.eq.f32.partialorder %v4360, 8.507059e+37
      %v4362 = vand.u32 %v4195, 2147483648
      %v4363 = vor.u32 1.1754944e-38, %v4362
      %v4364 = vsel %vm4361, %v4363, %v4359
      %v4365 = vmul.f32 1.0, %v4364
      %v4366 = vrcp.pop %v4196
      %v4367 = vmul.f32 %v4196, %v4366
      %v4368 = vsub.f32 1.0, %v4367
      %v4369 = vmul.f32 %v4366, %v4368
      %v4370 = vadd.f32 %v4366, %v4369
      %vm4371 = vweird.f32 %v4196
      %vm4372 = vweird.f32 %v4366
      %vm4373 = vmor %vm4371, %vm4372
      %v4374 = vsel %vm4373, %v4366, %v4370
      %v4375 = vand.u32 2147483647, %v4196
      %vm4376 = vcmp.eq.f32.partialorder %v4375, 8.507059e+37
      %v4377 = vand.u32 %v4196, 2147483648
      %v4378 = vor.u32 1.1754944e-38, %v4377
      %v4379 = vsel %vm4376, %v4378, %v4374
      %v4380 = vmul.f32 1.0, %v4379
      %v4381 = vrcp.pop %v4197
      %v4382 = vmul.f32 %v4197, %v4381
      %v4383 = vsub.f32 1.0, %v4382
      %v4384 = vmul.f32 %v4381, %v4383
      %v4385 = vadd.f32 %v4381, %v4384
      %vm4386 = vweird.f32 %v4197
      %vm4387 = vweird.f32 %v4381
      %vm4388 = vmor %vm4386, %vm4387
      %v4389 = vsel %vm4388, %v4381, %v4385
      %v4390 = vand.u32 2147483647, %v4197
      %vm4391 = vcmp.eq.f32.partialorder %v4390, 8.507059e+37
      %v4392 = vand.u32 %v4197, 2147483648
      %v4393 = vor.u32 1.1754944e-38, %v4392
      %v4394 = vsel %vm4391, %v4393, %v4389
      %v4395 = vmul.f32 1.0, %v4394
      %v4396 = vrcp.pop %v4198
      %v4397 = vmul.f32 %v4198, %v4396
      %v4398 = vsub.f32 1.0, %v4397
      %v4399 = vmul.f32 %v4396, %v4398
      %v4400 = vadd.f32 %v4396, %v4399
      %vm4401 = vweird.f32 %v4198
      %vm4402 = vweird.f32 %v4396
      %vm4403 = vmor %vm4401, %vm4402
      %v4404 = vsel %vm4403, %v4396, %v4400
      %v4405 = vand.u32 2147483647, %v4198
      %vm4406 = vcmp.eq.f32.partialorder %v4405, 8.507059e+37
      %v4407 = vand.u32 %v4198, 2147483648
      %v4408 = vor.u32 1.1754944e-38, %v4407
      %v4409 = vsel %vm4406, %v4408, %v4404
      %v4410 = vmul.f32 1.0, %v4409
      %v4411 = vrcp.pop %v4199
      %v4412 = vmul.f32 %v4199, %v4411
      %v4413 = vsub.f32 1.0, %v4412
      %v4414 = vmul.f32 %v4411, %v4413
      %v4415 = vadd.f32 %v4411, %v4414
      %vm4416 = vweird.f32 %v4199
      %vm4417 = vweird.f32 %v4411
      %vm4418 = vmor %vm4416, %vm4417
      %v4419 = vsel %vm4418, %v4411, %v4415
      %v4420 = vand.u32 2147483647, %v4199
      %vm4421 = vcmp.eq.f32.partialorder %v4420, 8.507059e+37
      %v4422 = vand.u32 %v4199, 2147483648
      %v4423 = vor.u32 1.1754944e-38, %v4422
      %v4424 = vsel %vm4421, %v4423, %v4419
      %v4425 = vmul.f32 1.0, %v4424
      %v4426 = vrcp.pop %v4200
      %v4427 = vmul.f32 %v4200, %v4426
      %v4428 = vsub.f32 1.0, %v4427
      %v4429 = vmul.f32 %v4426, %v4428
      %v4430 = vadd.f32 %v4426, %v4429
      %vm4431 = vweird.f32 %v4200
      %vm4432 = vweird.f32 %v4426
      %vm4433 = vmor %vm4431, %vm4432
      %v4434 = vsel %vm4433, %v4426, %v4430
      %v4435 = vand.u32 2147483647, %v4200
      %vm4436 = vcmp.eq.f32.partialorder %v4435, 8.507059e+37
      %v4437 = vand.u32 %v4200, 2147483648
      %v4438 = vor.u32 1.1754944e-38, %v4437
      %v4439 = vsel %vm4436, %v4438, %v4434
      %v4440 = vmul.f32 1.0, %v4439
      %v4441 = vrcp.pop %v4201
      %v4442 = vmul.f32 %v4201, %v4441
      %v4443 = vsub.f32 1.0, %v4442
      %v4444 = vmul.f32 %v4441, %v4443
      %v4445 = vadd.f32 %v4441, %v4444
      %vm4446 = vweird.f32 %v4201
      %vm4447 = vweird.f32 %v4441
      %vm4448 = vmor %vm4446, %vm4447
      %v4449 = vsel %vm4448, %v4441, %v4445
      %v4450 = vand.u32 2147483647, %v4201
      %vm4451 = vcmp.eq.f32.partialorder %v4450, 8.507059e+37
      %v4452 = vand.u32 %v4201, 2147483648
      %v4453 = vor.u32 1.1754944e-38, %v4452
      %v4454 = vsel %vm4451, %v4453, %v4449
      %v4455 = vmul.f32 1.0, %v4454
      %v4456 = vrcp.pop %v4202
      %v4457 = vmul.f32 %v4202, %v4456
      %v4458 = vsub.f32 1.0, %v4457
      %v4459 = vmul.f32 %v4456, %v4458
      %v4460 = vadd.f32 %v4456, %v4459
      %vm4461 = vweird.f32 %v4202
      %vm4462 = vweird.f32 %v4456
      %vm4463 = vmor %vm4461, %vm4462
      %v4464 = vsel %vm4463, %v4456, %v4460
      %v4465 = vand.u32 2147483647, %v4202
      %vm4466 = vcmp.eq.f32.partialorder %v4465, 8.507059e+37
      %v4467 = vand.u32 %v4202, 2147483648
      %v4468 = vor.u32 1.1754944e-38, %v4467
      %v4469 = vsel %vm4466, %v4468, %v4464
      %v4470 = vmul.f32 1.0, %v4469
      %v4471 = vrcp.pop %v4203
      %v4472 = vmul.f32 %v4203, %v4471
      %v4473 = vsub.f32 1.0, %v4472
      %v4474 = vmul.f32 %v4471, %v4473
      %v4475 = vadd.f32 %v4471, %v4474
      %vm4476 = vweird.f32 %v4203
      %vm4477 = vweird.f32 %v4471
      %vm4478 = vmor %vm4476, %vm4477
      %v4479 = vsel %vm4478, %v4471, %v4475
      %v4480 = vand.u32 2147483647, %v4203
      %vm4481 = vcmp.eq.f32.partialorder %v4480, 8.507059e+37
      %v4482 = vand.u32 %v4203, 2147483648
      %v4483 = vor.u32 1.1754944e-38, %v4482
      %v4484 = vsel %vm4481, %v4483, %v4479
      %v4485 = vmul.f32 1.0, %v4484
      %v4486 = vrcp.pop %v4204
      %v4487 = vmul.f32 %v4204, %v4486
      %v4488 = vsub.f32 1.0, %v4487
      %v4489 = vmul.f32 %v4486, %v4488
      %v4490 = vadd.f32 %v4486, %v4489
      %vm4491 = vweird.f32 %v4204
      %vm4492 = vweird.f32 %v4486
      %vm4493 = vmor %vm4491, %vm4492
      %v4494 = vsel %vm4493, %v4486, %v4490
      %v4495 = vand.u32 2147483647, %v4204
      %vm4496 = vcmp.eq.f32.partialorder %v4495, 8.507059e+37
      %v4497 = vand.u32 %v4204, 2147483648
      %v4498 = vor.u32 1.1754944e-38, %v4497
      %v4499 = vsel %vm4496, %v4498, %v4494
      %v4500 = vmul.f32 1.0, %v4499
      %v4501 = vrcp.pop %v4205
      %v4502 = vmul.f32 %v4205, %v4501
      %v4503 = vsub.f32 1.0, %v4502
      %v4504 = vmul.f32 %v4501, %v4503
      %v4505 = vadd.f32 %v4501, %v4504
      %vm4506 = vweird.f32 %v4205
      %vm4507 = vweird.f32 %v4501
      %vm4508 = vmor %vm4506, %vm4507
      %v4509 = vsel %vm4508, %v4501, %v4505
      %v4510 = vand.u32 2147483647, %v4205
      %vm4511 = vcmp.eq.f32.partialorder %v4510, 8.507059e+37
      %v4512 = vand.u32 %v4205, 2147483648
      %v4513 = vor.u32 1.1754944e-38, %v4512
      %v4514 = vsel %vm4511, %v4513, %v4509
      %v4515 = vmul.f32 1.0, %v4514
      %v4516 = vrcp.pop %v4206
      %v4517 = vmul.f32 %v4206, %v4516
      %v4518 = vsub.f32 1.0, %v4517
      %v4519 = vmul.f32 %v4516, %v4518
      %v4520 = vadd.f32 %v4516, %v4519
      %vm4521 = vweird.f32 %v4206
      %vm4522 = vweird.f32 %v4516
      %vm4523 = vmor %vm4521, %vm4522
      %v4524 = vsel %vm4523, %v4516, %v4520
      %v4525 = vand.u32 2147483647, %v4206
      %vm4526 = vcmp.eq.f32.partialorder %v4525, 8.507059e+37
      %v4527 = vand.u32 %v4206, 2147483648
      %v4528 = vor.u32 1.1754944e-38, %v4527
      %v4529 = vsel %vm4526, %v4528, %v4524
      %v4530 = vmul.f32 1.0, %v4529
      %v4531 = vrcp.pop %v4207
      %v4532 = vmul.f32 %v4207, %v4531
      %v4533 = vsub.f32 1.0, %v4532
      %v4534 = vmul.f32 %v4531, %v4533
      %v4535 = vadd.f32 %v4531, %v4534
      %vm4536 = vweird.f32 %v4207
      %vm4537 = vweird.f32 %v4531
      %vm4538 = vmor %vm4536, %vm4537
      %v4539 = vsel %vm4538, %v4531, %v4535
      %v4540 = vand.u32 2147483647, %v4207
      %vm4541 = vcmp.eq.f32.partialorder %v4540, 8.507059e+37
      %v4542 = vand.u32 %v4207, 2147483648
      %v4543 = vor.u32 1.1754944e-38, %v4542
      %v4544 = vsel %vm4541, %v4543, %v4539
      %v4545 = vmul.f32 1.0, %v4544
      %v4546 = vrcp.pop %v4208
      %v4547 = vmul.f32 %v4208, %v4546
      %v4548 = vsub.f32 1.0, %v4547
      %v4549 = vmul.f32 %v4546, %v4548
      %v4550 = vadd.f32 %v4546, %v4549
      %vm4551 = vweird.f32 %v4208
      %vm4552 = vweird.f32 %v4546
      %vm4553 = vmor %vm4551, %vm4552
      %v4554 = vsel %vm4553, %v4546, %v4550
      %v4555 = vand.u32 2147483647, %v4208
      %vm4556 = vcmp.eq.f32.partialorder %v4555, 8.507059e+37
      %v4557 = vand.u32 %v4208, 2147483648
      %v4558 = vor.u32 1.1754944e-38, %v4557
      %v4559 = vsel %vm4556, %v4558, %v4554
      %v4560 = vmul.f32 1.0, %v4559
      %v4561 = vrcp.pop %v4209
      %v4562 = vmul.f32 %v4209, %v4561
      %v4563 = vsub.f32 1.0, %v4562
      %v4564 = vmul.f32 %v4561, %v4563
      %v4565 = vadd.f32 %v4561, %v4564
      %vm4566 = vweird.f32 %v4209
      %vm4567 = vweird.f32 %v4561
      %vm4568 = vmor %vm4566, %vm4567
      %v4569 = vsel %vm4568, %v4561, %v4565
      %v4570 = vand.u32 2147483647, %v4209
      %vm4571 = vcmp.eq.f32.partialorder %v4570, 8.507059e+37
      %v4572 = vand.u32 %v4209, 2147483648
      %v4573 = vor.u32 1.1754944e-38, %v4572
      %v4574 = vsel %vm4571, %v4573, %v4569
      %v4575 = vmul.f32 1.0, %v4574
      %v4576 = vrcp.pop %v4210
      %v4577 = vmul.f32 %v4210, %v4576
      %v4578 = vsub.f32 1.0, %v4577
      %v4579 = vmul.f32 %v4576, %v4578
      %v4580 = vadd.f32 %v4576, %v4579
      %vm4581 = vweird.f32 %v4210
      %vm4582 = vweird.f32 %v4576
      %vm4583 = vmor %vm4581, %vm4582
      %v4584 = vsel %vm4583, %v4576, %v4580
      %v4585 = vand.u32 2147483647, %v4210
      %vm4586 = vcmp.eq.f32.partialorder %v4585, 8.507059e+37
      %v4587 = vand.u32 %v4210, 2147483648
      %v4588 = vor.u32 1.1754944e-38, %v4587
      %v4589 = vsel %vm4586, %v4588, %v4584
      %v4590 = vmul.f32 1.0, %v4589
      %v4591 = vrcp.pop %v4211
      %v4592 = vmul.f32 %v4211, %v4591
      %v4593 = vsub.f32 1.0, %v4592
      %v4594 = vmul.f32 %v4591, %v4593
      %v4595 = vadd.f32 %v4591, %v4594
      %vm4596 = vweird.f32 %v4211
      %vm4597 = vweird.f32 %v4591
      %vm4598 = vmor %vm4596, %vm4597
      %v4599 = vsel %vm4598, %v4591, %v4595
      %v4600 = vand.u32 2147483647, %v4211
      %vm4601 = vcmp.eq.f32.partialorder %v4600, 8.507059e+37
      %v4602 = vand.u32 %v4211, 2147483648
      %v4603 = vor.u32 1.1754944e-38, %v4602
      %v4604 = vsel %vm4601, %v4603, %v4599
      %v4605 = vmul.f32 1.0, %v4604
      %v4606 = vrcp.pop %v4212
      %v4607 = vmul.f32 %v4212, %v4606
      %v4608 = vsub.f32 1.0, %v4607
      %v4609 = vmul.f32 %v4606, %v4608
      %v4610 = vadd.f32 %v4606, %v4609
      %vm4611 = vweird.f32 %v4212
      %vm4612 = vweird.f32 %v4606
      %vm4613 = vmor %vm4611, %vm4612
      %v4614 = vsel %vm4613, %v4606, %v4610
      %v4615 = vand.u32 2147483647, %v4212
      %vm4616 = vcmp.eq.f32.partialorder %v4615, 8.507059e+37
      %v4617 = vand.u32 %v4212, 2147483648
      %v4618 = vor.u32 1.1754944e-38, %v4617
      %v4619 = vsel %vm4616, %v4618, %v4614
      %v4620 = vmul.f32 1.0, %v4619
      %v4621 = vrcp.pop %v4213
      %v4622 = vmul.f32 %v4213, %v4621
      %v4623 = vsub.f32 1.0, %v4622
      %v4624 = vmul.f32 %v4621, %v4623
      %v4625 = vadd.f32 %v4621, %v4624
      %vm4626 = vweird.f32 %v4213
      %vm4627 = vweird.f32 %v4621
      %vm4628 = vmor %vm4626, %vm4627
      %v4629 = vsel %vm4628, %v4621, %v4625
      %v4630 = vand.u32 2147483647, %v4213
      %vm4631 = vcmp.eq.f32.partialorder %v4630, 8.507059e+37
      %v4632 = vand.u32 %v4213, 2147483648
      %v4633 = vor.u32 1.1754944e-38, %v4632
      %v4634 = vsel %vm4631, %v4633, %v4629
      %v4635 = vmul.f32 1.0, %v4634
      %v4636 = vrcp.pop %v4214
      %v4637 = vmul.f32 %v4214, %v4636
      %v4638 = vsub.f32 1.0, %v4637
      %v4639 = vmul.f32 %v4636, %v4638
      %v4640 = vadd.f32 %v4636, %v4639
      %vm4641 = vweird.f32 %v4214
      %vm4642 = vweird.f32 %v4636
      %vm4643 = vmor %vm4641, %vm4642
      %v4644 = vsel %vm4643, %v4636, %v4640
      %v4645 = vand.u32 2147483647, %v4214
      %vm4646 = vcmp.eq.f32.partialorder %v4645, 8.507059e+37
      %v4647 = vand.u32 %v4214, 2147483648
      %v4648 = vor.u32 1.1754944e-38, %v4647
      %v4649 = vsel %vm4646, %v4648, %v4644
      %v4650 = vmul.f32 1.0, %v4649
      %v4651 = vrcp.pop %v4215
      %v4652 = vmul.f32 %v4215, %v4651
      %v4653 = vsub.f32 1.0, %v4652
      %v4654 = vmul.f32 %v4651, %v4653
      %v4655 = vadd.f32 %v4651, %v4654
      %vm4656 = vweird.f32 %v4215
      %vm4657 = vweird.f32 %v4651
      %vm4658 = vmor %vm4656, %vm4657
      %v4659 = vsel %vm4658, %v4651, %v4655
      %v4660 = vand.u32 2147483647, %v4215
      %vm4661 = vcmp.eq.f32.partialorder %v4660, 8.507059e+37
      %v4662 = vand.u32 %v4215, 2147483648
      %v4663 = vor.u32 1.1754944e-38, %v4662
      %v4664 = vsel %vm4661, %v4663, %v4659
      %v4665 = vmul.f32 1.0, %v4664
      %v4666 = vrcp.pop %v4216
      %v4667 = vmul.f32 %v4216, %v4666
      %v4668 = vsub.f32 1.0, %v4667
      %v4669 = vmul.f32 %v4666, %v4668
      %v4670 = vadd.f32 %v4666, %v4669
      %vm4671 = vweird.f32 %v4216
      %vm4672 = vweird.f32 %v4666
      %vm4673 = vmor %vm4671, %vm4672
      %v4674 = vsel %vm4673, %v4666, %v4670
      %v4675 = vand.u32 2147483647, %v4216
      %vm4676 = vcmp.eq.f32.partialorder %v4675, 8.507059e+37
      %v4677 = vand.u32 %v4216, 2147483648
      %v4678 = vor.u32 1.1754944e-38, %v4677
      %v4679 = vsel %vm4676, %v4678, %v4674
      %v4680 = vmul.f32 1.0, %v4679
      %v4681 = vrcp.pop %v4217
      %v4682 = vmul.f32 %v4217, %v4681
      %v4683 = vsub.f32 1.0, %v4682
      %v4684 = vmul.f32 %v4681, %v4683
      %v4685 = vadd.f32 %v4681, %v4684
      %vm4686 = vweird.f32 %v4217
      %vm4687 = vweird.f32 %v4681
      %vm4688 = vmor %vm4686, %vm4687
      %v4689 = vsel %vm4688, %v4681, %v4685
      %v4690 = vand.u32 2147483647, %v4217
      %vm4691 = vcmp.eq.f32.partialorder %v4690, 8.507059e+37
      %v4692 = vand.u32 %v4217, 2147483648
      %v4693 = vor.u32 1.1754944e-38, %v4692
      %v4694 = vsel %vm4691, %v4693, %v4689
      %v4695 = vmul.f32 1.0, %v4694
      %v4696 = vrcp.pop %v4218
      %v4697 = vmul.f32 %v4218, %v4696
      %v4698 = vsub.f32 1.0, %v4697
      %v4699 = vmul.f32 %v4696, %v4698
      %v4700 = vadd.f32 %v4696, %v4699
      %vm4701 = vweird.f32 %v4218
      %vm4702 = vweird.f32 %v4696
      %vm4703 = vmor %vm4701, %vm4702
      %v4704 = vsel %vm4703, %v4696, %v4700
      %v4705 = vand.u32 2147483647, %v4218
      %vm4706 = vcmp.eq.f32.partialorder %v4705, 8.507059e+37
      %v4707 = vand.u32 %v4218, 2147483648
      %v4708 = vor.u32 1.1754944e-38, %v4707
      %v4709 = vsel %vm4706, %v4708, %v4704
      %v4710 = vmul.f32 1.0, %v4709
      %v4711 = vrcp.pop %v4219
      %v4712 = vmul.f32 %v4219, %v4711
      %v4713 = vsub.f32 1.0, %v4712
      %v4714 = vmul.f32 %v4711, %v4713
      %v4715 = vadd.f32 %v4711, %v4714
      %vm4716 = vweird.f32 %v4219
      %vm4717 = vweird.f32 %v4711
      %vm4718 = vmor %vm4716, %vm4717
      %v4719 = vsel %vm4718, %v4711, %v4715
      %v4720 = vand.u32 2147483647, %v4219
      %vm4721 = vcmp.eq.f32.partialorder %v4720, 8.507059e+37
      %v4722 = vand.u32 %v4219, 2147483648
      %v4723 = vor.u32 1.1754944e-38, %v4722
      %v4724 = vsel %vm4721, %v4723, %v4719
      %v4725 = vmul.f32 1.0, %v4724
      %v4726 = vrcp.pop %v4220
      %v4727 = vmul.f32 %v4220, %v4726
      %v4728 = vsub.f32 1.0, %v4727
      %v4729 = vmul.f32 %v4726, %v4728
      %v4730 = vadd.f32 %v4726, %v4729
      %vm4731 = vweird.f32 %v4220
      %vm4732 = vweird.f32 %v4726
      %vm4733 = vmor %vm4731, %vm4732
      %v4734 = vsel %vm4733, %v4726, %v4730
      %v4735 = vand.u32 2147483647, %v4220
      %vm4736 = vcmp.eq.f32.partialorder %v4735, 8.507059e+37
      %v4737 = vand.u32 %v4220, 2147483648
      %v4738 = vor.u32 1.1754944e-38, %v4737
      %v4739 = vsel %vm4736, %v4738, %v4734
      %v4740 = vmul.f32 1.0, %v4739
      %v4741 = vrcp.pop %v4221
      %v4742 = vmul.f32 %v4221, %v4741
      %v4743 = vsub.f32 1.0, %v4742
      %v4744 = vmul.f32 %v4741, %v4743
      %v4745 = vadd.f32 %v4741, %v4744
      %vm4746 = vweird.f32 %v4221
      %vm4747 = vweird.f32 %v4741
      %vm4748 = vmor %vm4746, %vm4747
      %v4749 = vsel %vm4748, %v4741, %v4745
      %v4750 = vand.u32 2147483647, %v4221
      %vm4751 = vcmp.eq.f32.partialorder %v4750, 8.507059e+37
      %v4752 = vand.u32 %v4221, 2147483648
      %v4753 = vor.u32 1.1754944e-38, %v4752
      %v4754 = vsel %vm4751, %v4753, %v4749
      %v4755 = vmul.f32 1.0, %v4754
      %v4756 = vrcp.pop %v4222
      %v4757 = vmul.f32 %v4222, %v4756
      %v4758 = vsub.f32 1.0, %v4757
      %v4759 = vmul.f32 %v4756, %v4758
      %v4760 = vadd.f32 %v4756, %v4759
      %vm4761 = vweird.f32 %v4222
      %vm4762 = vweird.f32 %v4756
      %vm4763 = vmor %vm4761, %vm4762
      %v4764 = vsel %vm4763, %v4756, %v4760
      %v4765 = vand.u32 2147483647, %v4222
      %vm4766 = vcmp.eq.f32.partialorder %v4765, 8.507059e+37
      %v4767 = vand.u32 %v4222, 2147483648
      %v4768 = vor.u32 1.1754944e-38, %v4767
      %v4769 = vsel %vm4766, %v4768, %v4764
      %v4770 = vmul.f32 1.0, %v4769
      %v4771 = vrcp.pop %v4223
      %v4772 = vmul.f32 %v4223, %v4771
      %v4773 = vsub.f32 1.0, %v4772
      %v4774 = vmul.f32 %v4771, %v4773
      %v4775 = vadd.f32 %v4771, %v4774
      %vm4776 = vweird.f32 %v4223
      %vm4777 = vweird.f32 %v4771
      %vm4778 = vmor %vm4776, %vm4777
      %v4779 = vsel %vm4778, %v4771, %v4775
      %v4780 = vand.u32 2147483647, %v4223
      %vm4781 = vcmp.eq.f32.partialorder %v4780, 8.507059e+37
      %v4782 = vand.u32 %v4223, 2147483648
      %v4783 = vor.u32 1.1754944e-38, %v4782
      %v4784 = vsel %vm4781, %v4783, %v4779
      %v4785 = vmul.f32 1.0, %v4784
      %v4786 = vrcp.pop %v4224
      %v4787 = vmul.f32 %v4224, %v4786
      %v4788 = vsub.f32 1.0, %v4787
      %v4789 = vmul.f32 %v4786, %v4788
      %v4790 = vadd.f32 %v4786, %v4789
      %vm4791 = vweird.f32 %v4224
      %vm4792 = vweird.f32 %v4786
      %vm4793 = vmor %vm4791, %vm4792
      %v4794 = vsel %vm4793, %v4786, %v4790
      %v4795 = vand.u32 2147483647, %v4224
      %vm4796 = vcmp.eq.f32.partialorder %v4795, 8.507059e+37
      %v4797 = vand.u32 %v4224, 2147483648
      %v4798 = vor.u32 1.1754944e-38, %v4797
      %v4799 = vsel %vm4796, %v4798, %v4794
      %v4800 = vmul.f32 1.0, %v4799
      %v4801 = vrcp.pop %v4225
      %v4802 = vmul.f32 %v4225, %v4801
      %v4803 = vsub.f32 1.0, %v4802
      %v4804 = vmul.f32 %v4801, %v4803
      %v4805 = vadd.f32 %v4801, %v4804
      %vm4806 = vweird.f32 %v4225
      %vm4807 = vweird.f32 %v4801
      %vm4808 = vmor %vm4806, %vm4807
      %v4809 = vsel %vm4808, %v4801, %v4805
      %v4810 = vand.u32 2147483647, %v4225
      %vm4811 = vcmp.eq.f32.partialorder %v4810, 8.507059e+37
      %v4812 = vand.u32 %v4225, 2147483648
      %v4813 = vor.u32 1.1754944e-38, %v4812
      %v4814 = vsel %vm4811, %v4813, %v4809
      %v4815 = vmul.f32 1.0, %v4814
      %v4816 = vrcp.pop %v4226
      %v4817 = vmul.f32 %v4226, %v4816
      %v4818 = vsub.f32 1.0, %v4817
      %v4819 = vmul.f32 %v4816, %v4818
      %v4820 = vadd.f32 %v4816, %v4819
      %vm4821 = vweird.f32 %v4226
      %vm4822 = vweird.f32 %v4816
      %vm4823 = vmor %vm4821, %vm4822
      %v4824 = vsel %vm4823, %v4816, %v4820
      %v4825 = vand.u32 2147483647, %v4226
      %vm4826 = vcmp.eq.f32.partialorder %v4825, 8.507059e+37
      %v4827 = vand.u32 %v4226, 2147483648
      %v4828 = vor.u32 1.1754944e-38, %v4827
      %v4829 = vsel %vm4826, %v4828, %v4824
      %v4830 = vmul.f32 1.0, %v4829
      %v4831 = vrcp.pop %v4227
      %v4832 = vmul.f32 %v4227, %v4831
      %v4833 = vsub.f32 1.0, %v4832
      %v4834 = vmul.f32 %v4831, %v4833
      %v4835 = vadd.f32 %v4831, %v4834
      %vm4836 = vweird.f32 %v4227
      %vm4837 = vweird.f32 %v4831
      %vm4838 = vmor %vm4836, %vm4837
      %v4839 = vsel %vm4838, %v4831, %v4835
      %v4840 = vand.u32 2147483647, %v4227
      %vm4841 = vcmp.eq.f32.partialorder %v4840, 8.507059e+37
      %v4842 = vand.u32 %v4227, 2147483648
      %v4843 = vor.u32 1.1754944e-38, %v4842
      %v4844 = vsel %vm4841, %v4843, %v4839
      %v4845 = vmul.f32 1.0, %v4844
      %v4846 = vrcp.pop %v4228
      %v4847 = vmul.f32 %v4228, %v4846
      %v4848 = vsub.f32 1.0, %v4847
      %v4849 = vmul.f32 %v4846, %v4848
      %v4850 = vadd.f32 %v4846, %v4849
      %vm4851 = vweird.f32 %v4228
      %vm4852 = vweird.f32 %v4846
      %vm4853 = vmor %vm4851, %vm4852
      %v4854 = vsel %vm4853, %v4846, %v4850
      %v4855 = vand.u32 2147483647, %v4228
      %vm4856 = vcmp.eq.f32.partialorder %v4855, 8.507059e+37
      %v4857 = vand.u32 %v4228, 2147483648
      %v4858 = vor.u32 1.1754944e-38, %v4857
      %v4859 = vsel %vm4856, %v4858, %v4854
      %v4860 = vmul.f32 1.0, %v4859
      %v4861 = vrcp.pop %v4229
      %v4862 = vmul.f32 %v4229, %v4861
      %v4863 = vsub.f32 1.0, %v4862
      %v4864 = vmul.f32 %v4861, %v4863
      %v4865 = vadd.f32 %v4861, %v4864
      %vm4866 = vweird.f32 %v4229
      %vm4867 = vweird.f32 %v4861
      %vm4868 = vmor %vm4866, %vm4867
      %v4869 = vsel %vm4868, %v4861, %v4865
      %v4870 = vand.u32 2147483647, %v4229
      %vm4871 = vcmp.eq.f32.partialorder %v4870, 8.507059e+37
      %v4872 = vand.u32 %v4229, 2147483648
      %v4873 = vor.u32 1.1754944e-38, %v4872
      %v4874 = vsel %vm4871, %v4873, %v4869
      %v4875 = vmul.f32 1.0, %v4874
      %v4876 = vrcp.pop %v4230
      %v4877 = vmul.f32 %v4230, %v4876
      %v4878 = vsub.f32 1.0, %v4877
      %v4879 = vmul.f32 %v4876, %v4878
      %v4880 = vadd.f32 %v4876, %v4879
      %vm4881 = vweird.f32 %v4230
      %vm4882 = vweird.f32 %v4876
      %vm4883 = vmor %vm4881, %vm4882
      %v4884 = vsel %vm4883, %v4876, %v4880
      %v4885 = vand.u32 2147483647, %v4230
      %vm4886 = vcmp.eq.f32.partialorder %v4885, 8.507059e+37
      %v4887 = vand.u32 %v4230, 2147483648
      %v4888 = vor.u32 1.1754944e-38, %v4887
      %v4889 = vsel %vm4886, %v4888, %v4884
      %v4890 = vmul.f32 1.0, %v4889
      %v4891 = vrcp.pop %v4231
      %v4892 = vmul.f32 %v4231, %v4891
      %v4893 = vsub.f32 1.0, %v4892
      %v4894 = vmul.f32 %v4891, %v4893
      %v4895 = vadd.f32 %v4891, %v4894
      %vm4896 = vweird.f32 %v4231
      %vm4897 = vweird.f32 %v4891
      %vm4898 = vmor %vm4896, %vm4897
      %v4899 = vsel %vm4898, %v4891, %v4895
      %v4900 = vand.u32 2147483647, %v4231
      %vm4901 = vcmp.eq.f32.partialorder %v4900, 8.507059e+37
      %v4902 = vand.u32 %v4231, 2147483648
      %v4903 = vor.u32 1.1754944e-38, %v4902
      %v4904 = vsel %vm4901, %v4903, %v4899
      %v4905 = vmul.f32 1.0, %v4904
      %v4906 = vrcp.pop %v4232
      %v4907 = vmul.f32 %v4232, %v4906
      %v4908 = vsub.f32 1.0, %v4907
      %v4909 = vmul.f32 %v4906, %v4908
      %v4910 = vadd.f32 %v4906, %v4909
      %vm4911 = vweird.f32 %v4232
      %vm4912 = vweird.f32 %v4906
      %vm4913 = vmor %vm4911, %vm4912
      %v4914 = vsel %vm4913, %v4906, %v4910
      %v4915 = vand.u32 2147483647, %v4232
      %vm4916 = vcmp.eq.f32.partialorder %v4915, 8.507059e+37
      %v4917 = vand.u32 %v4232, 2147483648
      %v4918 = vor.u32 1.1754944e-38, %v4917
      %v4919 = vsel %vm4916, %v4918, %v4914
      %v4920 = vmul.f32 1.0, %v4919
      %v4921 = vrcp.pop %v4233
      %v4922 = vmul.f32 %v4233, %v4921
      %v4923 = vsub.f32 1.0, %v4922
      %v4924 = vmul.f32 %v4921, %v4923
      %v4925 = vadd.f32 %v4921, %v4924
      %vm4926 = vweird.f32 %v4233
      %vm4927 = vweird.f32 %v4921
      %vm4928 = vmor %vm4926, %vm4927
      %v4929 = vsel %vm4928, %v4921, %v4925
      %v4930 = vand.u32 2147483647, %v4233
      %vm4931 = vcmp.eq.f32.partialorder %v4930, 8.507059e+37
      %v4932 = vand.u32 %v4233, 2147483648
      %v4933 = vor.u32 1.1754944e-38, %v4932
      %v4934 = vsel %vm4931, %v4933, %v4929
      %v4935 = vmul.f32 1.0, %v4934
      %v4936 = vrcp.pop %v4234
      %v4937 = vmul.f32 %v4234, %v4936
      %v4938 = vsub.f32 1.0, %v4937
      %v4939 = vmul.f32 %v4936, %v4938
      %v4940 = vadd.f32 %v4936, %v4939
      %vm4941 = vweird.f32 %v4234
      %vm4942 = vweird.f32 %v4936
      %vm4943 = vmor %vm4941, %vm4942
      %v4944 = vsel %vm4943, %v4936, %v4940
      %v4945 = vand.u32 2147483647, %v4234
      %vm4946 = vcmp.eq.f32.partialorder %v4945, 8.507059e+37
      %v4947 = vand.u32 %v4234, 2147483648
      %v4948 = vor.u32 1.1754944e-38, %v4947
      %v4949 = vsel %vm4946, %v4948, %v4944
      %v4950 = vmul.f32 1.0, %v4949
      %v4951 = vrcp.pop %v4235
      %v4952 = vmul.f32 %v4235, %v4951
      %v4953 = vsub.f32 1.0, %v4952
      %v4954 = vmul.f32 %v4951, %v4953
      %v4955 = vadd.f32 %v4951, %v4954
      %vm4956 = vweird.f32 %v4235
      %vm4957 = vweird.f32 %v4951
      %vm4958 = vmor %vm4956, %vm4957
      %v4959 = vsel %vm4958, %v4951, %v4955
      %v4960 = vand.u32 2147483647, %v4235
      %vm4961 = vcmp.eq.f32.partialorder %v4960, 8.507059e+37
      %v4962 = vand.u32 %v4235, 2147483648
      %v4963 = vor.u32 1.1754944e-38, %v4962
      %v4964 = vsel %vm4961, %v4963, %v4959
      %v4965 = vmul.f32 1.0, %v4964
      %v4966 = vrcp.pop %v4236
      %v4967 = vmul.f32 %v4236, %v4966
      %v4968 = vsub.f32 1.0, %v4967
      %v4969 = vmul.f32 %v4966, %v4968
      %v4970 = vadd.f32 %v4966, %v4969
      %vm4971 = vweird.f32 %v4236
      %vm4972 = vweird.f32 %v4966
      %vm4973 = vmor %vm4971, %vm4972
      %v4974 = vsel %vm4973, %v4966, %v4970
      %v4975 = vand.u32 2147483647, %v4236
      %vm4976 = vcmp.eq.f32.partialorder %v4975, 8.507059e+37
      %v4977 = vand.u32 %v4236, 2147483648
      %v4978 = vor.u32 1.1754944e-38, %v4977
      %v4979 = vsel %vm4976, %v4978, %v4974
      %v4980 = vmul.f32 1.0, %v4979
      %v4981 = vrcp.pop %v4237
      %v4982 = vmul.f32 %v4237, %v4981
      %v4983 = vsub.f32 1.0, %v4982
      %v4984 = vmul.f32 %v4981, %v4983
      %v4985 = vadd.f32 %v4981, %v4984
      %vm4986 = vweird.f32 %v4237
      %vm4987 = vweird.f32 %v4981
      %vm4988 = vmor %vm4986, %vm4987
      %v4989 = vsel %vm4988, %v4981, %v4985
      %v4990 = vand.u32 2147483647, %v4237
      %vm4991 = vcmp.eq.f32.partialorder %v4990, 8.507059e+37
      %v4992 = vand.u32 %v4237, 2147483648
      %v4993 = vor.u32 1.1754944e-38, %v4992
      %v4994 = vsel %vm4991, %v4993, %v4989
      %v4995 = vmul.f32 1.0, %v4994
      %v4996 = vrcp.pop %v4238
      %v4997 = vmul.f32 %v4238, %v4996
      %v4998 = vsub.f32 1.0, %v4997
      %v4999 = vmul.f32 %v4996, %v4998
      %v5000 = vadd.f32 %v4996, %v4999
      %vm5001 = vweird.f32 %v4238
      %vm5002 = vweird.f32 %v4996
      %vm5003 = vmor %vm5001, %vm5002
      %v5004 = vsel %vm5003, %v4996, %v5000
      %v5005 = vand.u32 2147483647, %v4238
      %vm5006 = vcmp.eq.f32.partialorder %v5005, 8.507059e+37
      %v5007 = vand.u32 %v4238, 2147483648
      %v5008 = vor.u32 1.1754944e-38, %v5007
      %v5009 = vsel %vm5006, %v5008, %v5004
      %v5010 = vmul.f32 1.0, %v5009
      %v5011 = vrcp.pop %v4239
      %v5012 = vmul.f32 %v4239, %v5011
      %v5013 = vsub.f32 1.0, %v5012
      %v5014 = vmul.f32 %v5011, %v5013
      %v5015 = vadd.f32 %v5011, %v5014
      %vm5016 = vweird.f32 %v4239
      %vm5017 = vweird.f32 %v5011
      %vm5018 = vmor %vm5016, %vm5017
      %v5019 = vsel %vm5018, %v5011, %v5015
      %v5020 = vand.u32 2147483647, %v4239
      %vm5021 = vcmp.eq.f32.partialorder %v5020, 8.507059e+37
      %v5022 = vand.u32 %v4239, 2147483648
      %v5023 = vor.u32 1.1754944e-38, %v5022
      %v5024 = vsel %vm5021, %v5023, %v5019
      %v5025 = vmul.f32 1.0, %v5024
      %v5026 = vrcp.pop %v4240
      %v5027 = vmul.f32 %v4240, %v5026
      %v5028 = vsub.f32 1.0, %v5027
      %v5029 = vmul.f32 %v5026, %v5028
      %v5030 = vadd.f32 %v5026, %v5029
      %vm5031 = vweird.f32 %v4240
      %vm5032 = vweird.f32 %v5026
      %vm5033 = vmor %vm5031, %vm5032
      %v5034 = vsel %vm5033, %v5026, %v5030
      %v5035 = vand.u32 2147483647, %v4240
      %vm5036 = vcmp.eq.f32.partialorder %v5035, 8.507059e+37
      %v5037 = vand.u32 %v4240, 2147483648
      %v5038 = vor.u32 1.1754944e-38, %v5037
      %v5039 = vsel %vm5036, %v5038, %v5034
      %v5040 = vmul.f32 1.0, %v5039
      %v5041 = vrcp.pop %v4241
      %v5042 = vmul.f32 %v4241, %v5041
      %v5043 = vsub.f32 1.0, %v5042
      %v5044 = vmul.f32 %v5041, %v5043
      %v5045 = vadd.f32 %v5041, %v5044
      %vm5046 = vweird.f32 %v4241
      %vm5047 = vweird.f32 %v5041
      %vm5048 = vmor %vm5046, %vm5047
      %v5049 = vsel %vm5048, %v5041, %v5045
      %v5050 = vand.u32 2147483647, %v4241
      %vm5051 = vcmp.eq.f32.partialorder %v5050, 8.507059e+37
      %v5052 = vand.u32 %v4241, 2147483648
      %v5053 = vor.u32 1.1754944e-38, %v5052
      %v5054 = vsel %vm5051, %v5053, %v5049
      %v5055 = vmul.f32 1.0, %v5054
      %v5056 = vrcp.pop %v4242
      %v5057 = vmul.f32 %v4242, %v5056
      %v5058 = vsub.f32 1.0, %v5057
      %v5059 = vmul.f32 %v5056, %v5058
      %v5060 = vadd.f32 %v5056, %v5059
      %vm5061 = vweird.f32 %v4242
      %vm5062 = vweird.f32 %v5056
      %vm5063 = vmor %vm5061, %vm5062
      %v5064 = vsel %vm5063, %v5056, %v5060
      %v5065 = vand.u32 2147483647, %v4242
      %vm5066 = vcmp.eq.f32.partialorder %v5065, 8.507059e+37
      %v5067 = vand.u32 %v4242, 2147483648
      %v5068 = vor.u32 1.1754944e-38, %v5067
      %v5069 = vsel %vm5066, %v5068, %v5064
      %v5070 = vmul.f32 1.0, %v5069
      %v5071 = vrcp.pop %v4243
      %v5072 = vmul.f32 %v4243, %v5071
      %v5073 = vsub.f32 1.0, %v5072
      %v5074 = vmul.f32 %v5071, %v5073
      %v5075 = vadd.f32 %v5071, %v5074
      %vm5076 = vweird.f32 %v4243
      %vm5077 = vweird.f32 %v5071
      %vm5078 = vmor %vm5076, %vm5077
      %v5079 = vsel %vm5078, %v5071, %v5075
      %v5080 = vand.u32 2147483647, %v4243
      %vm5081 = vcmp.eq.f32.partialorder %v5080, 8.507059e+37
      %v5082 = vand.u32 %v4243, 2147483648
      %v5083 = vor.u32 1.1754944e-38, %v5082
      %v5084 = vsel %vm5081, %v5083, %v5079
      %v5085 = vmul.f32 1.0, %v5084
      %v5086 = vrcp.pop %v4244
      %v5087 = vmul.f32 %v4244, %v5086
      %v5088 = vsub.f32 1.0, %v5087
      %v5089 = vmul.f32 %v5086, %v5088
      %v5090 = vadd.f32 %v5086, %v5089
      %vm5091 = vweird.f32 %v4244
      %vm5092 = vweird.f32 %v5086
      %vm5093 = vmor %vm5091, %vm5092
      %v5094 = vsel %vm5093, %v5086, %v5090
      %v5095 = vand.u32 2147483647, %v4244
      %vm5096 = vcmp.eq.f32.partialorder %v5095, 8.507059e+37
      %v5097 = vand.u32 %v4244, 2147483648
      %v5098 = vor.u32 1.1754944e-38, %v5097
      %v5099 = vsel %vm5096, %v5098, %v5094
      %v5100 = vmul.f32 1.0, %v5099
      %v5101 = vrcp.pop %v4245
      %v5102 = vmul.f32 %v4245, %v5101
      %v5103 = vsub.f32 1.0, %v5102
      %v5104 = vmul.f32 %v5101, %v5103
      %v5105 = vadd.f32 %v5101, %v5104
      %vm5106 = vweird.f32 %v4245
      %vm5107 = vweird.f32 %v5101
      %vm5108 = vmor %vm5106, %vm5107
      %v5109 = vsel %vm5108, %v5101, %v5105
      %v5110 = vand.u32 2147483647, %v4245
      %vm5111 = vcmp.eq.f32.partialorder %v5110, 8.507059e+37
      %v5112 = vand.u32 %v4245, 2147483648
      %v5113 = vor.u32 1.1754944e-38, %v5112
      %v5114 = vsel %vm5111, %v5113, %v5109
      %v5115 = vmul.f32 1.0, %v5114
      %v5116 = vrcp.pop %v4246
      %v5117 = vmul.f32 %v4246, %v5116
      %v5118 = vsub.f32 1.0, %v5117
      %v5119 = vmul.f32 %v5116, %v5118
      %v5120 = vadd.f32 %v5116, %v5119
      %vm5121 = vweird.f32 %v4246
      %vm5122 = vweird.f32 %v5116
      %vm5123 = vmor %vm5121, %vm5122
      %v5124 = vsel %vm5123, %v5116, %v5120
      %v5125 = vand.u32 2147483647, %v4246
      %vm5126 = vcmp.eq.f32.partialorder %v5125, 8.507059e+37
      %v5127 = vand.u32 %v4246, 2147483648
      %v5128 = vor.u32 1.1754944e-38, %v5127
      %v5129 = vsel %vm5126, %v5128, %v5124
      %v5130 = vmul.f32 1.0, %v5129
      %v5131 = vrcp.pop %v4247
      %v5132 = vmul.f32 %v4247, %v5131
      %v5133 = vsub.f32 1.0, %v5132
      %v5134 = vmul.f32 %v5131, %v5133
      %v5135 = vadd.f32 %v5131, %v5134
      %vm5136 = vweird.f32 %v4247
      %vm5137 = vweird.f32 %v5131
      %vm5138 = vmor %vm5136, %vm5137
      %v5139 = vsel %vm5138, %v5131, %v5135
      %v5140 = vand.u32 2147483647, %v4247
      %vm5141 = vcmp.eq.f32.partialorder %v5140, 8.507059e+37
      %v5142 = vand.u32 %v4247, 2147483648
      %v5143 = vor.u32 1.1754944e-38, %v5142
      %v5144 = vsel %vm5141, %v5143, %v5139
      %v5145 = vmul.f32 1.0, %v5144
      %v5146 = vrcp.pop %v4248
      %v5147 = vmul.f32 %v4248, %v5146
      %v5148 = vsub.f32 1.0, %v5147
      %v5149 = vmul.f32 %v5146, %v5148
      %v5150 = vadd.f32 %v5146, %v5149
      %vm5151 = vweird.f32 %v4248
      %vm5152 = vweird.f32 %v5146
      %vm5153 = vmor %vm5151, %vm5152
      %v5154 = vsel %vm5153, %v5146, %v5150
      %v5155 = vand.u32 2147483647, %v4248
      %vm5156 = vcmp.eq.f32.partialorder %v5155, 8.507059e+37
      %v5157 = vand.u32 %v4248, 2147483648
      %v5158 = vor.u32 1.1754944e-38, %v5157
      %v5159 = vsel %vm5156, %v5158, %v5154
      %v5160 = vmul.f32 1.0, %v5159
      %v5161 = vrcp.pop %v4249
      %v5162 = vmul.f32 %v4249, %v5161
      %v5163 = vsub.f32 1.0, %v5162
      %v5164 = vmul.f32 %v5161, %v5163
      %v5165 = vadd.f32 %v5161, %v5164
      %vm5166 = vweird.f32 %v4249
      %vm5167 = vweird.f32 %v5161
      %vm5168 = vmor %vm5166, %vm5167
      %v5169 = vsel %vm5168, %v5161, %v5165
      %v5170 = vand.u32 2147483647, %v4249
      %vm5171 = vcmp.eq.f32.partialorder %v5170, 8.507059e+37
      %v5172 = vand.u32 %v4249, 2147483648
      %v5173 = vor.u32 1.1754944e-38, %v5172
      %v5174 = vsel %vm5171, %v5173, %v5169
      %v5175 = vmul.f32 1.0, %v5174
      %v5176 = vrcp.pop %v4250
      %v5177 = vmul.f32 %v4250, %v5176
      %v5178 = vsub.f32 1.0, %v5177
      %v5179 = vmul.f32 %v5176, %v5178
      %v5180 = vadd.f32 %v5176, %v5179
      %vm5181 = vweird.f32 %v4250
      %vm5182 = vweird.f32 %v5176
      %vm5183 = vmor %vm5181, %vm5182
      %v5184 = vsel %vm5183, %v5176, %v5180
      %v5185 = vand.u32 2147483647, %v4250
      %vm5186 = vcmp.eq.f32.partialorder %v5185, 8.507059e+37
      %v5187 = vand.u32 %v4250, 2147483648
      %v5188 = vor.u32 1.1754944e-38, %v5187
      %v5189 = vsel %vm5186, %v5188, %v5184
      %v5190 = vmul.f32 1.0, %v5189
      %v5191 = vrcp.pop %v4251
      %v5192 = vmul.f32 %v4251, %v5191
      %v5193 = vsub.f32 1.0, %v5192
      %v5194 = vmul.f32 %v5191, %v5193
      %v5195 = vadd.f32 %v5191, %v5194
      %vm5196 = vweird.f32 %v4251
      %vm5197 = vweird.f32 %v5191
      %vm5198 = vmor %vm5196, %vm5197
      %v5199 = vsel %vm5198, %v5191, %v5195
      %v5200 = vand.u32 2147483647, %v4251
      %vm5201 = vcmp.eq.f32.partialorder %v5200, 8.507059e+37
      %v5202 = vand.u32 %v4251, 2147483648
      %v5203 = vor.u32 1.1754944e-38, %v5202
      %v5204 = vsel %vm5201, %v5203, %v5199
      %v5205 = vmul.f32 1.0, %v5204
      %v5206 = vrcp.pop %v4252
      %v5207 = vmul.f32 %v4252, %v5206
      %v5208 = vsub.f32 1.0, %v5207
      %v5209 = vmul.f32 %v5206, %v5208
      %v5210 = vadd.f32 %v5206, %v5209
      %vm5211 = vweird.f32 %v4252
      %vm5212 = vweird.f32 %v5206
      %vm5213 = vmor %vm5211, %vm5212
      %v5214 = vsel %vm5213, %v5206, %v5210
      %v5215 = vand.u32 2147483647, %v4252
      %vm5216 = vcmp.eq.f32.partialorder %v5215, 8.507059e+37
      %v5217 = vand.u32 %v4252, 2147483648
      %v5218 = vor.u32 1.1754944e-38, %v5217
      %v5219 = vsel %vm5216, %v5218, %v5214
      %v5220 = vmul.f32 1.0, %v5219
      %v5221 = vrcp.pop %v4253
      %v5222 = vmul.f32 %v4253, %v5221
      %v5223 = vsub.f32 1.0, %v5222
      %v5224 = vmul.f32 %v5221, %v5223
      %v5225 = vadd.f32 %v5221, %v5224
      %vm5226 = vweird.f32 %v4253
      %vm5227 = vweird.f32 %v5221
      %vm5228 = vmor %vm5226, %vm5227
      %v5229 = vsel %vm5228, %v5221, %v5225
      %v5230 = vand.u32 2147483647, %v4253
      %vm5231 = vcmp.eq.f32.partialorder %v5230, 8.507059e+37
      %v5232 = vand.u32 %v4253, 2147483648
      %v5233 = vor.u32 1.1754944e-38, %v5232
      %v5234 = vsel %vm5231, %v5233, %v5229
      %v5235 = vmul.f32 1.0, %v5234
      %v5236 = vrcp.pop %v4254
      %v5237 = vmul.f32 %v4254, %v5236
      %v5238 = vsub.f32 1.0, %v5237
      %v5239 = vmul.f32 %v5236, %v5238
      %v5240 = vadd.f32 %v5236, %v5239
      %vm5241 = vweird.f32 %v4254
      %vm5242 = vweird.f32 %v5236
      %vm5243 = vmor %vm5241, %vm5242
      %v5244 = vsel %vm5243, %v5236, %v5240
      %v5245 = vand.u32 2147483647, %v4254
      %vm5246 = vcmp.eq.f32.partialorder %v5245, 8.507059e+37
      %v5247 = vand.u32 %v4254, 2147483648
      %v5248 = vor.u32 1.1754944e-38, %v5247
      %v5249 = vsel %vm5246, %v5248, %v5244
      %v5250 = vmul.f32 1.0, %v5249
      %v5251 = vrcp.pop %v4255
      %v5252 = vmul.f32 %v4255, %v5251
      %v5253 = vsub.f32 1.0, %v5252
      %v5254 = vmul.f32 %v5251, %v5253
      %v5255 = vadd.f32 %v5251, %v5254
      %vm5256 = vweird.f32 %v4255
      %vm5257 = vweird.f32 %v5251
      %vm5258 = vmor %vm5256, %vm5257
      %v5259 = vsel %vm5258, %v5251, %v5255
      %v5260 = vand.u32 2147483647, %v4255
      %vm5261 = vcmp.eq.f32.partialorder %v5260, 8.507059e+37
      %v5262 = vand.u32 %v4255, 2147483648
      %v5263 = vor.u32 1.1754944e-38, %v5262
      %v5264 = vsel %vm5261, %v5263, %v5259
      %v5265 = vmul.f32 1.0, %v5264
      %v5266 = vrcp.pop %v4256
      %v5267 = vmul.f32 %v4256, %v5266
      %v5268 = vsub.f32 1.0, %v5267
      %v5269 = vmul.f32 %v5266, %v5268
      %v5270 = vadd.f32 %v5266, %v5269
      %vm5271 = vweird.f32 %v4256
      %vm5272 = vweird.f32 %v5266
      %vm5273 = vmor %vm5271, %vm5272
      %v5274 = vsel %vm5273, %v5266, %v5270
      %v5275 = vand.u32 2147483647, %v4256
      %vm5276 = vcmp.eq.f32.partialorder %v5275, 8.507059e+37
      %v5277 = vand.u32 %v4256, 2147483648
      %v5278 = vor.u32 1.1754944e-38, %v5277
      %v5279 = vsel %vm5276, %v5278, %v5274
      %v5280 = vmul.f32 1.0, %v5279
      %v5281 = vrcp.pop %v4257
      %v5282 = vmul.f32 %v4257, %v5281
      %v5283 = vsub.f32 1.0, %v5282
      %v5284 = vmul.f32 %v5281, %v5283
      %v5285 = vadd.f32 %v5281, %v5284
      %vm5286 = vweird.f32 %v4257
      %vm5287 = vweird.f32 %v5281
      %vm5288 = vmor %vm5286, %vm5287
      %v5289 = vsel %vm5288, %v5281, %v5285
      %v5290 = vand.u32 2147483647, %v4257
      %vm5291 = vcmp.eq.f32.partialorder %v5290, 8.507059e+37
      %v5292 = vand.u32 %v4257, 2147483648
      %v5293 = vor.u32 1.1754944e-38, %v5292
      %v5294 = vsel %vm5291, %v5293, %v5289
      %v5295 = vmul.f32 1.0, %v5294
      %v5296 = vrcp.pop %v4258
      %v5297 = vmul.f32 %v4258, %v5296
      %v5298 = vsub.f32 1.0, %v5297
      %v5299 = vmul.f32 %v5296, %v5298
      %v5300 = vadd.f32 %v5296, %v5299
      %vm5301 = vweird.f32 %v4258
      %vm5302 = vweird.f32 %v5296
      %vm5303 = vmor %vm5301, %vm5302
      %v5304 = vsel %vm5303, %v5296, %v5300
      %v5305 = vand.u32 2147483647, %v4258
      %vm5306 = vcmp.eq.f32.partialorder %v5305, 8.507059e+37
      %v5307 = vand.u32 %v4258, 2147483648
      %v5308 = vor.u32 1.1754944e-38, %v5307
      %v5309 = vsel %vm5306, %v5308, %v5304
      %v5310 = vmul.f32 1.0, %v5309
      %v5311 = vrcp.pop %v4259
      %v5312 = vmul.f32 %v4259, %v5311
      %v5313 = vsub.f32 1.0, %v5312
      %v5314 = vmul.f32 %v5311, %v5313
      %v5315 = vadd.f32 %v5311, %v5314
      %vm5316 = vweird.f32 %v4259
      %vm5317 = vweird.f32 %v5311
      %vm5318 = vmor %vm5316, %vm5317
      %v5319 = vsel %vm5318, %v5311, %v5315
      %v5320 = vand.u32 2147483647, %v4259
      %vm5321 = vcmp.eq.f32.partialorder %v5320, 8.507059e+37
      %v5322 = vand.u32 %v4259, 2147483648
      %v5323 = vor.u32 1.1754944e-38, %v5322
      %v5324 = vsel %vm5321, %v5323, %v5319
      %v5325 = vmul.f32 1.0, %v5324
      %v5326 = vrcp.pop %v4260
      %v5327 = vmul.f32 %v4260, %v5326
      %v5328 = vsub.f32 1.0, %v5327
      %v5329 = vmul.f32 %v5326, %v5328
      %v5330 = vadd.f32 %v5326, %v5329
      %vm5331 = vweird.f32 %v4260
      %vm5332 = vweird.f32 %v5326
      %vm5333 = vmor %vm5331, %vm5332
      %v5334 = vsel %vm5333, %v5326, %v5330
      %v5335 = vand.u32 2147483647, %v4260
      %vm5336 = vcmp.eq.f32.partialorder %v5335, 8.507059e+37
      %v5337 = vand.u32 %v4260, 2147483648
      %v5338 = vor.u32 1.1754944e-38, %v5337
      %v5339 = vsel %vm5336, %v5338, %v5334
      %v5340 = vmul.f32 1.0, %v5339
      %v5341 = vrcp.pop %v4261
      %v5342 = vmul.f32 %v4261, %v5341
      %v5343 = vsub.f32 1.0, %v5342
      %v5344 = vmul.f32 %v5341, %v5343
      %v5345 = vadd.f32 %v5341, %v5344
      %vm5346 = vweird.f32 %v4261
      %vm5347 = vweird.f32 %v5341
      %vm5348 = vmor %vm5346, %vm5347
      %v5349 = vsel %vm5348, %v5341, %v5345
      %v5350 = vand.u32 2147483647, %v4261
      %vm5351 = vcmp.eq.f32.partialorder %v5350, 8.507059e+37
      %v5352 = vand.u32 %v4261, 2147483648
      %v5353 = vor.u32 1.1754944e-38, %v5352
      %v5354 = vsel %vm5351, %v5353, %v5349
      %v5355 = vmul.f32 1.0, %v5354
      %v5356 = vrcp.pop %v4262
      %v5357 = vmul.f32 %v4262, %v5356
      %v5358 = vsub.f32 1.0, %v5357
      %v5359 = vmul.f32 %v5356, %v5358
      %v5360 = vadd.f32 %v5356, %v5359
      %vm5361 = vweird.f32 %v4262
      %vm5362 = vweird.f32 %v5356
      %vm5363 = vmor %vm5361, %vm5362
      %v5364 = vsel %vm5363, %v5356, %v5360
      %v5365 = vand.u32 2147483647, %v4262
      %vm5366 = vcmp.eq.f32.partialorder %v5365, 8.507059e+37
      %v5367 = vand.u32 %v4262, 2147483648
      %v5368 = vor.u32 1.1754944e-38, %v5367
      %v5369 = vsel %vm5366, %v5368, %v5364
      %v5370 = vmul.f32 1.0, %v5369
      %v5371 = vrcp.pop %v4263
      %v5372 = vmul.f32 %v4263, %v5371
      %v5373 = vsub.f32 1.0, %v5372
      %v5374 = vmul.f32 %v5371, %v5373
      %v5375 = vadd.f32 %v5371, %v5374
      %vm5376 = vweird.f32 %v4263
      %vm5377 = vweird.f32 %v5371
      %vm5378 = vmor %vm5376, %vm5377
      %v5379 = vsel %vm5378, %v5371, %v5375
      %v5380 = vand.u32 2147483647, %v4263
      %vm5381 = vcmp.eq.f32.partialorder %v5380, 8.507059e+37
      %v5382 = vand.u32 %v4263, 2147483648
      %v5383 = vor.u32 1.1754944e-38, %v5382
      %v5384 = vsel %vm5381, %v5383, %v5379
      %v5385 = vmul.f32 1.0, %v5384
      %v5386 = vrcp.pop %v4264
      %v5387 = vmul.f32 %v4264, %v5386
      %v5388 = vsub.f32 1.0, %v5387
      %v5389 = vmul.f32 %v5386, %v5388
      %v5390 = vadd.f32 %v5386, %v5389
      %vm5391 = vweird.f32 %v4264
      %vm5392 = vweird.f32 %v5386
      %vm5393 = vmor %vm5391, %vm5392
      %v5394 = vsel %vm5393, %v5386, %v5390
      %v5395 = vand.u32 2147483647, %v4264
      %vm5396 = vcmp.eq.f32.partialorder %v5395, 8.507059e+37
      %v5397 = vand.u32 %v4264, 2147483648
      %v5398 = vor.u32 1.1754944e-38, %v5397
      %v5399 = vsel %vm5396, %v5398, %v5394
      %v5400 = vmul.f32 1.0, %v5399
      %v5401 = vrcp.pop %v4265
      %v5402 = vmul.f32 %v4265, %v5401
      %v5403 = vsub.f32 1.0, %v5402
      %v5404 = vmul.f32 %v5401, %v5403
      %v5405 = vadd.f32 %v5401, %v5404
      %vm5406 = vweird.f32 %v4265
      %vm5407 = vweird.f32 %v5401
      %vm5408 = vmor %vm5406, %vm5407
      %v5409 = vsel %vm5408, %v5401, %v5405
      %v5410 = vand.u32 2147483647, %v4265
      %vm5411 = vcmp.eq.f32.partialorder %v5410, 8.507059e+37
      %v5412 = vand.u32 %v4265, 2147483648
      %v5413 = vor.u32 1.1754944e-38, %v5412
      %v5414 = vsel %vm5411, %v5413, %v5409
      %v5415 = vmul.f32 1.0, %v5414
      %v5416 = vrcp.pop %v4266
      %v5417 = vmul.f32 %v4266, %v5416
      %v5418 = vsub.f32 1.0, %v5417
      %v5419 = vmul.f32 %v5416, %v5418
      %v5420 = vadd.f32 %v5416, %v5419
      %vm5421 = vweird.f32 %v4266
      %vm5422 = vweird.f32 %v5416
      %vm5423 = vmor %vm5421, %vm5422
      %v5424 = vsel %vm5423, %v5416, %v5420
      %v5425 = vand.u32 2147483647, %v4266
      %vm5426 = vcmp.eq.f32.partialorder %v5425, 8.507059e+37
      %v5427 = vand.u32 %v4266, 2147483648
      %v5428 = vor.u32 1.1754944e-38, %v5427
      %v5429 = vsel %vm5426, %v5428, %v5424
      %v5430 = vmul.f32 1.0, %v5429
      %v5431 = vrcp.pop %v4267
      %v5432 = vmul.f32 %v4267, %v5431
      %v5433 = vsub.f32 1.0, %v5432
      %v5434 = vmul.f32 %v5431, %v5433
      %v5435 = vadd.f32 %v5431, %v5434
      %vm5436 = vweird.f32 %v4267
      %vm5437 = vweird.f32 %v5431
      %vm5438 = vmor %vm5436, %vm5437
      %v5439 = vsel %vm5438, %v5431, %v5435
      %v5440 = vand.u32 2147483647, %v4267
      %vm5441 = vcmp.eq.f32.partialorder %v5440, 8.507059e+37
      %v5442 = vand.u32 %v4267, 2147483648
      %v5443 = vor.u32 1.1754944e-38, %v5442
      %v5444 = vsel %vm5441, %v5443, %v5439
      %v5445 = vmul.f32 1.0, %v5444
      %v5446 = vrcp.pop %v4268
      %v5447 = vmul.f32 %v4268, %v5446
      %v5448 = vsub.f32 1.0, %v5447
      %v5449 = vmul.f32 %v5446, %v5448
      %v5450 = vadd.f32 %v5446, %v5449
      %vm5451 = vweird.f32 %v4268
      %vm5452 = vweird.f32 %v5446
      %vm5453 = vmor %vm5451, %vm5452
      %v5454 = vsel %vm5453, %v5446, %v5450
      %v5455 = vand.u32 2147483647, %v4268
      %vm5456 = vcmp.eq.f32.partialorder %v5455, 8.507059e+37
      %v5457 = vand.u32 %v4268, 2147483648
      %v5458 = vor.u32 1.1754944e-38, %v5457
      %v5459 = vsel %vm5456, %v5458, %v5454
      %v5460 = vmul.f32 1.0, %v5459
      %v5461 = vrcp.pop %v4269
      %v5462 = vmul.f32 %v4269, %v5461
      %v5463 = vsub.f32 1.0, %v5462
      %v5464 = vmul.f32 %v5461, %v5463
      %v5465 = vadd.f32 %v5461, %v5464
      %vm5466 = vweird.f32 %v4269
      %vm5467 = vweird.f32 %v5461
      %vm5468 = vmor %vm5466, %vm5467
      %v5469 = vsel %vm5468, %v5461, %v5465
      %v5470 = vand.u32 2147483647, %v4269
      %vm5471 = vcmp.eq.f32.partialorder %v5470, 8.507059e+37
      %v5472 = vand.u32 %v4269, 2147483648
      %v5473 = vor.u32 1.1754944e-38, %v5472
      %v5474 = vsel %vm5471, %v5473, %v5469
      %v5475 = vmul.f32 1.0, %v5474
      %v5476 = vrcp.pop %v4270
      %v5477 = vmul.f32 %v4270, %v5476
      %v5478 = vsub.f32 1.0, %v5477
      %v5479 = vmul.f32 %v5476, %v5478
      %v5480 = vadd.f32 %v5476, %v5479
      %vm5481 = vweird.f32 %v4270
      %vm5482 = vweird.f32 %v5476
      %vm5483 = vmor %vm5481, %vm5482
      %v5484 = vsel %vm5483, %v5476, %v5480
      %v5485 = vand.u32 2147483647, %v4270
      %vm5486 = vcmp.eq.f32.partialorder %v5485, 8.507059e+37
      %v5487 = vand.u32 %v4270, 2147483648
      %v5488 = vor.u32 1.1754944e-38, %v5487
      %v5489 = vsel %vm5486, %v5488, %v5484
      %v5490 = vmul.f32 1.0, %v5489
      %v5491 = vrcp.pop %v4271
      %v5492 = vmul.f32 %v4271, %v5491
      %v5493 = vsub.f32 1.0, %v5492
      %v5494 = vmul.f32 %v5491, %v5493
      %v5495 = vadd.f32 %v5491, %v5494
      %vm5496 = vweird.f32 %v4271
      %vm5497 = vweird.f32 %v5491
      %vm5498 = vmor %vm5496, %vm5497
      %v5499 = vsel %vm5498, %v5491, %v5495
      %v5500 = vand.u32 2147483647, %v4271
      %vm5501 = vcmp.eq.f32.partialorder %v5500, 8.507059e+37
      %v5502 = vand.u32 %v4271, 2147483648
      %v5503 = vor.u32 1.1754944e-38, %v5502
      %v5504 = vsel %vm5501, %v5503, %v5499
      %v5505 = vmul.f32 1.0, %v5504
      %v5506 = vrcp.pop %v4272
      %v5507 = vmul.f32 %v4272, %v5506
      %v5508 = vsub.f32 1.0, %v5507
      %v5509 = vmul.f32 %v5506, %v5508
      %v5510 = vadd.f32 %v5506, %v5509
      %vm5511 = vweird.f32 %v4272
      %vm5512 = vweird.f32 %v5506
      %vm5513 = vmor %vm5511, %vm5512
      %v5514 = vsel %vm5513, %v5506, %v5510
      %v5515 = vand.u32 2147483647, %v4272
      %vm5516 = vcmp.eq.f32.partialorder %v5515, 8.507059e+37
      %v5517 = vand.u32 %v4272, 2147483648
      %v5518 = vor.u32 1.1754944e-38, %v5517
      %v5519 = vsel %vm5516, %v5518, %v5514
      %v5520 = vmul.f32 1.0, %v5519
      %v5521 = vrcp.pop %v4273
      %v5522 = vmul.f32 %v4273, %v5521
      %v5523 = vsub.f32 1.0, %v5522
      %v5524 = vmul.f32 %v5521, %v5523
      %v5525 = vadd.f32 %v5521, %v5524
      %vm5526 = vweird.f32 %v4273
      %vm5527 = vweird.f32 %v5521
      %vm5528 = vmor %vm5526, %vm5527
      %v5529 = vsel %vm5528, %v5521, %v5525
      %v5530 = vand.u32 2147483647, %v4273
      %vm5531 = vcmp.eq.f32.partialorder %v5530, 8.507059e+37
      %v5532 = vand.u32 %v4273, 2147483648
      %v5533 = vor.u32 1.1754944e-38, %v5532
      %v5534 = vsel %vm5531, %v5533, %v5529
      %v5535 = vmul.f32 1.0, %v5534
      %v5536 = vrcp.pop %v4274
      %v5537 = vmul.f32 %v4274, %v5536
      %v5538 = vsub.f32 1.0, %v5537
      %v5539 = vmul.f32 %v5536, %v5538
      %v5540 = vadd.f32 %v5536, %v5539
      %vm5541 = vweird.f32 %v4274
      %vm5542 = vweird.f32 %v5536
      %vm5543 = vmor %vm5541, %vm5542
      %v5544 = vsel %vm5543, %v5536, %v5540
      %v5545 = vand.u32 2147483647, %v4274
      %vm5546 = vcmp.eq.f32.partialorder %v5545, 8.507059e+37
      %v5547 = vand.u32 %v4274, 2147483648
      %v5548 = vor.u32 1.1754944e-38, %v5547
      %v5549 = vsel %vm5546, %v5548, %v5544
      %v5550 = vmul.f32 1.0, %v5549
      %v5551 = vrcp.pop %v4275
      %v5552 = vmul.f32 %v4275, %v5551
      %v5553 = vsub.f32 1.0, %v5552
      %v5554 = vmul.f32 %v5551, %v5553
      %v5555 = vadd.f32 %v5551, %v5554
      %vm5556 = vweird.f32 %v4275
      %vm5557 = vweird.f32 %v5551
      %vm5558 = vmor %vm5556, %vm5557
      %v5559 = vsel %vm5558, %v5551, %v5555
      %v5560 = vand.u32 2147483647, %v4275
      %vm5561 = vcmp.eq.f32.partialorder %v5560, 8.507059e+37
      %v5562 = vand.u32 %v4275, 2147483648
      %v5563 = vor.u32 1.1754944e-38, %v5562
      %v5564 = vsel %vm5561, %v5563, %v5559
      %v5565 = vmul.f32 1.0, %v5564
      %v5566 = vrcp.pop %v4276
      %v5567 = vmul.f32 %v4276, %v5566
      %v5568 = vsub.f32 1.0, %v5567
      %v5569 = vmul.f32 %v5566, %v5568
      %v5570 = vadd.f32 %v5566, %v5569
      %vm5571 = vweird.f32 %v4276
      %vm5572 = vweird.f32 %v5566
      %vm5573 = vmor %vm5571, %vm5572
      %v5574 = vsel %vm5573, %v5566, %v5570
      %v5575 = vand.u32 2147483647, %v4276
      %vm5576 = vcmp.eq.f32.partialorder %v5575, 8.507059e+37
      %v5577 = vand.u32 %v4276, 2147483648
      %v5578 = vor.u32 1.1754944e-38, %v5577
      %v5579 = vsel %vm5576, %v5578, %v5574
      %v5580 = vmul.f32 1.0, %v5579
      %v5581 = vrcp.pop %v4277
      %v5582 = vmul.f32 %v4277, %v5581
      %v5583 = vsub.f32 1.0, %v5582
      %v5584 = vmul.f32 %v5581, %v5583
      %v5585 = vadd.f32 %v5581, %v5584
      %vm5586 = vweird.f32 %v4277
      %vm5587 = vweird.f32 %v5581
      %vm5588 = vmor %vm5586, %vm5587
      %v5589 = vsel %vm5588, %v5581, %v5585
      %v5590 = vand.u32 2147483647, %v4277
      %vm5591 = vcmp.eq.f32.partialorder %v5590, 8.507059e+37
      %v5592 = vand.u32 %v4277, 2147483648
      %v5593 = vor.u32 1.1754944e-38, %v5592
      %v5594 = vsel %vm5591, %v5593, %v5589
      %v5595 = vmul.f32 1.0, %v5594
      %v5596 = vrcp.pop %v4278
      %v5597 = vmul.f32 %v4278, %v5596
      %v5598 = vsub.f32 1.0, %v5597
      %v5599 = vmul.f32 %v5596, %v5598
      %v5600 = vadd.f32 %v5596, %v5599
      %vm5601 = vweird.f32 %v4278
      %vm5602 = vweird.f32 %v5596
      %vm5603 = vmor %vm5601, %vm5602
      %v5604 = vsel %vm5603, %v5596, %v5600
      %v5605 = vand.u32 2147483647, %v4278
      %vm5606 = vcmp.eq.f32.partialorder %v5605, 8.507059e+37
      %v5607 = vand.u32 %v4278, 2147483648
      %v5608 = vor.u32 1.1754944e-38, %v5607
      %v5609 = vsel %vm5606, %v5608, %v5604
      %v5610 = vmul.f32 1.0, %v5609
      %v5611 = vrcp.pop %v4279
      %v5612 = vmul.f32 %v4279, %v5611
      %v5613 = vsub.f32 1.0, %v5612
      %v5614 = vmul.f32 %v5611, %v5613
      %v5615 = vadd.f32 %v5611, %v5614
      %vm5616 = vweird.f32 %v4279
      %vm5617 = vweird.f32 %v5611
      %vm5618 = vmor %vm5616, %vm5617
      %v5619 = vsel %vm5618, %v5611, %v5615
      %v5620 = vand.u32 2147483647, %v4279
      %vm5621 = vcmp.eq.f32.partialorder %v5620, 8.507059e+37
      %v5622 = vand.u32 %v4279, 2147483648
      %v5623 = vor.u32 1.1754944e-38, %v5622
      %v5624 = vsel %vm5621, %v5623, %v5619
      %v5625 = vmul.f32 1.0, %v5624
      %v5626 = vrcp.pop %v4280
      %v5627 = vmul.f32 %v4280, %v5626
      %v5628 = vsub.f32 1.0, %v5627
      %v5629 = vmul.f32 %v5626, %v5628
      %v5630 = vadd.f32 %v5626, %v5629
      %vm5631 = vweird.f32 %v4280
      %vm5632 = vweird.f32 %v5626
      %vm5633 = vmor %vm5631, %vm5632
      %v5634 = vsel %vm5633, %v5626, %v5630
      %v5635 = vand.u32 2147483647, %v4280
      %vm5636 = vcmp.eq.f32.partialorder %v5635, 8.507059e+37
      %v5637 = vand.u32 %v4280, 2147483648
      %v5638 = vor.u32 1.1754944e-38, %v5637
      %v5639 = vsel %vm5636, %v5638, %v5634
      %v5640 = vmul.f32 1.0, %v5639
      %v5641 = vrcp.pop %v4281
      %v5642 = vmul.f32 %v4281, %v5641
      %v5643 = vsub.f32 1.0, %v5642
      %v5644 = vmul.f32 %v5641, %v5643
      %v5645 = vadd.f32 %v5641, %v5644
      %vm5646 = vweird.f32 %v4281
      %vm5647 = vweird.f32 %v5641
      %vm5648 = vmor %vm5646, %vm5647
      %v5649 = vsel %vm5648, %v5641, %v5645
      %v5650 = vand.u32 2147483647, %v4281
      %vm5651 = vcmp.eq.f32.partialorder %v5650, 8.507059e+37
      %v5652 = vand.u32 %v4281, 2147483648
      %v5653 = vor.u32 1.1754944e-38, %v5652
      %v5654 = vsel %vm5651, %v5653, %v5649
      %v5655 = vmul.f32 1.0, %v5654
      %v5656 = vrcp.pop %v4282
      %v5657 = vmul.f32 %v4282, %v5656
      %v5658 = vsub.f32 1.0, %v5657
      %v5659 = vmul.f32 %v5656, %v5658
      %v5660 = vadd.f32 %v5656, %v5659
      %vm5661 = vweird.f32 %v4282
      %vm5662 = vweird.f32 %v5656
      %vm5663 = vmor %vm5661, %vm5662
      %v5664 = vsel %vm5663, %v5656, %v5660
      %v5665 = vand.u32 2147483647, %v4282
      %vm5666 = vcmp.eq.f32.partialorder %v5665, 8.507059e+37
      %v5667 = vand.u32 %v4282, 2147483648
      %v5668 = vor.u32 1.1754944e-38, %v5667
      %v5669 = vsel %vm5666, %v5668, %v5664
      %v5670 = vmul.f32 1.0, %v5669
      %v5671 = vrcp.pop %v4283
      %v5672 = vmul.f32 %v4283, %v5671
      %v5673 = vsub.f32 1.0, %v5672
      %v5674 = vmul.f32 %v5671, %v5673
      %v5675 = vadd.f32 %v5671, %v5674
      %vm5676 = vweird.f32 %v4283
      %vm5677 = vweird.f32 %v5671
      %vm5678 = vmor %vm5676, %vm5677
      %v5679 = vsel %vm5678, %v5671, %v5675
      %v5680 = vand.u32 2147483647, %v4283
      %vm5681 = vcmp.eq.f32.partialorder %v5680, 8.507059e+37
      %v5682 = vand.u32 %v4283, 2147483648
      %v5683 = vor.u32 1.1754944e-38, %v5682
      %v5684 = vsel %vm5681, %v5683, %v5679
      %v5685 = vmul.f32 1.0, %v5684
      %v5686 = vrcp.pop %v4284
      %v5687 = vmul.f32 %v4284, %v5686
      %v5688 = vsub.f32 1.0, %v5687
      %v5689 = vmul.f32 %v5686, %v5688
      %v5690 = vadd.f32 %v5686, %v5689
      %vm5691 = vweird.f32 %v4284
      %vm5692 = vweird.f32 %v5686
      %vm5693 = vmor %vm5691, %vm5692
      %v5694 = vsel %vm5693, %v5686, %v5690
      %v5695 = vand.u32 2147483647, %v4284
      %vm5696 = vcmp.eq.f32.partialorder %v5695, 8.507059e+37
      %v5697 = vand.u32 %v4284, 2147483648
      %v5698 = vor.u32 1.1754944e-38, %v5697
      %v5699 = vsel %vm5696, %v5698, %v5694
      %v5700 = vmul.f32 1.0, %v5699
      %v5701 = vrcp.pop %v4285
      %v5702 = vmul.f32 %v4285, %v5701
      %v5703 = vsub.f32 1.0, %v5702
      %v5704 = vmul.f32 %v5701, %v5703
      %v5705 = vadd.f32 %v5701, %v5704
      %vm5706 = vweird.f32 %v4285
      %vm5707 = vweird.f32 %v5701
      %vm5708 = vmor %vm5706, %vm5707
      %v5709 = vsel %vm5708, %v5701, %v5705
      %v5710 = vand.u32 2147483647, %v4285
      %vm5711 = vcmp.eq.f32.partialorder %v5710, 8.507059e+37
      %v5712 = vand.u32 %v4285, 2147483648
      %v5713 = vor.u32 1.1754944e-38, %v5712
      %v5714 = vsel %vm5711, %v5713, %v5709
      %v5715 = vmul.f32 1.0, %v5714
      %v5716 = vrcp.pop %v4286
      %v5717 = vmul.f32 %v4286, %v5716
      %v5718 = vsub.f32 1.0, %v5717
      %v5719 = vmul.f32 %v5716, %v5718
      %v5720 = vadd.f32 %v5716, %v5719
      %vm5721 = vweird.f32 %v4286
      %vm5722 = vweird.f32 %v5716
      %vm5723 = vmor %vm5721, %vm5722
      %v5724 = vsel %vm5723, %v5716, %v5720
      %v5725 = vand.u32 2147483647, %v4286
      %vm5726 = vcmp.eq.f32.partialorder %v5725, 8.507059e+37
      %v5727 = vand.u32 %v4286, 2147483648
      %v5728 = vor.u32 1.1754944e-38, %v5727
      %v5729 = vsel %vm5726, %v5728, %v5724
      %v5730 = vmul.f32 1.0, %v5729
      %v5731 = vrcp.pop %v4287
      %v5732 = vmul.f32 %v4287, %v5731
      %v5733 = vsub.f32 1.0, %v5732
      %v5734 = vmul.f32 %v5731, %v5733
      %v5735 = vadd.f32 %v5731, %v5734
      %vm5736 = vweird.f32 %v4287
      %vm5737 = vweird.f32 %v5731
      %vm5738 = vmor %vm5736, %vm5737
      %v5739 = vsel %vm5738, %v5731, %v5735
      %v5740 = vand.u32 2147483647, %v4287
      %vm5741 = vcmp.eq.f32.partialorder %v5740, 8.507059e+37
      %v5742 = vand.u32 %v4287, 2147483648
      %v5743 = vor.u32 1.1754944e-38, %v5742
      %v5744 = vsel %vm5741, %v5743, %v5739
      %v5745 = vmul.f32 1.0, %v5744
      %v5746 = vrcp.pop %v4288
      %v5747 = vmul.f32 %v4288, %v5746
      %v5748 = vsub.f32 1.0, %v5747
      %v5749 = vmul.f32 %v5746, %v5748
      %v5750 = vadd.f32 %v5746, %v5749
      %vm5751 = vweird.f32 %v4288
      %vm5752 = vweird.f32 %v5746
      %vm5753 = vmor %vm5751, %vm5752
      %v5754 = vsel %vm5753, %v5746, %v5750
      %v5755 = vand.u32 2147483647, %v4288
      %vm5756 = vcmp.eq.f32.partialorder %v5755, 8.507059e+37
      %v5757 = vand.u32 %v4288, 2147483648
      %v5758 = vor.u32 1.1754944e-38, %v5757
      %v5759 = vsel %vm5756, %v5758, %v5754
      %v5760 = vmul.f32 1.0, %v5759
      %v5761 = vrcp.pop %v4289
      %v5762 = vmul.f32 %v4289, %v5761
      %v5763 = vsub.f32 1.0, %v5762
      %v5764 = vmul.f32 %v5761, %v5763
      %v5765 = vadd.f32 %v5761, %v5764
      %vm5766 = vweird.f32 %v4289
      %vm5767 = vweird.f32 %v5761
      %vm5768 = vmor %vm5766, %vm5767
      %v5769 = vsel %vm5768, %v5761, %v5765
      %v5770 = vand.u32 2147483647, %v4289
      %vm5771 = vcmp.eq.f32.partialorder %v5770, 8.507059e+37
      %v5772 = vand.u32 %v4289, 2147483648
      %v5773 = vor.u32 1.1754944e-38, %v5772
      %v5774 = vsel %vm5771, %v5773, %v5769
      %v5775 = vmul.f32 1.0, %v5774
      %v5776 = vrcp.pop %v4290
      %v5777 = vmul.f32 %v4290, %v5776
      %v5778 = vsub.f32 1.0, %v5777
      %v5779 = vmul.f32 %v5776, %v5778
      %v5780 = vadd.f32 %v5776, %v5779
      %vm5781 = vweird.f32 %v4290
      %vm5782 = vweird.f32 %v5776
      %vm5783 = vmor %vm5781, %vm5782
      %v5784 = vsel %vm5783, %v5776, %v5780
      %v5785 = vand.u32 2147483647, %v4290
      %vm5786 = vcmp.eq.f32.partialorder %v5785, 8.507059e+37
      %v5787 = vand.u32 %v4290, 2147483648
      %v5788 = vor.u32 1.1754944e-38, %v5787
      %v5789 = vsel %vm5786, %v5788, %v5784
      %v5790 = vmul.f32 1.0, %v5789
      %v5791 = vrcp.pop %v4291
      %v5792 = vmul.f32 %v4291, %v5791
      %v5793 = vsub.f32 1.0, %v5792
      %v5794 = vmul.f32 %v5791, %v5793
      %v5795 = vadd.f32 %v5791, %v5794
      %vm5796 = vweird.f32 %v4291
      %vm5797 = vweird.f32 %v5791
      %vm5798 = vmor %vm5796, %vm5797
      %v5799 = vsel %vm5798, %v5791, %v5795
      %v5800 = vand.u32 2147483647, %v4291
      %vm5801 = vcmp.eq.f32.partialorder %v5800, 8.507059e+37
      %v5802 = vand.u32 %v4291, 2147483648
      %v5803 = vor.u32 1.1754944e-38, %v5802
      %v5804 = vsel %vm5801, %v5803, %v5799
      %v5805 = vmul.f32 1.0, %v5804
      %v5806 = vrcp.pop %v4292
      %v5807 = vmul.f32 %v4292, %v5806
      %v5808 = vsub.f32 1.0, %v5807
      %v5809 = vmul.f32 %v5806, %v5808
      %v5810 = vadd.f32 %v5806, %v5809
      %vm5811 = vweird.f32 %v4292
      %vm5812 = vweird.f32 %v5806
      %vm5813 = vmor %vm5811, %vm5812
      %v5814 = vsel %vm5813, %v5806, %v5810
      %v5815 = vand.u32 2147483647, %v4292
      %vm5816 = vcmp.eq.f32.partialorder %v5815, 8.507059e+37
      %v5817 = vand.u32 %v4292, 2147483648
      %v5818 = vor.u32 1.1754944e-38, %v5817
      %v5819 = vsel %vm5816, %v5818, %v5814
      %v5820 = vmul.f32 1.0, %v5819
      %v5821 = vrcp.pop %v4293
      %v5822 = vmul.f32 %v4293, %v5821
      %v5823 = vsub.f32 1.0, %v5822
      %v5824 = vmul.f32 %v5821, %v5823
      %v5825 = vadd.f32 %v5821, %v5824
      %vm5826 = vweird.f32 %v4293
      %vm5827 = vweird.f32 %v5821
      %vm5828 = vmor %vm5826, %vm5827
      %v5829 = vsel %vm5828, %v5821, %v5825
      %v5830 = vand.u32 2147483647, %v4293
      %vm5831 = vcmp.eq.f32.partialorder %v5830, 8.507059e+37
      %v5832 = vand.u32 %v4293, 2147483648
      %v5833 = vor.u32 1.1754944e-38, %v5832
      %v5834 = vsel %vm5831, %v5833, %v5829
      %v5835 = vmul.f32 1.0, %v5834
      %v5836 = vrcp.pop %v4294
      %v5837 = vmul.f32 %v4294, %v5836
      %v5838 = vsub.f32 1.0, %v5837
      %v5839 = vmul.f32 %v5836, %v5838
      %v5840 = vadd.f32 %v5836, %v5839
      %vm5841 = vweird.f32 %v4294
      %vm5842 = vweird.f32 %v5836
      %vm5843 = vmor %vm5841, %vm5842
      %v5844 = vsel %vm5843, %v5836, %v5840
      %v5845 = vand.u32 2147483647, %v4294
      %vm5846 = vcmp.eq.f32.partialorder %v5845, 8.507059e+37
      %v5847 = vand.u32 %v4294, 2147483648
      %v5848 = vor.u32 1.1754944e-38, %v5847
      %v5849 = vsel %vm5846, %v5848, %v5844
      %v5850 = vmul.f32 1.0, %v5849
      %v5851 = vrcp.pop %v4295
      %v5852 = vmul.f32 %v4295, %v5851
      %v5853 = vsub.f32 1.0, %v5852
      %v5854 = vmul.f32 %v5851, %v5853
      %v5855 = vadd.f32 %v5851, %v5854
      %vm5856 = vweird.f32 %v4295
      %vm5857 = vweird.f32 %v5851
      %vm5858 = vmor %vm5856, %vm5857
      %v5859 = vsel %vm5858, %v5851, %v5855
      %v5860 = vand.u32 2147483647, %v4295
      %vm5861 = vcmp.eq.f32.partialorder %v5860, 8.507059e+37
      %v5862 = vand.u32 %v4295, 2147483648
      %v5863 = vor.u32 1.1754944e-38, %v5862
      %v5864 = vsel %vm5861, %v5863, %v5859
      %v5865 = vmul.f32 1.0, %v5864
      %v5866 = vrcp.pop %v4296
      %v5867 = vmul.f32 %v4296, %v5866
      %v5868 = vsub.f32 1.0, %v5867
      %v5869 = vmul.f32 %v5866, %v5868
      %v5870 = vadd.f32 %v5866, %v5869
      %vm5871 = vweird.f32 %v4296
      %vm5872 = vweird.f32 %v5866
      %vm5873 = vmor %vm5871, %vm5872
      %v5874 = vsel %vm5873, %v5866, %v5870
      %v5875 = vand.u32 2147483647, %v4296
      %vm5876 = vcmp.eq.f32.partialorder %v5875, 8.507059e+37
      %v5877 = vand.u32 %v4296, 2147483648
      %v5878 = vor.u32 1.1754944e-38, %v5877
      %v5879 = vsel %vm5876, %v5878, %v5874
      %v5880 = vmul.f32 1.0, %v5879
      %v5881 = vrcp.pop %v4297
      %v5882 = vmul.f32 %v4297, %v5881
      %v5883 = vsub.f32 1.0, %v5882
      %v5884 = vmul.f32 %v5881, %v5883
      %v5885 = vadd.f32 %v5881, %v5884
      %vm5886 = vweird.f32 %v4297
      %vm5887 = vweird.f32 %v5881
      %vm5888 = vmor %vm5886, %vm5887
      %v5889 = vsel %vm5888, %v5881, %v5885
      %v5890 = vand.u32 2147483647, %v4297
      %vm5891 = vcmp.eq.f32.partialorder %v5890, 8.507059e+37
      %v5892 = vand.u32 %v4297, 2147483648
      %v5893 = vor.u32 1.1754944e-38, %v5892
      %v5894 = vsel %vm5891, %v5893, %v5889
      %v5895 = vmul.f32 1.0, %v5894
      %v5896 = vrcp.pop %v4298
      %v5897 = vmul.f32 %v4298, %v5896
      %v5898 = vsub.f32 1.0, %v5897
      %v5899 = vmul.f32 %v5896, %v5898
      %v5900 = vadd.f32 %v5896, %v5899
      %vm5901 = vweird.f32 %v4298
      %vm5902 = vweird.f32 %v5896
      %vm5903 = vmor %vm5901, %vm5902
      %v5904 = vsel %vm5903, %v5896, %v5900
      %v5905 = vand.u32 2147483647, %v4298
      %vm5906 = vcmp.eq.f32.partialorder %v5905, 8.507059e+37
      %v5907 = vand.u32 %v4298, 2147483648
      %v5908 = vor.u32 1.1754944e-38, %v5907
      %v5909 = vsel %vm5906, %v5908, %v5904
      %v5910 = vmul.f32 1.0, %v5909
      %v5911 = vrcp.pop %v4299
      %v5912 = vmul.f32 %v4299, %v5911
      %v5913 = vsub.f32 1.0, %v5912
      %v5914 = vmul.f32 %v5911, %v5913
      %v5915 = vadd.f32 %v5911, %v5914
      %vm5916 = vweird.f32 %v4299
      %vm5917 = vweird.f32 %v5911
      %vm5918 = vmor %vm5916, %vm5917
      %v5919 = vsel %vm5918, %v5911, %v5915
      %v5920 = vand.u32 2147483647, %v4299
      %vm5921 = vcmp.eq.f32.partialorder %v5920, 8.507059e+37
      %v5922 = vand.u32 %v4299, 2147483648
      %v5923 = vor.u32 1.1754944e-38, %v5922
      %v5924 = vsel %vm5921, %v5923, %v5919
      %v5925 = vmul.f32 1.0, %v5924
      %v5926 = vrcp.pop %v4300
      %v5927 = vmul.f32 %v4300, %v5926
      %v5928 = vsub.f32 1.0, %v5927
      %v5929 = vmul.f32 %v5926, %v5928
      %v5930 = vadd.f32 %v5926, %v5929
      %vm5931 = vweird.f32 %v4300
      %vm5932 = vweird.f32 %v5926
      %vm5933 = vmor %vm5931, %vm5932
      %v5934 = vsel %vm5933, %v5926, %v5930
      %v5935 = vand.u32 2147483647, %v4300
      %vm5936 = vcmp.eq.f32.partialorder %v5935, 8.507059e+37
      %v5937 = vand.u32 %v4300, 2147483648
      %v5938 = vor.u32 1.1754944e-38, %v5937
      %v5939 = vsel %vm5936, %v5938, %v5934
      %v5940 = vmul.f32 1.0, %v5939
      %v5941 = vrcp.pop %v4301
      %v5942 = vmul.f32 %v4301, %v5941
      %v5943 = vsub.f32 1.0, %v5942
      %v5944 = vmul.f32 %v5941, %v5943
      %v5945 = vadd.f32 %v5941, %v5944
      %vm5946 = vweird.f32 %v4301
      %vm5947 = vweird.f32 %v5941
      %vm5948 = vmor %vm5946, %vm5947
      %v5949 = vsel %vm5948, %v5941, %v5945
      %v5950 = vand.u32 2147483647, %v4301
      %vm5951 = vcmp.eq.f32.partialorder %v5950, 8.507059e+37
      %v5952 = vand.u32 %v4301, 2147483648
      %v5953 = vor.u32 1.1754944e-38, %v5952
      %v5954 = vsel %vm5951, %v5953, %v5949
      %v5955 = vmul.f32 1.0, %v5954
      %v5956 = vrcp.pop %v4302
      %v5957 = vmul.f32 %v4302, %v5956
      %v5958 = vsub.f32 1.0, %v5957
      %v5959 = vmul.f32 %v5956, %v5958
      %v5960 = vadd.f32 %v5956, %v5959
      %vm5961 = vweird.f32 %v4302
      %vm5962 = vweird.f32 %v5956
      %vm5963 = vmor %vm5961, %vm5962
      %v5964 = vsel %vm5963, %v5956, %v5960
      %v5965 = vand.u32 2147483647, %v4302
      %vm5966 = vcmp.eq.f32.partialorder %v5965, 8.507059e+37
      %v5967 = vand.u32 %v4302, 2147483648
      %v5968 = vor.u32 1.1754944e-38, %v5967
      %v5969 = vsel %vm5966, %v5968, %v5964
      %v5970 = vmul.f32 1.0, %v5969
      %v5971 = vrcp.pop %v4303
      %v5972 = vmul.f32 %v4303, %v5971
      %v5973 = vsub.f32 1.0, %v5972
      %v5974 = vmul.f32 %v5971, %v5973
      %v5975 = vadd.f32 %v5971, %v5974
      %vm5976 = vweird.f32 %v4303
      %vm5977 = vweird.f32 %v5971
      %vm5978 = vmor %vm5976, %vm5977
      %v5979 = vsel %vm5978, %v5971, %v5975
      %v5980 = vand.u32 2147483647, %v4303
      %vm5981 = vcmp.eq.f32.partialorder %v5980, 8.507059e+37
      %v5982 = vand.u32 %v4303, 2147483648
      %v5983 = vor.u32 1.1754944e-38, %v5982
      %v5984 = vsel %vm5981, %v5983, %v5979
      %v5985 = vmul.f32 1.0, %v5984
      %v5986 = vrcp.pop %v4304
      %v5987 = vmul.f32 %v4304, %v5986
      %v5988 = vsub.f32 1.0, %v5987
      %v5989 = vmul.f32 %v5986, %v5988
      %v5990 = vadd.f32 %v5986, %v5989
      %vm5991 = vweird.f32 %v4304
      %vm5992 = vweird.f32 %v5986
      %vm5993 = vmor %vm5991, %vm5992
      %v5994 = vsel %vm5993, %v5986, %v5990
      %v5995 = vand.u32 2147483647, %v4304
      %vm5996 = vcmp.eq.f32.partialorder %v5995, 8.507059e+37
      %v5997 = vand.u32 %v4304, 2147483648
      %v5998 = vor.u32 1.1754944e-38, %v5997
      %v5999 = vsel %vm5996, %v5998, %v5994
      %v6000 = vmul.f32 1.0, %v5999
      %v6001 = vrcp.pop %v4305
      %v6002 = vmul.f32 %v4305, %v6001
      %v6003 = vsub.f32 1.0, %v6002
      %v6004 = vmul.f32 %v6001, %v6003
      %v6005 = vadd.f32 %v6001, %v6004
      %vm6006 = vweird.f32 %v4305
      %vm6007 = vweird.f32 %v6001
      %vm6008 = vmor %vm6006, %vm6007
      %v6009 = vsel %vm6008, %v6001, %v6005
      %v6010 = vand.u32 2147483647, %v4305
      %vm6011 = vcmp.eq.f32.partialorder %v6010, 8.507059e+37
      %v6012 = vand.u32 %v4305, 2147483648
      %v6013 = vor.u32 1.1754944e-38, %v6012
      %v6014 = vsel %vm6011, %v6013, %v6009
      %v6015 = vmul.f32 1.0, %v6014
      %v6016 = vrcp.pop %v4306
      %v6017 = vmul.f32 %v4306, %v6016
      %v6018 = vsub.f32 1.0, %v6017
      %v6019 = vmul.f32 %v6016, %v6018
      %v6020 = vadd.f32 %v6016, %v6019
      %vm6021 = vweird.f32 %v4306
      %vm6022 = vweird.f32 %v6016
      %vm6023 = vmor %vm6021, %vm6022
      %v6024 = vsel %vm6023, %v6016, %v6020
      %v6025 = vand.u32 2147483647, %v4306
      %vm6026 = vcmp.eq.f32.partialorder %v6025, 8.507059e+37
      %v6027 = vand.u32 %v4306, 2147483648
      %v6028 = vor.u32 1.1754944e-38, %v6027
      %v6029 = vsel %vm6026, %v6028, %v6024
      %v6030 = vmul.f32 1.0, %v6029
      %v6031 = vrcp.pop %v4307
      %v6032 = vmul.f32 %v4307, %v6031
      %v6033 = vsub.f32 1.0, %v6032
      %v6034 = vmul.f32 %v6031, %v6033
      %v6035 = vadd.f32 %v6031, %v6034
      %vm6036 = vweird.f32 %v4307
      %vm6037 = vweird.f32 %v6031
      %vm6038 = vmor %vm6036, %vm6037
      %v6039 = vsel %vm6038, %v6031, %v6035
      %v6040 = vand.u32 2147483647, %v4307
      %vm6041 = vcmp.eq.f32.partialorder %v6040, 8.507059e+37
      %v6042 = vand.u32 %v4307, 2147483648
      %v6043 = vor.u32 1.1754944e-38, %v6042
      %v6044 = vsel %vm6041, %v6043, %v6039
      %v6045 = vmul.f32 1.0, %v6044
      %v6046 = vrcp.pop %v4308
      %v6047 = vmul.f32 %v4308, %v6046
      %v6048 = vsub.f32 1.0, %v6047
      %v6049 = vmul.f32 %v6046, %v6048
      %v6050 = vadd.f32 %v6046, %v6049
      %vm6051 = vweird.f32 %v4308
      %vm6052 = vweird.f32 %v6046
      %vm6053 = vmor %vm6051, %vm6052
      %v6054 = vsel %vm6053, %v6046, %v6050
      %v6055 = vand.u32 2147483647, %v4308
      %vm6056 = vcmp.eq.f32.partialorder %v6055, 8.507059e+37
      %v6057 = vand.u32 %v4308, 2147483648
      %v6058 = vor.u32 1.1754944e-38, %v6057
      %v6059 = vsel %vm6056, %v6058, %v6054
      %v6060 = vmul.f32 1.0, %v6059
      %v6061 = vrcp.pop %v4309
      %v6062 = vmul.f32 %v4309, %v6061
      %v6063 = vsub.f32 1.0, %v6062
      %v6064 = vmul.f32 %v6061, %v6063
      %v6065 = vadd.f32 %v6061, %v6064
      %vm6066 = vweird.f32 %v4309
      %vm6067 = vweird.f32 %v6061
      %vm6068 = vmor %vm6066, %vm6067
      %v6069 = vsel %vm6068, %v6061, %v6065
      %v6070 = vand.u32 2147483647, %v4309
      %vm6071 = vcmp.eq.f32.partialorder %v6070, 8.507059e+37
      %v6072 = vand.u32 %v4309, 2147483648
      %v6073 = vor.u32 1.1754944e-38, %v6072
      %v6074 = vsel %vm6071, %v6073, %v6069
      %v6075 = vmul.f32 1.0, %v6074
      %v6076 = vrcp.pop %v4310
      %v6077 = vmul.f32 %v4310, %v6076
      %v6078 = vsub.f32 1.0, %v6077
      %v6079 = vmul.f32 %v6076, %v6078
      %v6080 = vadd.f32 %v6076, %v6079
      %vm6081 = vweird.f32 %v4310
      %vm6082 = vweird.f32 %v6076
      %vm6083 = vmor %vm6081, %vm6082
      %v6084 = vsel %vm6083, %v6076, %v6080
      %v6085 = vand.u32 2147483647, %v4310
      %vm6086 = vcmp.eq.f32.partialorder %v6085, 8.507059e+37
      %v6087 = vand.u32 %v4310, 2147483648
      %v6088 = vor.u32 1.1754944e-38, %v6087
      %v6089 = vsel %vm6086, %v6088, %v6084
      %v6090 = vmul.f32 1.0, %v6089
      %v6091 = vrcp.pop %v4311
      %v6092 = vmul.f32 %v4311, %v6091
      %v6093 = vsub.f32 1.0, %v6092
      %v6094 = vmul.f32 %v6091, %v6093
      %v6095 = vadd.f32 %v6091, %v6094
      %vm6096 = vweird.f32 %v4311
      %vm6097 = vweird.f32 %v6091
      %vm6098 = vmor %vm6096, %vm6097
      %v6099 = vsel %vm6098, %v6091, %v6095
      %v6100 = vand.u32 2147483647, %v4311
      %vm6101 = vcmp.eq.f32.partialorder %v6100, 8.507059e+37
      %v6102 = vand.u32 %v4311, 2147483648
      %v6103 = vor.u32 1.1754944e-38, %v6102
      %v6104 = vsel %vm6101, %v6103, %v6099
      %v6105 = vmul.f32 1.0, %v6104
      %v6106 = vrcp.pop %v4312
      %v6107 = vmul.f32 %v4312, %v6106
      %v6108 = vsub.f32 1.0, %v6107
      %v6109 = vmul.f32 %v6106, %v6108
      %v6110 = vadd.f32 %v6106, %v6109
      %vm6111 = vweird.f32 %v4312
      %vm6112 = vweird.f32 %v6106
      %vm6113 = vmor %vm6111, %vm6112
      %v6114 = vsel %vm6113, %v6106, %v6110
      %v6115 = vand.u32 2147483647, %v4312
      %vm6116 = vcmp.eq.f32.partialorder %v6115, 8.507059e+37
      %v6117 = vand.u32 %v4312, 2147483648
      %v6118 = vor.u32 1.1754944e-38, %v6117
      %v6119 = vsel %vm6116, %v6118, %v6114
      %v6120 = vmul.f32 1.0, %v6119
      %v6121 = vrcp.pop %v4313
      %v6122 = vmul.f32 %v4313, %v6121
      %v6123 = vsub.f32 1.0, %v6122
      %v6124 = vmul.f32 %v6121, %v6123
      %v6125 = vadd.f32 %v6121, %v6124
      %vm6126 = vweird.f32 %v4313
      %vm6127 = vweird.f32 %v6121
      %vm6128 = vmor %vm6126, %vm6127
      %v6129 = vsel %vm6128, %v6121, %v6125
      %v6130 = vand.u32 2147483647, %v4313
      %vm6131 = vcmp.eq.f32.partialorder %v6130, 8.507059e+37
      %v6132 = vand.u32 %v4313, 2147483648
      %v6133 = vor.u32 1.1754944e-38, %v6132
      %v6134 = vsel %vm6131, %v6133, %v6129
      %v6135 = vmul.f32 1.0, %v6134
      %v6136 = vrcp.pop %v4314
      %v6137 = vmul.f32 %v4314, %v6136
      %v6138 = vsub.f32 1.0, %v6137
      %v6139 = vmul.f32 %v6136, %v6138
      %v6140 = vadd.f32 %v6136, %v6139
      %vm6141 = vweird.f32 %v4314
      %vm6142 = vweird.f32 %v6136
      %vm6143 = vmor %vm6141, %vm6142
      %v6144 = vsel %vm6143, %v6136, %v6140
      %v6145 = vand.u32 2147483647, %v4314
      %vm6146 = vcmp.eq.f32.partialorder %v6145, 8.507059e+37
      %v6147 = vand.u32 %v4314, 2147483648
      %v6148 = vor.u32 1.1754944e-38, %v6147
      %v6149 = vsel %vm6146, %v6148, %v6144
      %v6150 = vmul.f32 1.0, %v6149
      %v6151 = vrcp.pop %v4315
      %v6152 = vmul.f32 %v4315, %v6151
      %v6153 = vsub.f32 1.0, %v6152
      %v6154 = vmul.f32 %v6151, %v6153
      %v6155 = vadd.f32 %v6151, %v6154
      %vm6156 = vweird.f32 %v4315
      %vm6157 = vweird.f32 %v6151
      %vm6158 = vmor %vm6156, %vm6157
      %v6159 = vsel %vm6158, %v6151, %v6155
      %v6160 = vand.u32 2147483647, %v4315
      %vm6161 = vcmp.eq.f32.partialorder %v6160, 8.507059e+37
      %v6162 = vand.u32 %v4315, 2147483648
      %v6163 = vor.u32 1.1754944e-38, %v6162
      %v6164 = vsel %vm6161, %v6163, %v6159
      %v6165 = vmul.f32 1.0, %v6164
      %v6166 = vrcp.pop %v4316
      %v6167 = vmul.f32 %v4316, %v6166
      %v6168 = vsub.f32 1.0, %v6167
      %v6169 = vmul.f32 %v6166, %v6168
      %v6170 = vadd.f32 %v6166, %v6169
      %vm6171 = vweird.f32 %v4316
      %vm6172 = vweird.f32 %v6166
      %vm6173 = vmor %vm6171, %vm6172
      %v6174 = vsel %vm6173, %v6166, %v6170
      %v6175 = vand.u32 2147483647, %v4316
      %vm6176 = vcmp.eq.f32.partialorder %v6175, 8.507059e+37
      %v6177 = vand.u32 %v4316, 2147483648
      %v6178 = vor.u32 1.1754944e-38, %v6177
      %v6179 = vsel %vm6176, %v6178, %v6174
      %v6180 = vmul.f32 1.0, %v6179
      %v6181 = vrcp.pop %v4317
      %v6182 = vmul.f32 %v4317, %v6181
      %v6183 = vsub.f32 1.0, %v6182
      %v6184 = vmul.f32 %v6181, %v6183
      %v6185 = vadd.f32 %v6181, %v6184
      %vm6186 = vweird.f32 %v4317
      %vm6187 = vweird.f32 %v6181
      %vm6188 = vmor %vm6186, %vm6187
      %v6189 = vsel %vm6188, %v6181, %v6185
      %v6190 = vand.u32 2147483647, %v4317
      %vm6191 = vcmp.eq.f32.partialorder %v6190, 8.507059e+37
      %v6192 = vand.u32 %v4317, 2147483648
      %v6193 = vor.u32 1.1754944e-38, %v6192
      %v6194 = vsel %vm6191, %v6193, %v6189
      %v6195 = vmul.f32 1.0, %v6194
      %v6196 = vrcp.pop %v4318
      %v6197 = vmul.f32 %v4318, %v6196
      %v6198 = vsub.f32 1.0, %v6197
      %v6199 = vmul.f32 %v6196, %v6198
      %v6200 = vadd.f32 %v6196, %v6199
      %vm6201 = vweird.f32 %v4318
      %vm6202 = vweird.f32 %v6196
      %vm6203 = vmor %vm6201, %vm6202
      %v6204 = vsel %vm6203, %v6196, %v6200
      %v6205 = vand.u32 2147483647, %v4318
      %vm6206 = vcmp.eq.f32.partialorder %v6205, 8.507059e+37
      %v6207 = vand.u32 %v4318, 2147483648
      %v6208 = vor.u32 1.1754944e-38, %v6207
      %v6209 = vsel %vm6206, %v6208, %v6204
      %v6210 = vmul.f32 1.0, %v6209
      %v6211 = vrcp.pop %v4319
      %v6212 = vmul.f32 %v4319, %v6211
      %v6213 = vsub.f32 1.0, %v6212
      %v6214 = vmul.f32 %v6211, %v6213
      %v6215 = vadd.f32 %v6211, %v6214
      %vm6216 = vweird.f32 %v4319
      %vm6217 = vweird.f32 %v6211
      %vm6218 = vmor %vm6216, %vm6217
      %v6219 = vsel %vm6218, %v6211, %v6215
      %v6220 = vand.u32 2147483647, %v4319
      %vm6221 = vcmp.eq.f32.partialorder %v6220, 8.507059e+37
      %v6222 = vand.u32 %v4319, 2147483648
      %v6223 = vor.u32 1.1754944e-38, %v6222
      %v6224 = vsel %vm6221, %v6223, %v6219
      %v6225 = vmul.f32 1.0, %v6224
      %v6226 = vrcp.pop %v4320
      %v6227 = vmul.f32 %v4320, %v6226
      %v6228 = vsub.f32 1.0, %v6227
      %v6229 = vmul.f32 %v6226, %v6228
      %v6230 = vadd.f32 %v6226, %v6229
      %vm6231 = vweird.f32 %v4320
      %vm6232 = vweird.f32 %v6226
      %vm6233 = vmor %vm6231, %vm6232
      %v6234 = vsel %vm6233, %v6226, %v6230
      %v6235 = vand.u32 2147483647, %v4320
      %vm6236 = vcmp.eq.f32.partialorder %v6235, 8.507059e+37
      %v6237 = vand.u32 %v4320, 2147483648
      %v6238 = vor.u32 1.1754944e-38, %v6237
      %v6239 = vsel %vm6236, %v6238, %v6234
      %v6240 = vmul.f32 1.0, %v6239
      %vm6241 = vcmask 392192
      %6242 = vst.msk [vmem:[%s229] sm:$0xff] %vm6241, %v4335
      %6243 = vst.msk [vmem:[%s229 + $0x8] sm:$0xff] %vm6241, %v4350
      %6244 = vst.msk [vmem:[%s229 + $0x10] sm:$0xff] %vm6241, %v4365
      %6245 = vst.msk [vmem:[%s229 + $0x18] sm:$0xff] %vm6241, %v4380
      %6246 = vst.msk [vmem:[%s229 + $0x20] sm:$0xff] %vm6241, %v4395
      %6247 = vst.msk [vmem:[%s229 + $0x28] sm:$0xff] %vm6241, %v4410
      %6248 = vst.msk [vmem:[%s229 + $0x30] sm:$0xff] %vm6241, %v4425
      %6249 = vst.msk [vmem:[%s229 + $0x38] sm:$0xff] %vm6241, %v4440
      %6250 = vst.msk [vmem:[%s229 + $0x40] sm:$0xff] %vm6241, %v4455
      %6251 = vst.msk [vmem:[%s229 + $0x48] sm:$0xff] %vm6241, %v4470
      %6252 = vst.msk [vmem:[%s229 + $0x50] sm:$0xff] %vm6241, %v4485
      %6253 = vst.msk [vmem:[%s229 + $0x58] sm:$0xff] %vm6241, %v4500
      %6254 = vst.msk [vmem:[%s229 + $0x60] sm:$0xff] %vm6241, %v4515
      %6255 = vst.msk [vmem:[%s229 + $0x68] sm:$0xff] %vm6241, %v4530
      %6256 = vst.msk [vmem:[%s229 + $0x70] sm:$0xff] %vm6241, %v4545
      %6257 = vst.msk [vmem:[%s229 + $0x78] sm:$0xff] %vm6241, %v4560
      %6258 = vst.msk [vmem:[%s229 + $0x80] sm:$0xff] %vm6241, %v4575
      %6259 = vst.msk [vmem:[%s229 + $0x88] sm:$0xff] %vm6241, %v4590
      %6260 = vst.msk [vmem:[%s229 + $0x90] sm:$0xff] %vm6241, %v4605
      %6261 = vst.msk [vmem:[%s229 + $0x98] sm:$0xff] %vm6241, %v4620
      %6262 = vst.msk [vmem:[%s229 + $0xa0] sm:$0xff] %vm6241, %v4635
      %6263 = vst.msk [vmem:[%s229 + $0xa8] sm:$0xff] %vm6241, %v4650
      %6264 = vst.msk [vmem:[%s229 + $0xb0] sm:$0xff] %vm6241, %v4665
      %6265 = vst.msk [vmem:[%s229 + $0xb8] sm:$0xff] %vm6241, %v4680
      %6266 = vst.msk [vmem:[%s229 + $0xc0] sm:$0xff] %vm6241, %v4695
      %6267 = vst.msk [vmem:[%s229 + $0xc8] sm:$0xff] %vm6241, %v4710
      %6268 = vst.msk [vmem:[%s229 + $0xd0] sm:$0xff] %vm6241, %v4725
      %6269 = vst.msk [vmem:[%s229 + $0xd8] sm:$0xff] %vm6241, %v4740
      %6270 = vst.msk [vmem:[%s229 + $0xe0] sm:$0xff] %vm6241, %v4755
      %6271 = vst.msk [vmem:[%s229 + $0xe8] sm:$0xff] %vm6241, %v4770
      %6272 = vst.msk [vmem:[%s229 + $0xf0] sm:$0xff] %vm6241, %v4785
      %6273 = vst.msk [vmem:[%s229 + $0xf8] sm:$0xff] %vm6241, %v4800
      %6274 = vst.msk [vmem:[%s229 + $0x100] sm:$0xff] %vm6241, %v4815
      %6275 = vst.msk [vmem:[%s229 + $0x108] sm:$0xff] %vm6241, %v4830
      %6276 = vst.msk [vmem:[%s229 + $0x110] sm:$0xff] %vm6241, %v4845
      %6277 = vst.msk [vmem:[%s229 + $0x118] sm:$0xff] %vm6241, %v4860
      %6278 = vst.msk [vmem:[%s229 + $0x120] sm:$0xff] %vm6241, %v4875
      %6279 = vst.msk [vmem:[%s229 + $0x128] sm:$0xff] %vm6241, %v4890
      %6280 = vst.msk [vmem:[%s229 + $0x130] sm:$0xff] %vm6241, %v4905
      %6281 = vst.msk [vmem:[%s229 + $0x138] sm:$0xff] %vm6241, %v4920
      %6282 = vst.msk [vmem:[%s229 + $0x140] sm:$0xff] %vm6241, %v4935
      %6283 = vst.msk [vmem:[%s229 + $0x148] sm:$0xff] %vm6241, %v4950
      %6284 = vst.msk [vmem:[%s229 + $0x150] sm:$0xff] %vm6241, %v4965
      %6285 = vst.msk [vmem:[%s229 + $0x158] sm:$0xff] %vm6241, %v4980
      %6286 = vst.msk [vmem:[%s229 + $0x160] sm:$0xff] %vm6241, %v4995
      %6287 = vst.msk [vmem:[%s229 + $0x168] sm:$0xff] %vm6241, %v5010
      %6288 = vst.msk [vmem:[%s229 + $0x170] sm:$0xff] %vm6241, %v5025
      %6289 = vst.msk [vmem:[%s229 + $0x178] sm:$0xff] %vm6241, %v5040
      %6290 = vst.msk [vmem:[%s229 + $0x180] sm:$0xff] %vm6241, %v5055
      %6291 = vst.msk [vmem:[%s229 + $0x188] sm:$0xff] %vm6241, %v5070
      %6292 = vst.msk [vmem:[%s229 + $0x190] sm:$0xff] %vm6241, %v5085
      %6293 = vst.msk [vmem:[%s229 + $0x198] sm:$0xff] %vm6241, %v5100
      %6294 = vst.msk [vmem:[%s229 + $0x1a0] sm:$0xff] %vm6241, %v5115
      %6295 = vst.msk [vmem:[%s229 + $0x1a8] sm:$0xff] %vm6241, %v5130
      %6296 = vst.msk [vmem:[%s229 + $0x1b0] sm:$0xff] %vm6241, %v5145
      %6297 = vst.msk [vmem:[%s229 + $0x1b8] sm:$0xff] %vm6241, %v5160
      %6298 = vst.msk [vmem:[%s229 + $0x1c0] sm:$0xff] %vm6241, %v5175
      %6299 = vst.msk [vmem:[%s229 + $0x1c8] sm:$0xff] %vm6241, %v5190
      %6300 = vst.msk [vmem:[%s229 + $0x1d0] sm:$0xff] %vm6241, %v5205
      %6301 = vst.msk [vmem:[%s229 + $0x1d8] sm:$0xff] %vm6241, %v5220
      %6302 = vst.msk [vmem:[%s229 + $0x1e0] sm:$0xff] %vm6241, %v5235
      %6303 = vst.msk [vmem:[%s229 + $0x1e8] sm:$0xff] %vm6241, %v5250
      %6304 = vst.msk [vmem:[%s229 + $0x1f0] sm:$0xff] %vm6241, %v5265
      %6305 = vst.msk [vmem:[%s229 + $0x1f8] sm:$0xff] %vm6241, %v5280
      %6306 = vst.msk [vmem:[%s229 + $0x200] sm:$0xff] %vm6241, %v5295
      %6307 = vst.msk [vmem:[%s229 + $0x208] sm:$0xff] %vm6241, %v5310
      %6308 = vst.msk [vmem:[%s229 + $0x210] sm:$0xff] %vm6241, %v5325
      %6309 = vst.msk [vmem:[%s229 + $0x218] sm:$0xff] %vm6241, %v5340
      %6310 = vst.msk [vmem:[%s229 + $0x220] sm:$0xff] %vm6241, %v5355
      %6311 = vst.msk [vmem:[%s229 + $0x228] sm:$0xff] %vm6241, %v5370
      %6312 = vst.msk [vmem:[%s229 + $0x230] sm:$0xff] %vm6241, %v5385
      %6313 = vst.msk [vmem:[%s229 + $0x238] sm:$0xff] %vm6241, %v5400
      %6314 = vst.msk [vmem:[%s229 + $0x240] sm:$0xff] %vm6241, %v5415
      %6315 = vst.msk [vmem:[%s229 + $0x248] sm:$0xff] %vm6241, %v5430
      %6316 = vst.msk [vmem:[%s229 + $0x250] sm:$0xff] %vm6241, %v5445
      %6317 = vst.msk [vmem:[%s229 + $0x258] sm:$0xff] %vm6241, %v5460
      %6318 = vst.msk [vmem:[%s229 + $0x260] sm:$0xff] %vm6241, %v5475
      %6319 = vst.msk [vmem:[%s229 + $0x268] sm:$0xff] %vm6241, %v5490
      %6320 = vst.msk [vmem:[%s229 + $0x270] sm:$0xff] %vm6241, %v5505
      %6321 = vst.msk [vmem:[%s229 + $0x278] sm:$0xff] %vm6241, %v5520
      %6322 = vst.msk [vmem:[%s229 + $0x280] sm:$0xff] %vm6241, %v5535
      %6323 = vst.msk [vmem:[%s229 + $0x288] sm:$0xff] %vm6241, %v5550
      %6324 = vst.msk [vmem:[%s229 + $0x290] sm:$0xff] %vm6241, %v5565
      %6325 = vst.msk [vmem:[%s229 + $0x298] sm:$0xff] %vm6241, %v5580
      %6326 = vst.msk [vmem:[%s229 + $0x2a0] sm:$0xff] %vm6241, %v5595
      %6327 = vst.msk [vmem:[%s229 + $0x2a8] sm:$0xff] %vm6241, %v5610
      %6328 = vst.msk [vmem:[%s229 + $0x2b0] sm:$0xff] %vm6241, %v5625
      %6329 = vst.msk [vmem:[%s229 + $0x2b8] sm:$0xff] %vm6241, %v5640
      %6330 = vst.msk [vmem:[%s229 + $0x2c0] sm:$0xff] %vm6241, %v5655
      %6331 = vst.msk [vmem:[%s229 + $0x2c8] sm:$0xff] %vm6241, %v5670
      %6332 = vst.msk [vmem:[%s229 + $0x2d0] sm:$0xff] %vm6241, %v5685
      %6333 = vst.msk [vmem:[%s229 + $0x2d8] sm:$0xff] %vm6241, %v5700
      %6334 = vst.msk [vmem:[%s229 + $0x2e0] sm:$0xff] %vm6241, %v5715
      %6335 = vst.msk [vmem:[%s229 + $0x2e8] sm:$0xff] %vm6241, %v5730
      %6336 = vst.msk [vmem:[%s229 + $0x2f0] sm:$0xff] %vm6241, %v5745
      %6337 = vst.msk [vmem:[%s229 + $0x2f8] sm:$0xff] %vm6241, %v5760
      %6338 = vst.msk [vmem:[%s229 + $0x300] sm:$0xff] %vm6241, %v5775
      %6339 = vst.msk [vmem:[%s229 + $0x308] sm:$0xff] %vm6241, %v5790
      %6340 = vst.msk [vmem:[%s229 + $0x310] sm:$0xff] %vm6241, %v5805
      %6341 = vst.msk [vmem:[%s229 + $0x318] sm:$0xff] %vm6241, %v5820
      %6342 = vst.msk [vmem:[%s229 + $0x320] sm:$0xff] %vm6241, %v5835
      %6343 = vst.msk [vmem:[%s229 + $0x328] sm:$0xff] %vm6241, %v5850
      %6344 = vst.msk [vmem:[%s229 + $0x330] sm:$0xff] %vm6241, %v5865
      %6345 = vst.msk [vmem:[%s229 + $0x338] sm:$0xff] %vm6241, %v5880
      %6346 = vst.msk [vmem:[%s229 + $0x340] sm:$0xff] %vm6241, %v5895
      %6347 = vst.msk [vmem:[%s229 + $0x348] sm:$0xff] %vm6241, %v5910
      %6348 = vst.msk [vmem:[%s229 + $0x350] sm:$0xff] %vm6241, %v5925
      %6349 = vst.msk [vmem:[%s229 + $0x358] sm:$0xff] %vm6241, %v5940
      %6350 = vst.msk [vmem:[%s229 + $0x360] sm:$0xff] %vm6241, %v5955
      %6351 = vst.msk [vmem:[%s229 + $0x368] sm:$0xff] %vm6241, %v5970
      %6352 = vst.msk [vmem:[%s229 + $0x370] sm:$0xff] %vm6241, %v5985
      %6353 = vst.msk [vmem:[%s229 + $0x378] sm:$0xff] %vm6241, %v6000
      %6354 = vst.msk [vmem:[%s229 + $0x380] sm:$0xff] %vm6241, %v6015
      %6355 = vst.msk [vmem:[%s229 + $0x388] sm:$0xff] %vm6241, %v6030
      %6356 = vst.msk [vmem:[%s229 + $0x390] sm:$0xff] %vm6241, %v6045
      %6357 = vst.msk [vmem:[%s229 + $0x398] sm:$0xff] %vm6241, %v6060
      %6358 = vst.msk [vmem:[%s229 + $0x3a0] sm:$0xff] %vm6241, %v6075
      %6359 = vst.msk [vmem:[%s229 + $0x3a8] sm:$0xff] %vm6241, %v6090
      %6360 = vst.msk [vmem:[%s229 + $0x3b0] sm:$0xff] %vm6241, %v6105
      %6361 = vst.msk [vmem:[%s229 + $0x3b8] sm:$0xff] %vm6241, %v6120
      %6362 = vst.msk [vmem:[%s229 + $0x3c0] sm:$0xff] %vm6241, %v6135
      %6363 = vst.msk [vmem:[%s229 + $0x3c8] sm:$0xff] %vm6241, %v6150
      %6364 = vst.msk [vmem:[%s229 + $0x3d0] sm:$0xff] %vm6241, %v6165
      %6365 = vst.msk [vmem:[%s229 + $0x3d8] sm:$0xff] %vm6241, %v6180
      %6366 = vst.msk [vmem:[%s229 + $0x3e0] sm:$0xff] %vm6241, %v6195
      %6367 = vst.msk [vmem:[%s229 + $0x3e8] sm:$0xff] %vm6241, %v6210
      %6368 = vst.msk [vmem:[%s229 + $0x3f0] sm:$0xff] %vm6241, %v6225
      %6369 = vst.msk [vmem:[%s229 + $0x3f8] sm:$0xff] %vm6241, %v6240
      %s6370 = smul.u32 128, %s16
      %p6371 = scmp.lt.s32.totalorder %s6370, 255
      %s6372 = scalar_select %p6371, %s6370, 255
      %s6373 = smul.addr %s6372, 8
      %s6374 = scalar_lea.vmem %s5, %s6373
      // Predicated region
      $region41: #{image_decoder_forward.5} parent=39 // pred_check
        %p6375 = pneg %p144
      $region42: #{image_decoder_forward.5} parent=39 // pred_check_branch
        %6377 = sbr.rel (%p6375) target = $region44
      $region43: #{image_decoder_forward.5} parent=39 // pred_region
        %s6378 = smul.u32 128, %s16
      $region44: #{image_decoder_forward.5} parent=39 // pred_fallthru
        _
    $region40: #{image_decoder_forward.5} parent=5 // pred_fallthru
      _
    %p6379 = scmp.le.s32.totalorder 2, %s11
    // Predicated region
    $region45: #{image_decoder_forward.5} parent=5 // pred_check
      %p6380 = pneg %p6379
    $region46: #{image_decoder_forward.5} parent=5 // pred_check_branch
      %6382 = sbr.rel (%p6380) target = $region48
    $region47: #{image_decoder_forward.5} parent=5 // pred_region
      %s6383 = ssub.s32 %s11, 2
      // Predicated region
      $region49: #{image_decoder_forward.5} parent=47 // pred_check
        %p6384 = pneg %p150
      $region50: #{image_decoder_forward.5} parent=47 // pred_check_branch
        %6386 = sbr.rel (%p6384) target = $region52
      $region51: #{image_decoder_forward.5} parent=47 // pred_region
        %s6387 = smul.u32 128, %s17
        %p6388 = scmp.lt.s32.totalorder %s6387, 255
        %s6389 = scalar_select %p6388, %s6387, 255
        %s6390 = smul.addr %s6389, 8
        %s6391 = scalar_lea.vmem %s5, %s6390
      $region52: #{image_decoder_forward.5} parent=47 // pred_fallthru
        _
    $region48: #{image_decoder_forward.5} parent=5 // pred_fallthru
      _
  $region6: #{image_decoder_forward.5} parent=0 // loop_footer
    %s15 = sadd.s32 1, %s11
  $region7: #{image_decoder_forward.5} parent=0 // loop_footer_branch
    %10 = sbr.rel target = $region3
  $region8: #{image_decoder_forward.5} parent=0 // loop_exit
    _

</llo_original>
